<compile_context>
chip_gen: v5e
topology: v5e:2x2
jax: 0.10.0
libtpu: 0.0.40
codegen_flags: <defaults>
</compile_context>

<pallas_src>
import jax
import jax.numpy as jnp
import numpy as np
from jax import lax
from jax.experimental import pallas as pl
from jax.experimental.pallas import tpu as pltpu


# ------------------------------ chip queries ------------------------------- #

def _vmem_capacity_bytes():
    try:
        cap = int(pltpu.get_tpu_info().vmem_capacity_bytes)
        if cap > 0:
            return cap
    except Exception:
        pass
    return 64 << 20          # conservative fallback (v7x-sized VMEM)


# ----------------------------- Pallas kernel ------------------------------- #

def _make_conv_kernel(mode, th, w, wp, cin, cout):
    """mode:
        "relu"          : y = relu(conv(x) + b)
        "relu_add_relu" : y = relu(relu(conv(x) + b) + res)   (decoder + skip)
        "add"           : y = conv(x) + b + res               (output layer)
    All tensors are W-padded: valid image columns are [1, w], cols 0 and w+1
    are zero.  The kernel re-emits zero pad columns in its output so the next
    layer can consume it directly.
    """

    def kernel(*refs):
        if mode == "relu":
            xb_ref, xt_ref, xu_ref, w_ref, b_ref, o_ref = refs
            res_ref = None
        else:
            xb_ref, xt_ref, xu_ref, w_ref, b_ref, res_ref, o_ref = refs

        i = pl.program_id(1)
        last = pl.num_programs(1) - 1

        body = xb_ref[0]                                     # (th, wp, cin)
        act_dt = body.dtype

        # Halo rows that fall on the image boundary must read as zero
        # (replaces any H padding of the activation in HBM).
        tmask = (i > 0).astype(jnp.float32)
        bmask = (i < last).astype(jnp.float32)
        top = (xt_ref[0].astype(jnp.float32) * tmask).astype(act_dt)   # (1, wp, cin)
        bot = (xu_ref[0].astype(jnp.float32) * bmask).astype(act_dt)   # (1, wp, cin)

        # Stitch 1 halo row on each side of the body (single small row-copy).
        xt = jnp.concatenate([top, body, bot], axis=0)       # (th+2, wp, cin)

        # 3x3 conv as 9 accumulating MXU GEMMs on shifted views — no 9*Cin
        # im2col buffer and no lane concats.
        # TODO(synk): on v5e (128-deep MXU, compute-bound) group the kx taps
        # into K = 3*Cin GEMMs to avoid the K=Cin underfill.
        acc = jnp.zeros((th * w, cout), jnp.float32)
        for kx in range(3):
            xk = xt[:, kx:kx + w, :]                         # (th+2, w, cin)
            for ky in range(3):
                tap = xk[ky:ky + th].reshape(th * w, cin)
                acc = acc + jnp.dot(tap, w_ref[ky * 3 + kx],
                                    preferred_element_type=jnp.float32)
        acc = acc + b_ref[...]                               # (1, cout) broadcast

        if mode in ("relu", "relu_add_relu"):
            acc = jnp.maximum(acc, 0.0)

        # Re-insert the zero W-pad columns so the next layer consumes this
        # output directly (no per-layer HBM pad round-trip).
        y = acc.reshape(th, w, cout)
        zl = jnp.zeros((th, 1, cout), jnp.float32)
        zr = jnp.zeros((th, wp - w - 1, cout), jnp.float32)
        ypad = jnp.concatenate([zl, y, zr], axis=1)          # (th, wp, cout)

        if mode == "relu_add_relu":
            # residual is also W-padded with zero edge cols -> pads stay 0.
            ypad = jnp.maximum(ypad + res_ref[0].astype(jnp.float32), 0.0)
        elif mode == "add":
            ypad = ypad + res_ref[0].astype(jnp.float32)

        o_ref[...] = ypad.reshape(1, th, wp, cout).astype(o_ref.dtype)

    return kernel


# ------------------------------ tile picking ------------------------------- #

def _pick_tile_rows(H, Wp, cin, cout, res_bytes, out_bytes, budget):
    """Largest divisor of H whose per-tile VMEM footprint fits `budget`,
    preferring an even (>=2) number of row tiles so v7x's two TensorCores
    stay balanced."""
    W = Wp - 2

    def footprint(th):
        by = 0
        by += 2 * th * Wp * cin * 2            # body block, double-buffered bf16
        by += 2 * 2 * Wp * cin * 2             # two 1-row halo blocks, 2 buffers
        by += 2 * th * Wp * cout * out_bytes   # output block, double-buffered
        if res_bytes:
            by += 2 * th * Wp * cout * res_bytes
        by += (th + 2) * Wp * cin * 2          # stitched halo tile
        by += 4 * th * W * cin * 2             # live shifted tap views
        by += th * W * cout * 4                # f32 accumulator
        by += 2 * th * Wp * cout * 4           # padded-output temporaries
        by += 9 * cin * cout * 2 + cout * 4    # resident weights + bias
        return int(by * 1.25)                  # headroom

    divs = [d for d in range(1, H + 1) if H % d == 0]
    fits = [d for d in divs if footprint(d) <= budget] or [min(divs)]
    even = [d for d in fits if (H // d) >= 2 and (H // d) % 2 == 0]
    two = [d for d in fits if (H // d) >= 2]
    pool = even or two or fits
    return max(pool)


# ------------------------------ layer wrapper ------------------------------ #

def conv3x3_padded(x_pad, w_eff, bias, mode, res_pad=None,
                   out_dtype=jnp.bfloat16):
    """3x3 'same' conv (stride 1) on a W-padded activation, fused bias /
    ReLU / residual, producing a W-padded output.

    x_pad   : (N, H, W+2, Cin) with zero columns 0 and W+1
    w_eff   : (9, Cin, Cout), tap index t = ky*3 + kx
    bias    : (Cout,)
    res_pad : optional (N, H, W+2, Cout) W-padded residual
    """
    N, H, Wp, cin = x_pad.shape
    W = Wp - 2
    cout = w_eff.shape[-1]

    out_bytes = jnp.dtype(out_dtype).itemsize
    res_bytes = 0 if res_pad is None else jnp.dtype(res_pad.dtype).itemsize

    vmem_cap = _vmem_capacity_bytes()
    vmem_limit = int(min(vmem_cap // 2, 64 << 20))
    budget = vmem_limit // 2
    th = _pick_tile_rows(H, Wp, cin, cout, res_bytes, out_bytes, budget)
    n_tiles = H // th

    wq = w_eff.astype(jnp.bfloat16)
    b2 = bias.reshape(1, cout).astype(jnp.float32)

    body_spec = pl.BlockSpec((1, th, Wp, cin), lambda n, i: (n, i, 0, 0))
    # 1-row top / bottom halos with clamped row index; the kernel zeroes them
    # on boundary tiles.
    top_spec = pl.BlockSpec(
        (1, 1, Wp, cin), lambda n, i: (n, jnp.maximum(i * th - 1, 0), 0, 0))
    bot_spec = pl.BlockSpec(
        (1, 1, Wp, cin), lambda n, i: (n, jnp.minimum((i + 1) * th, H - 1), 0, 0))
    # Weights / bias: constant block index -> DMA'd once, stay resident.
    w_spec = pl.BlockSpec((9, cin, cout), lambda n, i: (0, 0, 0))
    b_spec = pl.BlockSpec((1, cout), lambda n, i: (0, 0))

    in_specs = [body_spec, top_spec, bot_spec, w_spec, b_spec]
    args = [x_pad, x_pad, x_pad, wq, b2]
    if mode != "relu":
        in_specs.append(pl.BlockSpec((1, th, Wp, cout),
                                     lambda n, i: (n, i, 0, 0)))
        args.append(res_pad)

    return pl.pallas_call(
        _make_conv_kernel(mode, th, W, Wp, cin, cout),
        grid=(N, n_tiles),
        in_specs=in_specs,
        out_specs=pl.BlockSpec((1, th, Wp, cout), lambda n, i: (n, i, 0, 0)),
        out_shape=jax.ShapeDtypeStruct((N, H, Wp, cout), out_dtype),
        compiler_params=pltpu.CompilerParams(
            dimension_semantics=("parallel", "parallel"),
            vmem_limit_bytes=vmem_limit),
    )(*args)


# ------------------------ weight layout transforms ------------------------- #

def conv_w_to_eff(W):
    # torch Conv2d weight (Cout, Cin, 3, 3) -> (9, Cin, Cout), t = ky*3 + kx
    cout, cin = W.shape[0], W.shape[1]
    return jnp.transpose(W, (2, 3, 1, 0)).reshape(9, cin, cout)


def deconv_w_to_eff(W):
    # torch ConvTranspose2d weight (Cin, Cout, 3, 3), stride=1, padding=1:
    # equivalent regular conv = flip spatial dims, swap channel axes.
    cin, cout = W.shape[0], W.shape[1]
    return jnp.transpose(jnp.flip(W, (2, 3)), (2, 3, 0, 1)).reshape(9, cin, cout)


# ------------------------------ REDNet forward ------------------------------ #

def rednet_forward(params, x_nchw):
    x_nhwc = jnp.transpose(x_nchw, (0, 2, 3, 1)).astype(jnp.float32)
    N, H, W, c = x_nhwc.shape

    # Single W pad at the network entrance; every layer afterwards produces an
    # already W-padded activation, so the per-layer pad round-trip is gone.
    padw = ((0, 0), (0, 0), (1, 1), (0, 0))
    x = jnp.pad(x_nhwc.astype(jnp.bfloat16), padw)
    inp_pad = jnp.pad(x_nhwc, padw)                    # f32 residual, last layer

    # input conv + ReLU
    # TODO(synk): pad Cin=c (=3) / final Cout=c to a lane-friendlier width,
    # and fuse 2+ consecutive layers per pallas_call for real image sizes.
    x = conv3x3_padded(x, params["w_in"], params["b_in"], "relu")

    # encoder convs (keep skips, stored W-padded in bf16)
    skips = []
    for wi, bi in zip(params["w_conv"], params["b_conv"]):
        x = conv3x3_padded(x, wi, bi, "relu")
        skips.append(x)

    # decoder deconvs; skip fusion (add + ReLU) every second layer
    l = len(params["w_conv"])
    for idx, (wi, bi) in enumerate(zip(params["w_deconv"], params["b_deconv"])):
        if idx % 2 == 1:
            x = conv3x3_padded(x, wi, bi, "relu_add_relu",
                               res_pad=skips[l - 1 - idx])
        else:
            x = conv3x3_padded(x, wi, bi, "relu")

    # output deconv + global residual (no ReLU), f32 result
    x = conv3x3_padded(x, params["w_out"], params["b_out"], "add",
                       res_pad=inp_pad, out_dtype=jnp.float32)

    y = x[:, :, 1:W + 1, :]                            # drop the W padding
    return jnp.transpose(y, (0, 3, 1, 2))              # NHWC -> NCHW


# -------------------------------- reference --------------------------------- #

def ref_forward(raw, x):
    def conv(x, W, b):
        y = lax.conv_general_dilated(
            x, W, (1, 1), ((1, 1), (1, 1)),
            dimension_numbers=("NCHW", "OIHW", "NCHW"))
        return y + b[None, :, None, None]

    def deconv(x, W, b):  # ConvTranspose2d, stride=1, padding=1
        Wc = jnp.transpose(jnp.flip(W, (2, 3)), (1, 0, 2, 3))
        return conv(x, Wc, b)

    relu = lambda v: jnp.maximum(v, 0.0)
    inp = x
    x = relu(conv(x, raw["w_in"], raw["b_in"]))
    skips = []
    for W, b in zip(raw["w_conv"], raw["b_conv"]):
        x = relu(conv(x, W, b))
        skips.append(x)
    l = len(raw["w_conv"])
    for i, (W, b) in enumerate(zip(raw["w_deconv"], raw["b_deconv"])):
        x = relu(deconv(x, W, b))
        if i % 2 == 1:
            x = relu(x + skips[l - 1 - i])
    return deconv(x, raw["w_out"], raw["b_out"]) + inp


# ---------------------------------- setup ----------------------------------- #

def init_raw_params(key, c, n, l, scale=0.1):
    ks = iter(jax.random.split(key, 4 * l + 4))
    nrm = lambda k, s: scale * jax.random.normal(k, s, jnp.float32)
    return {
        "w_in":     nrm(next(ks), (n, c, 3, 3)),
        "b_in":     nrm(next(ks), (n,)),
        "w_conv":   [nrm(next(ks), (n, n, 3, 3)) for _ in range(l)],
        "b_conv":   [nrm(next(ks), (n,)) for _ in range(l)],
        "w_deconv": [nrm(next(ks), (n, n, 3, 3)) for _ in range(l)],
        "b_deconv": [nrm(next(ks), (n,)) for _ in range(l)],
        "w_out":    nrm(next(ks), (n, c, 3, 3)),
        "b_out":    nrm(next(ks), (c,)),
    }


if __name__ == "__main__":
    # Small synthetic configuration (module defaults are c=3, f=3, n=64, l=15).
    c, n, l = 3, 8, 4
    N, H, W = 2, 16, 16

    key = jax.random.PRNGKey(0)
    k_x, k_p = jax.random.split(key)
    x = jax.random.normal(k_x, (N, c, H, W), jnp.float32)

    raw = init_raw_params(k_p, c, n, l)
    params = {
        "w_in":     conv_w_to_eff(raw["w_in"]),
        "b_in":     raw["b_in"],
        "w_conv":   [conv_w_to_eff(w) for w in raw["w_conv"]],
        "b_conv":   raw["b_conv"],
        "w_deconv": [deconv_w_to_eff(w) for w in raw["w_deconv"]],
        "b_deconv": raw["b_deconv"],
        "w_out":    deconv_w_to_eff(raw["w_out"]),
        "b_out":    raw["b_out"],
    }

    fwd = jax.jit(rednet_forward)
    out = jax.block_until_ready(fwd(params, x))
    ref = jax.block_until_ready(ref_forward(raw, x))

    np.testing.assert_allclose(np.asarray(out), np.asarray(ref),
                               rtol=5e-2, atol=5e-2)
    print("KERNEL_OK")
</pallas_src>

<mosaic_0001>
module attributes {stable_mosaic.version = 11 : i64} {
  func.func @kernel(%arg0: i32, %arg1: i32, %arg2: memref<1x8x18x3xbf16, #tpu.memory_space<vmem>>, %arg3: memref<1x1x18x3xbf16, #tpu.memory_space<vmem>>, %arg4: memref<1x1x18x3xbf16, #tpu.memory_space<vmem>>, %arg5: memref<9x3x8xbf16, #tpu.memory_space<vmem>>, %arg6: memref<1x8xf32, #tpu.memory_space<vmem>>, %arg7: memref<1x8x18x8xbf16, #tpu.memory_space<vmem>>) attributes {dimension_semantics = [#tpu.dimension_semantics<parallel>, #tpu.dimension_semantics<parallel>], iteration_bounds = array<i64: 2, 2>, scalar_prefetch = 0 : i64, scratch_operands = 0 : i64, tpu.core_type = #tpu.core_type<tc>, window_params = [{transform_indices = @transform_0, window_bounds = array<i64: 1, 8, 18, 3>}, {transform_indices = @transform_1, window_bounds = array<i64: 1, 1, 18, 3>}, {transform_indices = @transform_2, window_bounds = array<i64: 1, 1, 18, 3>}, {pipeline_mode = #tpu.pipeline_mode<synchronous>, transform_indices = @transform_3, window_bounds = array<i64: 9, 3, 8>}, {pipeline_mode = #tpu.pipeline_mode<synchronous>, transform_indices = @transform_4, window_bounds = array<i64: 1, 8>}, {transform_indices = @transform_5, window_bounds = array<i64: 1, 8, 18, 8>}]} {
    %c0 = arith.constant 0 : index
    %c0_0 = arith.constant 0 : index
    %c0_1 = arith.constant 0 : index
    %c0_2 = arith.constant 0 : index
    %0 = vector.load %arg2[%c0, %c0_0, %c0_1, %c0_2] : memref<1x8x18x3xbf16, #tpu.memory_space<vmem>>, vector<1x8x18x3xbf16>
    %1 = vector.shape_cast %0 : vector<1x8x18x3xbf16> to vector<8x18x3xbf16>
    %c0_i32 = arith.constant 0 : i32
    %2 = arith.cmpi sgt, %arg1, %c0_i32 : i32
    %3 = arith.extui %2 : i1 to i32
    %4 = arith.sitofp %3 : i32 to f32
    %c1_i32 = arith.constant 1 : i32
    %5 = arith.cmpi slt, %arg1, %c1_i32 : i32
    %6 = arith.extui %5 : i1 to i32
    %7 = arith.sitofp %6 : i32 to f32
    %c0_3 = arith.constant 0 : index
    %c0_4 = arith.constant 0 : index
    %c0_5 = arith.constant 0 : index
    %c0_6 = arith.constant 0 : index
    %8 = vector.load %arg3[%c0_3, %c0_4, %c0_5, %c0_6] : memref<1x1x18x3xbf16, #tpu.memory_space<vmem>>, vector<1x1x18x3xbf16>
    %9 = vector.shape_cast %8 : vector<1x1x18x3xbf16> to vector<1x18x3xbf16>
    %10 = arith.extf %9 : vector<1x18x3xbf16> to vector<1x18x3xf32>
    %11 = vector.broadcast %4 : f32 to vector<1x18x3xf32>
    %12 = arith.mulf %10, %11 : vector<1x18x3xf32>
    %13 = arith.truncf %12 : vector<1x18x3xf32> to vector<1x18x3xbf16>
    %c0_7 = arith.constant 0 : index
    %c0_8 = arith.constant 0 : index
    %c0_9 = arith.constant 0 : index
    %c0_10 = arith.constant 0 : index
    %14 = vector.load %arg4[%c0_7, %c0_8, %c0_9, %c0_10] : memref<1x1x18x3xbf16, #tpu.memory_space<vmem>>, vector<1x1x18x3xbf16>
    %15 = vector.shape_cast %14 : vector<1x1x18x3xbf16> to vector<1x18x3xbf16>
    %16 = arith.extf %15 : vector<1x18x3xbf16> to vector<1x18x3xf32>
    %17 = vector.broadcast %7 : f32 to vector<1x18x3xf32>
    %18 = arith.mulf %16, %17 : vector<1x18x3xf32>
    %19 = arith.truncf %18 : vector<1x18x3xf32> to vector<1x18x3xbf16>
    %20 = tpu.concatenate %13, %1, %19 in 0 : vector<1x18x3xbf16>, vector<8x18x3xbf16>, vector<1x18x3xbf16> -> vector<10x18x3xbf16>
    %cst = arith.constant 0.000000e+00 : f32
    %21 = vector.broadcast %cst : f32 to vector<128x8xf32>
    %22 = vector.extract_strided_slice %20 {offsets = [0, 0, 0], sizes = [10, 16, 3], strides = [1, 1, 1]} : vector<10x18x3xbf16> to vector<10x16x3xbf16>
    %23 = vector.extract_strided_slice %22 {offsets = [0, 0, 0], sizes = [8, 16, 3], strides = [1, 1, 1]} : vector<10x16x3xbf16> to vector<8x16x3xbf16>
    %24 = vector.shape_cast %23 : vector<8x16x3xbf16> to vector<128x3xbf16>
    %c0_11 = arith.constant 0 : index
    %c0_12 = arith.constant 0 : index
    %c0_13 = arith.constant 0 : index
    %25 = vector.load %arg5[%c0_11, %c0_12, %c0_13] : memref<9x3x8xbf16, #tpu.memory_space<vmem>>, vector<1x3x8xbf16>
    %26 = vector.shape_cast %25 : vector<1x3x8xbf16> to vector<3x8xbf16>
    %cst_14 = arith.constant dense<0.000000e+00> : vector<128x8xf32>
    %27 = tpu.matmul %24, %26, %cst_14 {dimension_numbers = #tpu.dot_dimension_numbers<[1], [0], [0], [1], [0, 0, 1, 1], [], []>} : vector<128x3xbf16>, vector<3x8xbf16>, vector<128x8xf32> -> vector<128x8xf32>
    %28 = arith.addf %21, %27 : vector<128x8xf32>
    %29 = vector.extract_strided_slice %22 {offsets = [1, 0, 0], sizes = [8, 16, 3], strides = [1, 1, 1]} : vector<10x16x3xbf16> to vector<8x16x3xbf16>
    %30 = vector.shape_cast %29 : vector<8x16x3xbf16> to vector<128x3xbf16>
    %c3 = arith.constant 3 : index
    %c0_15 = arith.constant 0 : index
    %c0_16 = arith.constant 0 : index
    %31 = vector.load %arg5[%c3, %c0_15, %c0_16] : memref<9x3x8xbf16, #tpu.memory_space<vmem>>, vector<1x3x8xbf16>
    %32 = vector.shape_cast %31 : vector<1x3x8xbf16> to vector<3x8xbf16>
    %cst_17 = arith.constant dense<0.000000e+00> : vector<128x8xf32>
    %33 = tpu.matmul %30, %32, %cst_17 {dimension_numbers = #tpu.dot_dimension_numbers<[1], [0], [0], [1], [0, 0, 1, 1], [], []>} : vector<128x3xbf16>, vector<3x8xbf16>, vector<128x8xf32> -> vector<128x8xf32>
    %34 = arith.addf %28, %33 : vector<128x8xf32>
    %35 = vector.extract_strided_slice %22 {offsets = [2, 0, 0], sizes = [8, 16, 3], strides = [1, 1, 1]} : vector<10x16x3xbf16> to vector<8x16x3xbf16>
    %36 = vector.shape_cast %35 : vector<8x16x3xbf16> to vector<128x3xbf16>
    %c6 = arith.constant 6 : index
    %c0_18 = arith.constant 0 : index
    %c0_19 = arith.constant 0 : index
    %37 = vector.load %arg5[%c6, %c0_18, %c0_19] : memref<9x3x8xbf16, #tpu.memory_space<vmem>>, vector<1x3x8xbf16>
    %38 = vector.shape_cast %37 : vector<1x3x8xbf16> to vector<3x8xbf16>
    %cst_20 = arith.constant dense<0.000000e+00> : vector<128x8xf32>
    %39 = tpu.matmul %36, %38, %cst_20 {dimension_numbers = #tpu.dot_dimension_numbers<[1], [0], [0], [1], [0, 0, 1, 1], [], []>} : vector<128x3xbf16>, vector<3x8xbf16>, vector<128x8xf32> -> vector<128x8xf32>
    %40 = arith.addf %34, %39 : vector<128x8xf32>
    %41 = vector.extract_strided_slice %20 {offsets = [0, 1, 0], sizes = [10, 16, 3], strides = [1, 1, 1]} : vector<10x18x3xbf16> to vector<10x16x3xbf16>
    %42 = vector.extract_strided_slice %41 {offsets = [0, 0, 0], sizes = [8, 16, 3], strides = [1, 1, 1]} : vector<10x16x3xbf16> to vector<8x16x3xbf16>
    %43 = vector.shape_cast %42 : vector<8x16x3xbf16> to vector<128x3xbf16>
    %c1 = arith.constant 1 : index
    %c0_21 = arith.constant 0 : index
    %c0_22 = arith.constant 0 : index
    %44 = vector.load %arg5[%c1, %c0_21, %c0_22] : memref<9x3x8xbf16, #tpu.memory_space<vmem>>, vector<1x3x8xbf16>
    %45 = vector.shape_cast %44 : vector<1x3x8xbf16> to vector<3x8xbf16>
    %cst_23 = arith.constant dense<0.000000e+00> : vector<128x8xf32>
    %46 = tpu.matmul %43, %45, %cst_23 {dimension_numbers = #tpu.dot_dimension_numbers<[1], [0], [0], [1], [0, 0, 1, 1], [], []>} : vector<128x3xbf16>, vector<3x8xbf16>, vector<128x8xf32> -> vector<128x8xf32>
    %47 = arith.addf %40, %46 : vector<128x8xf32>
    %48 = vector.extract_strided_slice %41 {offsets = [1, 0, 0], sizes = [8, 16, 3], strides = [1, 1, 1]} : vector<10x16x3xbf16> to vector<8x16x3xbf16>
    %49 = vector.shape_cast %48 : vector<8x16x3xbf16> to vector<128x3xbf16>
    %c4 = arith.constant 4 : index
    %c0_24 = arith.constant 0 : index
    %c0_25 = arith.constant 0 : index
    %50 = vector.load %arg5[%c4, %c0_24, %c0_25] : memref<9x3x8xbf16, #tpu.memory_space<vmem>>, vector<1x3x8xbf16>
    %51 = vector.shape_cast %50 : vector<1x3x8xbf16> to vector<3x8xbf16>
    %cst_26 = arith.constant dense<0.000000e+00> : vector<128x8xf32>
    %52 = tpu.matmul %49, %51, %cst_26 {dimension_numbers = #tpu.dot_dimension_numbers<[1], [0], [0], [1], [0, 0, 1, 1], [], []>} : vector<128x3xbf16>, vector<3x8xbf16>, vector<128x8xf32> -> vector<128x8xf32>
    %53 = arith.addf %47, %52 : vector<128x8xf32>
    %54 = vector.extract_strided_slice %41 {offsets = [2, 0, 0], sizes = [8, 16, 3], strides = [1, 1, 1]} : vector<10x16x3xbf16> to vector<8x16x3xbf16>
    %55 = vector.shape_cast %54 : vector<8x16x3xbf16> to vector<128x3xbf16>
    %c7 = arith.constant 7 : index
    %c0_27 = arith.constant 0 : index
    %c0_28 = arith.constant 0 : index
    %56 = vector.load %arg5[%c7, %c0_27, %c0_28] : memref<9x3x8xbf16, #tpu.memory_space<vmem>>, vector<1x3x8xbf16>
    %57 = vector.shape_cast %56 : vector<1x3x8xbf16> to vector<3x8xbf16>
    %cst_29 = arith.constant dense<0.000000e+00> : vector<128x8xf32>
    %58 = tpu.matmul %55, %57, %cst_29 {dimension_numbers = #tpu.dot_dimension_numbers<[1], [0], [0], [1], [0, 0, 1, 1], [], []>} : vector<128x3xbf16>, vector<3x8xbf16>, vector<128x8xf32> -> vector<128x8xf32>
    %59 = arith.addf %53, %58 : vector<128x8xf32>
    %60 = vector.extract_strided_slice %20 {offsets = [0, 2, 0], sizes = [10, 16, 3], strides = [1, 1, 1]} : vector<10x18x3xbf16> to vector<10x16x3xbf16>
    %61 = vector.extract_strided_slice %60 {offsets = [0, 0, 0], sizes = [8, 16, 3], strides = [1, 1, 1]} : vector<10x16x3xbf16> to vector<8x16x3xbf16>
    %62 = vector.shape_cast %61 : vector<8x16x3xbf16> to vector<128x3xbf16>
    %c2 = arith.constant 2 : index
    %c0_30 = arith.constant 0 : index
    %c0_31 = arith.constant 0 : index
    %63 = vector.load %arg5[%c2, %c0_30, %c0_31] : memref<9x3x8xbf16, #tpu.memory_space<vmem>>, vector<1x3x8xbf16>
    %64 = vector.shape_cast %63 : vector<1x3x8xbf16> to vector<3x8xbf16>
    %cst_32 = arith.constant dense<0.000000e+00> : vector<128x8xf32>
    %65 = tpu.matmul %62, %64, %cst_32 {dimension_numbers = #tpu.dot_dimension_numbers<[1], [0], [0], [1], [0, 0, 1, 1], [], []>} : vector<128x3xbf16>, vector<3x8xbf16>, vector<128x8xf32> -> vector<128x8xf32>
    %66 = arith.addf %59, %65 : vector<128x8xf32>
    %67 = vector.extract_strided_slice %60 {offsets = [1, 0, 0], sizes = [8, 16, 3], strides = [1, 1, 1]} : vector<10x16x3xbf16> to vector<8x16x3xbf16>
    %68 = vector.shape_cast %67 : vector<8x16x3xbf16> to vector<128x3xbf16>
    %c5 = arith.constant 5 : index
    %c0_33 = arith.constant 0 : index
    %c0_34 = arith.constant 0 : index
    %69 = vector.load %arg5[%c5, %c0_33, %c0_34] : memref<9x3x8xbf16, #tpu.memory_space<vmem>>, vector<1x3x8xbf16>
    %70 = vector.shape_cast %69 : vector<1x3x8xbf16> to vector<3x8xbf16>
    %cst_35 = arith.constant dense<0.000000e+00> : vector<128x8xf32>
    %71 = tpu.matmul %68, %70, %cst_35 {dimension_numbers = #tpu.dot_dimension_numbers<[1], [0], [0], [1], [0, 0, 1, 1], [], []>} : vector<128x3xbf16>, vector<3x8xbf16>, vector<128x8xf32> -> vector<128x8xf32>
    %72 = arith.addf %66, %71 : vector<128x8xf32>
    %73 = vector.extract_strided_slice %60 {offsets = [2, 0, 0], sizes = [8, 16, 3], strides = [1, 1, 1]} : vector<10x16x3xbf16> to vector<8x16x3xbf16>
    %74 = vector.shape_cast %73 : vector<8x16x3xbf16> to vector<128x3xbf16>
    %c8 = arith.constant 8 : index
    %c0_36 = arith.constant 0 : index
    %c0_37 = arith.constant 0 : index
    %75 = vector.load %arg5[%c8, %c0_36, %c0_37] : memref<9x3x8xbf16, #tpu.memory_space<vmem>>, vector<1x3x8xbf16>
    %76 = vector.shape_cast %75 : vector<1x3x8xbf16> to vector<3x8xbf16>
    %cst_38 = arith.constant dense<0.000000e+00> : vector<128x8xf32>
    %77 = tpu.matmul %74, %76, %cst_38 {dimension_numbers = #tpu.dot_dimension_numbers<[1], [0], [0], [1], [0, 0, 1, 1], [], []>} : vector<128x3xbf16>, vector<3x8xbf16>, vector<128x8xf32> -> vector<128x8xf32>
    %78 = arith.addf %72, %77 : vector<128x8xf32>
    %c0_39 = arith.constant 0 : index
    %c0_40 = arith.constant 0 : index
    %79 = vector.load %arg6[%c0_39, %c0_40] : memref<1x8xf32, #tpu.memory_space<vmem>>, vector<1x8xf32>
    %80 = vector.broadcast %79 : vector<1x8xf32> to vector<128x8xf32>
    %81 = arith.addf %78, %80 : vector<128x8xf32>
    %cst_41 = arith.constant 0.000000e+00 : f32
    %82 = vector.broadcast %cst_41 : f32 to vector<128x8xf32>
    %83 = arith.maximumf %81, %82 : vector<128x8xf32>
    %84 = vector.shape_cast %83 : vector<128x8xf32> to vector<8x16x8xf32>
    %cst_42 = arith.constant 0.000000e+00 : f32
    %85 = vector.broadcast %cst_42 : f32 to vector<8x1x8xf32>
    %cst_43 = arith.constant 0.000000e+00 : f32
    %86 = vector.broadcast %cst_43 : f32 to vector<8x1x8xf32>
    %87 = tpu.concatenate %85, %84, %86 in 1 : vector<8x1x8xf32>, vector<8x16x8xf32>, vector<8x1x8xf32> -> vector<8x18x8xf32>
    %88 = vector.shape_cast %87 : vector<8x18x8xf32> to vector<1x8x18x8xf32>
    %89 = arith.truncf %88 : vector<1x8x18x8xf32> to vector<1x8x18x8xbf16>
    %c0_44 = arith.constant 0 : index
    %c0_45 = arith.constant 0 : index
    %c0_46 = arith.constant 0 : index
    %c0_47 = arith.constant 0 : index
    %90 = vector.load %arg7[%c0_44, %c0_45, %c0_46, %c0_47] : memref<1x8x18x8xbf16, #tpu.memory_space<vmem>>, vector<1x8x18x8xbf16>
    tpu.vector_store %arg7[%c0_44, %c0_45, %c0_46, %c0_47], %89 {strides = array<i32>} : memref<1x8x18x8xbf16, #tpu.memory_space<vmem>>, vector<1x8x18x8xbf16>,
    return
  }
  func.func @transform_0(%arg0: i32, %arg1: i32) -> (i32, i32, i32, i32) {
    %c0_i32 = arith.constant 0 : i32
    %c0_i32_0 = arith.constant 0 : i32
    %c0_i32_1 = arith.constant 0 : i32
    return %arg0, %arg1, %c0_i32, %c0_i32_0 : i32, i32, i32, i32
  }
  func.func @transform_1(%arg0: i32, %arg1: i32) -> (i32, i32, i32, i32) {
    %c8_i32 = arith.constant 8 : i32
    %0 = arith.muli %arg1, %c8_i32 : i32
    %c1_i32 = arith.constant 1 : i32
    %1 = arith.subi %0, %c1_i32 : i32
    %c0_i32 = arith.constant 0 : i32
    %2 = arith.maxsi %1, %c0_i32 : i32
    %c0_i32_0 = arith.constant 0 : i32
    %c0_i32_1 = arith.constant 0 : i32
    %c0_i32_2 = arith.constant 0 : i32
    return %arg0, %2, %c0_i32_0, %c0_i32_1 : i32, i32, i32, i32
  }
  func.func @transform_2(%arg0: i32, %arg1: i32) -> (i32, i32, i32, i32) {
    %c1_i32 = arith.constant 1 : i32
    %0 = arith.addi %arg1, %c1_i32 : i32
    %c8_i32 = arith.constant 8 : i32
    %1 = arith.muli %0, %c8_i32 : i32
    %c15_i32 = arith.constant 15 : i32
    %2 = arith.minsi %1, %c15_i32 : i32
    %c0_i32 = arith.constant 0 : i32
    %c0_i32_0 = arith.constant 0 : i32
    %c0_i32_1 = arith.constant 0 : i32
    return %arg0, %2, %c0_i32, %c0_i32_0 : i32, i32, i32, i32
  }
  func.func @transform_3(%arg0: i32, %arg1: i32) -> (i32, i32, i32) {
    %c0_i32 = arith.constant 0 : i32
    %c0_i32_0 = arith.constant 0 : i32
    %c0_i32_1 = arith.constant 0 : i32
    %c0_i32_2 = arith.constant 0 : i32
    return %c0_i32, %c0_i32_0, %c0_i32_1 : i32, i32, i32
  }
  func.func @transform_4(%arg0: i32, %arg1: i32) -> (i32, i32) {
    %c0_i32 = arith.constant 0 : i32
    %c0_i32_0 = arith.constant 0 : i32
    %c0_i32_1 = arith.constant 0 : i32
    return %c0_i32, %c0_i32_0 : i32, i32
  }
  func.func @transform_5(%arg0: i32, %arg1: i32) -> (i32, i32, i32, i32) {
    %c0_i32 = arith.constant 0 : i32
    %c0_i32_0 = arith.constant 0 : i32
    %c0_i32_1 = arith.constant 0 : i32
    return %arg0, %arg1, %c0_i32, %c0_i32_0 : i32, i32, i32, i32
  }
}

module attributes {stable_mosaic.version = 11 : i64} {
  func.func @kernel(%arg0: i32, %arg1: i32, %arg2: memref<1x8x18x8xbf16, #tpu.memory_space<vmem>>, %arg3: memref<1x1x18x8xbf16, #tpu.memory_space<vmem>>, %arg4: memref<1x1x18x8xbf16, #tpu.memory_space<vmem>>, %arg5: memref<9x8x8xbf16, #tpu.memory_space<vmem>>, %arg6: memref<1x8xf32, #tpu.memory_space<vmem>>, %arg7: memref<1x8x18x8xbf16, #tpu.memory_space<vmem>>) attributes {dimension_semantics = [#tpu.dimension_semantics<parallel>, #tpu.dimension_semantics<parallel>], iteration_bounds = array<i64: 2, 2>, scalar_prefetch = 0 : i64, scratch_operands = 0 : i64, tpu.core_type = #tpu.core_type<tc>, window_params = [{transform_indices = @transform_0, window_bounds = array<i64: 1, 8, 18, 8>}, {transform_indices = @transform_1, window_bounds = array<i64: 1, 1, 18, 8>}, {transform_indices = @transform_2, window_bounds = array<i64: 1, 1, 18, 8>}, {pipeline_mode = #tpu.pipeline_mode<synchronous>, transform_indices = @transform_3, window_bounds = array<i64: 9, 8, 8>}, {pipeline_mode = #tpu.pipeline_mode<synchronous>, transform_indices = @transform_4, window_bounds = array<i64: 1, 8>}, {transform_indices = @transform_5, window_bounds = array<i64: 1, 8, 18, 8>}]} {
    %c0 = arith.constant 0 : index
    %c0_0 = arith.constant 0 : index
    %c0_1 = arith.constant 0 : index
    %c0_2 = arith.constant 0 : index
    %0 = vector.load %arg2[%c0, %c0_0, %c0_1, %c0_2] : memref<1x8x18x8xbf16, #tpu.memory_space<vmem>>, vector<1x8x18x8xbf16>
    %1 = vector.shape_cast %0 : vector<1x8x18x8xbf16> to vector<8x18x8xbf16>
    %c0_i32 = arith.constant 0 : i32
    %2 = arith.cmpi sgt, %arg1, %c0_i32 : i32
    %3 = arith.extui %2 : i1 to i32
    %4 = arith.sitofp %3 : i32 to f32
    %c1_i32 = arith.constant 1 : i32
    %5 = arith.cmpi slt, %arg1, %c1_i32 : i32
    %6 = arith.extui %5 : i1 to i32
    %7 = arith.sitofp %6 : i32 to f32
    %c0_3 = arith.constant 0 : index
    %c0_4 = arith.constant 0 : index
    %c0_5 = arith.constant 0 : index
    %c0_6 = arith.constant 0 : index
    %8 = vector.load %arg3[%c0_3, %c0_4, %c0_5, %c0_6] : memref<1x1x18x8xbf16, #tpu.memory_space<vmem>>, vector<1x1x18x8xbf16>
    %9 = vector.shape_cast %8 : vector<1x1x18x8xbf16> to vector<1x18x8xbf16>
    %10 = arith.extf %9 : vector<1x18x8xbf16> to vector<1x18x8xf32>
    %11 = vector.broadcast %4 : f32 to vector<1x18x8xf32>
    %12 = arith.mulf %10, %11 : vector<1x18x8xf32>
    %13 = arith.truncf %12 : vector<1x18x8xf32> to vector<1x18x8xbf16>
    %c0_7 = arith.constant 0 : index
    %c0_8 = arith.constant 0 : index
    %c0_9 = arith.constant 0 : index
    %c0_10 = arith.constant 0 : index
    %14 = vector.load %arg4[%c0_7, %c0_8, %c0_9, %c0_10] : memref<1x1x18x8xbf16, #tpu.memory_space<vmem>>, vector<1x1x18x8xbf16>
    %15 = vector.shape_cast %14 : vector<1x1x18x8xbf16> to vector<1x18x8xbf16>
    %16 = arith.extf %15 : vector<1x18x8xbf16> to vector<1x18x8xf32>
    %17 = vector.broadcast %7 : f32 to vector<1x18x8xf32>
    %18 = arith.mulf %16, %17 : vector<1x18x8xf32>
    %19 = arith.truncf %18 : vector<1x18x8xf32> to vector<1x18x8xbf16>
    %20 = tpu.concatenate %13, %1, %19 in 0 : vector<1x18x8xbf16>, vector<8x18x8xbf16>, vector<1x18x8xbf16> -> vector<10x18x8xbf16>
    %cst = arith.constant 0.000000e+00 : f32
    %21 = vector.broadcast %cst : f32 to vector<128x8xf32>
    %22 = vector.extract_strided_slice %20 {offsets = [0, 0, 0], sizes = [10, 16, 8], strides = [1, 1, 1]} : vector<10x18x8xbf16> to vector<10x16x8xbf16>
    %23 = vector.extract_strided_slice %22 {offsets = [0, 0, 0], sizes = [8, 16, 8], strides = [1, 1, 1]} : vector<10x16x8xbf16> to vector<8x16x8xbf16>
    %24 = vector.shape_cast %23 : vector<8x16x8xbf16> to vector<128x8xbf16>
    %c0_11 = arith.constant 0 : index
    %c0_12 = arith.constant 0 : index
    %c0_13 = arith.constant 0 : index
    %25 = vector.load %arg5[%c0_11, %c0_12, %c0_13] : memref<9x8x8xbf16, #tpu.memory_space<vmem>>, vector<1x8x8xbf16>
    %26 = vector.shape_cast %25 : vector<1x8x8xbf16> to vector<8x8xbf16>
    %cst_14 = arith.constant dense<0.000000e+00> : vector<128x8xf32>
    %27 = tpu.matmul %24, %26, %cst_14 {dimension_numbers = #tpu.dot_dimension_numbers<[1], [0], [0], [1], [0, 0, 1, 1], [], []>} : vector<128x8xbf16>, vector<8x8xbf16>, vector<128x8xf32> -> vector<128x8xf32>
    %28 = arith.addf %21, %27 : vector<128x8xf32>
    %29 = vector.extract_strided_slice %22 {offsets = [1, 0, 0], sizes = [8, 16, 8], strides = [1, 1, 1]} : vector<10x16x8xbf16> to vector<8x16x8xbf16>
    %30 = vector.shape_cast %29 : vector<8x16x8xbf16> to vector<128x8xbf16>
    %c3 = arith.constant 3 : index
    %c0_15 = arith.constant 0 : index
    %c0_16 = arith.constant 0 : index
    %31 = vector.load %arg5[%c3, %c0_15, %c0_16] : memref<9x8x8xbf16, #tpu.memory_space<vmem>>, vector<1x8x8xbf16>
    %32 = vector.shape_cast %31 : vector<1x8x8xbf16> to vector<8x8xbf16>
    %cst_17 = arith.constant dense<0.000000e+00> : vector<128x8xf32>
    %33 = tpu.matmul %30, %32, %cst_17 {dimension_numbers = #tpu.dot_dimension_numbers<[1], [0], [0], [1], [0, 0, 1, 1], [], []>} : vector<128x8xbf16>, vector<8x8xbf16>, vector<128x8xf32> -> vector<128x8xf32>
    %34 = arith.addf %28, %33 : vector<128x8xf32>
    %35 = vector.extract_strided_slice %22 {offsets = [2, 0, 0], sizes = [8, 16, 8], strides = [1, 1, 1]} : vector<10x16x8xbf16> to vector<8x16x8xbf16>
    %36 = vector.shape_cast %35 : vector<8x16x8xbf16> to vector<128x8xbf16>
    %c6 = arith.constant 6 : index
    %c0_18 = arith.constant 0 : index
    %c0_19 = arith.constant 0 : index
    %37 = vector.load %arg5[%c6, %c0_18, %c0_19] : memref<9x8x8xbf16, #tpu.memory_space<vmem>>, vector<1x8x8xbf16>
    %38 = vector.shape_cast %37 : vector<1x8x8xbf16> to vector<8x8xbf16>
    %cst_20 = arith.constant dense<0.000000e+00> : vector<128x8xf32>
    %39 = tpu.matmul %36, %38, %cst_20 {dimension_numbers = #tpu.dot_dimension_numbers<[1], [0], [0], [1], [0, 0, 1, 1], [], []>} : vector<128x8xbf16>, vector<8x8xbf16>, vector<128x8xf32> -> vector<128x8xf32>
    %40 = arith.addf %34, %39 : vector<128x8xf32>
    %41 = vector.extract_strided_slice %20 {offsets = [0, 1, 0], sizes = [10, 16, 8], strides = [1, 1, 1]} : vector<10x18x8xbf16> to vector<10x16x8xbf16>
    %42 = vector.extract_strided_slice %41 {offsets = [0, 0, 0], sizes = [8, 16, 8], strides = [1, 1, 1]} : vector<10x16x8xbf16> to vector<8x16x8xbf16>
    %43 = vector.shape_cast %42 : vector<8x16x8xbf16> to vector<128x8xbf16>
    %c1 = arith.constant 1 : index
    %c0_21 = arith.constant 0 : index
    %c0_22 = arith.constant 0 : index
    %44 = vector.load %arg5[%c1, %c0_21, %c0_22] : memref<9x8x8xbf16, #tpu.memory_space<vmem>>, vector<1x8x8xbf16>
    %45 = vector.shape_cast %44 : vector<1x8x8xbf16> to vector<8x8xbf16>
    %cst_23 = arith.constant dense<0.000000e+00> : vector<128x8xf32>
    %46 = tpu.matmul %43, %45, %cst_23 {dimension_numbers = #tpu.dot_dimension_numbers<[1], [0], [0], [1], [0, 0, 1, 1], [], []>} : vector<128x8xbf16>, vector<8x8xbf16>, vector<128x8xf32> -> vector<128x8xf32>
    %47 = arith.addf %40, %46 : vector<128x8xf32>
    %48 = vector.extract_strided_slice %41 {offsets = [1, 0, 0], sizes = [8, 16, 8], strides = [1, 1, 1]} : vector<10x16x8xbf16> to vector<8x16x8xbf16>
    %49 = vector.shape_cast %48 : vector<8x16x8xbf16> to vector<128x8xbf16>
    %c4 = arith.constant 4 : index
    %c0_24 = arith.constant 0 : index
    %c0_25 = arith.constant 0 : index
    %50 = vector.load %arg5[%c4, %c0_24, %c0_25] : memref<9x8x8xbf16, #tpu.memory_space<vmem>>, vector<1x8x8xbf16>
    %51 = vector.shape_cast %50 : vector<1x8x8xbf16> to vector<8x8xbf16>
    %cst_26 = arith.constant dense<0.000000e+00> : vector<128x8xf32>
    %52 = tpu.matmul %49, %51, %cst_26 {dimension_numbers = #tpu.dot_dimension_numbers<[1], [0], [0], [1], [0, 0, 1, 1], [], []>} : vector<128x8xbf16>, vector<8x8xbf16>, vector<128x8xf32> -> vector<128x8xf32>
    %53 = arith.addf %47, %52 : vector<128x8xf32>
    %54 = vector.extract_strided_slice %41 {offsets = [2, 0, 0], sizes = [8, 16, 8], strides = [1, 1, 1]} : vector<10x16x8xbf16> to vector<8x16x8xbf16>
    %55 = vector.shape_cast %54 : vector<8x16x8xbf16> to vector<128x8xbf16>
    %c7 = arith.constant 7 : index
    %c0_27 = arith.constant 0 : index
    %c0_28 = arith.constant 0 : index
    %56 = vector.load %arg5[%c7, %c0_27, %c0_28] : memref<9x8x8xbf16, #tpu.memory_space<vmem>>, vector<1x8x8xbf16>
    %57 = vector.shape_cast %56 : vector<1x8x8xbf16> to vector<8x8xbf16>
    %cst_29 = arith.constant dense<0.000000e+00> : vector<128x8xf32>
    %58 = tpu.matmul %55, %57, %cst_29 {dimension_numbers = #tpu.dot_dimension_numbers<[1], [0], [0], [1], [0, 0, 1, 1], [], []>} : vector<128x8xbf16>, vector<8x8xbf16>, vector<128x8xf32> -> vector<128x8xf32>
    %59 = arith.addf %53, %58 : vector<128x8xf32>
    %60 = vector.extract_strided_slice %20 {offsets = [0, 2, 0], sizes = [10, 16, 8], strides = [1, 1, 1]} : vector<10x18x8xbf16> to vector<10x16x8xbf16>
    %61 = vector.extract_strided_slice %60 {offsets = [0, 0, 0], sizes = [8, 16, 8], strides = [1, 1, 1]} : vector<10x16x8xbf16> to vector<8x16x8xbf16>
    %62 = vector.shape_cast %61 : vector<8x16x8xbf16> to vector<128x8xbf16>
    %c2 = arith.constant 2 : index
    %c0_30 = arith.constant 0 : index
    %c0_31 = arith.constant 0 : index
    %63 = vector.load %arg5[%c2, %c0_30, %c0_31] : memref<9x8x8xbf16, #tpu.memory_space<vmem>>, vector<1x8x8xbf16>
    %64 = vector.shape_cast %63 : vector<1x8x8xbf16> to vector<8x8xbf16>
    %cst_32 = arith.constant dense<0.000000e+00> : vector<128x8xf32>
    %65 = tpu.matmul %62, %64, %cst_32 {dimension_numbers = #tpu.dot_dimension_numbers<[1], [0], [0], [1], [0, 0, 1, 1], [], []>} : vector<128x8xbf16>, vector<8x8xbf16>, vector<128x8xf32> -> vector<128x8xf32>
    %66 = arith.addf %59, %65 : vector<128x8xf32>
    %67 = vector.extract_strided_slice %60 {offsets = [1, 0, 0], sizes = [8, 16, 8], strides = [1, 1, 1]} : vector<10x16x8xbf16> to vector<8x16x8xbf16>
    %68 = vector.shape_cast %67 : vector<8x16x8xbf16> to vector<128x8xbf16>
    %c5 = arith.constant 5 : index
    %c0_33 = arith.constant 0 : index
    %c0_34 = arith.constant 0 : index
    %69 = vector.load %arg5[%c5, %c0_33, %c0_34] : memref<9x8x8xbf16, #tpu.memory_space<vmem>>, vector<1x8x8xbf16>
    %70 = vector.shape_cast %69 : vector<1x8x8xbf16> to vector<8x8xbf16>
    %cst_35 = arith.constant dense<0.000000e+00> : vector<128x8xf32>
    %71 = tpu.matmul %68, %70, %cst_35 {dimension_numbers = #tpu.dot_dimension_numbers<[1], [0], [0], [1], [0, 0, 1, 1], [], []>} : vector<128x8xbf16>, vector<8x8xbf16>, vector<128x8xf32> -> vector<128x8xf32>
    %72 = arith.addf %66, %71 : vector<128x8xf32>
    %73 = vector.extract_strided_slice %60 {offsets = [2, 0, 0], sizes = [8, 16, 8], strides = [1, 1, 1]} : vector<10x16x8xbf16> to vector<8x16x8xbf16>
    %74 = vector.shape_cast %73 : vector<8x16x8xbf16> to vector<128x8xbf16>
    %c8 = arith.constant 8 : index
    %c0_36 = arith.constant 0 : index
    %c0_37 = arith.constant 0 : index
    %75 = vector.load %arg5[%c8, %c0_36, %c0_37] : memref<9x8x8xbf16, #tpu.memory_space<vmem>>, vector<1x8x8xbf16>
    %76 = vector.shape_cast %75 : vector<1x8x8xbf16> to vector<8x8xbf16>
    %cst_38 = arith.constant dense<0.000000e+00> : vector<128x8xf32>
    %77 = tpu.matmul %74, %76, %cst_38 {dimension_numbers = #tpu.dot_dimension_numbers<[1], [0], [0], [1], [0, 0, 1, 1], [], []>} : vector<128x8xbf16>, vector<8x8xbf16>, vector<128x8xf32> -> vector<128x8xf32>
    %78 = arith.addf %72, %77 : vector<128x8xf32>
    %c0_39 = arith.constant 0 : index
    %c0_40 = arith.constant 0 : index
    %79 = vector.load %arg6[%c0_39, %c0_40] : memref<1x8xf32, #tpu.memory_space<vmem>>, vector<1x8xf32>
    %80 = vector.broadcast %79 : vector<1x8xf32> to vector<128x8xf32>
    %81 = arith.addf %78, %80 : vector<128x8xf32>
    %cst_41 = arith.constant 0.000000e+00 : f32
    %82 = vector.broadcast %cst_41 : f32 to vector<128x8xf32>
    %83 = arith.maximumf %81, %82 : vector<128x8xf32>
    %84 = vector.shape_cast %83 : vector<128x8xf32> to vector<8x16x8xf32>
    %cst_42 = arith.constant 0.000000e+00 : f32
    %85 = vector.broadcast %cst_42 : f32 to vector<8x1x8xf32>
    %cst_43 = arith.constant 0.000000e+00 : f32
    %86 = vector.broadcast %cst_43 : f32 to vector<8x1x8xf32>
    %87 = tpu.concatenate %85, %84, %86 in 1 : vector<8x1x8xf32>, vector<8x16x8xf32>, vector<8x1x8xf32> -> vector<8x18x8xf32>
    %88 = vector.shape_cast %87 : vector<8x18x8xf32> to vector<1x8x18x8xf32>
    %89 = arith.truncf %88 : vector<1x8x18x8xf32> to vector<1x8x18x8xbf16>
    %c0_44 = arith.constant 0 : index
    %c0_45 = arith.constant 0 : index
    %c0_46 = arith.constant 0 : index
    %c0_47 = arith.constant 0 : index
    %90 = vector.load %arg7[%c0_44, %c0_45, %c0_46, %c0_47] : memref<1x8x18x8xbf16, #tpu.memory_space<vmem>>, vector<1x8x18x8xbf16>
    tpu.vector_store %arg7[%c0_44, %c0_45, %c0_46, %c0_47], %89 {strides = array<i32>} : memref<1x8x18x8xbf16, #tpu.memory_space<vmem>>, vector<1x8x18x8xbf16>,
    return
  }
  func.func @transform_0(%arg0: i32, %arg1: i32) -> (i32, i32, i32, i32) {
    %c0_i32 = arith.constant 0 : i32
    %c0_i32_0 = arith.constant 0 : i32
    %c0_i32_1 = arith.constant 0 : i32
    return %arg0, %arg1, %c0_i32, %c0_i32_0 : i32, i32, i32, i32
  }
  func.func @transform_1(%arg0: i32, %arg1: i32) -> (i32, i32, i32, i32) {
    %c8_i32 = arith.constant 8 : i32
    %0 = arith.muli %arg1, %c8_i32 : i32
    %c1_i32 = arith.constant 1 : i32
    %1 = arith.subi %0, %c1_i32 : i32
    %c0_i32 = arith.constant 0 : i32
    %2 = arith.maxsi %1, %c0_i32 : i32
    %c0_i32_0 = arith.constant 0 : i32
    %c0_i32_1 = arith.constant 0 : i32
    %c0_i32_2 = arith.constant 0 : i32
    return %arg0, %2, %c0_i32_0, %c0_i32_1 : i32, i32, i32, i32
  }
  func.func @transform_2(%arg0: i32, %arg1: i32) -> (i32, i32, i32, i32) {
    %c1_i32 = arith.constant 1 : i32
    %0 = arith.addi %arg1, %c1_i32 : i32
    %c8_i32 = arith.constant 8 : i32
    %1 = arith.muli %0, %c8_i32 : i32
    %c15_i32 = arith.constant 15 : i32
    %2 = arith.minsi %1, %c15_i32 : i32
    %c0_i32 = arith.constant 0 : i32
    %c0_i32_0 = arith.constant 0 : i32
    %c0_i32_1 = arith.constant 0 : i32
    return %arg0, %2, %c0_i32, %c0_i32_0 : i32, i32, i32, i32
  }
  func.func @transform_3(%arg0: i32, %arg1: i32) -> (i32, i32, i32) {
    %c0_i32 = arith.constant 0 : i32
    %c0_i32_0 = arith.constant 0 : i32
    %c0_i32_1 = arith.constant 0 : i32
    %c0_i32_2 = arith.constant 0 : i32
    return %c0_i32, %c0_i32_0, %c0_i32_1 : i32, i32, i32
  }
  func.func @transform_4(%arg0: i32, %arg1: i32) -> (i32, i32) {
    %c0_i32 = arith.constant 0 : i32
    %c0_i32_0 = arith.constant 0 : i32
    %c0_i32_1 = arith.constant 0 : i32
    return %c0_i32, %c0_i32_0 : i32, i32
  }
  func.func @transform_5(%arg0: i32, %arg1: i32) -> (i32, i32, i32, i32) {
    %c0_i32 = arith.constant 0 : i32
    %c0_i32_0 = arith.constant 0 : i32
    %c0_i32_1 = arith.constant 0 : i32
    return %arg0, %arg1, %c0_i32, %c0_i32_0 : i32, i32, i32, i32
  }
}

module attributes {stable_mosaic.version = 11 : i64} {
  func.func @kernel(%arg0: i32, %arg1: i32, %arg2: memref<1x8x18x8xbf16, #tpu.memory_space<vmem>>, %arg3: memref<1x1x18x8xbf16, #tpu.memory_space<vmem>>, %arg4: memref<1x1x18x8xbf16, #tpu.memory_space<vmem>>, %arg5: memref<9x8x8xbf16, #tpu.memory_space<vmem>>, %arg6: memref<1x8xf32, #tpu.memory_space<vmem>>, %arg7: memref<1x8x18x8xbf16, #tpu.memory_space<vmem>>, %arg8: memref<1x8x18x8xbf16, #tpu.memory_space<vmem>>) attributes {dimension_semantics = [#tpu.dimension_semantics<parallel>, #tpu.dimension_semantics<parallel>], iteration_bounds = array<i64: 2, 2>, scalar_prefetch = 0 : i64, scratch_operands = 0 : i64, tpu.core_type = #tpu.core_type<tc>, window_params = [{transform_indices = @transform_0, window_bounds = array<i64: 1, 8, 18, 8>}, {transform_indices = @transform_1, window_bounds = array<i64: 1, 1, 18, 8>}, {transform_indices = @transform_2, window_bounds = array<i64: 1, 1, 18, 8>}, {pipeline_mode = #tpu.pipeline_mode<synchronous>, transform_indices = @transform_3, window_bounds = array<i64: 9, 8, 8>}, {pipeline_mode = #tpu.pipeline_mode<synchronous>, transform_indices = @transform_4, window_bounds = array<i64: 1, 8>}, {transform_indices = @transform_5, window_bounds = array<i64: 1, 8, 18, 8>}, {transform_indices = @transform_6, window_bounds = array<i64: 1, 8, 18, 8>}]} {
    %c0 = arith.constant 0 : index
    %c0_0 = arith.constant 0 : index
    %c0_1 = arith.constant 0 : index
    %c0_2 = arith.constant 0 : index
    %0 = vector.load %arg2[%c0, %c0_0, %c0_1, %c0_2] : memref<1x8x18x8xbf16, #tpu.memory_space<vmem>>, vector<1x8x18x8xbf16>
    %1 = vector.shape_cast %0 : vector<1x8x18x8xbf16> to vector<8x18x8xbf16>
    %c0_i32 = arith.constant 0 : i32
    %2 = arith.cmpi sgt, %arg1, %c0_i32 : i32
    %3 = arith.extui %2 : i1 to i32
    %4 = arith.sitofp %3 : i32 to f32
    %c1_i32 = arith.constant 1 : i32
    %5 = arith.cmpi slt, %arg1, %c1_i32 : i32
    %6 = arith.extui %5 : i1 to i32
    %7 = arith.sitofp %6 : i32 to f32
    %c0_3 = arith.constant 0 : index
    %c0_4 = arith.constant 0 : index
    %c0_5 = arith.constant 0 : index
    %c0_6 = arith.constant 0 : index
    %8 = vector.load %arg3[%c0_3, %c0_4, %c0_5, %c0_6] : memref<1x1x18x8xbf16, #tpu.memory_space<vmem>>, vector<1x1x18x8xbf16>
    %9 = vector.shape_cast %8 : vector<1x1x18x8xbf16> to vector<1x18x8xbf16>
    %10 = arith.extf %9 : vector<1x18x8xbf16> to vector<1x18x8xf32>
    %11 = vector.broadcast %4 : f32 to vector<1x18x8xf32>
    %12 = arith.mulf %10, %11 : vector<1x18x8xf32>
    %13 = arith.truncf %12 : vector<1x18x8xf32> to vector<1x18x8xbf16>
    %c0_7 = arith.constant 0 : index
    %c0_8 = arith.constant 0 : index
    %c0_9 = arith.constant 0 : index
    %c0_10 = arith.constant 0 : index
    %14 = vector.load %arg4[%c0_7, %c0_8, %c0_9, %c0_10] : memref<1x1x18x8xbf16, #tpu.memory_space<vmem>>, vector<1x1x18x8xbf16>
    %15 = vector.shape_cast %14 : vector<1x1x18x8xbf16> to vector<1x18x8xbf16>
    %16 = arith.extf %15 : vector<1x18x8xbf16> to vector<1x18x8xf32>
    %17 = vector.broadcast %7 : f32 to vector<1x18x8xf32>
    %18 = arith.mulf %16, %17 : vector<1x18x8xf32>
    %19 = arith.truncf %18 : vector<1x18x8xf32> to vector<1x18x8xbf16>
    %20 = tpu.concatenate %13, %1, %19 in 0 : vector<1x18x8xbf16>, vector<8x18x8xbf16>, vector<1x18x8xbf16> -> vector<10x18x8xbf16>
    %cst = arith.constant 0.000000e+00 : f32
    %21 = vector.broadcast %cst : f32 to vector<128x8xf32>
    %22 = vector.extract_strided_slice %20 {offsets = [0, 0, 0], sizes = [10, 16, 8], strides = [1, 1, 1]} : vector<10x18x8xbf16> to vector<10x16x8xbf16>
    %23 = vector.extract_strided_slice %22 {offsets = [0, 0, 0], sizes = [8, 16, 8], strides = [1, 1, 1]} : vector<10x16x8xbf16> to vector<8x16x8xbf16>
    %24 = vector.shape_cast %23 : vector<8x16x8xbf16> to vector<128x8xbf16>
    %c0_11 = arith.constant 0 : index
    %c0_12 = arith.constant 0 : index
    %c0_13 = arith.constant 0 : index
    %25 = vector.load %arg5[%c0_11, %c0_12, %c0_13] : memref<9x8x8xbf16, #tpu.memory_space<vmem>>, vector<1x8x8xbf16>
    %26 = vector.shape_cast %25 : vector<1x8x8xbf16> to vector<8x8xbf16>
    %cst_14 = arith.constant dense<0.000000e+00> : vector<128x8xf32>
    %27 = tpu.matmul %24, %26, %cst_14 {dimension_numbers = #tpu.dot_dimension_numbers<[1], [0], [0], [1], [0, 0, 1, 1], [], []>} : vector<128x8xbf16>, vector<8x8xbf16>, vector<128x8xf32> -> vector<128x8xf32>
    %28 = arith.addf %21, %27 : vector<128x8xf32>
    %29 = vector.extract_strided_slice %22 {offsets = [1, 0, 0], sizes = [8, 16, 8], strides = [1, 1, 1]} : vector<10x16x8xbf16> to vector<8x16x8xbf16>
    %30 = vector.shape_cast %29 : vector<8x16x8xbf16> to vector<128x8xbf16>
    %c3 = arith.constant 3 : index
    %c0_15 = arith.constant 0 : index
    %c0_16 = arith.constant 0 : index
    %31 = vector.load %arg5[%c3, %c0_15, %c0_16] : memref<9x8x8xbf16, #tpu.memory_space<vmem>>, vector<1x8x8xbf16>
    %32 = vector.shape_cast %31 : vector<1x8x8xbf16> to vector<8x8xbf16>
    %cst_17 = arith.constant dense<0.000000e+00> : vector<128x8xf32>
    %33 = tpu.matmul %30, %32, %cst_17 {dimension_numbers = #tpu.dot_dimension_numbers<[1], [0], [0], [1], [0, 0, 1, 1], [], []>} : vector<128x8xbf16>, vector<8x8xbf16>, vector<128x8xf32> -> vector<128x8xf32>
    %34 = arith.addf %28, %33 : vector<128x8xf32>
    %35 = vector.extract_strided_slice %22 {offsets = [2, 0, 0], sizes = [8, 16, 8], strides = [1, 1, 1]} : vector<10x16x8xbf16> to vector<8x16x8xbf16>
    %36 = vector.shape_cast %35 : vector<8x16x8xbf16> to vector<128x8xbf16>
    %c6 = arith.constant 6 : index
    %c0_18 = arith.constant 0 : index
    %c0_19 = arith.constant 0 : index
    %37 = vector.load %arg5[%c6, %c0_18, %c0_19] : memref<9x8x8xbf16, #tpu.memory_space<vmem>>, vector<1x8x8xbf16>
    %38 = vector.shape_cast %37 : vector<1x8x8xbf16> to vector<8x8xbf16>
    %cst_20 = arith.constant dense<0.000000e+00> : vector<128x8xf32>
    %39 = tpu.matmul %36, %38, %cst_20 {dimension_numbers = #tpu.dot_dimension_numbers<[1], [0], [0], [1], [0, 0, 1, 1], [], []>} : vector<128x8xbf16>, vector<8x8xbf16>, vector<128x8xf32> -> vector<128x8xf32>
    %40 = arith.addf %34, %39 : vector<128x8xf32>
    %41 = vector.extract_strided_slice %20 {offsets = [0, 1, 0], sizes = [10, 16, 8], strides = [1, 1, 1]} : vector<10x18x8xbf16> to vector<10x16x8xbf16>
    %42 = vector.extract_strided_slice %41 {offsets = [0, 0, 0], sizes = [8, 16, 8], strides = [1, 1, 1]} : vector<10x16x8xbf16> to vector<8x16x8xbf16>
    %43 = vector.shape_cast %42 : vector<8x16x8xbf16> to vector<128x8xbf16>
    %c1 = arith.constant 1 : index
    %c0_21 = arith.constant 0 : index
    %c0_22 = arith.constant 0 : index
    %44 = vector.load %arg5[%c1, %c0_21, %c0_22] : memref<9x8x8xbf16, #tpu.memory_space<vmem>>, vector<1x8x8xbf16>
    %45 = vector.shape_cast %44 : vector<1x8x8xbf16> to vector<8x8xbf16>
    %cst_23 = arith.constant dense<0.000000e+00> : vector<128x8xf32>
    %46 = tpu.matmul %43, %45, %cst_23 {dimension_numbers = #tpu.dot_dimension_numbers<[1], [0], [0], [1], [0, 0, 1, 1], [], []>} : vector<128x8xbf16>, vector<8x8xbf16>, vector<128x8xf32> -> vector<128x8xf32>
    %47 = arith.addf %40, %46 : vector<128x8xf32>
    %48 = vector.extract_strided_slice %41 {offsets = [1, 0, 0], sizes = [8, 16, 8], strides = [1, 1, 1]} : vector<10x16x8xbf16> to vector<8x16x8xbf16>
    %49 = vector.shape_cast %48 : vector<8x16x8xbf16> to vector<128x8xbf16>
    %c4 = arith.constant 4 : index
    %c0_24 = arith.constant 0 : index
    %c0_25 = arith.constant 0 : index
    %50 = vector.load %arg5[%c4, %c0_24, %c0_25] : memref<9x8x8xbf16, #tpu.memory_space<vmem>>, vector<1x8x8xbf16>
    %51 = vector.shape_cast %50 : vector<1x8x8xbf16> to vector<8x8xbf16>
    %cst_26 = arith.constant dense<0.000000e+00> : vector<128x8xf32>
    %52 = tpu.matmul %49, %51, %cst_26 {dimension_numbers = #tpu.dot_dimension_numbers<[1], [0], [0], [1], [0, 0, 1, 1], [], []>} : vector<128x8xbf16>, vector<8x8xbf16>, vector<128x8xf32> -> vector<128x8xf32>
    %53 = arith.addf %47, %52 : vector<128x8xf32>
    %54 = vector.extract_strided_slice %41 {offsets = [2, 0, 0], sizes = [8, 16, 8], strides = [1, 1, 1]} : vector<10x16x8xbf16> to vector<8x16x8xbf16>
    %55 = vector.shape_cast %54 : vector<8x16x8xbf16> to vector<128x8xbf16>
    %c7 = arith.constant 7 : index
    %c0_27 = arith.constant 0 : index
    %c0_28 = arith.constant 0 : index
    %56 = vector.load %arg5[%c7, %c0_27, %c0_28] : memref<9x8x8xbf16, #tpu.memory_space<vmem>>, vector<1x8x8xbf16>
    %57 = vector.shape_cast %56 : vector<1x8x8xbf16> to vector<8x8xbf16>
    %cst_29 = arith.constant dense<0.000000e+00> : vector<128x8xf32>
    %58 = tpu.matmul %55, %57, %cst_29 {dimension_numbers = #tpu.dot_dimension_numbers<[1], [0], [0], [1], [0, 0, 1, 1], [], []>} : vector<128x8xbf16>, vector<8x8xbf16>, vector<128x8xf32> -> vector<128x8xf32>
    %59 = arith.addf %53, %58 : vector<128x8xf32>
    %60 = vector.extract_strided_slice %20 {offsets = [0, 2, 0], sizes = [10, 16, 8], strides = [1, 1, 1]} : vector<10x18x8xbf16> to vector<10x16x8xbf16>
    %61 = vector.extract_strided_slice %60 {offsets = [0, 0, 0], sizes = [8, 16, 8], strides = [1, 1, 1]} : vector<10x16x8xbf16> to vector<8x16x8xbf16>
    %62 = vector.shape_cast %61 : vector<8x16x8xbf16> to vector<128x8xbf16>
    %c2 = arith.constant 2 : index
    %c0_30 = arith.constant 0 : index
    %c0_31 = arith.constant 0 : index
    %63 = vector.load %arg5[%c2, %c0_30, %c0_31] : memref<9x8x8xbf16, #tpu.memory_space<vmem>>, vector<1x8x8xbf16>
    %64 = vector.shape_cast %63 : vector<1x8x8xbf16> to vector<8x8xbf16>
    %cst_32 = arith.constant dense<0.000000e+00> : vector<128x8xf32>
    %65 = tpu.matmul %62, %64, %cst_32 {dimension_numbers = #tpu.dot_dimension_numbers<[1], [0], [0], [1], [0, 0, 1, 1], [], []>} : vector<128x8xbf16>, vector<8x8xbf16>, vector<128x8xf32> -> vector<128x8xf32>
    %66 = arith.addf %59, %65 : vector<128x8xf32>
    %67 = vector.extract_strided_slice %60 {offsets = [1, 0, 0], sizes = [8, 16, 8], strides = [1, 1, 1]} : vector<10x16x8xbf16> to vector<8x16x8xbf16>
    %68 = vector.shape_cast %67 : vector<8x16x8xbf16> to vector<128x8xbf16>
    %c5 = arith.constant 5 : index
    %c0_33 = arith.constant 0 : index
    %c0_34 = arith.constant 0 : index
    %69 = vector.load %arg5[%c5, %c0_33, %c0_34] : memref<9x8x8xbf16, #tpu.memory_space<vmem>>, vector<1x8x8xbf16>
    %70 = vector.shape_cast %69 : vector<1x8x8xbf16> to vector<8x8xbf16>
    %cst_35 = arith.constant dense<0.000000e+00> : vector<128x8xf32>
    %71 = tpu.matmul %68, %70, %cst_35 {dimension_numbers = #tpu.dot_dimension_numbers<[1], [0], [0], [1], [0, 0, 1, 1], [], []>} : vector<128x8xbf16>, vector<8x8xbf16>, vector<128x8xf32> -> vector<128x8xf32>
    %72 = arith.addf %66, %71 : vector<128x8xf32>
    %73 = vector.extract_strided_slice %60 {offsets = [2, 0, 0], sizes = [8, 16, 8], strides = [1, 1, 1]} : vector<10x16x8xbf16> to vector<8x16x8xbf16>
    %74 = vector.shape_cast %73 : vector<8x16x8xbf16> to vector<128x8xbf16>
    %c8 = arith.constant 8 : index
    %c0_36 = arith.constant 0 : index
    %c0_37 = arith.constant 0 : index
    %75 = vector.load %arg5[%c8, %c0_36, %c0_37] : memref<9x8x8xbf16, #tpu.memory_space<vmem>>, vector<1x8x8xbf16>
    %76 = vector.shape_cast %75 : vector<1x8x8xbf16> to vector<8x8xbf16>
    %cst_38 = arith.constant dense<0.000000e+00> : vector<128x8xf32>
    %77 = tpu.matmul %74, %76, %cst_38 {dimension_numbers = #tpu.dot_dimension_numbers<[1], [0], [0], [1], [0, 0, 1, 1], [], []>} : vector<128x8xbf16>, vector<8x8xbf16>, vector<128x8xf32> -> vector<128x8xf32>
    %78 = arith.addf %72, %77 : vector<128x8xf32>
    %c0_39 = arith.constant 0 : index
    %c0_40 = arith.constant 0 : index
    %79 = vector.load %arg6[%c0_39, %c0_40] : memref<1x8xf32, #tpu.memory_space<vmem>>, vector<1x8xf32>
    %80 = vector.broadcast %79 : vector<1x8xf32> to vector<128x8xf32>
    %81 = arith.addf %78, %80 : vector<128x8xf32>
    %cst_41 = arith.constant 0.000000e+00 : f32
    %82 = vector.broadcast %cst_41 : f32 to vector<128x8xf32>
    %83 = arith.maximumf %81, %82 : vector<128x8xf32>
    %84 = vector.shape_cast %83 : vector<128x8xf32> to vector<8x16x8xf32>
    %cst_42 = arith.constant 0.000000e+00 : f32
    %85 = vector.broadcast %cst_42 : f32 to vector<8x1x8xf32>
    %cst_43 = arith.constant 0.000000e+00 : f32
    %86 = vector.broadcast %cst_43 : f32 to vector<8x1x8xf32>
    %87 = tpu.concatenate %85, %84, %86 in 1 : vector<8x1x8xf32>, vector<8x16x8xf32>, vector<8x1x8xf32> -> vector<8x18x8xf32>
    %c0_44 = arith.constant 0 : index
    %c0_45 = arith.constant 0 : index
    %c0_46 = arith.constant 0 : index
    %c0_47 = arith.constant 0 : index
    %88 = vector.load %arg7[%c0_44, %c0_45, %c0_46, %c0_47] : memref<1x8x18x8xbf16, #tpu.memory_space<vmem>>, vector<1x8x18x8xbf16>
    %89 = vector.shape_cast %88 : vector<1x8x18x8xbf16> to vector<8x18x8xbf16>
    %90 = arith.extf %89 : vector<8x18x8xbf16> to vector<8x18x8xf32>
    %91 = arith.addf %87, %90 : vector<8x18x8xf32>
    %cst_48 = arith.constant 0.000000e+00 : f32
    %92 = vector.broadcast %cst_48 : f32 to vector<8x18x8xf32>
    %93 = arith.maximumf %91, %92 : vector<8x18x8xf32>
    %94 = vector.shape_cast %93 : vector<8x18x8xf32> to vector<1x8x18x8xf32>
    %95 = arith.truncf %94 : vector<1x8x18x8xf32> to vector<1x8x18x8xbf16>
    %c0_49 = arith.constant 0 : index
    %c0_50 = arith.constant 0 : index
    %c0_51 = arith.constant 0 : index
    %c0_52 = arith.constant 0 : index
    %96 = vector.load %arg8[%c0_49, %c0_50, %c0_51, %c0_52] : memref<1x8x18x8xbf16, #tpu.memory_space<vmem>>, vector<1x8x18x8xbf16>
    tpu.vector_store %arg8[%c0_49, %c0_50, %c0_51, %c0_52], %95 {strides = array<i32>} : memref<1x8x18x8xbf16, #tpu.memory_space<vmem>>, vector<1x8x18x8xbf16>,
    return
  }
  func.func @transform_0(%arg0: i32, %arg1: i32) -> (i32, i32, i32, i32) {
    %c0_i32 = arith.constant 0 : i32
    %c0_i32_0 = arith.constant 0 : i32
    %c0_i32_1 = arith.constant 0 : i32
    return %arg0, %arg1, %c0_i32, %c0_i32_0 : i32, i32, i32, i32
  }
  func.func @transform_1(%arg0: i32, %arg1: i32) -> (i32, i32, i32, i32) {
    %c8_i32 = arith.constant 8 : i32
    %0 = arith.muli %arg1, %c8_i32 : i32
    %c1_i32 = arith.constant 1 : i32
    %1 = arith.subi %0, %c1_i32 : i32
    %c0_i32 = arith.constant 0 : i32
    %2 = arith.maxsi %1, %c0_i32 : i32
    %c0_i32_0 = arith.constant 0 : i32
    %c0_i32_1 = arith.constant 0 : i32
    %c0_i32_2 = arith.constant 0 : i32
    return %arg0, %2, %c0_i32_0, %c0_i32_1 : i32, i32, i32, i32
  }
  func.func @transform_2(%arg0: i32, %arg1: i32) -> (i32, i32, i32, i32) {
    %c1_i32 = arith.constant 1 : i32
    %0 = arith.addi %arg1, %c1_i32 : i32
    %c8_i32 = arith.constant 8 : i32
    %1 = arith.muli %0, %c8_i32 : i32
    %c15_i32 = arith.constant 15 : i32
    %2 = arith.minsi %1, %c15_i32 : i32
    %c0_i32 = arith.constant 0 : i32
    %c0_i32_0 = arith.constant 0 : i32
    %c0_i32_1 = arith.constant 0 : i32
    return %arg0, %2, %c0_i32, %c0_i32_0 : i32, i32, i32, i32
  }
  func.func @transform_3(%arg0: i32, %arg1: i32) -> (i32, i32, i32) {
    %c0_i32 = arith.constant 0 : i32
    %c0_i32_0 = arith.constant 0 : i32
    %c0_i32_1 = arith.constant 0 : i32
    %c0_i32_2 = arith.constant 0 : i32
    return %c0_i32, %c0_i32_0, %c0_i32_1 : i32, i32, i32
  }
  func.func @transform_4(%arg0: i32, %arg1: i32) -> (i32, i32) {
    %c0_i32 = arith.constant 0 : i32
    %c0_i32_0 = arith.constant 0 : i32
    %c0_i32_1 = arith.constant 0 : i32
    return %c0_i32, %c0_i32_0 : i32, i32
  }
  func.func @transform_5(%arg0: i32, %arg1: i32) -> (i32, i32, i32, i32) {
    %c0_i32 = arith.constant 0 : i32
    %c0_i32_0 = arith.constant 0 : i32
    %c0_i32_1 = arith.constant 0 : i32
    return %arg0, %arg1, %c0_i32, %c0_i32_0 : i32, i32, i32, i32
  }
  func.func @transform_6(%arg0: i32, %arg1: i32) -> (i32, i32, i32, i32) {
    %c0_i32 = arith.constant 0 : i32
    %c0_i32_0 = arith.constant 0 : i32
    %c0_i32_1 = arith.constant 0 : i32
    return %arg0, %arg1, %c0_i32, %c0_i32_0 : i32, i32, i32, i32
  }
}

module attributes {stable_mosaic.version = 11 : i64} {
  func.func @kernel(%arg0: i32, %arg1: i32, %arg2: memref<1x8x18x8xbf16, #tpu.memory_space<vmem>>, %arg3: memref<1x1x18x8xbf16, #tpu.memory_space<vmem>>, %arg4: memref<1x1x18x8xbf16, #tpu.memory_space<vmem>>, %arg5: memref<9x8x3xbf16, #tpu.memory_space<vmem>>, %arg6: memref<1x3xf32, #tpu.memory_space<vmem>>, %arg7: memref<1x8x18x3xf32, #tpu.memory_space<vmem>>, %arg8: memref<1x8x18x3xf32, #tpu.memory_space<vmem>>) attributes {dimension_semantics = [#tpu.dimension_semantics<parallel>, #tpu.dimension_semantics<parallel>], iteration_bounds = array<i64: 2, 2>, scalar_prefetch = 0 : i64, scratch_operands = 0 : i64, tpu.core_type = #tpu.core_type<tc>, window_params = [{transform_indices = @transform_0, window_bounds = array<i64: 1, 8, 18, 8>}, {transform_indices = @transform_1, window_bounds = array<i64: 1, 1, 18, 8>}, {transform_indices = @transform_2, window_bounds = array<i64: 1, 1, 18, 8>}, {pipeline_mode = #tpu.pipeline_mode<synchronous>, transform_indices = @transform_3, window_bounds = array<i64: 9, 8, 3>}, {pipeline_mode = #tpu.pipeline_mode<synchronous>, transform_indices = @transform_4, window_bounds = array<i64: 1, 3>}, {transform_indices = @transform_5, window_bounds = array<i64: 1, 8, 18, 3>}, {transform_indices = @transform_6, window_bounds = array<i64: 1, 8, 18, 3>}]} {
    %c0 = arith.constant 0 : index
    %c0_0 = arith.constant 0 : index
    %c0_1 = arith.constant 0 : index
    %c0_2 = arith.constant 0 : index
    %0 = vector.load %arg2[%c0, %c0_0, %c0_1, %c0_2] : memref<1x8x18x8xbf16, #tpu.memory_space<vmem>>, vector<1x8x18x8xbf16>
    %1 = vector.shape_cast %0 : vector<1x8x18x8xbf16> to vector<8x18x8xbf16>
    %c0_i32 = arith.constant 0 : i32
    %2 = arith.cmpi sgt, %arg1, %c0_i32 : i32
    %3 = arith.extui %2 : i1 to i32
    %4 = arith.sitofp %3 : i32 to f32
    %c1_i32 = arith.constant 1 : i32
    %5 = arith.cmpi slt, %arg1, %c1_i32 : i32
    %6 = arith.extui %5 : i1 to i32
    %7 = arith.sitofp %6 : i32 to f32
    %c0_3 = arith.constant 0 : index
    %c0_4 = arith.constant 0 : index
    %c0_5 = arith.constant 0 : index
    %c0_6 = arith.constant 0 : index
    %8 = vector.load %arg3[%c0_3, %c0_4, %c0_5, %c0_6] : memref<1x1x18x8xbf16, #tpu.memory_space<vmem>>, vector<1x1x18x8xbf16>
    %9 = vector.shape_cast %8 : vector<1x1x18x8xbf16> to vector<1x18x8xbf16>
    %10 = arith.extf %9 : vector<1x18x8xbf16> to vector<1x18x8xf32>
    %11 = vector.broadcast %4 : f32 to vector<1x18x8xf32>
    %12 = arith.mulf %10, %11 : vector<1x18x8xf32>
    %13 = arith.truncf %12 : vector<1x18x8xf32> to vector<1x18x8xbf16>
    %c0_7 = arith.constant 0 : index
    %c0_8 = arith.constant 0 : index
    %c0_9 = arith.constant 0 : index
    %c0_10 = arith.constant 0 : index
    %14 = vector.load %arg4[%c0_7, %c0_8, %c0_9, %c0_10] : memref<1x1x18x8xbf16, #tpu.memory_space<vmem>>, vector<1x1x18x8xbf16>
    %15 = vector.shape_cast %14 : vector<1x1x18x8xbf16> to vector<1x18x8xbf16>
    %16 = arith.extf %15 : vector<1x18x8xbf16> to vector<1x18x8xf32>
    %17 = vector.broadcast %7 : f32 to vector<1x18x8xf32>
    %18 = arith.mulf %16, %17 : vector<1x18x8xf32>
    %19 = arith.truncf %18 : vector<1x18x8xf32> to vector<1x18x8xbf16>
    %20 = tpu.concatenate %13, %1, %19 in 0 : vector<1x18x8xbf16>, vector<8x18x8xbf16>, vector<1x18x8xbf16> -> vector<10x18x8xbf16>
    %cst = arith.constant 0.000000e+00 : f32
    %21 = vector.broadcast %cst : f32 to vector<128x3xf32>
    %22 = vector.extract_strided_slice %20 {offsets = [0, 0, 0], sizes = [10, 16, 8], strides = [1, 1, 1]} : vector<10x18x8xbf16> to vector<10x16x8xbf16>
    %23 = vector.extract_strided_slice %22 {offsets = [0, 0, 0], sizes = [8, 16, 8], strides = [1, 1, 1]} : vector<10x16x8xbf16> to vector<8x16x8xbf16>
    %24 = vector.shape_cast %23 : vector<8x16x8xbf16> to vector<128x8xbf16>
    %c0_11 = arith.constant 0 : index
    %c0_12 = arith.constant 0 : index
    %c0_13 = arith.constant 0 : index
    %25 = vector.load %arg5[%c0_11, %c0_12, %c0_13] : memref<9x8x3xbf16, #tpu.memory_space<vmem>>, vector<1x8x3xbf16>
    %26 = vector.shape_cast %25 : vector<1x8x3xbf16> to vector<8x3xbf16>
    %cst_14 = arith.constant dense<0.000000e+00> : vector<128x3xf32>
    %27 = tpu.matmul %24, %26, %cst_14 {dimension_numbers = #tpu.dot_dimension_numbers<[1], [0], [0], [1], [0, 0, 1, 1], [], []>} : vector<128x8xbf16>, vector<8x3xbf16>, vector<128x3xf32> -> vector<128x3xf32>
    %28 = arith.addf %21, %27 : vector<128x3xf32>
    %29 = vector.extract_strided_slice %22 {offsets = [1, 0, 0], sizes = [8, 16, 8], strides = [1, 1, 1]} : vector<10x16x8xbf16> to vector<8x16x8xbf16>
    %30 = vector.shape_cast %29 : vector<8x16x8xbf16> to vector<128x8xbf16>
    %c3 = arith.constant 3 : index
    %c0_15 = arith.constant 0 : index
    %c0_16 = arith.constant 0 : index
    %31 = vector.load %arg5[%c3, %c0_15, %c0_16] : memref<9x8x3xbf16, #tpu.memory_space<vmem>>, vector<1x8x3xbf16>
    %32 = vector.shape_cast %31 : vector<1x8x3xbf16> to vector<8x3xbf16>
    %cst_17 = arith.constant dense<0.000000e+00> : vector<128x3xf32>
    %33 = tpu.matmul %30, %32, %cst_17 {dimension_numbers = #tpu.dot_dimension_numbers<[1], [0], [0], [1], [0, 0, 1, 1], [], []>} : vector<128x8xbf16>, vector<8x3xbf16>, vector<128x3xf32> -> vector<128x3xf32>
    %34 = arith.addf %28, %33 : vector<128x3xf32>
    %35 = vector.extract_strided_slice %22 {offsets = [2, 0, 0], sizes = [8, 16, 8], strides = [1, 1, 1]} : vector<10x16x8xbf16> to vector<8x16x8xbf16>
    %36 = vector.shape_cast %35 : vector<8x16x8xbf16> to vector<128x8xbf16>
    %c6 = arith.constant 6 : index
    %c0_18 = arith.constant 0 : index
    %c0_19 = arith.constant 0 : index
    %37 = vector.load %arg5[%c6, %c0_18, %c0_19] : memref<9x8x3xbf16, #tpu.memory_space<vmem>>, vector<1x8x3xbf16>
    %38 = vector.shape_cast %37 : vector<1x8x3xbf16> to vector<8x3xbf16>
    %cst_20 = arith.constant dense<0.000000e+00> : vector<128x3xf32>
    %39 = tpu.matmul %36, %38, %cst_20 {dimension_numbers = #tpu.dot_dimension_numbers<[1], [0], [0], [1], [0, 0, 1, 1], [], []>} : vector<128x8xbf16>, vector<8x3xbf16>, vector<128x3xf32> -> vector<128x3xf32>
    %40 = arith.addf %34, %39 : vector<128x3xf32>
    %41 = vector.extract_strided_slice %20 {offsets = [0, 1, 0], sizes = [10, 16, 8], strides = [1, 1, 1]} : vector<10x18x8xbf16> to vector<10x16x8xbf16>
    %42 = vector.extract_strided_slice %41 {offsets = [0, 0, 0], sizes = [8, 16, 8], strides = [1, 1, 1]} : vector<10x16x8xbf16> to vector<8x16x8xbf16>
    %43 = vector.shape_cast %42 : vector<8x16x8xbf16> to vector<128x8xbf16>
    %c1 = arith.constant 1 : index
    %c0_21 = arith.constant 0 : index
    %c0_22 = arith.constant 0 : index
    %44 = vector.load %arg5[%c1, %c0_21, %c0_22] : memref<9x8x3xbf16, #tpu.memory_space<vmem>>, vector<1x8x3xbf16>
    %45 = vector.shape_cast %44 : vector<1x8x3xbf16> to vector<8x3xbf16>
    %cst_23 = arith.constant dense<0.000000e+00> : vector<128x3xf32>
    %46 = tpu.matmul %43, %45, %cst_23 {dimension_numbers = #tpu.dot_dimension_numbers<[1], [0], [0], [1], [0, 0, 1, 1], [], []>} : vector<128x8xbf16>, vector<8x3xbf16>, vector<128x3xf32> -> vector<128x3xf32>
    %47 = arith.addf %40, %46 : vector<128x3xf32>
    %48 = vector.extract_strided_slice %41 {offsets = [1, 0, 0], sizes = [8, 16, 8], strides = [1, 1, 1]} : vector<10x16x8xbf16> to vector<8x16x8xbf16>
    %49 = vector.shape_cast %48 : vector<8x16x8xbf16> to vector<128x8xbf16>
    %c4 = arith.constant 4 : index
    %c0_24 = arith.constant 0 : index
    %c0_25 = arith.constant 0 : index
    %50 = vector.load %arg5[%c4, %c0_24, %c0_25] : memref<9x8x3xbf16, #tpu.memory_space<vmem>>, vector<1x8x3xbf16>
    %51 = vector.shape_cast %50 : vector<1x8x3xbf16> to vector<8x3xbf16>
    %cst_26 = arith.constant dense<0.000000e+00> : vector<128x3xf32>
    %52 = tpu.matmul %49, %51, %cst_26 {dimension_numbers = #tpu.dot_dimension_numbers<[1], [0], [0], [1], [0, 0, 1, 1], [], []>} : vector<128x8xbf16>, vector<8x3xbf16>, vector<128x3xf32> -> vector<128x3xf32>
    %53 = arith.addf %47, %52 : vector<128x3xf32>
    %54 = vector.extract_strided_slice %41 {offsets = [2, 0, 0], sizes = [8, 16, 8], strides = [1, 1, 1]} : vector<10x16x8xbf16> to vector<8x16x8xbf16>
    %55 = vector.shape_cast %54 : vector<8x16x8xbf16> to vector<128x8xbf16>
    %c7 = arith.constant 7 : index
    %c0_27 = arith.constant 0 : index
    %c0_28 = arith.constant 0 : index
    %56 = vector.load %arg5[%c7, %c0_27, %c0_28] : memref<9x8x3xbf16, #tpu.memory_space<vmem>>, vector<1x8x3xbf16>
    %57 = vector.shape_cast %56 : vector<1x8x3xbf16> to vector<8x3xbf16>
    %cst_29 = arith.constant dense<0.000000e+00> : vector<128x3xf32>
    %58 = tpu.matmul %55, %57, %cst_29 {dimension_numbers = #tpu.dot_dimension_numbers<[1], [0], [0], [1], [0, 0, 1, 1], [], []>} : vector<128x8xbf16>, vector<8x3xbf16>, vector<128x3xf32> -> vector<128x3xf32>
    %59 = arith.addf %53, %58 : vector<128x3xf32>
    %60 = vector.extract_strided_slice %20 {offsets = [0, 2, 0], sizes = [10, 16, 8], strides = [1, 1, 1]} : vector<10x18x8xbf16> to vector<10x16x8xbf16>
    %61 = vector.extract_strided_slice %60 {offsets = [0, 0, 0], sizes = [8, 16, 8], strides = [1, 1, 1]} : vector<10x16x8xbf16> to vector<8x16x8xbf16>
    %62 = vector.shape_cast %61 : vector<8x16x8xbf16> to vector<128x8xbf16>
    %c2 = arith.constant 2 : index
    %c0_30 = arith.constant 0 : index
    %c0_31 = arith.constant 0 : index
    %63 = vector.load %arg5[%c2, %c0_30, %c0_31] : memref<9x8x3xbf16, #tpu.memory_space<vmem>>, vector<1x8x3xbf16>
    %64 = vector.shape_cast %63 : vector<1x8x3xbf16> to vector<8x3xbf16>
    %cst_32 = arith.constant dense<0.000000e+00> : vector<128x3xf32>
    %65 = tpu.matmul %62, %64, %cst_32 {dimension_numbers = #tpu.dot_dimension_numbers<[1], [0], [0], [1], [0, 0, 1, 1], [], []>} : vector<128x8xbf16>, vector<8x3xbf16>, vector<128x3xf32> -> vector<128x3xf32>
    %66 = arith.addf %59, %65 : vector<128x3xf32>
    %67 = vector.extract_strided_slice %60 {offsets = [1, 0, 0], sizes = [8, 16, 8], strides = [1, 1, 1]} : vector<10x16x8xbf16> to vector<8x16x8xbf16>
    %68 = vector.shape_cast %67 : vector<8x16x8xbf16> to vector<128x8xbf16>
    %c5 = arith.constant 5 : index
    %c0_33 = arith.constant 0 : index
    %c0_34 = arith.constant 0 : index
    %69 = vector.load %arg5[%c5, %c0_33, %c0_34] : memref<9x8x3xbf16, #tpu.memory_space<vmem>>, vector<1x8x3xbf16>
    %70 = vector.shape_cast %69 : vector<1x8x3xbf16> to vector<8x3xbf16>
    %cst_35 = arith.constant dense<0.000000e+00> : vector<128x3xf32>
    %71 = tpu.matmul %68, %70, %cst_35 {dimension_numbers = #tpu.dot_dimension_numbers<[1], [0], [0], [1], [0, 0, 1, 1], [], []>} : vector<128x8xbf16>, vector<8x3xbf16>, vector<128x3xf32> -> vector<128x3xf32>
    %72 = arith.addf %66, %71 : vector<128x3xf32>
    %73 = vector.extract_strided_slice %60 {offsets = [2, 0, 0], sizes = [8, 16, 8], strides = [1, 1, 1]} : vector<10x16x8xbf16> to vector<8x16x8xbf16>
    %74 = vector.shape_cast %73 : vector<8x16x8xbf16> to vector<128x8xbf16>
    %c8 = arith.constant 8 : index
    %c0_36 = arith.constant 0 : index
    %c0_37 = arith.constant 0 : index
    %75 = vector.load %arg5[%c8, %c0_36, %c0_37] : memref<9x8x3xbf16, #tpu.memory_space<vmem>>, vector<1x8x3xbf16>
    %76 = vector.shape_cast %75 : vector<1x8x3xbf16> to vector<8x3xbf16>
    %cst_38 = arith.constant dense<0.000000e+00> : vector<128x3xf32>
    %77 = tpu.matmul %74, %76, %cst_38 {dimension_numbers = #tpu.dot_dimension_numbers<[1], [0], [0], [1], [0, 0, 1, 1], [], []>} : vector<128x8xbf16>, vector<8x3xbf16>, vector<128x3xf32> -> vector<128x3xf32>
    %78 = arith.addf %72, %77 : vector<128x3xf32>
    %c0_39 = arith.constant 0 : index
    %c0_40 = arith.constant 0 : index
    %79 = vector.load %arg6[%c0_39, %c0_40] : memref<1x3xf32, #tpu.memory_space<vmem>>, vector<1x3xf32>
    %80 = vector.broadcast %79 : vector<1x3xf32> to vector<128x3xf32>
    %81 = arith.addf %78, %80 : vector<128x3xf32>
    %82 = vector.shape_cast %81 : vector<128x3xf32> to vector<8x16x3xf32>
    %cst_41 = arith.constant 0.000000e+00 : f32
    %83 = vector.broadcast %cst_41 : f32 to vector<8x1x3xf32>
    %cst_42 = arith.constant 0.000000e+00 : f32
    %84 = vector.broadcast %cst_42 : f32 to vector<8x1x3xf32>
    %85 = tpu.concatenate %83, %82, %84 in 1 : vector<8x1x3xf32>, vector<8x16x3xf32>, vector<8x1x3xf32> -> vector<8x18x3xf32>
    %c0_43 = arith.constant 0 : index
    %c0_44 = arith.constant 0 : index
    %c0_45 = arith.constant 0 : index
    %c0_46 = arith.constant 0 : index
    %86 = vector.load %arg7[%c0_43, %c0_44, %c0_45, %c0_46] : memref<1x8x18x3xf32, #tpu.memory_space<vmem>>, vector<1x8x18x3xf32>
    %87 = vector.shape_cast %86 : vector<1x8x18x3xf32> to vector<8x18x3xf32>
    %88 = arith.addf %85, %87 : vector<8x18x3xf32>
    %89 = vector.shape_cast %88 : vector<8x18x3xf32> to vector<1x8x18x3xf32>
    %c0_47 = arith.constant 0 : index
    %c0_48 = arith.constant 0 : index
    %c0_49 = arith.constant 0 : index
    %c0_50 = arith.constant 0 : index
    %90 = vector.load %arg8[%c0_47, %c0_48, %c0_49, %c0_50] : memref<1x8x18x3xf32, #tpu.memory_space<vmem>>, vector<1x8x18x3xf32>
    tpu.vector_store %arg8[%c0_47, %c0_48, %c0_49, %c0_50], %89 {strides = array<i32>} : memref<1x8x18x3xf32, #tpu.memory_space<vmem>>, vector<1x8x18x3xf32>,
    return
  }
  func.func @transform_0(%arg0: i32, %arg1: i32) -> (i32, i32, i32, i32) {
    %c0_i32 = arith.constant 0 : i32
    %c0_i32_0 = arith.constant 0 : i32
    %c0_i32_1 = arith.constant 0 : i32
    return %arg0, %arg1, %c0_i32, %c0_i32_0 : i32, i32, i32, i32
  }
  func.func @transform_1(%arg0: i32, %arg1: i32) -> (i32, i32, i32, i32) {
    %c8_i32 = arith.constant 8 : i32
    %0 = arith.muli %arg1, %c8_i32 : i32
    %c1_i32 = arith.constant 1 : i32
    %1 = arith.subi %0, %c1_i32 : i32
    %c0_i32 = arith.constant 0 : i32
    %2 = arith.maxsi %1, %c0_i32 : i32
    %c0_i32_0 = arith.constant 0 : i32
    %c0_i32_1 = arith.constant 0 : i32
    %c0_i32_2 = arith.constant 0 : i32
    return %arg0, %2, %c0_i32_0, %c0_i32_1 : i32, i32, i32, i32
  }
  func.func @transform_2(%arg0: i32, %arg1: i32) -> (i32, i32, i32, i32) {
    %c1_i32 = arith.constant 1 : i32
    %0 = arith.addi %arg1, %c1_i32 : i32
    %c8_i32 = arith.constant 8 : i32
    %1 = arith.muli %0, %c8_i32 : i32
    %c15_i32 = arith.constant 15 : i32
    %2 = arith.minsi %1, %c15_i32 : i32
    %c0_i32 = arith.constant 0 : i32
    %c0_i32_0 = arith.constant 0 : i32
    %c0_i32_1 = arith.constant 0 : i32
    return %arg0, %2, %c0_i32, %c0_i32_0 : i32, i32, i32, i32
  }
  func.func @transform_3(%arg0: i32, %arg1: i32) -> (i32, i32, i32) {
    %c0_i32 = arith.constant 0 : i32
    %c0_i32_0 = arith.constant 0 : i32
    %c0_i32_1 = arith.constant 0 : i32
    %c0_i32_2 = arith.constant 0 : i32
    return %c0_i32, %c0_i32_0, %c0_i32_1 : i32, i32, i32
  }
  func.func @transform_4(%arg0: i32, %arg1: i32) -> (i32, i32) {
    %c0_i32 = arith.constant 0 : i32
    %c0_i32_0 = arith.constant 0 : i32
    %c0_i32_1 = arith.constant 0 : i32
    return %c0_i32, %c0_i32_0 : i32, i32
  }
  func.func @transform_5(%arg0: i32, %arg1: i32) -> (i32, i32, i32, i32) {
    %c0_i32 = arith.constant 0 : i32
    %c0_i32_0 = arith.constant 0 : i32
    %c0_i32_1 = arith.constant 0 : i32
    return %arg0, %arg1, %c0_i32, %c0_i32_0 : i32, i32, i32, i32
  }
  func.func @transform_6(%arg0: i32, %arg1: i32) -> (i32, i32, i32, i32) {
    %c0_i32 = arith.constant 0 : i32
    %c0_i32_0 = arith.constant 0 : i32
    %c0_i32_1 = arith.constant 0 : i32
    return %arg0, %arg1, %c0_i32, %c0_i32_0 : i32, i32, i32, i32
  }
}

</mosaic_0001>

<llo_original>
// kernel: rednet_forward.10
$region0: #{rednet_forward.10}
  #allocation0 [shape = 'u32[]', space=smem, size = 0x4, offset = 0x4, fixed_abs, tag = 'smem constant byte address 0x4 - core index']
  #allocation1 [shape = 'u32[72,128]{1,0:T(1,128)}', space=vmem, size = 0x9000, scoped, tag = 'internal scratch']
  %s0 = inlined_call_operand.vmem [shape: bf16[2,16,18,3], index: 0, kind: input, shape index: {}, may-alias: {0,1,2}]
  %s1 = inlined_call_operand.vmem [shape: bf16[2,16,18,3], index: 1, kind: input, shape index: {}, may-alias: {0,1,2}]
  %s2 = inlined_call_operand.vmem [shape: bf16[2,16,18,3], index: 2, kind: input, shape index: {}, may-alias: {0,1,2}]
  %s3 = inlined_call_operand.vmem [shape: bf16[9,3,8], index: 3, kind: input, shape index: {}]
  %s4 = inlined_call_operand.vmem [shape: f32[1,8], index: 4, kind: input, shape index: {}]
  %s5 = inlined_call_operand.vmem [shape: bf16[2,16,18,8], index: 5, kind: output, shape index: {}]
  %s6 = sld [smem:[#allocation0]]
  $region53: #{rednet_forward.10} parent=0
    _
  %s8 = ssub.s32 1, %s6
  %s9 = scalar_select 0, %s8, %s6
  loop: start=0, step=1, limit=6
  $region2: #{rednet_forward.10} parent=0 // loop_pre_header
    _
  $region3: #{rednet_forward.10} parent=0 // loop_header
    %s11 = sphi 0, %s15
    %p12 = scmp.ge.s32.totalorder %s11, 6
    %s18 = sphi 0, %s30
    %s19 = sphi 0, %s26
    %s20 = sphi 0, %s18
    %s21 = sphi 0, %s19
    %s22 = sphi 0, %s20
    %s23 = sphi 0, %s21
    %s35 = sphi 0, %s37
    %s38 = sphi 0, %s35
    %s39 = sphi 0, %s38
    %s55 = sphi 0, %s39
    %s71 = sphi 0, %s73
    %s74 = sphi 0, %s71
    %s75 = sphi 0, %s74
    %s91 = sphi 0, %s75
    %s107 = sphi 0, %s109
    %s110 = sphi 0, %s107
    %s111 = sphi 0, %s110
    %s127 = sphi 0, %s111
    %s131 = sphi 0, %s131
    %s133 = sphi 0, %s131
    %s134 = sphi 0, %s133
    %s148 = sphi 0, %s134
    %s152 = sphi 0, %s152
    %s154 = sphi 0, %s152
    %s155 = sphi 0, %s154
    %s169 = sphi 0, %s155
    %s177 = sphi 0, %s179
    %s180 = sphi 0, %s177
    %s181 = sphi 0, %s180
    %s197 = sphi 0, %s181
  $region4: #{rednet_forward.10} parent=0 // loop_header_branch
    %14 = sbr.rel (%p12) target = $region8
  $region5: #{rednet_forward.10} parent=0 // loop_body
    %s16 = ssub.s32 %s11, 1
    %s17 = ssub.s32 %s11, 2
    %s24 = sadd.s32 1, %s19
    %p25 = scmp.ge.s32.totalorder %s24, 2
    %s26 = scalar_select %p25, 0, %s24
    %s27 = sadd.s32 1, %s18
    %s28 = scalar_select %p25, %s27, %s18
    %p29 = scmp.ge.s32.totalorder %s28, 2
    %s30 = scalar_select %p29, 0, %s28
    %s31 = ssub.s32 %s18, %s30
    %s32 = ssub.s32 %s19, %s26
    %s33 = sor.u32 %s31, %s32
    %p34 = scmp.eq.s32.totalorder %s33, 0
    %s36 = sadd.s32 %s35, 1
    %s37 = scalar_select %p34, %s35, %s36
    %p40 = pneg %p34
    %p41 = scmp.eq.s32.totalorder %s11, 3
    %p42 = por %p40, %p41
    %p43 = scmp.ne.s32.totalorder %s35, %s38
    %p44 = scmp.eq.s32.totalorder %s11, 0
    %p45 = por %p43, %p44
    %p46 = scmp.ne.s32.totalorder %s35, %s38
    %p47 = scmp.eq.s32.totalorder %s16, 3
    %p48 = por %p46, %p47
    %p49 = scmp.ne.s32.totalorder %s38, %s39
    %p50 = scmp.eq.s32.totalorder %s16, 0
    %p51 = por %p49, %p50
    %p52 = scmp.ne.s32.totalorder %s38, %s39
    %p53 = scmp.eq.s32.totalorder %s17, 3
    %p54 = por %p52, %p53
    %p56 = scmp.ne.s32.totalorder %s39, %s55
    %p57 = scmp.eq.s32.totalorder %s17, 0
    %p58 = por %p56, %p57
    %s59 = smul.u32 %s19, 8
    %s60 = ssub.s32 %s59, 1
    %p61 = scmp.gt.s32.totalorder %s60, 0
    %s62 = scalar_select %p61, %s60, 0
    %s63 = smul.u32 %s26, 8
    %s64 = ssub.s32 %s63, 1
    %p65 = scmp.gt.s32.totalorder %s64, 0
    %s66 = scalar_select %p65, %s64, 0
    %s67 = ssub.s32 %s18, %s30
    %s68 = ssub.s32 %s62, %s66
    %s69 = sor.u32 %s67, %s68
    %p70 = scmp.eq.s32.totalorder %s69, 0
    %s72 = sadd.s32 %s71, 1
    %s73 = scalar_select %p70, %s71, %s72
    %p76 = pneg %p70
    %p77 = scmp.eq.s32.totalorder %s11, 3
    %p78 = por %p76, %p77
    %p79 = scmp.ne.s32.totalorder %s71, %s74
    %p80 = scmp.eq.s32.totalorder %s11, 0
    %p81 = por %p79, %p80
    %p82 = scmp.ne.s32.totalorder %s71, %s74
    %p83 = scmp.eq.s32.totalorder %s16, 3
    %p84 = por %p82, %p83
    %p85 = scmp.ne.s32.totalorder %s74, %s75
    %p86 = scmp.eq.s32.totalorder %s16, 0
    %p87 = por %p85, %p86
    %p88 = scmp.ne.s32.totalorder %s74, %s75
    %p89 = scmp.eq.s32.totalorder %s17, 3
    %p90 = por %p88, %p89
    %p92 = scmp.ne.s32.totalorder %s75, %s91
    %p93 = scmp.eq.s32.totalorder %s17, 0
    %p94 = por %p92, %p93
    %s95 = sadd.s32 %s19, 1
    %s96 = smul.u32 %s95, 8
    %p97 = scmp.lt.s32.totalorder %s96, 15
    %s98 = scalar_select %p97, %s96, 15
    %s99 = sadd.s32 %s26, 1
    %s100 = smul.u32 %s99, 8
    %p101 = scmp.lt.s32.totalorder %s100, 15
    %s102 = scalar_select %p101, %s100, 15
    %s103 = ssub.s32 %s18, %s30
    %s104 = ssub.s32 %s98, %s102
    %s105 = sor.u32 %s103, %s104
    %p106 = scmp.eq.s32.totalorder %s105, 0
    %s108 = sadd.s32 %s107, 1
    %s109 = scalar_select %p106, %s107, %s108
    %p112 = pneg %p106
    %p113 = scmp.eq.s32.totalorder %s11, 3
    %p114 = por %p112, %p113
    %p115 = scmp.ne.s32.totalorder %s107, %s110
    %p116 = scmp.eq.s32.totalorder %s11, 0
    %p117 = por %p115, %p116
    %p118 = scmp.ne.s32.totalorder %s107, %s110
    %p119 = scmp.eq.s32.totalorder %s16, 3
    %p120 = por %p118, %p119
    %p121 = scmp.ne.s32.totalorder %s110, %s111
    %p122 = scmp.eq.s32.totalorder %s16, 0
    %p123 = por %p121, %p122
    %p124 = scmp.ne.s32.totalorder %s110, %s111
    %p125 = scmp.eq.s32.totalorder %s17, 3
    %p126 = por %p124, %p125
    %p128 = scmp.ne.s32.totalorder %s111, %s127
    %p129 = scmp.eq.s32.totalorder %s17, 0
    %p130 = por %p128, %p129
    %s132 = sadd.s32 %s131, 1
    %p135 = scmp.eq.s32.totalorder %s11, 3
    %p136 = scmp.ne.s32.totalorder %s131, %s133
    %p137 = scmp.eq.s32.totalorder %s11, 0
    %p138 = por %p136, %p137
    %p139 = scmp.ne.s32.totalorder %s131, %s133
    %p140 = scmp.eq.s32.totalorder %s16, 3
    %p141 = por %p139, %p140
    %p142 = scmp.ne.s32.totalorder %s133, %s134
    %p143 = scmp.eq.s32.totalorder %s16, 0
    %p144 = por %p142, %p143
    %p145 = scmp.ne.s32.totalorder %s133, %s134
    %p146 = scmp.eq.s32.totalorder %s17, 3
    %p147 = por %p145, %p146
    %p149 = scmp.ne.s32.totalorder %s134, %s148
    %p150 = scmp.eq.s32.totalorder %s17, 0
    %p151 = por %p149, %p150
    %s153 = sadd.s32 %s152, 1
    %p156 = scmp.eq.s32.totalorder %s11, 3
    %p157 = scmp.ne.s32.totalorder %s152, %s154
    %p158 = scmp.eq.s32.totalorder %s11, 0
    %p159 = por %p157, %p158
    %p160 = scmp.ne.s32.totalorder %s152, %s154
    %p161 = scmp.eq.s32.totalorder %s16, 3
    %p162 = por %p160, %p161
    %p163 = scmp.ne.s32.totalorder %s154, %s155
    %p164 = scmp.eq.s32.totalorder %s16, 0
    %p165 = por %p163, %p164
    %p166 = scmp.ne.s32.totalorder %s154, %s155
    %p167 = scmp.eq.s32.totalorder %s17, 3
    %p168 = por %p166, %p167
    %p170 = scmp.ne.s32.totalorder %s155, %s169
    %p171 = scmp.eq.s32.totalorder %s17, 0
    %p172 = por %p170, %p171
    %s173 = ssub.s32 %s18, %s30
    %s174 = ssub.s32 %s19, %s26
    %s175 = sor.u32 %s173, %s174
    %p176 = scmp.eq.s32.totalorder %s175, 0
    %s178 = sadd.s32 %s177, 1
    %s179 = scalar_select %p176, %s177, %s178
    %p182 = pneg %p176
    %p183 = scmp.eq.s32.totalorder %s11, 3
    %p184 = por %p182, %p183
    %p185 = scmp.ne.s32.totalorder %s177, %s180
    %p186 = scmp.eq.s32.totalorder %s11, 0
    %p187 = por %p185, %p186
    %p188 = scmp.ne.s32.totalorder %s177, %s180
    %p189 = scmp.eq.s32.totalorder %s16, 3
    %p190 = por %p188, %p189
    %p191 = scmp.ne.s32.totalorder %s180, %s181
    %p192 = scmp.eq.s32.totalorder %s16, 0
    %p193 = por %p191, %p192
    %p194 = scmp.ne.s32.totalorder %s180, %s181
    %p195 = scmp.eq.s32.totalorder %s17, 3
    %p196 = por %p194, %p195
    %p198 = scmp.ne.s32.totalorder %s181, %s197
    %p199 = scmp.eq.s32.totalorder %s17, 0
    %p200 = por %p198, %p199
    %p201 = scmp.le.s32.totalorder 1, %s11
    %p202 = scmp.lt.s32.totalorder %s11, 5
    %p203 = pnand %p201, %p202
    %p204 = pneg %p203
    // Predicated region
    $region9: #{rednet_forward.10} parent=5 // pred_check
      _
    $region10: #{rednet_forward.10} parent=5 // pred_check_branch
      %206 = sbr.rel (%p203) target = $region12
    $region11: #{rednet_forward.10} parent=5 // pred_region
      %s207 = ssub.s32 %s11, 1
      // Predicated region
      $region13: #{rednet_forward.10} parent=11 // pred_check
        %p208 = pneg %p144
      $region14: #{rednet_forward.10} parent=11 // pred_check_branch
        %210 = sbr.rel (%p208) target = $region16
      $region15: #{rednet_forward.10} parent=11 // pred_region
        _
      $region16: #{rednet_forward.10} parent=11 // pred_fallthru
        _
      // Predicated region
      $region17: #{rednet_forward.10} parent=11 // pred_check
        %p211 = pneg %p165
      $region18: #{rednet_forward.10} parent=11 // pred_check_branch
        %213 = sbr.rel (%p211) target = $region20
      $region19: #{rednet_forward.10} parent=11 // pred_region
        _
      $region20: #{rednet_forward.10} parent=11 // pred_fallthru
        _
    $region12: #{rednet_forward.10} parent=5 // pred_fallthru
      _
    %p214 = scmp.lt.s32.totalorder %s11, 4
    // Predicated region
    $region21: #{rednet_forward.10} parent=5 // pred_check
      %p215 = pneg %p214
    $region22: #{rednet_forward.10} parent=5 // pred_check_branch
      %217 = sbr.rel (%p215) target = $region24
    $region23: #{rednet_forward.10} parent=5 // pred_region
      // Predicated region
      $region25: #{rednet_forward.10} parent=23 // pred_check
        %p218 = pneg %p45
      $region26: #{rednet_forward.10} parent=23 // pred_check_branch
        %220 = sbr.rel (%p218) target = $region28
      $region27: #{rednet_forward.10} parent=23 // pred_region
        %s221 = smul.u32 8, %s19
        %p222 = scmp.lt.s32.totalorder %s18, 1
        %s223 = scalar_select %p222, %s18, 1
        %p224 = scmp.lt.s32.totalorder %s221, 15
        %s225 = scalar_select %p224, %s221, 15
        %s226 = smul.addr %s225, 3
        %s227 = smul.addr %s223, 48
        %s228 = sadd.s32 %s226, %s227
        %s229 = smul.addr %s228, 4
        %s230 = scalar_lea.vmem %s0, %s229
        %s231 = smul.u32 8, %s19
      $region28: #{rednet_forward.10} parent=23 // pred_fallthru
        _
      // Predicated region
      $region29: #{rednet_forward.10} parent=23 // pred_check
        %p232 = pneg %p81
      $region30: #{rednet_forward.10} parent=23 // pred_check_branch
        %234 = sbr.rel (%p232) target = $region32
      $region31: #{rednet_forward.10} parent=23 // pred_region
        %s235 = smul.u32 %s19, 8
        %s236 = ssub.s32 %s235, 1
        %p237 = scmp.gt.s32.totalorder %s236, 0
        %s238 = scalar_select %p237, %s236, 0
        %p239 = scmp.lt.s32.totalorder %s18, 1
        %s240 = scalar_select %p239, %s18, 1
        %p241 = scmp.lt.s32.totalorder %s238, 15
        %s242 = scalar_select %p241, %s238, 15
        %s243 = smul.addr %s242, 3
        %s244 = smul.addr %s240, 48
        %s245 = sadd.s32 %s243, %s244
        %s246 = smul.addr %s245, 4
        %s247 = scalar_lea.vmem %s1, %s246
        %s248 = smul.u32 %s19, 8
        %s249 = ssub.s32 %s248, 1
        %p250 = scmp.gt.s32.totalorder %s249, 0
        %s251 = scalar_select %p250, %s249, 0
      $region32: #{rednet_forward.10} parent=23 // pred_fallthru
        _
      // Predicated region
      $region33: #{rednet_forward.10} parent=23 // pred_check
        %p252 = pneg %p117
      $region34: #{rednet_forward.10} parent=23 // pred_check_branch
        %254 = sbr.rel (%p252) target = $region36
      $region35: #{rednet_forward.10} parent=23 // pred_region
        %s255 = sadd.s32 %s19, 1
        %s256 = smul.u32 %s255, 8
        %p257 = scmp.lt.s32.totalorder %s256, 15
        %s258 = scalar_select %p257, %s256, 15
        %p259 = scmp.lt.s32.totalorder %s18, 1
        %s260 = scalar_select %p259, %s18, 1
        %p261 = scmp.lt.s32.totalorder %s258, 15
        %s262 = scalar_select %p261, %s258, 15
        %s263 = smul.addr %s262, 3
        %s264 = smul.addr %s260, 48
        %s265 = sadd.s32 %s263, %s264
        %s266 = smul.addr %s265, 4
        %s267 = scalar_lea.vmem %s2, %s266
        %s268 = sadd.s32 %s19, 1
        %s269 = smul.u32 %s268, 8
        %p270 = scmp.lt.s32.totalorder %s269, 15
        %s271 = scalar_select %p270, %s269, 15
      $region36: #{rednet_forward.10} parent=23 // pred_fallthru
        _
    $region24: #{rednet_forward.10} parent=5 // pred_fallthru
      _
    %p272 = scmp.le.s32.totalorder 1, %s11
    %p273 = scmp.lt.s32.totalorder %s11, 5
    %p274 = pnand %p272, %p273
    %p275 = pneg %p274
    // Predicated region
    $region37: #{rednet_forward.10} parent=5 // pred_check
      _
    $region38: #{rednet_forward.10} parent=5 // pred_check_branch
      %277 = sbr.rel (%p274) target = $region40
    $region39: #{rednet_forward.10} parent=5 // pred_region
      %s278 = ssub.s32 %s11, 1
      %s279 = smul.u32 8, %s21
      %p280 = scmp.lt.s32.totalorder %s20, 1
      %s281 = scalar_select %p280, %s20, 1
      %p282 = scmp.lt.s32.totalorder %s279, 15
      %s283 = scalar_select %p282, %s279, 15
      %s284 = smul.addr %s283, 3
      %s285 = smul.addr %s281, 48
      %s286 = sadd.s32 %s284, %s285
      %s287 = smul.addr %s286, 4
      %s288 = scalar_lea.vmem %s0, %s287
      %p289 = pneg %p51
      %p290 = pneg %p48
      %s291 = smul.u32 %s21, 8
      %s292 = ssub.s32 %s291, 1
      %p293 = scmp.gt.s32.totalorder %s292, 0
      %s294 = scalar_select %p293, %s292, 0
      %p295 = scmp.lt.s32.totalorder %s20, 1
      %s296 = scalar_select %p295, %s20, 1
      %p297 = scmp.lt.s32.totalorder %s294, 15
      %s298 = scalar_select %p297, %s294, 15
      %s299 = smul.addr %s298, 3
      %s300 = smul.addr %s296, 48
      %s301 = sadd.s32 %s299, %s300
      %s302 = smul.addr %s301, 4
      %s303 = scalar_lea.vmem %s1, %s302
      %p304 = pneg %p87
      %p305 = pneg %p84
      %s306 = sadd.s32 %s21, 1
      %s307 = smul.u32 %s306, 8
      %p308 = scmp.lt.s32.totalorder %s307, 15
      %s309 = scalar_select %p308, %s307, 15
      %p310 = scmp.lt.s32.totalorder %s20, 1
      %s311 = scalar_select %p310, %s20, 1
      %p312 = scmp.lt.s32.totalorder %s309, 15
      %s313 = scalar_select %p312, %s309, 15
      %s314 = smul.addr %s313, 3
      %s315 = smul.addr %s311, 48
      %s316 = sadd.s32 %s314, %s315
      %s317 = smul.addr %s316, 4
      %s318 = scalar_lea.vmem %s2, %s317
      %p319 = pneg %p123
      %p320 = pneg %p120
      %p321 = pneg %p144
      %p322 = pneg %p141
      %p323 = pneg %p165
      %p324 = pneg %p162
      %p325 = pneg %p193
      %p326 = pneg %p190
      %s327 = smul.u32 8, %s21
      %p328 = scmp.lt.s32.totalorder %s20, 1
      %s329 = scalar_select %p328, %s20, 1
      %p330 = scmp.lt.s32.totalorder %s327, 15
      %s331 = scalar_select %p330, %s327, 15
      %s332 = smul.addr %s331, 3
      %s333 = smul.addr %s329, 48
      %s334 = sadd.s32 %s332, %s333
      %s335 = smul.addr %s334, 4
      %s336 = scalar_lea.vmem %s5, %s335
      %s337 = smul.u32 8, %s21
      %p338 = scmp.lt.s32.totalorder %s20, 1
      %s339 = scalar_select %p338, %s20, 1
      %p340 = scmp.lt.s32.totalorder %s337, 15
      %s341 = scalar_select %p340, %s337, 15
      %s342 = smul.addr %s341, 3
      %s343 = smul.addr %s339, 48
      %s344 = sadd.s32 %s342, %s343
      %s345 = smul.addr %s344, 4
      %s346 = scalar_lea.vmem %s0, %s345
      %s347 = smul.u32 8, %s21
      %s348 = smul.u32 %s21, 8
      %s349 = ssub.s32 %s348, 1
      %p350 = scmp.gt.s32.totalorder %s349, 0
      %s351 = scalar_select %p350, %s349, 0
      %p352 = scmp.lt.s32.totalorder %s20, 1
      %s353 = scalar_select %p352, %s20, 1
      %p354 = scmp.lt.s32.totalorder %s351, 15
      %s355 = scalar_select %p354, %s351, 15
      %s356 = smul.addr %s355, 3
      %s357 = smul.addr %s353, 48
      %s358 = sadd.s32 %s356, %s357
      %s359 = smul.addr %s358, 4
      %s360 = scalar_lea.vmem %s1, %s359
      %s361 = smul.u32 %s21, 8
      %s362 = ssub.s32 %s361, 1
      %p363 = scmp.gt.s32.totalorder %s362, 0
      %s364 = scalar_select %p363, %s362, 0
      %s365 = sadd.s32 %s21, 1
      %s366 = smul.u32 %s365, 8
      %p367 = scmp.lt.s32.totalorder %s366, 15
      %s368 = scalar_select %p367, %s366, 15
      %p369 = scmp.lt.s32.totalorder %s20, 1
      %s370 = scalar_select %p369, %s20, 1
      %p371 = scmp.lt.s32.totalorder %s368, 15
      %s372 = scalar_select %p371, %s368, 15
      %s373 = smul.addr %s372, 3
      %s374 = smul.addr %s370, 48
      %s375 = sadd.s32 %s373, %s374
      %s376 = smul.addr %s375, 4
      %s377 = scalar_lea.vmem %s2, %s376
      %s378 = sadd.s32 %s21, 1
      %s379 = smul.u32 %s378, 8
      %p380 = scmp.lt.s32.totalorder %s379, 15
      %s381 = scalar_select %p380, %s379, 15
      %s382 = smul.u32 8, %s21
      %p383 = scmp.lt.s32.totalorder %s20, 1
      %s384 = scalar_select %p383, %s20, 1
      %p385 = scmp.lt.s32.totalorder %s382, 15
      %s386 = scalar_select %p385, %s382, 15
      %s387 = smul.addr %s386, 3
      %s388 = smul.addr %s384, 48
      %s389 = sadd.s32 %s387, %s388
      %s390 = smul.addr %s389, 4
      %s391 = scalar_lea.vmem %s5, %s390
      %s392 = smul.u32 8, %s21
      %v394 = vld [vmem:[%s346] sm:$0xf]
      %v395 = vld [vmem:[%s346 + $0x4] sm:$0xf]
      %v396 = vld [vmem:[%s346 + $0x8] sm:$0x1]
      %v397 = vld [vmem:[%s346 + $0xc] sm:$0xf]
      %v398 = vld [vmem:[%s346 + $0x10] sm:$0xf]
      %v399 = vld [vmem:[%s346 + $0x14] sm:$0x1]
      %v400 = vld [vmem:[%s346 + $0x18] sm:$0xf]
      %v401 = vld [vmem:[%s346 + $0x1c] sm:$0xf]
      %v402 = vld [vmem:[%s346 + $0x20] sm:$0x1]
      %v403 = vld [vmem:[%s346 + $0x24] sm:$0xf]
      %v404 = vld [vmem:[%s346 + $0x28] sm:$0xf]
      %v405 = vld [vmem:[%s346 + $0x2c] sm:$0x1]
      %v406 = vld [vmem:[%s346 + $0x30] sm:$0xf]
      %v407 = vld [vmem:[%s346 + $0x34] sm:$0xf]
      %v408 = vld [vmem:[%s346 + $0x38] sm:$0x1]
      %v409 = vld [vmem:[%s346 + $0x3c] sm:$0xf]
      %v410 = vld [vmem:[%s346 + $0x40] sm:$0xf]
      %v411 = vld [vmem:[%s346 + $0x44] sm:$0x1]
      %v412 = vld [vmem:[%s346 + $0x48] sm:$0xf]
      %v413 = vld [vmem:[%s346 + $0x4c] sm:$0xf]
      %v414 = vld [vmem:[%s346 + $0x50] sm:$0x1]
      %v415 = vld [vmem:[%s346 + $0x54] sm:$0xf]
      %v416 = vld [vmem:[%s346 + $0x58] sm:$0xf]
      %v417 = vld [vmem:[%s346 + $0x5c] sm:$0x1]
      %p418 = scmp.gt.s32.totalorder %s21, 0
      %s419 = scalar_select %p418, 1, 0
      %s420 = scvt.s32.f32 %s419
      %p421 = scmp.lt.s32.totalorder %s21, 1
      %s422 = scalar_select %p421, 1, 0
      %s423 = scvt.s32.f32 %s422
      %v424 = vld [vmem:[%s360] sm:$0xf]
      %v425 = vld [vmem:[%s360 + $0x4] sm:$0xf]
      %v426 = vld [vmem:[%s360 + $0x8] sm:$0x1]
      %v427 = vunpack.c.l.bf16 %v424
      %v428 = vunpack.c.l.bf16 %v425
      %v429 = vunpack.c.l.bf16 %v426
      %v430 = vstv %s420
      %v431 = vmul.f32 %v427, %v430
      %v432 = vmul.f32 %v428, %v430
      %v433 = vmul.f32 %v429, %v430
      %v434 = vpack.c.bf16 %v431, %v431
      %v435 = vpack.c.bf16 %v432, %v432
      %v436 = vpack.c.bf16 %v433, %v433
      %v437 = vld [vmem:[%s377] sm:$0xf]
      %v438 = vld [vmem:[%s377 + $0x4] sm:$0xf]
      %v439 = vld [vmem:[%s377 + $0x8] sm:$0x1]
      %v440 = vunpack.c.l.bf16 %v437
      %v441 = vunpack.c.l.bf16 %v438
      %v442 = vunpack.c.l.bf16 %v439
      %v443 = vstv %s423
      %v444 = vmul.f32 %v440, %v443
      %v445 = vmul.f32 %v441, %v443
      %v446 = vmul.f32 %v442, %v443
      %v447 = vpack.c.bf16 %v444, %v444
      %v448 = vpack.c.bf16 %v445, %v445
      %v449 = vpack.c.bf16 %v446, %v446
      %v450 = vld [vmem:[%s3] sm:$0x3]
      %s451 = scalar_lea.vmem %s3, 6
      %v452 = vld [vmem:[%s451] sm:$0x3]
      %v469 = vunpack.c.l.b16 %v394
      %v470 = vunpack.c.l.b16 %v395
      %v471 = vunpack.c.l.b16 %v397
      %v472 = vunpack.c.l.b16 %v398
      %v473 = vunpack.c.l.b16 %v400
      %v474 = vunpack.c.l.b16 %v401
      %v475 = vunpack.c.l.b16 %v403
      %v476 = vunpack.c.l.b16 %v404
      %v477 = vunpack.c.l.b16 %v406
      %v478 = vunpack.c.l.b16 %v407
      %v479 = vunpack.c.l.b16 %v409
      %v480 = vunpack.c.l.b16 %v410
      %v481 = vunpack.c.l.b16 %v412
      %v482 = vunpack.c.l.b16 %v413
      %v483 = vunpack.c.l.b16 %v415
      %v484 = vunpack.c.l.b16 %v416
      %v485 = vpack.c.b16 %v470, %v469
      %v486 = vpack.c.b16 %v472, %v471
      %v487 = vpack.c.b16 %v474, %v473
      %v488 = vpack.c.b16 %v476, %v475
      %v489 = vpack.c.b16 %v478, %v477
      %v490 = vpack.c.b16 %v480, %v479
      %v491 = vpack.c.b16 %v482, %v481
      %v492 = vpack.c.b16 %v484, %v483
      %vm493 = vcmask 23552
      %v495 = vsel %vm493, %v485, 0
      %v498 = vsel %vm493, %v486, 0
      %v501 = vsel %vm493, %v487, 0
      %v504 = vsel %vm493, %v488, 0
      %v507 = vsel %vm493, %v489, 0
      %v510 = vsel %vm493, %v490, 0
      %v513 = vsel %vm493, %v491, 0
      %v516 = vsel %vm493, %v492, 0
      %vm518 = vcmask 1040384
      %vm519 = vcmask 1041408
      %v520 = vsel %vm518, 4294967295, 65535
      %v521 = vsel %vm519, %v520, 0
      %v523 = vand.u32 %v452, %v521
      %525 = vmatpush.bf16.msra.mxu0 0
      %526 = vmatpush.bf16.msra.mxu0 0
      %527 = vmatpush.bf16.msra.mxu0 0
      %528 = vmatpush.bf16.msra.mxu0 0
      %529 = vmatpush.bf16.msra.mxu0 0
      %530 = vmatpush.bf16.msra.mxu0 0
      %531 = vmatpush.bf16.msra.mxu0 0
      %532 = vmatpush.bf16.msra.mxu0 %v523
      %533 = vmatmul.bf16.gmra.mxu0 %v495
      %v534 = vpop.f32.mrf.mxu0
      %v535 = vadd.f32 0.0, %v534
      %v536 = vpop.f32.mrf.mxu0
      %v537 = vadd.f32 0.0, %v536
      %538 = vmatmul.bf16.gmra.mxu0 %v498
      %v539 = vpop.f32.mrf.mxu0
      %v540 = vadd.f32 0.0, %v539
      %v541 = vpop.f32.mrf.mxu0
      %v542 = vadd.f32 0.0, %v541
      %543 = vmatmul.bf16.gmra.mxu0 %v501
      %v544 = vpop.f32.mrf.mxu0
      %v545 = vadd.f32 0.0, %v544
      %v546 = vpop.f32.mrf.mxu0
      %v547 = vadd.f32 0.0, %v546
      %548 = vmatmul.bf16.gmra.mxu0 %v504
      %v549 = vpop.f32.mrf.mxu0
      %v550 = vadd.f32 0.0, %v549
      %v551 = vpop.f32.mrf.mxu0
      %v552 = vadd.f32 0.0, %v551
      %553 = vmatmul.bf16.gmra.mxu0 %v507
      %v554 = vpop.f32.mrf.mxu0
      %v555 = vadd.f32 0.0, %v554
      %v556 = vpop.f32.mrf.mxu0
      %v557 = vadd.f32 0.0, %v556
      %558 = vmatmul.bf16.gmra.mxu0 %v510
      %v559 = vpop.f32.mrf.mxu0
      %v560 = vadd.f32 0.0, %v559
      %v561 = vpop.f32.mrf.mxu0
      %v562 = vadd.f32 0.0, %v561
      %563 = vmatmul.bf16.gmra.mxu0 %v513
      %v564 = vpop.f32.mrf.mxu0
      %v565 = vadd.f32 0.0, %v564
      %v566 = vpop.f32.mrf.mxu0
      %v567 = vadd.f32 0.0, %v566
      %568 = vmatmul.bf16.gmra.mxu0 %v516
      %v569 = vpop.f32.mrf.mxu0
      %v570 = vadd.f32 0.0, %v569
      %v571 = vpop.f32.mrf.mxu0
      %v572 = vadd.f32 0.0, %v571
      %573 = vdwg.mxu0
      %v576 = vunpack.c.l.b16 %v434
      %v577 = vunpack.c.l.b16 %v435
      %v578 = vpack.c.b16 %v577, %v576
      %v580 = vsel %vm493, %v578, 0
      %v583 = vand.u32 %v450, %v521
      %585 = vmatpush.bf16.msra.mxu0 0
      %586 = vmatpush.bf16.msra.mxu0 0
      %587 = vmatpush.bf16.msra.mxu0 0
      %588 = vmatpush.bf16.msra.mxu0 0
      %589 = vmatpush.bf16.msra.mxu0 0
      %590 = vmatpush.bf16.msra.mxu0 0
      %591 = vmatpush.bf16.msra.mxu0 0
      %592 = vmatpush.bf16.msra.mxu0 %v583
      %593 = vmatmul.bf16.gmra.mxu0 %v580
      %v594 = vpop.f32.mrf.mxu0
      %v595 = vadd.f32 %v535, %v594
      %v596 = vpop.f32.mrf.mxu0
      %v597 = vadd.f32 %v537, %v596
      %598 = vmatmul.bf16.gmra.mxu0 %v495
      %v599 = vpop.f32.mrf.mxu0
      %v600 = vadd.f32 %v540, %v599
      %v601 = vpop.f32.mrf.mxu0
      %v602 = vadd.f32 %v542, %v601
      %603 = vmatmul.bf16.gmra.mxu0 %v498
      %v604 = vpop.f32.mrf.mxu0
      %v605 = vadd.f32 %v545, %v604
      %v606 = vpop.f32.mrf.mxu0
      %v607 = vadd.f32 %v547, %v606
      %608 = vmatmul.bf16.gmra.mxu0 %v501
      %v609 = vpop.f32.mrf.mxu0
      %v610 = vadd.f32 %v550, %v609
      %v611 = vpop.f32.mrf.mxu0
      %v612 = vadd.f32 %v552, %v611
      %613 = vmatmul.bf16.gmra.mxu0 %v504
      %v614 = vpop.f32.mrf.mxu0
      %v615 = vadd.f32 %v555, %v614
      %v616 = vpop.f32.mrf.mxu0
      %v617 = vadd.f32 %v557, %v616
      %618 = vmatmul.bf16.gmra.mxu0 %v507
      %v619 = vpop.f32.mrf.mxu0
      %v620 = vadd.f32 %v560, %v619
      %v621 = vpop.f32.mrf.mxu0
      %v622 = vadd.f32 %v562, %v621
      %623 = vmatmul.bf16.gmra.mxu0 %v510
      %v624 = vpop.f32.mrf.mxu0
      %v625 = vadd.f32 %v565, %v624
      %v626 = vpop.f32.mrf.mxu0
      %v627 = vadd.f32 %v567, %v626
      %628 = vmatmul.bf16.gmra.mxu0 %v513
      %v629 = vpop.f32.mrf.mxu0
      %v630 = vadd.f32 %v570, %v629
      %v631 = vpop.f32.mrf.mxu0
      %v632 = vadd.f32 %v572, %v631
      %633 = vdwg.mxu0
      %s634 = scalar_lea.vmem %s3, 12
      %v635 = vld [vmem:[%s634] sm:$0x3]
      %v638 = vunpack.c.l.b16 %v447
      %v639 = vunpack.c.l.b16 %v448
      %v640 = vpack.c.b16 %v639, %v638
      %v642 = vsel %vm493, %v640, 0
      %v645 = vand.u32 %v635, %v521
      %647 = vmatpush.bf16.msra.mxu0 0
      %648 = vmatpush.bf16.msra.mxu0 0
      %649 = vmatpush.bf16.msra.mxu0 0
      %650 = vmatpush.bf16.msra.mxu0 0
      %651 = vmatpush.bf16.msra.mxu0 0
      %652 = vmatpush.bf16.msra.mxu0 0
      %653 = vmatpush.bf16.msra.mxu0 0
      %654 = vmatpush.bf16.msra.mxu0 %v645
      %655 = vmatmul.bf16.gmra.mxu0 %v498
      %v656 = vpop.f32.mrf.mxu0
      %v657 = vadd.f32 0.0, %v656
      %v658 = vpop.f32.mrf.mxu0
      %v659 = vadd.f32 0.0, %v658
      %660 = vmatmul.bf16.gmra.mxu0 %v501
      %v661 = vpop.f32.mrf.mxu0
      %v662 = vadd.f32 0.0, %v661
      %v663 = vpop.f32.mrf.mxu0
      %v664 = vadd.f32 0.0, %v663
      %665 = vmatmul.bf16.gmra.mxu0 %v504
      %v666 = vpop.f32.mrf.mxu0
      %v667 = vadd.f32 0.0, %v666
      %v668 = vpop.f32.mrf.mxu0
      %v669 = vadd.f32 0.0, %v668
      %670 = vmatmul.bf16.gmra.mxu0 %v507
      %v671 = vpop.f32.mrf.mxu0
      %v672 = vadd.f32 0.0, %v671
      %v673 = vpop.f32.mrf.mxu0
      %v674 = vadd.f32 0.0, %v673
      %675 = vmatmul.bf16.gmra.mxu0 %v510
      %v676 = vpop.f32.mrf.mxu0
      %v677 = vadd.f32 0.0, %v676
      %v678 = vpop.f32.mrf.mxu0
      %v679 = vadd.f32 0.0, %v678
      %680 = vmatmul.bf16.gmra.mxu0 %v513
      %v681 = vpop.f32.mrf.mxu0
      %v682 = vadd.f32 0.0, %v681
      %v683 = vpop.f32.mrf.mxu0
      %v684 = vadd.f32 0.0, %v683
      %685 = vmatmul.bf16.gmra.mxu0 %v516
      %v686 = vpop.f32.mrf.mxu0
      %v687 = vadd.f32 0.0, %v686
      %v688 = vpop.f32.mrf.mxu0
      %v689 = vadd.f32 0.0, %v688
      %690 = vmatmul.bf16.gmra.mxu0 %v642
      %v691 = vpop.f32.mrf.mxu0
      %v692 = vadd.f32 0.0, %v691
      %v693 = vpop.f32.mrf.mxu0
      %v694 = vadd.f32 0.0, %v693
      %695 = vdwg.mxu0
      %v696 = vadd.f32 %v595, %v657
      %v697 = vadd.f32 %v597, %v659
      %v698 = vadd.f32 %v600, %v662
      %v699 = vadd.f32 %v602, %v664
      %v700 = vadd.f32 %v605, %v667
      %v701 = vadd.f32 %v607, %v669
      %v702 = vadd.f32 %v610, %v672
      %v703 = vadd.f32 %v612, %v674
      %v704 = vadd.f32 %v615, %v677
      %v705 = vadd.f32 %v617, %v679
      %v706 = vadd.f32 %v620, %v682
      %v707 = vadd.f32 %v622, %v684
      %v708 = vadd.f32 %v625, %v687
      %v709 = vadd.f32 %v627, %v689
      %v710 = vadd.f32 %v630, %v692
      %v711 = vadd.f32 %v632, %v694
      %vm712 = vsmask.f32 3328
      %vm713 = vsmask.f32 7440
      %vm714 = vmor %vm712, %vm713
      %v716 = vshrl.u32 %v434, 16
      %v718 = vrot.slane %v716, 4
      %v719 = vshll.u32 %v434, 16
      %v721 = vrot.slane %v719, 5
      %v722 = vor.u32 %v718, %v721
      %v723 = vrot.slane %v722, 4
      %v725 = vshll.u32 %v435, 16
      %v727 = vrot.slane %v725, 5
      %v728 = vsel %vm714, %v723, %v727
      %v729 = vshrl.u32 %v435, 16
      %v731 = vrot.slane %v729, 4
      %v732 = vor.u32 %v731, %v727
      %v733 = vrot.slane %v732, 4
      %v735 = vshll.u32 %v436, 16
      %v737 = vrot.slane %v735, 5
      %v738 = vsel %vm714, %v733, %v737
      %v740 = vshrl.u32 %v394, 16
      %v742 = vrot.slane %v740, 4
      %v743 = vshll.u32 %v394, 16
      %v745 = vrot.slane %v743, 5
      %v746 = vor.u32 %v742, %v745
      %v747 = vrot.slane %v746, 4
      %v749 = vshll.u32 %v395, 16
      %v751 = vrot.slane %v749, 5
      %v752 = vsel %vm714, %v747, %v751
      %v753 = vshrl.u32 %v395, 16
      %v755 = vrot.slane %v753, 4
      %v756 = vor.u32 %v755, %v751
      %v757 = vrot.slane %v756, 4
      %v759 = vshll.u32 %v396, 16
      %v761 = vrot.slane %v759, 5
      %v762 = vsel %vm714, %v757, %v761
      %v764 = vshrl.u32 %v397, 16
      %v766 = vrot.slane %v764, 4
      %v767 = vshll.u32 %v397, 16
      %v769 = vrot.slane %v767, 5
      %v770 = vor.u32 %v766, %v769
      %v771 = vrot.slane %v770, 4
      %v773 = vshll.u32 %v398, 16
      %v775 = vrot.slane %v773, 5
      %v776 = vsel %vm714, %v771, %v775
      %v777 = vshrl.u32 %v398, 16
      %v779 = vrot.slane %v777, 4
      %v780 = vor.u32 %v779, %v775
      %v781 = vrot.slane %v780, 4
      %v783 = vshll.u32 %v399, 16
      %v785 = vrot.slane %v783, 5
      %v786 = vsel %vm714, %v781, %v785
      %v788 = vshrl.u32 %v400, 16
      %v790 = vrot.slane %v788, 4
      %v791 = vshll.u32 %v400, 16
      %v793 = vrot.slane %v791, 5
      %v794 = vor.u32 %v790, %v793
      %v795 = vrot.slane %v794, 4
      %v797 = vshll.u32 %v401, 16
      %v799 = vrot.slane %v797, 5
      %v800 = vsel %vm714, %v795, %v799
      %v801 = vshrl.u32 %v401, 16
      %v803 = vrot.slane %v801, 4
      %v804 = vor.u32 %v803, %v799
      %v805 = vrot.slane %v804, 4
      %v807 = vshll.u32 %v402, 16
      %v809 = vrot.slane %v807, 5
      %v810 = vsel %vm714, %v805, %v809
      %v812 = vshrl.u32 %v403, 16
      %v814 = vrot.slane %v812, 4
      %v815 = vshll.u32 %v403, 16
      %v817 = vrot.slane %v815, 5
      %v818 = vor.u32 %v814, %v817
      %v819 = vrot.slane %v818, 4
      %v821 = vshll.u32 %v404, 16
      %v823 = vrot.slane %v821, 5
      %v824 = vsel %vm714, %v819, %v823
      %v825 = vshrl.u32 %v404, 16
      %v827 = vrot.slane %v825, 4
      %v828 = vor.u32 %v827, %v823
      %v829 = vrot.slane %v828, 4
      %v831 = vshll.u32 %v405, 16
      %v833 = vrot.slane %v831, 5
      %v834 = vsel %vm714, %v829, %v833
      %v836 = vshrl.u32 %v406, 16
      %v838 = vrot.slane %v836, 4
      %v839 = vshll.u32 %v406, 16
      %v841 = vrot.slane %v839, 5
      %v842 = vor.u32 %v838, %v841
      %v843 = vrot.slane %v842, 4
      %v845 = vshll.u32 %v407, 16
      %v847 = vrot.slane %v845, 5
      %v848 = vsel %vm714, %v843, %v847
      %v849 = vshrl.u32 %v407, 16
      %v851 = vrot.slane %v849, 4
      %v852 = vor.u32 %v851, %v847
      %v853 = vrot.slane %v852, 4
      %v855 = vshll.u32 %v408, 16
      %v857 = vrot.slane %v855, 5
      %v858 = vsel %vm714, %v853, %v857
      %v860 = vshrl.u32 %v409, 16
      %v862 = vrot.slane %v860, 4
      %v863 = vshll.u32 %v409, 16
      %v865 = vrot.slane %v863, 5
      %v866 = vor.u32 %v862, %v865
      %v867 = vrot.slane %v866, 4
      %v869 = vshll.u32 %v410, 16
      %v871 = vrot.slane %v869, 5
      %v872 = vsel %vm714, %v867, %v871
      %v873 = vshrl.u32 %v410, 16
      %v875 = vrot.slane %v873, 4
      %v876 = vor.u32 %v875, %v871
      %v877 = vrot.slane %v876, 4
      %v879 = vshll.u32 %v411, 16
      %v881 = vrot.slane %v879, 5
      %v882 = vsel %vm714, %v877, %v881
      %v884 = vshrl.u32 %v412, 16
      %v886 = vrot.slane %v884, 4
      %v887 = vshll.u32 %v412, 16
      %v889 = vrot.slane %v887, 5
      %v890 = vor.u32 %v886, %v889
      %v891 = vrot.slane %v890, 4
      %v893 = vshll.u32 %v413, 16
      %v895 = vrot.slane %v893, 5
      %v896 = vsel %vm714, %v891, %v895
      %v897 = vshrl.u32 %v413, 16
      %v899 = vrot.slane %v897, 4
      %v900 = vor.u32 %v899, %v895
      %v901 = vrot.slane %v900, 4
      %v903 = vshll.u32 %v414, 16
      %v905 = vrot.slane %v903, 5
      %v906 = vsel %vm714, %v901, %v905
      %s907 = scalar_lea.vmem %s3, 2
      %v908 = vld [vmem:[%s907] sm:$0x3]
      %v909 = vunpack.c.l.b16 %v728
      %v910 = vunpack.c.l.b16 %v738
      %v911 = vunpack.c.l.b16 %v752
      %v912 = vunpack.c.l.b16 %v762
      %v913 = vunpack.c.l.b16 %v776
      %v914 = vunpack.c.l.b16 %v786
      %v915 = vunpack.c.l.b16 %v800
      %v916 = vunpack.c.l.b16 %v810
      %v917 = vunpack.c.l.b16 %v824
      %v918 = vunpack.c.l.b16 %v834
      %v919 = vunpack.c.l.b16 %v848
      %v920 = vunpack.c.l.b16 %v858
      %v921 = vunpack.c.l.b16 %v872
      %v922 = vunpack.c.l.b16 %v882
      %v923 = vunpack.c.l.b16 %v896
      %v924 = vunpack.c.l.b16 %v906
      %v925 = vpack.c.b16 %v910, %v909
      %v926 = vpack.c.b16 %v912, %v911
      %v927 = vpack.c.b16 %v914, %v913
      %v928 = vpack.c.b16 %v916, %v915
      %v929 = vpack.c.b16 %v918, %v917
      %v930 = vpack.c.b16 %v920, %v919
      %v931 = vpack.c.b16 %v922, %v921
      %v932 = vpack.c.b16 %v924, %v923
      %v934 = vsel %vm493, %v925, 0
      %v937 = vsel %vm493, %v926, 0
      %v940 = vsel %vm493, %v927, 0
      %v943 = vsel %vm493, %v928, 0
      %v946 = vsel %vm493, %v929, 0
      %v949 = vsel %vm493, %v930, 0
      %v952 = vsel %vm493, %v931, 0
      %v955 = vsel %vm493, %v932, 0
      %v958 = vand.u32 %v908, %v521
      %960 = vmatpush.bf16.msra.mxu0 0
      %961 = vmatpush.bf16.msra.mxu0 0
      %962 = vmatpush.bf16.msra.mxu0 0
      %963 = vmatpush.bf16.msra.mxu0 0
      %964 = vmatpush.bf16.msra.mxu0 0
      %965 = vmatpush.bf16.msra.mxu0 0
      %966 = vmatpush.bf16.msra.mxu0 0
      %967 = vmatpush.bf16.msra.mxu0 %v958
      %968 = vmatmul.bf16.gmra.mxu0 %v934
      %v969 = vpop.f32.mrf.mxu0
      %v970 = vadd.f32 0.0, %v969
      %v971 = vpop.f32.mrf.mxu0
      %v972 = vadd.f32 0.0, %v971
      %973 = vmatmul.bf16.gmra.mxu0 %v937
      %v974 = vpop.f32.mrf.mxu0
      %v975 = vadd.f32 0.0, %v974
      %v976 = vpop.f32.mrf.mxu0
      %v977 = vadd.f32 0.0, %v976
      %978 = vmatmul.bf16.gmra.mxu0 %v940
      %v979 = vpop.f32.mrf.mxu0
      %v980 = vadd.f32 0.0, %v979
      %v981 = vpop.f32.mrf.mxu0
      %v982 = vadd.f32 0.0, %v981
      %983 = vmatmul.bf16.gmra.mxu0 %v943
      %v984 = vpop.f32.mrf.mxu0
      %v985 = vadd.f32 0.0, %v984
      %v986 = vpop.f32.mrf.mxu0
      %v987 = vadd.f32 0.0, %v986
      %988 = vmatmul.bf16.gmra.mxu0 %v946
      %v989 = vpop.f32.mrf.mxu0
      %v990 = vadd.f32 0.0, %v989
      %v991 = vpop.f32.mrf.mxu0
      %v992 = vadd.f32 0.0, %v991
      %993 = vmatmul.bf16.gmra.mxu0 %v949
      %v994 = vpop.f32.mrf.mxu0
      %v995 = vadd.f32 0.0, %v994
      %v996 = vpop.f32.mrf.mxu0
      %v997 = vadd.f32 0.0, %v996
      %998 = vmatmul.bf16.gmra.mxu0 %v952
      %v999 = vpop.f32.mrf.mxu0
      %v1000 = vadd.f32 0.0, %v999
      %v1001 = vpop.f32.mrf.mxu0
      %v1002 = vadd.f32 0.0, %v1001
      %1003 = vmatmul.bf16.gmra.mxu0 %v955
      %v1004 = vpop.f32.mrf.mxu0
      %v1005 = vadd.f32 0.0, %v1004
      %v1006 = vpop.f32.mrf.mxu0
      %v1007 = vadd.f32 0.0, %v1006
      %1008 = vdwg.mxu0
      %v1009 = vadd.f32 %v696, %v970
      %v1010 = vadd.f32 %v697, %v972
      %v1011 = vadd.f32 %v698, %v975
      %v1012 = vadd.f32 %v699, %v977
      %v1013 = vadd.f32 %v700, %v980
      %v1014 = vadd.f32 %v701, %v982
      %v1015 = vadd.f32 %v702, %v985
      %v1016 = vadd.f32 %v703, %v987
      %v1017 = vadd.f32 %v704, %v990
      %v1018 = vadd.f32 %v705, %v992
      %v1019 = vadd.f32 %v706, %v995
      %v1020 = vadd.f32 %v707, %v997
      %v1021 = vadd.f32 %v708, %v1000
      %v1022 = vadd.f32 %v709, %v1002
      %v1023 = vadd.f32 %v710, %v1005
      %v1024 = vadd.f32 %v711, %v1007
      %v1026 = vshrl.u32 %v415, 16
      %v1028 = vrot.slane %v1026, 4
      %v1029 = vshll.u32 %v415, 16
      %v1031 = vrot.slane %v1029, 5
      %v1032 = vor.u32 %v1028, %v1031
      %v1033 = vrot.slane %v1032, 4
      %v1035 = vshll.u32 %v416, 16
      %v1037 = vrot.slane %v1035, 5
      %v1038 = vsel %vm714, %v1033, %v1037
      %v1039 = vshrl.u32 %v416, 16
      %v1041 = vrot.slane %v1039, 4
      %v1042 = vor.u32 %v1041, %v1037
      %v1043 = vrot.slane %v1042, 4
      %v1045 = vshll.u32 %v417, 16
      %v1047 = vrot.slane %v1045, 5
      %v1048 = vsel %vm714, %v1043, %v1047
      %s1049 = scalar_lea.vmem %s3, 8
      %v1050 = vld [vmem:[%s1049] sm:$0x3]
      %v1051 = vunpack.c.l.b16 %v1038
      %v1052 = vunpack.c.l.b16 %v1048
      %v1053 = vpack.c.b16 %v1052, %v1051
      %v1055 = vsel %vm493, %v1053, 0
      %v1058 = vand.u32 %v1050, %v521
      %1060 = vmatpush.bf16.msra.mxu0 0
      %1061 = vmatpush.bf16.msra.mxu0 0
      %1062 = vmatpush.bf16.msra.mxu0 0
      %1063 = vmatpush.bf16.msra.mxu0 0
      %1064 = vmatpush.bf16.msra.mxu0 0
      %1065 = vmatpush.bf16.msra.mxu0 0
      %1066 = vmatpush.bf16.msra.mxu0 0
      %1067 = vmatpush.bf16.msra.mxu0 %v1058
      %1068 = vmatmul.bf16.gmra.mxu0 %v937
      %v1069 = vpop.f32.mrf.mxu0
      %v1070 = vadd.f32 0.0, %v1069
      %v1071 = vpop.f32.mrf.mxu0
      %v1072 = vadd.f32 0.0, %v1071
      %1073 = vmatmul.bf16.gmra.mxu0 %v940
      %v1074 = vpop.f32.mrf.mxu0
      %v1075 = vadd.f32 0.0, %v1074
      %v1076 = vpop.f32.mrf.mxu0
      %v1077 = vadd.f32 0.0, %v1076
      %1078 = vmatmul.bf16.gmra.mxu0 %v943
      %v1079 = vpop.f32.mrf.mxu0
      %v1080 = vadd.f32 0.0, %v1079
      %v1081 = vpop.f32.mrf.mxu0
      %v1082 = vadd.f32 0.0, %v1081
      %1083 = vmatmul.bf16.gmra.mxu0 %v946
      %v1084 = vpop.f32.mrf.mxu0
      %v1085 = vadd.f32 0.0, %v1084
      %v1086 = vpop.f32.mrf.mxu0
      %v1087 = vadd.f32 0.0, %v1086
      %1088 = vmatmul.bf16.gmra.mxu0 %v949
      %v1089 = vpop.f32.mrf.mxu0
      %v1090 = vadd.f32 0.0, %v1089
      %v1091 = vpop.f32.mrf.mxu0
      %v1092 = vadd.f32 0.0, %v1091
      %1093 = vmatmul.bf16.gmra.mxu0 %v952
      %v1094 = vpop.f32.mrf.mxu0
      %v1095 = vadd.f32 0.0, %v1094
      %v1096 = vpop.f32.mrf.mxu0
      %v1097 = vadd.f32 0.0, %v1096
      %1098 = vmatmul.bf16.gmra.mxu0 %v955
      %v1099 = vpop.f32.mrf.mxu0
      %v1100 = vadd.f32 0.0, %v1099
      %v1101 = vpop.f32.mrf.mxu0
      %v1102 = vadd.f32 0.0, %v1101
      %1103 = vmatmul.bf16.gmra.mxu0 %v1055
      %v1104 = vpop.f32.mrf.mxu0
      %v1105 = vadd.f32 0.0, %v1104
      %v1106 = vpop.f32.mrf.mxu0
      %v1107 = vadd.f32 0.0, %v1106
      %1108 = vdwg.mxu0
      %v1109 = vadd.f32 %v1009, %v1070
      %v1110 = vadd.f32 %v1010, %v1072
      %v1111 = vadd.f32 %v1011, %v1075
      %v1112 = vadd.f32 %v1012, %v1077
      %v1113 = vadd.f32 %v1013, %v1080
      %v1114 = vadd.f32 %v1014, %v1082
      %v1115 = vadd.f32 %v1015, %v1085
      %v1116 = vadd.f32 %v1016, %v1087
      %v1117 = vadd.f32 %v1017, %v1090
      %v1118 = vadd.f32 %v1018, %v1092
      %v1119 = vadd.f32 %v1019, %v1095
      %v1120 = vadd.f32 %v1020, %v1097
      %v1121 = vadd.f32 %v1021, %v1100
      %v1122 = vadd.f32 %v1022, %v1102
      %v1123 = vadd.f32 %v1023, %v1105
      %v1124 = vadd.f32 %v1024, %v1107
      %v1126 = vshrl.u32 %v447, 16
      %v1128 = vrot.slane %v1126, 4
      %v1129 = vshll.u32 %v447, 16
      %v1131 = vrot.slane %v1129, 5
      %v1132 = vor.u32 %v1128, %v1131
      %v1133 = vrot.slane %v1132, 4
      %v1135 = vshll.u32 %v448, 16
      %v1137 = vrot.slane %v1135, 5
      %v1138 = vsel %vm714, %v1133, %v1137
      %v1139 = vshrl.u32 %v448, 16
      %v1141 = vrot.slane %v1139, 4
      %v1142 = vor.u32 %v1141, %v1137
      %v1143 = vrot.slane %v1142, 4
      %v1145 = vshll.u32 %v449, 16
      %v1147 = vrot.slane %v1145, 5
      %v1148 = vsel %vm714, %v1143, %v1147
      %s1149 = scalar_lea.vmem %s3, 14
      %v1150 = vld [vmem:[%s1149] sm:$0x3]
      %v1151 = vunpack.c.l.b16 %v1138
      %v1152 = vunpack.c.l.b16 %v1148
      %v1153 = vpack.c.b16 %v1152, %v1151
      %v1155 = vsel %vm493, %v1153, 0
      %v1158 = vand.u32 %v1150, %v521
      %1160 = vmatpush.bf16.msra.mxu0 0
      %1161 = vmatpush.bf16.msra.mxu0 0
      %1162 = vmatpush.bf16.msra.mxu0 0
      %1163 = vmatpush.bf16.msra.mxu0 0
      %1164 = vmatpush.bf16.msra.mxu0 0
      %1165 = vmatpush.bf16.msra.mxu0 0
      %1166 = vmatpush.bf16.msra.mxu0 0
      %1167 = vmatpush.bf16.msra.mxu0 %v1158
      %1168 = vmatmul.bf16.gmra.mxu0 %v940
      %v1169 = vpop.f32.mrf.mxu0
      %v1170 = vadd.f32 0.0, %v1169
      %v1171 = vpop.f32.mrf.mxu0
      %v1172 = vadd.f32 0.0, %v1171
      %1173 = vmatmul.bf16.gmra.mxu0 %v943
      %v1174 = vpop.f32.mrf.mxu0
      %v1175 = vadd.f32 0.0, %v1174
      %v1176 = vpop.f32.mrf.mxu0
      %v1177 = vadd.f32 0.0, %v1176
      %1178 = vmatmul.bf16.gmra.mxu0 %v946
      %v1179 = vpop.f32.mrf.mxu0
      %v1180 = vadd.f32 0.0, %v1179
      %v1181 = vpop.f32.mrf.mxu0
      %v1182 = vadd.f32 0.0, %v1181
      %1183 = vmatmul.bf16.gmra.mxu0 %v949
      %v1184 = vpop.f32.mrf.mxu0
      %v1185 = vadd.f32 0.0, %v1184
      %v1186 = vpop.f32.mrf.mxu0
      %v1187 = vadd.f32 0.0, %v1186
      %1188 = vmatmul.bf16.gmra.mxu0 %v952
      %v1189 = vpop.f32.mrf.mxu0
      %v1190 = vadd.f32 0.0, %v1189
      %v1191 = vpop.f32.mrf.mxu0
      %v1192 = vadd.f32 0.0, %v1191
      %1193 = vmatmul.bf16.gmra.mxu0 %v955
      %v1194 = vpop.f32.mrf.mxu0
      %v1195 = vadd.f32 0.0, %v1194
      %v1196 = vpop.f32.mrf.mxu0
      %v1197 = vadd.f32 0.0, %v1196
      %1198 = vmatmul.bf16.gmra.mxu0 %v1055
      %v1199 = vpop.f32.mrf.mxu0
      %v1200 = vadd.f32 0.0, %v1199
      %v1201 = vpop.f32.mrf.mxu0
      %v1202 = vadd.f32 0.0, %v1201
      %1203 = vmatmul.bf16.gmra.mxu0 %v1155
      %v1204 = vpop.f32.mrf.mxu0
      %v1205 = vadd.f32 0.0, %v1204
      %v1206 = vpop.f32.mrf.mxu0
      %v1207 = vadd.f32 0.0, %v1206
      %1208 = vdwg.mxu0
      %v1209 = vadd.f32 %v1109, %v1170
      %v1210 = vadd.f32 %v1110, %v1172
      %v1211 = vadd.f32 %v1111, %v1175
      %v1212 = vadd.f32 %v1112, %v1177
      %v1213 = vadd.f32 %v1113, %v1180
      %v1214 = vadd.f32 %v1114, %v1182
      %v1215 = vadd.f32 %v1115, %v1185
      %v1216 = vadd.f32 %v1116, %v1187
      %v1217 = vadd.f32 %v1117, %v1190
      %v1218 = vadd.f32 %v1118, %v1192
      %v1219 = vadd.f32 %v1119, %v1195
      %v1220 = vadd.f32 %v1120, %v1197
      %v1221 = vadd.f32 %v1121, %v1200
      %v1222 = vadd.f32 %v1122, %v1202
      %v1223 = vadd.f32 %v1123, %v1205
      %v1224 = vadd.f32 %v1124, %v1207
      %vm1233 = vcmask 1042432
      %vm1234 = vcmask 1046532
      %vm1235 = vmor %vm1233, %vm1234
      %v1236 = vrot.slane %v434, 5
      %v1237 = vrot.slane %v1236, 4
      %v1238 = vrot.slane %v435, 5
      %v1239 = vsel %vm1235, %v1237, %v1238
      %v1240 = vrot.slane %v1238, 4
      %v1241 = vrot.slane %v436, 5
      %v1242 = vsel %vm1235, %v1240, %v1241
      %v1243 = vrot.slane %v394, 5
      %v1244 = vrot.slane %v1243, 4
      %v1245 = vrot.slane %v395, 5
      %v1246 = vsel %vm1235, %v1244, %v1245
      %v1247 = vrot.slane %v1245, 4
      %v1248 = vrot.slane %v396, 5
      %v1249 = vsel %vm1235, %v1247, %v1248
      %v1250 = vrot.slane %v397, 5
      %v1251 = vrot.slane %v1250, 4
      %v1252 = vrot.slane %v398, 5
      %v1253 = vsel %vm1235, %v1251, %v1252
      %v1254 = vrot.slane %v1252, 4
      %v1255 = vrot.slane %v399, 5
      %v1256 = vsel %vm1235, %v1254, %v1255
      %v1257 = vrot.slane %v400, 5
      %v1258 = vrot.slane %v1257, 4
      %v1259 = vrot.slane %v401, 5
      %v1260 = vsel %vm1235, %v1258, %v1259
      %v1261 = vrot.slane %v1259, 4
      %v1262 = vrot.slane %v402, 5
      %v1263 = vsel %vm1235, %v1261, %v1262
      %v1264 = vrot.slane %v403, 5
      %v1265 = vrot.slane %v1264, 4
      %v1266 = vrot.slane %v404, 5
      %v1267 = vsel %vm1235, %v1265, %v1266
      %v1268 = vrot.slane %v1266, 4
      %v1269 = vrot.slane %v405, 5
      %v1270 = vsel %vm1235, %v1268, %v1269
      %v1271 = vrot.slane %v406, 5
      %v1272 = vrot.slane %v1271, 4
      %v1273 = vrot.slane %v407, 5
      %v1274 = vsel %vm1235, %v1272, %v1273
      %v1275 = vrot.slane %v1273, 4
      %v1276 = vrot.slane %v408, 5
      %v1277 = vsel %vm1235, %v1275, %v1276
      %v1278 = vrot.slane %v409, 5
      %v1279 = vrot.slane %v1278, 4
      %v1280 = vrot.slane %v410, 5
      %v1281 = vsel %vm1235, %v1279, %v1280
      %v1282 = vrot.slane %v1280, 4
      %v1283 = vrot.slane %v411, 5
      %v1284 = vsel %vm1235, %v1282, %v1283
      %v1285 = vrot.slane %v412, 5
      %v1286 = vrot.slane %v1285, 4
      %v1287 = vrot.slane %v413, 5
      %v1288 = vsel %vm1235, %v1286, %v1287
      %v1289 = vrot.slane %v1287, 4
      %v1290 = vrot.slane %v414, 5
      %v1291 = vsel %vm1235, %v1289, %v1290
      %s1292 = scalar_lea.vmem %s3, 4
      %v1293 = vld [vmem:[%s1292] sm:$0x3]
      %v1294 = vunpack.c.l.b16 %v1239
      %v1295 = vunpack.c.l.b16 %v1242
      %v1296 = vunpack.c.l.b16 %v1246
      %v1297 = vunpack.c.l.b16 %v1249
      %v1298 = vunpack.c.l.b16 %v1253
      %v1299 = vunpack.c.l.b16 %v1256
      %v1300 = vunpack.c.l.b16 %v1260
      %v1301 = vunpack.c.l.b16 %v1263
      %v1302 = vunpack.c.l.b16 %v1267
      %v1303 = vunpack.c.l.b16 %v1270
      %v1304 = vunpack.c.l.b16 %v1274
      %v1305 = vunpack.c.l.b16 %v1277
      %v1306 = vunpack.c.l.b16 %v1281
      %v1307 = vunpack.c.l.b16 %v1284
      %v1308 = vunpack.c.l.b16 %v1288
      %v1309 = vunpack.c.l.b16 %v1291
      %v1310 = vpack.c.b16 %v1295, %v1294
      %v1311 = vpack.c.b16 %v1297, %v1296
      %v1312 = vpack.c.b16 %v1299, %v1298
      %v1313 = vpack.c.b16 %v1301, %v1300
      %v1314 = vpack.c.b16 %v1303, %v1302
      %v1315 = vpack.c.b16 %v1305, %v1304
      %v1316 = vpack.c.b16 %v1307, %v1306
      %v1317 = vpack.c.b16 %v1309, %v1308
      %v1319 = vsel %vm493, %v1310, 0
      %v1322 = vsel %vm493, %v1311, 0
      %v1325 = vsel %vm493, %v1312, 0
      %v1328 = vsel %vm493, %v1313, 0
      %v1331 = vsel %vm493, %v1314, 0
      %v1334 = vsel %vm493, %v1315, 0
      %v1337 = vsel %vm493, %v1316, 0
      %v1340 = vsel %vm493, %v1317, 0
      %v1343 = vand.u32 %v1293, %v521
      %1345 = vmatpush.bf16.msra.mxu0 0
      %1346 = vmatpush.bf16.msra.mxu0 0
      %1347 = vmatpush.bf16.msra.mxu0 0
      %1348 = vmatpush.bf16.msra.mxu0 0
      %1349 = vmatpush.bf16.msra.mxu0 0
      %1350 = vmatpush.bf16.msra.mxu0 0
      %1351 = vmatpush.bf16.msra.mxu0 0
      %1352 = vmatpush.bf16.msra.mxu0 %v1343
      %1353 = vmatmul.bf16.gmra.mxu0 %v1319
      %v1354 = vpop.f32.mrf.mxu0
      %v1355 = vadd.f32 0.0, %v1354
      %v1356 = vpop.f32.mrf.mxu0
      %v1357 = vadd.f32 0.0, %v1356
      %1358 = vmatmul.bf16.gmra.mxu0 %v1322
      %v1359 = vpop.f32.mrf.mxu0
      %v1360 = vadd.f32 0.0, %v1359
      %v1361 = vpop.f32.mrf.mxu0
      %v1362 = vadd.f32 0.0, %v1361
      %1363 = vmatmul.bf16.gmra.mxu0 %v1325
      %v1364 = vpop.f32.mrf.mxu0
      %v1365 = vadd.f32 0.0, %v1364
      %v1366 = vpop.f32.mrf.mxu0
      %v1367 = vadd.f32 0.0, %v1366
      %1368 = vmatmul.bf16.gmra.mxu0 %v1328
      %v1369 = vpop.f32.mrf.mxu0
      %v1370 = vadd.f32 0.0, %v1369
      %v1371 = vpop.f32.mrf.mxu0
      %v1372 = vadd.f32 0.0, %v1371
      %1373 = vmatmul.bf16.gmra.mxu0 %v1331
      %v1374 = vpop.f32.mrf.mxu0
      %v1375 = vadd.f32 0.0, %v1374
      %v1376 = vpop.f32.mrf.mxu0
      %v1377 = vadd.f32 0.0, %v1376
      %1378 = vmatmul.bf16.gmra.mxu0 %v1334
      %v1379 = vpop.f32.mrf.mxu0
      %v1380 = vadd.f32 0.0, %v1379
      %v1381 = vpop.f32.mrf.mxu0
      %v1382 = vadd.f32 0.0, %v1381
      %1383 = vmatmul.bf16.gmra.mxu0 %v1337
      %v1384 = vpop.f32.mrf.mxu0
      %v1385 = vadd.f32 0.0, %v1384
      %v1386 = vpop.f32.mrf.mxu0
      %v1387 = vadd.f32 0.0, %v1386
      %1388 = vmatmul.bf16.gmra.mxu0 %v1340
      %v1389 = vpop.f32.mrf.mxu0
      %v1390 = vadd.f32 0.0, %v1389
      %v1391 = vpop.f32.mrf.mxu0
      %v1392 = vadd.f32 0.0, %v1391
      %1393 = vdwg.mxu0
      %v1394 = vadd.f32 %v1209, %v1355
      %v1395 = vadd.f32 %v1210, %v1357
      %v1396 = vadd.f32 %v1211, %v1360
      %v1397 = vadd.f32 %v1212, %v1362
      %v1398 = vadd.f32 %v1213, %v1365
      %v1399 = vadd.f32 %v1214, %v1367
      %v1400 = vadd.f32 %v1215, %v1370
      %v1401 = vadd.f32 %v1216, %v1372
      %v1402 = vadd.f32 %v1217, %v1375
      %v1403 = vadd.f32 %v1218, %v1377
      %v1404 = vadd.f32 %v1219, %v1380
      %v1405 = vadd.f32 %v1220, %v1382
      %v1406 = vadd.f32 %v1221, %v1385
      %v1407 = vadd.f32 %v1222, %v1387
      %v1408 = vadd.f32 %v1223, %v1390
      %v1409 = vadd.f32 %v1224, %v1392
      %v1411 = vrot.slane %v415, 5
      %v1412 = vrot.slane %v1411, 4
      %v1413 = vrot.slane %v416, 5
      %v1414 = vsel %vm1235, %v1412, %v1413
      %v1415 = vrot.slane %v1413, 4
      %v1416 = vrot.slane %v417, 5
      %v1417 = vsel %vm1235, %v1415, %v1416
      %s1418 = scalar_lea.vmem %s3, 10
      %v1419 = vld [vmem:[%s1418] sm:$0x3]
      %v1420 = vunpack.c.l.b16 %v1414
      %v1421 = vunpack.c.l.b16 %v1417
      %v1422 = vpack.c.b16 %v1421, %v1420
      %v1424 = vsel %vm493, %v1422, 0
      %v1427 = vand.u32 %v1419, %v521
      %1429 = vmatpush.bf16.msra.mxu0 0
      %1430 = vmatpush.bf16.msra.mxu0 0
      %1431 = vmatpush.bf16.msra.mxu0 0
      %1432 = vmatpush.bf16.msra.mxu0 0
      %1433 = vmatpush.bf16.msra.mxu0 0
      %1434 = vmatpush.bf16.msra.mxu0 0
      %1435 = vmatpush.bf16.msra.mxu0 0
      %1436 = vmatpush.bf16.msra.mxu0 %v1427
      %1437 = vmatmul.bf16.gmra.mxu0 %v1322
      %v1438 = vpop.f32.mrf.mxu0
      %v1439 = vadd.f32 0.0, %v1438
      %v1440 = vpop.f32.mrf.mxu0
      %v1441 = vadd.f32 0.0, %v1440
      %1442 = vmatmul.bf16.gmra.mxu0 %v1325
      %v1443 = vpop.f32.mrf.mxu0
      %v1444 = vadd.f32 0.0, %v1443
      %v1445 = vpop.f32.mrf.mxu0
      %v1446 = vadd.f32 0.0, %v1445
      %1447 = vmatmul.bf16.gmra.mxu0 %v1328
      %v1448 = vpop.f32.mrf.mxu0
      %v1449 = vadd.f32 0.0, %v1448
      %v1450 = vpop.f32.mrf.mxu0
      %v1451 = vadd.f32 0.0, %v1450
      %1452 = vmatmul.bf16.gmra.mxu0 %v1331
      %v1453 = vpop.f32.mrf.mxu0
      %v1454 = vadd.f32 0.0, %v1453
      %v1455 = vpop.f32.mrf.mxu0
      %v1456 = vadd.f32 0.0, %v1455
      %1457 = vmatmul.bf16.gmra.mxu0 %v1334
      %v1458 = vpop.f32.mrf.mxu0
      %v1459 = vadd.f32 0.0, %v1458
      %v1460 = vpop.f32.mrf.mxu0
      %v1461 = vadd.f32 0.0, %v1460
      %1462 = vmatmul.bf16.gmra.mxu0 %v1337
      %v1463 = vpop.f32.mrf.mxu0
      %v1464 = vadd.f32 0.0, %v1463
      %v1465 = vpop.f32.mrf.mxu0
      %v1466 = vadd.f32 0.0, %v1465
      %1467 = vmatmul.bf16.gmra.mxu0 %v1340
      %v1468 = vpop.f32.mrf.mxu0
      %v1469 = vadd.f32 0.0, %v1468
      %v1470 = vpop.f32.mrf.mxu0
      %v1471 = vadd.f32 0.0, %v1470
      %1472 = vmatmul.bf16.gmra.mxu0 %v1424
      %v1473 = vpop.f32.mrf.mxu0
      %v1474 = vadd.f32 0.0, %v1473
      %v1475 = vpop.f32.mrf.mxu0
      %v1476 = vadd.f32 0.0, %v1475
      %1477 = vdwg.mxu0
      %v1478 = vadd.f32 %v1394, %v1439
      %v1479 = vadd.f32 %v1395, %v1441
      %v1480 = vadd.f32 %v1396, %v1444
      %v1481 = vadd.f32 %v1397, %v1446
      %v1482 = vadd.f32 %v1398, %v1449
      %v1483 = vadd.f32 %v1399, %v1451
      %v1484 = vadd.f32 %v1400, %v1454
      %v1485 = vadd.f32 %v1401, %v1456
      %v1486 = vadd.f32 %v1402, %v1459
      %v1487 = vadd.f32 %v1403, %v1461
      %v1488 = vadd.f32 %v1404, %v1464
      %v1489 = vadd.f32 %v1405, %v1466
      %v1490 = vadd.f32 %v1406, %v1469
      %v1491 = vadd.f32 %v1407, %v1471
      %v1492 = vadd.f32 %v1408, %v1474
      %v1493 = vadd.f32 %v1409, %v1476
      %v1495 = vrot.slane %v447, 5
      %v1496 = vrot.slane %v1495, 4
      %v1497 = vrot.slane %v448, 5
      %v1498 = vsel %vm1235, %v1496, %v1497
      %v1499 = vrot.slane %v1497, 4
      %v1500 = vrot.slane %v449, 5
      %v1501 = vsel %vm1235, %v1499, %v1500
      %s1502 = scalar_lea.vmem %s3, 16
      %v1503 = vld [vmem:[%s1502] sm:$0x3]
      %v1504 = vunpack.c.l.b16 %v1498
      %v1505 = vunpack.c.l.b16 %v1501
      %v1506 = vpack.c.b16 %v1505, %v1504
      %v1508 = vsel %vm493, %v1506, 0
      %v1511 = vand.u32 %v1503, %v521
      %1513 = vmatpush.bf16.msra.mxu0 0
      %1514 = vmatpush.bf16.msra.mxu0 0
      %1515 = vmatpush.bf16.msra.mxu0 0
      %1516 = vmatpush.bf16.msra.mxu0 0
      %1517 = vmatpush.bf16.msra.mxu0 0
      %1518 = vmatpush.bf16.msra.mxu0 0
      %1519 = vmatpush.bf16.msra.mxu0 0
      %1520 = vmatpush.bf16.msra.mxu0 %v1511
      %1521 = vmatmul.bf16.gmra.mxu0 %v1325
      %v1522 = vpop.f32.mrf.mxu0
      %v1523 = vadd.f32 0.0, %v1522
      %v1524 = vpop.f32.mrf.mxu0
      %v1525 = vadd.f32 0.0, %v1524
      %1526 = vmatmul.bf16.gmra.mxu0 %v1328
      %v1527 = vpop.f32.mrf.mxu0
      %v1528 = vadd.f32 0.0, %v1527
      %v1529 = vpop.f32.mrf.mxu0
      %v1530 = vadd.f32 0.0, %v1529
      %1531 = vmatmul.bf16.gmra.mxu0 %v1331
      %v1532 = vpop.f32.mrf.mxu0
      %v1533 = vadd.f32 0.0, %v1532
      %v1534 = vpop.f32.mrf.mxu0
      %v1535 = vadd.f32 0.0, %v1534
      %1536 = vmatmul.bf16.gmra.mxu0 %v1334
      %v1537 = vpop.f32.mrf.mxu0
      %v1538 = vadd.f32 0.0, %v1537
      %v1539 = vpop.f32.mrf.mxu0
      %v1540 = vadd.f32 0.0, %v1539
      %1541 = vmatmul.bf16.gmra.mxu0 %v1337
      %v1542 = vpop.f32.mrf.mxu0
      %v1543 = vadd.f32 0.0, %v1542
      %v1544 = vpop.f32.mrf.mxu0
      %v1545 = vadd.f32 0.0, %v1544
      %1546 = vmatmul.bf16.gmra.mxu0 %v1340
      %v1547 = vpop.f32.mrf.mxu0
      %v1548 = vadd.f32 0.0, %v1547
      %v1549 = vpop.f32.mrf.mxu0
      %v1550 = vadd.f32 0.0, %v1549
      %1551 = vmatmul.bf16.gmra.mxu0 %v1424
      %v1552 = vpop.f32.mrf.mxu0
      %v1553 = vadd.f32 0.0, %v1552
      %v1554 = vpop.f32.mrf.mxu0
      %v1555 = vadd.f32 0.0, %v1554
      %1556 = vmatmul.bf16.gmra.mxu0 %v1508
      %v1557 = vpop.f32.mrf.mxu0
      %v1558 = vadd.f32 0.0, %v1557
      %v1559 = vpop.f32.mrf.mxu0
      %v1560 = vadd.f32 0.0, %v1559
      %1561 = vdwg.mxu0
      %v1562 = vadd.f32 %v1478, %v1523
      %v1563 = vadd.f32 %v1479, %v1525
      %v1564 = vadd.f32 %v1480, %v1528
      %v1565 = vadd.f32 %v1481, %v1530
      %v1566 = vadd.f32 %v1482, %v1533
      %v1567 = vadd.f32 %v1483, %v1535
      %v1568 = vadd.f32 %v1484, %v1538
      %v1569 = vadd.f32 %v1485, %v1540
      %v1570 = vadd.f32 %v1486, %v1543
      %v1571 = vadd.f32 %v1487, %v1545
      %v1572 = vadd.f32 %v1488, %v1548
      %v1573 = vadd.f32 %v1489, %v1550
      %v1574 = vadd.f32 %v1490, %v1553
      %v1575 = vadd.f32 %v1491, %v1555
      %v1576 = vadd.f32 %v1492, %v1558
      %v1577 = vadd.f32 %v1493, %v1560
      %v1578 = vld [vmem:[%s4] sm:$0x1]
      %v1580 = vperm.slane %v1578, 0
      %v1582 = vadd.f32 %v1562, %v1580
      %v1583 = vadd.f32 %v1563, %v1580
      %v1584 = vadd.f32 %v1564, %v1580
      %v1585 = vadd.f32 %v1565, %v1580
      %v1586 = vadd.f32 %v1566, %v1580
      %v1587 = vadd.f32 %v1567, %v1580
      %v1588 = vadd.f32 %v1568, %v1580
      %v1589 = vadd.f32 %v1569, %v1580
      %v1590 = vadd.f32 %v1570, %v1580
      %v1591 = vadd.f32 %v1571, %v1580
      %v1592 = vadd.f32 %v1572, %v1580
      %v1593 = vadd.f32 %v1573, %v1580
      %v1594 = vadd.f32 %v1574, %v1580
      %v1595 = vadd.f32 %v1575, %v1580
      %v1596 = vadd.f32 %v1576, %v1580
      %v1597 = vadd.f32 %v1577, %v1580
      %v1598 = vmax.f32 %v1582, 0.0
      %v1599 = vmax.f32 %v1583, 0.0
      %v1600 = vmax.f32 %v1584, 0.0
      %v1601 = vmax.f32 %v1585, 0.0
      %v1602 = vmax.f32 %v1586, 0.0
      %v1603 = vmax.f32 %v1587, 0.0
      %v1604 = vmax.f32 %v1588, 0.0
      %v1605 = vmax.f32 %v1589, 0.0
      %v1606 = vmax.f32 %v1590, 0.0
      %v1607 = vmax.f32 %v1591, 0.0
      %v1608 = vmax.f32 %v1592, 0.0
      %v1609 = vmax.f32 %v1593, 0.0
      %v1610 = vmax.f32 %v1594, 0.0
      %v1611 = vmax.f32 %v1595, 0.0
      %v1612 = vmax.f32 %v1596, 0.0
      %v1613 = vmax.f32 %v1597, 0.0
      %v1630 = vrot.slane %v1598, 7
      %v1631 = vrot.slane %v1599, 7
      %v1632 = vsel %vm518, %v1630, %v1631
      %v1633 = vrot.slane %v1600, 7
      %v1634 = vrot.slane %v1601, 7
      %v1635 = vsel %vm518, %v1633, %v1634
      %v1636 = vrot.slane %v1602, 7
      %v1637 = vrot.slane %v1603, 7
      %v1638 = vsel %vm518, %v1636, %v1637
      %v1639 = vrot.slane %v1604, 7
      %v1640 = vrot.slane %v1605, 7
      %v1641 = vsel %vm518, %v1639, %v1640
      %v1642 = vrot.slane %v1606, 7
      %v1643 = vrot.slane %v1607, 7
      %v1644 = vsel %vm518, %v1642, %v1643
      %v1645 = vrot.slane %v1608, 7
      %v1646 = vrot.slane %v1609, 7
      %v1647 = vsel %vm518, %v1645, %v1646
      %v1648 = vrot.slane %v1610, 7
      %v1649 = vrot.slane %v1611, 7
      %v1650 = vsel %vm518, %v1648, %v1649
      %v1651 = vrot.slane %v1612, 7
      %v1652 = vrot.slane %v1613, 7
      %v1653 = vsel %vm518, %v1651, %v1652
      %v1678 = vsel %vm518, 0.0, %v1630
      %v1679 = vsel %vm518, 0.0, %v1633
      %v1680 = vsel %vm518, 0.0, %v1636
      %v1681 = vsel %vm518, 0.0, %v1639
      %v1682 = vsel %vm518, 0.0, %v1642
      %v1683 = vsel %vm518, 0.0, %v1645
      %v1684 = vsel %vm518, 0.0, %v1648
      %v1685 = vsel %vm518, 0.0, %v1651
      %v1686 = vsel %vm518, %v1631, 0.0
      %v1687 = vsel %vm518, %v1634, 0.0
      %v1688 = vsel %vm518, %v1637, 0.0
      %v1689 = vsel %vm518, %v1640, 0.0
      %v1690 = vsel %vm518, %v1643, 0.0
      %v1691 = vsel %vm518, %v1646, 0.0
      %v1692 = vsel %vm518, %v1649, 0.0
      %v1693 = vsel %vm518, %v1652, 0.0
      %v1694 = vpack.c.bf16 %v1678, %v1678
      %v1695 = vpack.c.bf16 %v1632, %v1632
      %v1696 = vpack.c.bf16 %v1686, %v1686
      %v1697 = vpack.c.bf16 %v1679, %v1679
      %v1698 = vpack.c.bf16 %v1635, %v1635
      %v1699 = vpack.c.bf16 %v1687, %v1687
      %v1700 = vpack.c.bf16 %v1680, %v1680
      %v1701 = vpack.c.bf16 %v1638, %v1638
      %v1702 = vpack.c.bf16 %v1688, %v1688
      %v1703 = vpack.c.bf16 %v1681, %v1681
      %v1704 = vpack.c.bf16 %v1641, %v1641
      %v1705 = vpack.c.bf16 %v1689, %v1689
      %v1706 = vpack.c.bf16 %v1682, %v1682
      %v1707 = vpack.c.bf16 %v1644, %v1644
      %v1708 = vpack.c.bf16 %v1690, %v1690
      %v1709 = vpack.c.bf16 %v1683, %v1683
      %v1710 = vpack.c.bf16 %v1647, %v1647
      %v1711 = vpack.c.bf16 %v1691, %v1691
      %v1712 = vpack.c.bf16 %v1684, %v1684
      %v1713 = vpack.c.bf16 %v1650, %v1650
      %v1714 = vpack.c.bf16 %v1692, %v1692
      %v1715 = vpack.c.bf16 %v1685, %v1685
      %v1716 = vpack.c.bf16 %v1653, %v1653
      %v1717 = vpack.c.bf16 %v1693, %v1693
      %vm1718 = vcmask 60416
      %1719 = vst.msk [vmem:[%s391] sm:$0xf] %vm1718, %v1694
      %1720 = vst.msk [vmem:[%s391 + $0x4] sm:$0xf] %vm1718, %v1695
      %vm1721 = vcmask 57344
      %1722 = vst.msk [vmem:[%s391 + $0x8] sm:$0x1] %vm1721, %v1696
      %1723 = vst.msk [vmem:[%s391 + $0xc] sm:$0xf] %vm1718, %v1697
      %1724 = vst.msk [vmem:[%s391 + $0x10] sm:$0xf] %vm1718, %v1698
      %1725 = vst.msk [vmem:[%s391 + $0x14] sm:$0x1] %vm1721, %v1699
      %1726 = vst.msk [vmem:[%s391 + $0x18] sm:$0xf] %vm1718, %v1700
      %1727 = vst.msk [vmem:[%s391 + $0x1c] sm:$0xf] %vm1718, %v1701
      %1728 = vst.msk [vmem:[%s391 + $0x20] sm:$0x1] %vm1721, %v1702
      %1729 = vst.msk [vmem:[%s391 + $0x24] sm:$0xf] %vm1718, %v1703
      %1730 = vst.msk [vmem:[%s391 + $0x28] sm:$0xf] %vm1718, %v1704
      %1731 = vst.msk [vmem:[%s391 + $0x2c] sm:$0x1] %vm1721, %v1705
      %1732 = vst.msk [vmem:[%s391 + $0x30] sm:$0xf] %vm1718, %v1706
      %1733 = vst.msk [vmem:[%s391 + $0x34] sm:$0xf] %vm1718, %v1707
      %1734 = vst.msk [vmem:[%s391 + $0x38] sm:$0x1] %vm1721, %v1708
      %1735 = vst.msk [vmem:[%s391 + $0x3c] sm:$0xf] %vm1718, %v1709
      %1736 = vst.msk [vmem:[%s391 + $0x40] sm:$0xf] %vm1718, %v1710
      %1737 = vst.msk [vmem:[%s391 + $0x44] sm:$0x1] %vm1721, %v1711
      %1738 = vst.msk [vmem:[%s391 + $0x48] sm:$0xf] %vm1718, %v1712
      %1739 = vst.msk [vmem:[%s391 + $0x4c] sm:$0xf] %vm1718, %v1713
      %1740 = vst.msk [vmem:[%s391 + $0x50] sm:$0x1] %vm1721, %v1714
      %1741 = vst.msk [vmem:[%s391 + $0x54] sm:$0xf] %vm1718, %v1715
      %1742 = vst.msk [vmem:[%s391 + $0x58] sm:$0xf] %vm1718, %v1716
      %1743 = vst.msk [vmem:[%s391 + $0x5c] sm:$0x1] %vm1721, %v1717
      %s1744 = smul.u32 8, %s21
      %p1745 = scmp.lt.s32.totalorder %s20, 1
      %s1746 = scalar_select %p1745, %s20, 1
      %p1747 = scmp.lt.s32.totalorder %s1744, 15
      %s1748 = scalar_select %p1747, %s1744, 15
      %s1749 = smul.addr %s1748, 3
      %s1750 = smul.addr %s1746, 48
      %s1751 = sadd.s32 %s1749, %s1750
      %s1752 = smul.addr %s1751, 4
      %s1753 = scalar_lea.vmem %s5, %s1752
      // Predicated region
      $region41: #{rednet_forward.10} parent=39 // pred_check
        %p1754 = pneg %p190
      $region42: #{rednet_forward.10} parent=39 // pred_check_branch
        %1756 = sbr.rel (%p1754) target = $region44
      $region43: #{rednet_forward.10} parent=39 // pred_region
        %s1757 = smul.u32 8, %s21
      $region44: #{rednet_forward.10} parent=39 // pred_fallthru
        _
    $region40: #{rednet_forward.10} parent=5 // pred_fallthru
      _
    %p1758 = scmp.le.s32.totalorder 2, %s11
    // Predicated region
    $region45: #{rednet_forward.10} parent=5 // pred_check
      %p1759 = pneg %p1758
    $region46: #{rednet_forward.10} parent=5 // pred_check_branch
      %1761 = sbr.rel (%p1759) target = $region48
    $region47: #{rednet_forward.10} parent=5 // pred_region
      %s1762 = ssub.s32 %s11, 2
      // Predicated region
      $region49: #{rednet_forward.10} parent=47 // pred_check
        %p1763 = pneg %p196
      $region50: #{rednet_forward.10} parent=47 // pred_check_branch
        %1765 = sbr.rel (%p1763) target = $region52
      $region51: #{rednet_forward.10} parent=47 // pred_region
        %s1766 = smul.u32 8, %s23
        %p1767 = scmp.lt.s32.totalorder %s22, 1
        %s1768 = scalar_select %p1767, %s22, 1
        %p1769 = scmp.lt.s32.totalorder %s1766, 15
        %s1770 = scalar_select %p1769, %s1766, 15
        %s1771 = smul.addr %s1770, 3
        %s1772 = smul.addr %s1768, 48
        %s1773 = sadd.s32 %s1771, %s1772
        %s1774 = smul.addr %s1773, 4
        %s1775 = scalar_lea.vmem %s5, %s1774
      $region52: #{rednet_forward.10} parent=47 // pred_fallthru
        _
    $region48: #{rednet_forward.10} parent=5 // pred_fallthru
      _
  $region6: #{rednet_forward.10} parent=0 // loop_footer
    %s15 = sadd.s32 1, %s11
  $region7: #{rednet_forward.10} parent=0 // loop_footer_branch
    %10 = sbr.rel target = $region3
  $region8: #{rednet_forward.10} parent=0 // loop_exit
    _

// kernel: rednet_forward.11
$region0: #{rednet_forward.11}
  #allocation0 [shape = 'u32[]', space=smem, size = 0x4, offset = 0x4, fixed_abs, tag = 'smem constant byte address 0x4 - core index']
  #allocation1 [shape = 'u32[72,128]{1,0:T(1,128)}', space=vmem, size = 0x9000, scoped, tag = 'internal scratch']
  %s0 = inlined_call_operand.vmem [shape: bf16[2,16,18,8], index: 0, kind: input, shape index: {}, may-alias: {0,1,2}]
  %s1 = inlined_call_operand.vmem [shape: bf16[2,16,18,8], index: 1, kind: input, shape index: {}, may-alias: {0,1,2}]
  %s2 = inlined_call_operand.vmem [shape: bf16[2,16,18,8], index: 2, kind: input, shape index: {}, may-alias: {0,1,2}]
  %s3 = inlined_call_operand.vmem [shape: bf16[9,8,8], index: 3, kind: input, shape index: {}]
  %s4 = inlined_call_operand.vmem [shape: f32[1,8], index: 4, kind: input, shape index: {}]
  %s5 = inlined_call_operand.vmem [shape: bf16[2,16,18,8], index: 5, kind: output, shape index: {}]
  %s6 = sld [smem:[#allocation0]]
  $region53: #{rednet_forward.11} parent=0
    _
  %s8 = ssub.s32 1, %s6
  %s9 = scalar_select 0, %s8, %s6
  loop: start=0, step=1, limit=6
  $region2: #{rednet_forward.11} parent=0 // loop_pre_header
    _
  $region3: #{rednet_forward.11} parent=0 // loop_header
    %s11 = sphi 0, %s15
    %p12 = scmp.ge.s32.totalorder %s11, 6
    %s18 = sphi 0, %s30
    %s19 = sphi 0, %s26
    %s20 = sphi 0, %s18
    %s21 = sphi 0, %s19
    %s22 = sphi 0, %s20
    %s23 = sphi 0, %s21
    %s35 = sphi 0, %s37
    %s38 = sphi 0, %s35
    %s39 = sphi 0, %s38
    %s55 = sphi 0, %s39
    %s71 = sphi 0, %s73
    %s74 = sphi 0, %s71
    %s75 = sphi 0, %s74
    %s91 = sphi 0, %s75
    %s107 = sphi 0, %s109
    %s110 = sphi 0, %s107
    %s111 = sphi 0, %s110
    %s127 = sphi 0, %s111
    %s131 = sphi 0, %s131
    %s133 = sphi 0, %s131
    %s134 = sphi 0, %s133
    %s148 = sphi 0, %s134
    %s152 = sphi 0, %s152
    %s154 = sphi 0, %s152
    %s155 = sphi 0, %s154
    %s169 = sphi 0, %s155
    %s177 = sphi 0, %s179
    %s180 = sphi 0, %s177
    %s181 = sphi 0, %s180
    %s197 = sphi 0, %s181
  $region4: #{rednet_forward.11} parent=0 // loop_header_branch
    %14 = sbr.rel (%p12) target = $region8
  $region5: #{rednet_forward.11} parent=0 // loop_body
    %s16 = ssub.s32 %s11, 1
    %s17 = ssub.s32 %s11, 2
    %s24 = sadd.s32 1, %s19
    %p25 = scmp.ge.s32.totalorder %s24, 2
    %s26 = scalar_select %p25, 0, %s24
    %s27 = sadd.s32 1, %s18
    %s28 = scalar_select %p25, %s27, %s18
    %p29 = scmp.ge.s32.totalorder %s28, 2
    %s30 = scalar_select %p29, 0, %s28
    %s31 = ssub.s32 %s18, %s30
    %s32 = ssub.s32 %s19, %s26
    %s33 = sor.u32 %s31, %s32
    %p34 = scmp.eq.s32.totalorder %s33, 0
    %s36 = sadd.s32 %s35, 1
    %s37 = scalar_select %p34, %s35, %s36
    %p40 = pneg %p34
    %p41 = scmp.eq.s32.totalorder %s11, 3
    %p42 = por %p40, %p41
    %p43 = scmp.ne.s32.totalorder %s35, %s38
    %p44 = scmp.eq.s32.totalorder %s11, 0
    %p45 = por %p43, %p44
    %p46 = scmp.ne.s32.totalorder %s35, %s38
    %p47 = scmp.eq.s32.totalorder %s16, 3
    %p48 = por %p46, %p47
    %p49 = scmp.ne.s32.totalorder %s38, %s39
    %p50 = scmp.eq.s32.totalorder %s16, 0
    %p51 = por %p49, %p50
    %p52 = scmp.ne.s32.totalorder %s38, %s39
    %p53 = scmp.eq.s32.totalorder %s17, 3
    %p54 = por %p52, %p53
    %p56 = scmp.ne.s32.totalorder %s39, %s55
    %p57 = scmp.eq.s32.totalorder %s17, 0
    %p58 = por %p56, %p57
    %s59 = smul.u32 %s19, 8
    %s60 = ssub.s32 %s59, 1
    %p61 = scmp.gt.s32.totalorder %s60, 0
    %s62 = scalar_select %p61, %s60, 0
    %s63 = smul.u32 %s26, 8
    %s64 = ssub.s32 %s63, 1
    %p65 = scmp.gt.s32.totalorder %s64, 0
    %s66 = scalar_select %p65, %s64, 0
    %s67 = ssub.s32 %s18, %s30
    %s68 = ssub.s32 %s62, %s66
    %s69 = sor.u32 %s67, %s68
    %p70 = scmp.eq.s32.totalorder %s69, 0
    %s72 = sadd.s32 %s71, 1
    %s73 = scalar_select %p70, %s71, %s72
    %p76 = pneg %p70
    %p77 = scmp.eq.s32.totalorder %s11, 3
    %p78 = por %p76, %p77
    %p79 = scmp.ne.s32.totalorder %s71, %s74
    %p80 = scmp.eq.s32.totalorder %s11, 0
    %p81 = por %p79, %p80
    %p82 = scmp.ne.s32.totalorder %s71, %s74
    %p83 = scmp.eq.s32.totalorder %s16, 3
    %p84 = por %p82, %p83
    %p85 = scmp.ne.s32.totalorder %s74, %s75
    %p86 = scmp.eq.s32.totalorder %s16, 0
    %p87 = por %p85, %p86
    %p88 = scmp.ne.s32.totalorder %s74, %s75
    %p89 = scmp.eq.s32.totalorder %s17, 3
    %p90 = por %p88, %p89
    %p92 = scmp.ne.s32.totalorder %s75, %s91
    %p93 = scmp.eq.s32.totalorder %s17, 0
    %p94 = por %p92, %p93
    %s95 = sadd.s32 %s19, 1
    %s96 = smul.u32 %s95, 8
    %p97 = scmp.lt.s32.totalorder %s96, 15
    %s98 = scalar_select %p97, %s96, 15
    %s99 = sadd.s32 %s26, 1
    %s100 = smul.u32 %s99, 8
    %p101 = scmp.lt.s32.totalorder %s100, 15
    %s102 = scalar_select %p101, %s100, 15
    %s103 = ssub.s32 %s18, %s30
    %s104 = ssub.s32 %s98, %s102
    %s105 = sor.u32 %s103, %s104
    %p106 = scmp.eq.s32.totalorder %s105, 0
    %s108 = sadd.s32 %s107, 1
    %s109 = scalar_select %p106, %s107, %s108
    %p112 = pneg %p106
    %p113 = scmp.eq.s32.totalorder %s11, 3
    %p114 = por %p112, %p113
    %p115 = scmp.ne.s32.totalorder %s107, %s110
    %p116 = scmp.eq.s32.totalorder %s11, 0
    %p117 = por %p115, %p116
    %p118 = scmp.ne.s32.totalorder %s107, %s110
    %p119 = scmp.eq.s32.totalorder %s16, 3
    %p120 = por %p118, %p119
    %p121 = scmp.ne.s32.totalorder %s110, %s111
    %p122 = scmp.eq.s32.totalorder %s16, 0
    %p123 = por %p121, %p122
    %p124 = scmp.ne.s32.totalorder %s110, %s111
    %p125 = scmp.eq.s32.totalorder %s17, 3
    %p126 = por %p124, %p125
    %p128 = scmp.ne.s32.totalorder %s111, %s127
    %p129 = scmp.eq.s32.totalorder %s17, 0
    %p130 = por %p128, %p129
    %s132 = sadd.s32 %s131, 1
    %p135 = scmp.eq.s32.totalorder %s11, 3
    %p136 = scmp.ne.s32.totalorder %s131, %s133
    %p137 = scmp.eq.s32.totalorder %s11, 0
    %p138 = por %p136, %p137
    %p139 = scmp.ne.s32.totalorder %s131, %s133
    %p140 = scmp.eq.s32.totalorder %s16, 3
    %p141 = por %p139, %p140
    %p142 = scmp.ne.s32.totalorder %s133, %s134
    %p143 = scmp.eq.s32.totalorder %s16, 0
    %p144 = por %p142, %p143
    %p145 = scmp.ne.s32.totalorder %s133, %s134
    %p146 = scmp.eq.s32.totalorder %s17, 3
    %p147 = por %p145, %p146
    %p149 = scmp.ne.s32.totalorder %s134, %s148
    %p150 = scmp.eq.s32.totalorder %s17, 0
    %p151 = por %p149, %p150
    %s153 = sadd.s32 %s152, 1
    %p156 = scmp.eq.s32.totalorder %s11, 3
    %p157 = scmp.ne.s32.totalorder %s152, %s154
    %p158 = scmp.eq.s32.totalorder %s11, 0
    %p159 = por %p157, %p158
    %p160 = scmp.ne.s32.totalorder %s152, %s154
    %p161 = scmp.eq.s32.totalorder %s16, 3
    %p162 = por %p160, %p161
    %p163 = scmp.ne.s32.totalorder %s154, %s155
    %p164 = scmp.eq.s32.totalorder %s16, 0
    %p165 = por %p163, %p164
    %p166 = scmp.ne.s32.totalorder %s154, %s155
    %p167 = scmp.eq.s32.totalorder %s17, 3
    %p168 = por %p166, %p167
    %p170 = scmp.ne.s32.totalorder %s155, %s169
    %p171 = scmp.eq.s32.totalorder %s17, 0
    %p172 = por %p170, %p171
    %s173 = ssub.s32 %s18, %s30
    %s174 = ssub.s32 %s19, %s26
    %s175 = sor.u32 %s173, %s174
    %p176 = scmp.eq.s32.totalorder %s175, 0
    %s178 = sadd.s32 %s177, 1
    %s179 = scalar_select %p176, %s177, %s178
    %p182 = pneg %p176
    %p183 = scmp.eq.s32.totalorder %s11, 3
    %p184 = por %p182, %p183
    %p185 = scmp.ne.s32.totalorder %s177, %s180
    %p186 = scmp.eq.s32.totalorder %s11, 0
    %p187 = por %p185, %p186
    %p188 = scmp.ne.s32.totalorder %s177, %s180
    %p189 = scmp.eq.s32.totalorder %s16, 3
    %p190 = por %p188, %p189
    %p191 = scmp.ne.s32.totalorder %s180, %s181
    %p192 = scmp.eq.s32.totalorder %s16, 0
    %p193 = por %p191, %p192
    %p194 = scmp.ne.s32.totalorder %s180, %s181
    %p195 = scmp.eq.s32.totalorder %s17, 3
    %p196 = por %p194, %p195
    %p198 = scmp.ne.s32.totalorder %s181, %s197
    %p199 = scmp.eq.s32.totalorder %s17, 0
    %p200 = por %p198, %p199
    %p201 = scmp.le.s32.totalorder 1, %s11
    %p202 = scmp.lt.s32.totalorder %s11, 5
    %p203 = pnand %p201, %p202
    %p204 = pneg %p203
    // Predicated region
    $region9: #{rednet_forward.11} parent=5 // pred_check
      _
    $region10: #{rednet_forward.11} parent=5 // pred_check_branch
      %206 = sbr.rel (%p203) target = $region12
    $region11: #{rednet_forward.11} parent=5 // pred_region
      %s207 = ssub.s32 %s11, 1
      // Predicated region
      $region13: #{rednet_forward.11} parent=11 // pred_check
        %p208 = pneg %p144
      $region14: #{rednet_forward.11} parent=11 // pred_check_branch
        %210 = sbr.rel (%p208) target = $region16
      $region15: #{rednet_forward.11} parent=11 // pred_region
        _
      $region16: #{rednet_forward.11} parent=11 // pred_fallthru
        _
      // Predicated region
      $region17: #{rednet_forward.11} parent=11 // pred_check
        %p211 = pneg %p165
      $region18: #{rednet_forward.11} parent=11 // pred_check_branch
        %213 = sbr.rel (%p211) target = $region20
      $region19: #{rednet_forward.11} parent=11 // pred_region
        _
      $region20: #{rednet_forward.11} parent=11 // pred_fallthru
        _
    $region12: #{rednet_forward.11} parent=5 // pred_fallthru
      _
    %p214 = scmp.lt.s32.totalorder %s11, 4
    // Predicated region
    $region21: #{rednet_forward.11} parent=5 // pred_check
      %p215 = pneg %p214
    $region22: #{rednet_forward.11} parent=5 // pred_check_branch
      %217 = sbr.rel (%p215) target = $region24
    $region23: #{rednet_forward.11} parent=5 // pred_region
      // Predicated region
      $region25: #{rednet_forward.11} parent=23 // pred_check
        %p218 = pneg %p45
      $region26: #{rednet_forward.11} parent=23 // pred_check_branch
        %220 = sbr.rel (%p218) target = $region28
      $region27: #{rednet_forward.11} parent=23 // pred_region
        %s221 = smul.u32 8, %s19
        %p222 = scmp.lt.s32.totalorder %s18, 1
        %s223 = scalar_select %p222, %s18, 1
        %p224 = scmp.lt.s32.totalorder %s221, 15
        %s225 = scalar_select %p224, %s221, 15
        %s226 = smul.addr %s225, 3
        %s227 = smul.addr %s223, 48
        %s228 = sadd.s32 %s226, %s227
        %s229 = smul.addr %s228, 4
        %s230 = scalar_lea.vmem %s0, %s229
        %s231 = smul.u32 8, %s19
      $region28: #{rednet_forward.11} parent=23 // pred_fallthru
        _
      // Predicated region
      $region29: #{rednet_forward.11} parent=23 // pred_check
        %p232 = pneg %p81
      $region30: #{rednet_forward.11} parent=23 // pred_check_branch
        %234 = sbr.rel (%p232) target = $region32
      $region31: #{rednet_forward.11} parent=23 // pred_region
        %s235 = smul.u32 %s19, 8
        %s236 = ssub.s32 %s235, 1
        %p237 = scmp.gt.s32.totalorder %s236, 0
        %s238 = scalar_select %p237, %s236, 0
        %p239 = scmp.lt.s32.totalorder %s18, 1
        %s240 = scalar_select %p239, %s18, 1
        %p241 = scmp.lt.s32.totalorder %s238, 15
        %s242 = scalar_select %p241, %s238, 15
        %s243 = smul.addr %s242, 3
        %s244 = smul.addr %s240, 48
        %s245 = sadd.s32 %s243, %s244
        %s246 = smul.addr %s245, 4
        %s247 = scalar_lea.vmem %s1, %s246
        %s248 = smul.u32 %s19, 8
        %s249 = ssub.s32 %s248, 1
        %p250 = scmp.gt.s32.totalorder %s249, 0
        %s251 = scalar_select %p250, %s249, 0
      $region32: #{rednet_forward.11} parent=23 // pred_fallthru
        _
      // Predicated region
      $region33: #{rednet_forward.11} parent=23 // pred_check
        %p252 = pneg %p117
      $region34: #{rednet_forward.11} parent=23 // pred_check_branch
        %254 = sbr.rel (%p252) target = $region36
      $region35: #{rednet_forward.11} parent=23 // pred_region
        %s255 = sadd.s32 %s19, 1
        %s256 = smul.u32 %s255, 8
        %p257 = scmp.lt.s32.totalorder %s256, 15
        %s258 = scalar_select %p257, %s256, 15
        %p259 = scmp.lt.s32.totalorder %s18, 1
        %s260 = scalar_select %p259, %s18, 1
        %p261 = scmp.lt.s32.totalorder %s258, 15
        %s262 = scalar_select %p261, %s258, 15
        %s263 = smul.addr %s262, 3
        %s264 = smul.addr %s260, 48
        %s265 = sadd.s32 %s263, %s264
        %s266 = smul.addr %s265, 4
        %s267 = scalar_lea.vmem %s2, %s266
        %s268 = sadd.s32 %s19, 1
        %s269 = smul.u32 %s268, 8
        %p270 = scmp.lt.s32.totalorder %s269, 15
        %s271 = scalar_select %p270, %s269, 15
      $region36: #{rednet_forward.11} parent=23 // pred_fallthru
        _
    $region24: #{rednet_forward.11} parent=5 // pred_fallthru
      _
    %p272 = scmp.le.s32.totalorder 1, %s11
    %p273 = scmp.lt.s32.totalorder %s11, 5
    %p274 = pnand %p272, %p273
    %p275 = pneg %p274
    // Predicated region
    $region37: #{rednet_forward.11} parent=5 // pred_check
      _
    $region38: #{rednet_forward.11} parent=5 // pred_check_branch
      %277 = sbr.rel (%p274) target = $region40
    $region39: #{rednet_forward.11} parent=5 // pred_region
      %s278 = ssub.s32 %s11, 1
      %s279 = smul.u32 8, %s21
      %p280 = scmp.lt.s32.totalorder %s20, 1
      %s281 = scalar_select %p280, %s20, 1
      %p282 = scmp.lt.s32.totalorder %s279, 15
      %s283 = scalar_select %p282, %s279, 15
      %s284 = smul.addr %s283, 3
      %s285 = smul.addr %s281, 48
      %s286 = sadd.s32 %s284, %s285
      %s287 = smul.addr %s286, 4
      %s288 = scalar_lea.vmem %s0, %s287
      %p289 = pneg %p51
      %p290 = pneg %p48
      %s291 = smul.u32 %s21, 8
      %s292 = ssub.s32 %s291, 1
      %p293 = scmp.gt.s32.totalorder %s292, 0
      %s294 = scalar_select %p293, %s292, 0
      %p295 = scmp.lt.s32.totalorder %s20, 1
      %s296 = scalar_select %p295, %s20, 1
      %p297 = scmp.lt.s32.totalorder %s294, 15
      %s298 = scalar_select %p297, %s294, 15
      %s299 = smul.addr %s298, 3
      %s300 = smul.addr %s296, 48
      %s301 = sadd.s32 %s299, %s300
      %s302 = smul.addr %s301, 4
      %s303 = scalar_lea.vmem %s1, %s302
      %p304 = pneg %p87
      %p305 = pneg %p84
      %s306 = sadd.s32 %s21, 1
      %s307 = smul.u32 %s306, 8
      %p308 = scmp.lt.s32.totalorder %s307, 15
      %s309 = scalar_select %p308, %s307, 15
      %p310 = scmp.lt.s32.totalorder %s20, 1
      %s311 = scalar_select %p310, %s20, 1
      %p312 = scmp.lt.s32.totalorder %s309, 15
      %s313 = scalar_select %p312, %s309, 15
      %s314 = smul.addr %s313, 3
      %s315 = smul.addr %s311, 48
      %s316 = sadd.s32 %s314, %s315
      %s317 = smul.addr %s316, 4
      %s318 = scalar_lea.vmem %s2, %s317
      %p319 = pneg %p123
      %p320 = pneg %p120
      %p321 = pneg %p144
      %p322 = pneg %p141
      %p323 = pneg %p165
      %p324 = pneg %p162
      %p325 = pneg %p193
      %p326 = pneg %p190
      %s327 = smul.u32 8, %s21
      %p328 = scmp.lt.s32.totalorder %s20, 1
      %s329 = scalar_select %p328, %s20, 1
      %p330 = scmp.lt.s32.totalorder %s327, 15
      %s331 = scalar_select %p330, %s327, 15
      %s332 = smul.addr %s331, 3
      %s333 = smul.addr %s329, 48
      %s334 = sadd.s32 %s332, %s333
      %s335 = smul.addr %s334, 4
      %s336 = scalar_lea.vmem %s5, %s335
      %s337 = smul.u32 8, %s21
      %p338 = scmp.lt.s32.totalorder %s20, 1
      %s339 = scalar_select %p338, %s20, 1
      %p340 = scmp.lt.s32.totalorder %s337, 15
      %s341 = scalar_select %p340, %s337, 15
      %s342 = smul.addr %s341, 3
      %s343 = smul.addr %s339, 48
      %s344 = sadd.s32 %s342, %s343
      %s345 = smul.addr %s344, 4
      %s346 = scalar_lea.vmem %s0, %s345
      %s347 = smul.u32 8, %s21
      %s348 = smul.u32 %s21, 8
      %s349 = ssub.s32 %s348, 1
      %p350 = scmp.gt.s32.totalorder %s349, 0
      %s351 = scalar_select %p350, %s349, 0
      %p352 = scmp.lt.s32.totalorder %s20, 1
      %s353 = scalar_select %p352, %s20, 1
      %p354 = scmp.lt.s32.totalorder %s351, 15
      %s355 = scalar_select %p354, %s351, 15
      %s356 = smul.addr %s355, 3
      %s357 = smul.addr %s353, 48
      %s358 = sadd.s32 %s356, %s357
      %s359 = smul.addr %s358, 4
      %s360 = scalar_lea.vmem %s1, %s359
      %s361 = smul.u32 %s21, 8
      %s362 = ssub.s32 %s361, 1
      %p363 = scmp.gt.s32.totalorder %s362, 0
      %s364 = scalar_select %p363, %s362, 0
      %s365 = sadd.s32 %s21, 1
      %s366 = smul.u32 %s365, 8
      %p367 = scmp.lt.s32.totalorder %s366, 15
      %s368 = scalar_select %p367, %s366, 15
      %p369 = scmp.lt.s32.totalorder %s20, 1
      %s370 = scalar_select %p369, %s20, 1
      %p371 = scmp.lt.s32.totalorder %s368, 15
      %s372 = scalar_select %p371, %s368, 15
      %s373 = smul.addr %s372, 3
      %s374 = smul.addr %s370, 48
      %s375 = sadd.s32 %s373, %s374
      %s376 = smul.addr %s375, 4
      %s377 = scalar_lea.vmem %s2, %s376
      %s378 = sadd.s32 %s21, 1
      %s379 = smul.u32 %s378, 8
      %p380 = scmp.lt.s32.totalorder %s379, 15
      %s381 = scalar_select %p380, %s379, 15
      %s382 = smul.u32 8, %s21
      %p383 = scmp.lt.s32.totalorder %s20, 1
      %s384 = scalar_select %p383, %s20, 1
      %p385 = scmp.lt.s32.totalorder %s382, 15
      %s386 = scalar_select %p385, %s382, 15
      %s387 = smul.addr %s386, 3
      %s388 = smul.addr %s384, 48
      %s389 = sadd.s32 %s387, %s388
      %s390 = smul.addr %s389, 4
      %s391 = scalar_lea.vmem %s5, %s390
      %s392 = smul.u32 8, %s21
      %v394 = vld [vmem:[%s346] sm:$0xf]
      %v395 = vld [vmem:[%s346 + $0x4] sm:$0xf]
      %v396 = vld [vmem:[%s346 + $0x8] sm:$0x1]
      %v397 = vld [vmem:[%s346 + $0xc] sm:$0xf]
      %v398 = vld [vmem:[%s346 + $0x10] sm:$0xf]
      %v399 = vld [vmem:[%s346 + $0x14] sm:$0x1]
      %v400 = vld [vmem:[%s346 + $0x18] sm:$0xf]
      %v401 = vld [vmem:[%s346 + $0x1c] sm:$0xf]
      %v402 = vld [vmem:[%s346 + $0x20] sm:$0x1]
      %v403 = vld [vmem:[%s346 + $0x24] sm:$0xf]
      %v404 = vld [vmem:[%s346 + $0x28] sm:$0xf]
      %v405 = vld [vmem:[%s346 + $0x2c] sm:$0x1]
      %v406 = vld [vmem:[%s346 + $0x30] sm:$0xf]
      %v407 = vld [vmem:[%s346 + $0x34] sm:$0xf]
      %v408 = vld [vmem:[%s346 + $0x38] sm:$0x1]
      %v409 = vld [vmem:[%s346 + $0x3c] sm:$0xf]
      %v410 = vld [vmem:[%s346 + $0x40] sm:$0xf]
      %v411 = vld [vmem:[%s346 + $0x44] sm:$0x1]
      %v412 = vld [vmem:[%s346 + $0x48] sm:$0xf]
      %v413 = vld [vmem:[%s346 + $0x4c] sm:$0xf]
      %v414 = vld [vmem:[%s346 + $0x50] sm:$0x1]
      %v415 = vld [vmem:[%s346 + $0x54] sm:$0xf]
      %v416 = vld [vmem:[%s346 + $0x58] sm:$0xf]
      %v417 = vld [vmem:[%s346 + $0x5c] sm:$0x1]
      %p418 = scmp.gt.s32.totalorder %s21, 0
      %s419 = scalar_select %p418, 1, 0
      %s420 = scvt.s32.f32 %s419
      %p421 = scmp.lt.s32.totalorder %s21, 1
      %s422 = scalar_select %p421, 1, 0
      %s423 = scvt.s32.f32 %s422
      %v424 = vld [vmem:[%s360] sm:$0xf]
      %v425 = vld [vmem:[%s360 + $0x4] sm:$0xf]
      %v426 = vld [vmem:[%s360 + $0x8] sm:$0x1]
      %v427 = vunpack.c.l.bf16 %v424
      %v428 = vunpack.c.l.bf16 %v425
      %v429 = vunpack.c.l.bf16 %v426
      %v430 = vstv %s420
      %v431 = vmul.f32 %v427, %v430
      %v432 = vmul.f32 %v428, %v430
      %v433 = vmul.f32 %v429, %v430
      %v434 = vpack.c.bf16 %v431, %v431
      %v435 = vpack.c.bf16 %v432, %v432
      %v436 = vpack.c.bf16 %v433, %v433
      %v437 = vld [vmem:[%s377] sm:$0xf]
      %v438 = vld [vmem:[%s377 + $0x4] sm:$0xf]
      %v439 = vld [vmem:[%s377 + $0x8] sm:$0x1]
      %v440 = vunpack.c.l.bf16 %v437
      %v441 = vunpack.c.l.bf16 %v438
      %v442 = vunpack.c.l.bf16 %v439
      %v443 = vstv %s423
      %v444 = vmul.f32 %v440, %v443
      %v445 = vmul.f32 %v441, %v443
      %v446 = vmul.f32 %v442, %v443
      %v447 = vpack.c.bf16 %v444, %v444
      %v448 = vpack.c.bf16 %v445, %v445
      %v449 = vpack.c.bf16 %v446, %v446
      %v450 = vld [vmem:[%s3] sm:$0xf]
      %s451 = scalar_lea.vmem %s3, 12
      %v452 = vld [vmem:[%s451] sm:$0xf]
      %v469 = vunpack.c.l.b16 %v394
      %v470 = vunpack.c.l.b16 %v395
      %v471 = vunpack.c.l.b16 %v397
      %v472 = vunpack.c.l.b16 %v398
      %v473 = vunpack.c.l.b16 %v400
      %v474 = vunpack.c.l.b16 %v401
      %v475 = vunpack.c.l.b16 %v403
      %v476 = vunpack.c.l.b16 %v404
      %v477 = vunpack.c.l.b16 %v406
      %v478 = vunpack.c.l.b16 %v407
      %v479 = vunpack.c.l.b16 %v409
      %v480 = vunpack.c.l.b16 %v410
      %v481 = vunpack.c.l.b16 %v412
      %v482 = vunpack.c.l.b16 %v413
      %v483 = vunpack.c.l.b16 %v415
      %v484 = vunpack.c.l.b16 %v416
      %v485 = vpack.c.b16 %v470, %v469
      %v486 = vpack.c.b16 %v472, %v471
      %v487 = vpack.c.b16 %v474, %v473
      %v488 = vpack.c.b16 %v476, %v475
      %v489 = vpack.c.b16 %v478, %v477
      %v490 = vpack.c.b16 %v480, %v479
      %v491 = vpack.c.b16 %v482, %v481
      %v492 = vpack.c.b16 %v484, %v483
      %vm493 = vcmask 64512
      %v495 = vsel %vm493, %v485, 0
      %v498 = vsel %vm493, %v486, 0
      %v501 = vsel %vm493, %v487, 0
      %v504 = vsel %vm493, %v488, 0
      %v507 = vsel %vm493, %v489, 0
      %v510 = vsel %vm493, %v490, 0
      %v513 = vsel %vm493, %v491, 0
      %v516 = vsel %vm493, %v492, 0
      %vm518 = vcmask 1043456
      %v520 = vsel %vm518, %v452, 0
      %522 = vmatpush.bf16.msra.mxu0 0
      %523 = vmatpush.bf16.msra.mxu0 0
      %524 = vmatpush.bf16.msra.mxu0 0
      %525 = vmatpush.bf16.msra.mxu0 0
      %526 = vmatpush.bf16.msra.mxu0 0
      %527 = vmatpush.bf16.msra.mxu0 0
      %528 = vmatpush.bf16.msra.mxu0 0
      %529 = vmatpush.bf16.msra.mxu0 %v520
      %530 = vmatmul.bf16.gmra.mxu0 %v495
      %v531 = vpop.f32.mrf.mxu0
      %v532 = vadd.f32 0.0, %v531
      %v533 = vpop.f32.mrf.mxu0
      %v534 = vadd.f32 0.0, %v533
      %535 = vmatmul.bf16.gmra.mxu0 %v498
      %v536 = vpop.f32.mrf.mxu0
      %v537 = vadd.f32 0.0, %v536
      %v538 = vpop.f32.mrf.mxu0
      %v539 = vadd.f32 0.0, %v538
      %540 = vmatmul.bf16.gmra.mxu0 %v501
      %v541 = vpop.f32.mrf.mxu0
      %v542 = vadd.f32 0.0, %v541
      %v543 = vpop.f32.mrf.mxu0
      %v544 = vadd.f32 0.0, %v543
      %545 = vmatmul.bf16.gmra.mxu0 %v504
      %v546 = vpop.f32.mrf.mxu0
      %v547 = vadd.f32 0.0, %v546
      %v548 = vpop.f32.mrf.mxu0
      %v549 = vadd.f32 0.0, %v548
      %550 = vmatmul.bf16.gmra.mxu0 %v507
      %v551 = vpop.f32.mrf.mxu0
      %v552 = vadd.f32 0.0, %v551
      %v553 = vpop.f32.mrf.mxu0
      %v554 = vadd.f32 0.0, %v553
      %555 = vmatmul.bf16.gmra.mxu0 %v510
      %v556 = vpop.f32.mrf.mxu0
      %v557 = vadd.f32 0.0, %v556
      %v558 = vpop.f32.mrf.mxu0
      %v559 = vadd.f32 0.0, %v558
      %560 = vmatmul.bf16.gmra.mxu0 %v513
      %v561 = vpop.f32.mrf.mxu0
      %v562 = vadd.f32 0.0, %v561
      %v563 = vpop.f32.mrf.mxu0
      %v564 = vadd.f32 0.0, %v563
      %565 = vmatmul.bf16.gmra.mxu0 %v516
      %v566 = vpop.f32.mrf.mxu0
      %v567 = vadd.f32 0.0, %v566
      %v568 = vpop.f32.mrf.mxu0
      %v569 = vadd.f32 0.0, %v568
      %570 = vdwg.mxu0
      %v573 = vunpack.c.l.b16 %v434
      %v574 = vunpack.c.l.b16 %v435
      %v575 = vpack.c.b16 %v574, %v573
      %v577 = vsel %vm493, %v575, 0
      %v580 = vsel %vm518, %v450, 0
      %582 = vmatpush.bf16.msra.mxu0 0
      %583 = vmatpush.bf16.msra.mxu0 0
      %584 = vmatpush.bf16.msra.mxu0 0
      %585 = vmatpush.bf16.msra.mxu0 0
      %586 = vmatpush.bf16.msra.mxu0 0
      %587 = vmatpush.bf16.msra.mxu0 0
      %588 = vmatpush.bf16.msra.mxu0 0
      %589 = vmatpush.bf16.msra.mxu0 %v580
      %590 = vmatmul.bf16.gmra.mxu0 %v577
      %v591 = vpop.f32.mrf.mxu0
      %v592 = vadd.f32 %v532, %v591
      %v593 = vpop.f32.mrf.mxu0
      %v594 = vadd.f32 %v534, %v593
      %595 = vmatmul.bf16.gmra.mxu0 %v495
      %v596 = vpop.f32.mrf.mxu0
      %v597 = vadd.f32 %v537, %v596
      %v598 = vpop.f32.mrf.mxu0
      %v599 = vadd.f32 %v539, %v598
      %600 = vmatmul.bf16.gmra.mxu0 %v498
      %v601 = vpop.f32.mrf.mxu0
      %v602 = vadd.f32 %v542, %v601
      %v603 = vpop.f32.mrf.mxu0
      %v604 = vadd.f32 %v544, %v603
      %605 = vmatmul.bf16.gmra.mxu0 %v501
      %v606 = vpop.f32.mrf.mxu0
      %v607 = vadd.f32 %v547, %v606
      %v608 = vpop.f32.mrf.mxu0
      %v609 = vadd.f32 %v549, %v608
      %610 = vmatmul.bf16.gmra.mxu0 %v504
      %v611 = vpop.f32.mrf.mxu0
      %v612 = vadd.f32 %v552, %v611
      %v613 = vpop.f32.mrf.mxu0
      %v614 = vadd.f32 %v554, %v613
      %615 = vmatmul.bf16.gmra.mxu0 %v507
      %v616 = vpop.f32.mrf.mxu0
      %v617 = vadd.f32 %v557, %v616
      %v618 = vpop.f32.mrf.mxu0
      %v619 = vadd.f32 %v559, %v618
      %620 = vmatmul.bf16.gmra.mxu0 %v510
      %v621 = vpop.f32.mrf.mxu0
      %v622 = vadd.f32 %v562, %v621
      %v623 = vpop.f32.mrf.mxu0
      %v624 = vadd.f32 %v564, %v623
      %625 = vmatmul.bf16.gmra.mxu0 %v513
      %v626 = vpop.f32.mrf.mxu0
      %v627 = vadd.f32 %v567, %v626
      %v628 = vpop.f32.mrf.mxu0
      %v629 = vadd.f32 %v569, %v628
      %630 = vdwg.mxu0
      %s631 = scalar_lea.vmem %s3, 24
      %v632 = vld [vmem:[%s631] sm:$0xf]
      %v635 = vunpack.c.l.b16 %v447
      %v636 = vunpack.c.l.b16 %v448
      %v637 = vpack.c.b16 %v636, %v635
      %v639 = vsel %vm493, %v637, 0
      %v642 = vsel %vm518, %v632, 0
      %644 = vmatpush.bf16.msra.mxu0 0
      %645 = vmatpush.bf16.msra.mxu0 0
      %646 = vmatpush.bf16.msra.mxu0 0
      %647 = vmatpush.bf16.msra.mxu0 0
      %648 = vmatpush.bf16.msra.mxu0 0
      %649 = vmatpush.bf16.msra.mxu0 0
      %650 = vmatpush.bf16.msra.mxu0 0
      %651 = vmatpush.bf16.msra.mxu0 %v642
      %652 = vmatmul.bf16.gmra.mxu0 %v498
      %v653 = vpop.f32.mrf.mxu0
      %v654 = vadd.f32 0.0, %v653
      %v655 = vpop.f32.mrf.mxu0
      %v656 = vadd.f32 0.0, %v655
      %657 = vmatmul.bf16.gmra.mxu0 %v501
      %v658 = vpop.f32.mrf.mxu0
      %v659 = vadd.f32 0.0, %v658
      %v660 = vpop.f32.mrf.mxu0
      %v661 = vadd.f32 0.0, %v660
      %662 = vmatmul.bf16.gmra.mxu0 %v504
      %v663 = vpop.f32.mrf.mxu0
      %v664 = vadd.f32 0.0, %v663
      %v665 = vpop.f32.mrf.mxu0
      %v666 = vadd.f32 0.0, %v665
      %667 = vmatmul.bf16.gmra.mxu0 %v507
      %v668 = vpop.f32.mrf.mxu0
      %v669 = vadd.f32 0.0, %v668
      %v670 = vpop.f32.mrf.mxu0
      %v671 = vadd.f32 0.0, %v670
      %672 = vmatmul.bf16.gmra.mxu0 %v510
      %v673 = vpop.f32.mrf.mxu0
      %v674 = vadd.f32 0.0, %v673
      %v675 = vpop.f32.mrf.mxu0
      %v676 = vadd.f32 0.0, %v675
      %677 = vmatmul.bf16.gmra.mxu0 %v513
      %v678 = vpop.f32.mrf.mxu0
      %v679 = vadd.f32 0.0, %v678
      %v680 = vpop.f32.mrf.mxu0
      %v681 = vadd.f32 0.0, %v680
      %682 = vmatmul.bf16.gmra.mxu0 %v516
      %v683 = vpop.f32.mrf.mxu0
      %v684 = vadd.f32 0.0, %v683
      %v685 = vpop.f32.mrf.mxu0
      %v686 = vadd.f32 0.0, %v685
      %687 = vmatmul.bf16.gmra.mxu0 %v639
      %v688 = vpop.f32.mrf.mxu0
      %v689 = vadd.f32 0.0, %v688
      %v690 = vpop.f32.mrf.mxu0
      %v691 = vadd.f32 0.0, %v690
      %692 = vdwg.mxu0
      %v693 = vadd.f32 %v592, %v654
      %v694 = vadd.f32 %v594, %v656
      %v695 = vadd.f32 %v597, %v659
      %v696 = vadd.f32 %v599, %v661
      %v697 = vadd.f32 %v602, %v664
      %v698 = vadd.f32 %v604, %v666
      %v699 = vadd.f32 %v607, %v669
      %v700 = vadd.f32 %v609, %v671
      %v701 = vadd.f32 %v612, %v674
      %v702 = vadd.f32 %v614, %v676
      %v703 = vadd.f32 %v617, %v679
      %v704 = vadd.f32 %v619, %v681
      %v705 = vadd.f32 %v622, %v684
      %v706 = vadd.f32 %v624, %v686
      %v707 = vadd.f32 %v627, %v689
      %v708 = vadd.f32 %v629, %v691
      %vm709 = vsmask.f32 3328
      %vm710 = vsmask.f32 7440
      %vm711 = vmor %vm709, %vm710
      %v713 = vshrl.u32 %v434, 16
      %v715 = vrot.slane %v713, 4
      %v716 = vshll.u32 %v434, 16
      %v718 = vrot.slane %v716, 5
      %v719 = vor.u32 %v715, %v718
      %v720 = vrot.slane %v719, 4
      %v722 = vshll.u32 %v435, 16
      %v724 = vrot.slane %v722, 5
      %v725 = vsel %vm711, %v720, %v724
      %v726 = vshrl.u32 %v435, 16
      %v728 = vrot.slane %v726, 4
      %v729 = vor.u32 %v728, %v724
      %v730 = vrot.slane %v729, 4
      %v732 = vshll.u32 %v436, 16
      %v734 = vrot.slane %v732, 5
      %v735 = vsel %vm711, %v730, %v734
      %v737 = vshrl.u32 %v394, 16
      %v739 = vrot.slane %v737, 4
      %v740 = vshll.u32 %v394, 16
      %v742 = vrot.slane %v740, 5
      %v743 = vor.u32 %v739, %v742
      %v744 = vrot.slane %v743, 4
      %v746 = vshll.u32 %v395, 16
      %v748 = vrot.slane %v746, 5
      %v749 = vsel %vm711, %v744, %v748
      %v750 = vshrl.u32 %v395, 16
      %v752 = vrot.slane %v750, 4
      %v753 = vor.u32 %v752, %v748
      %v754 = vrot.slane %v753, 4
      %v756 = vshll.u32 %v396, 16
      %v758 = vrot.slane %v756, 5
      %v759 = vsel %vm711, %v754, %v758
      %v761 = vshrl.u32 %v397, 16
      %v763 = vrot.slane %v761, 4
      %v764 = vshll.u32 %v397, 16
      %v766 = vrot.slane %v764, 5
      %v767 = vor.u32 %v763, %v766
      %v768 = vrot.slane %v767, 4
      %v770 = vshll.u32 %v398, 16
      %v772 = vrot.slane %v770, 5
      %v773 = vsel %vm711, %v768, %v772
      %v774 = vshrl.u32 %v398, 16
      %v776 = vrot.slane %v774, 4
      %v777 = vor.u32 %v776, %v772
      %v778 = vrot.slane %v777, 4
      %v780 = vshll.u32 %v399, 16
      %v782 = vrot.slane %v780, 5
      %v783 = vsel %vm711, %v778, %v782
      %v785 = vshrl.u32 %v400, 16
      %v787 = vrot.slane %v785, 4
      %v788 = vshll.u32 %v400, 16
      %v790 = vrot.slane %v788, 5
      %v791 = vor.u32 %v787, %v790
      %v792 = vrot.slane %v791, 4
      %v794 = vshll.u32 %v401, 16
      %v796 = vrot.slane %v794, 5
      %v797 = vsel %vm711, %v792, %v796
      %v798 = vshrl.u32 %v401, 16
      %v800 = vrot.slane %v798, 4
      %v801 = vor.u32 %v800, %v796
      %v802 = vrot.slane %v801, 4
      %v804 = vshll.u32 %v402, 16
      %v806 = vrot.slane %v804, 5
      %v807 = vsel %vm711, %v802, %v806
      %v809 = vshrl.u32 %v403, 16
      %v811 = vrot.slane %v809, 4
      %v812 = vshll.u32 %v403, 16
      %v814 = vrot.slane %v812, 5
      %v815 = vor.u32 %v811, %v814
      %v816 = vrot.slane %v815, 4
      %v818 = vshll.u32 %v404, 16
      %v820 = vrot.slane %v818, 5
      %v821 = vsel %vm711, %v816, %v820
      %v822 = vshrl.u32 %v404, 16
      %v824 = vrot.slane %v822, 4
      %v825 = vor.u32 %v824, %v820
      %v826 = vrot.slane %v825, 4
      %v828 = vshll.u32 %v405, 16
      %v830 = vrot.slane %v828, 5
      %v831 = vsel %vm711, %v826, %v830
      %v833 = vshrl.u32 %v406, 16
      %v835 = vrot.slane %v833, 4
      %v836 = vshll.u32 %v406, 16
      %v838 = vrot.slane %v836, 5
      %v839 = vor.u32 %v835, %v838
      %v840 = vrot.slane %v839, 4
      %v842 = vshll.u32 %v407, 16
      %v844 = vrot.slane %v842, 5
      %v845 = vsel %vm711, %v840, %v844
      %v846 = vshrl.u32 %v407, 16
      %v848 = vrot.slane %v846, 4
      %v849 = vor.u32 %v848, %v844
      %v850 = vrot.slane %v849, 4
      %v852 = vshll.u32 %v408, 16
      %v854 = vrot.slane %v852, 5
      %v855 = vsel %vm711, %v850, %v854
      %v857 = vshrl.u32 %v409, 16
      %v859 = vrot.slane %v857, 4
      %v860 = vshll.u32 %v409, 16
      %v862 = vrot.slane %v860, 5
      %v863 = vor.u32 %v859, %v862
      %v864 = vrot.slane %v863, 4
      %v866 = vshll.u32 %v410, 16
      %v868 = vrot.slane %v866, 5
      %v869 = vsel %vm711, %v864, %v868
      %v870 = vshrl.u32 %v410, 16
      %v872 = vrot.slane %v870, 4
      %v873 = vor.u32 %v872, %v868
      %v874 = vrot.slane %v873, 4
      %v876 = vshll.u32 %v411, 16
      %v878 = vrot.slane %v876, 5
      %v879 = vsel %vm711, %v874, %v878
      %v881 = vshrl.u32 %v412, 16
      %v883 = vrot.slane %v881, 4
      %v884 = vshll.u32 %v412, 16
      %v886 = vrot.slane %v884, 5
      %v887 = vor.u32 %v883, %v886
      %v888 = vrot.slane %v887, 4
      %v890 = vshll.u32 %v413, 16
      %v892 = vrot.slane %v890, 5
      %v893 = vsel %vm711, %v888, %v892
      %v894 = vshrl.u32 %v413, 16
      %v896 = vrot.slane %v894, 4
      %v897 = vor.u32 %v896, %v892
      %v898 = vrot.slane %v897, 4
      %v900 = vshll.u32 %v414, 16
      %v902 = vrot.slane %v900, 5
      %v903 = vsel %vm711, %v898, %v902
      %s904 = scalar_lea.vmem %s3, 4
      %v905 = vld [vmem:[%s904] sm:$0xf]
      %v906 = vunpack.c.l.b16 %v725
      %v907 = vunpack.c.l.b16 %v735
      %v908 = vunpack.c.l.b16 %v749
      %v909 = vunpack.c.l.b16 %v759
      %v910 = vunpack.c.l.b16 %v773
      %v911 = vunpack.c.l.b16 %v783
      %v912 = vunpack.c.l.b16 %v797
      %v913 = vunpack.c.l.b16 %v807
      %v914 = vunpack.c.l.b16 %v821
      %v915 = vunpack.c.l.b16 %v831
      %v916 = vunpack.c.l.b16 %v845
      %v917 = vunpack.c.l.b16 %v855
      %v918 = vunpack.c.l.b16 %v869
      %v919 = vunpack.c.l.b16 %v879
      %v920 = vunpack.c.l.b16 %v893
      %v921 = vunpack.c.l.b16 %v903
      %v922 = vpack.c.b16 %v907, %v906
      %v923 = vpack.c.b16 %v909, %v908
      %v924 = vpack.c.b16 %v911, %v910
      %v925 = vpack.c.b16 %v913, %v912
      %v926 = vpack.c.b16 %v915, %v914
      %v927 = vpack.c.b16 %v917, %v916
      %v928 = vpack.c.b16 %v919, %v918
      %v929 = vpack.c.b16 %v921, %v920
      %v931 = vsel %vm493, %v922, 0
      %v934 = vsel %vm493, %v923, 0
      %v937 = vsel %vm493, %v924, 0
      %v940 = vsel %vm493, %v925, 0
      %v943 = vsel %vm493, %v926, 0
      %v946 = vsel %vm493, %v927, 0
      %v949 = vsel %vm493, %v928, 0
      %v952 = vsel %vm493, %v929, 0
      %v955 = vsel %vm518, %v905, 0
      %957 = vmatpush.bf16.msra.mxu0 0
      %958 = vmatpush.bf16.msra.mxu0 0
      %959 = vmatpush.bf16.msra.mxu0 0
      %960 = vmatpush.bf16.msra.mxu0 0
      %961 = vmatpush.bf16.msra.mxu0 0
      %962 = vmatpush.bf16.msra.mxu0 0
      %963 = vmatpush.bf16.msra.mxu0 0
      %964 = vmatpush.bf16.msra.mxu0 %v955
      %965 = vmatmul.bf16.gmra.mxu0 %v931
      %v966 = vpop.f32.mrf.mxu0
      %v967 = vadd.f32 0.0, %v966
      %v968 = vpop.f32.mrf.mxu0
      %v969 = vadd.f32 0.0, %v968
      %970 = vmatmul.bf16.gmra.mxu0 %v934
      %v971 = vpop.f32.mrf.mxu0
      %v972 = vadd.f32 0.0, %v971
      %v973 = vpop.f32.mrf.mxu0
      %v974 = vadd.f32 0.0, %v973
      %975 = vmatmul.bf16.gmra.mxu0 %v937
      %v976 = vpop.f32.mrf.mxu0
      %v977 = vadd.f32 0.0, %v976
      %v978 = vpop.f32.mrf.mxu0
      %v979 = vadd.f32 0.0, %v978
      %980 = vmatmul.bf16.gmra.mxu0 %v940
      %v981 = vpop.f32.mrf.mxu0
      %v982 = vadd.f32 0.0, %v981
      %v983 = vpop.f32.mrf.mxu0
      %v984 = vadd.f32 0.0, %v983
      %985 = vmatmul.bf16.gmra.mxu0 %v943
      %v986 = vpop.f32.mrf.mxu0
      %v987 = vadd.f32 0.0, %v986
      %v988 = vpop.f32.mrf.mxu0
      %v989 = vadd.f32 0.0, %v988
      %990 = vmatmul.bf16.gmra.mxu0 %v946
      %v991 = vpop.f32.mrf.mxu0
      %v992 = vadd.f32 0.0, %v991
      %v993 = vpop.f32.mrf.mxu0
      %v994 = vadd.f32 0.0, %v993
      %995 = vmatmul.bf16.gmra.mxu0 %v949
      %v996 = vpop.f32.mrf.mxu0
      %v997 = vadd.f32 0.0, %v996
      %v998 = vpop.f32.mrf.mxu0
      %v999 = vadd.f32 0.0, %v998
      %1000 = vmatmul.bf16.gmra.mxu0 %v952
      %v1001 = vpop.f32.mrf.mxu0
      %v1002 = vadd.f32 0.0, %v1001
      %v1003 = vpop.f32.mrf.mxu0
      %v1004 = vadd.f32 0.0, %v1003
      %1005 = vdwg.mxu0
      %v1006 = vadd.f32 %v693, %v967
      %v1007 = vadd.f32 %v694, %v969
      %v1008 = vadd.f32 %v695, %v972
      %v1009 = vadd.f32 %v696, %v974
      %v1010 = vadd.f32 %v697, %v977
      %v1011 = vadd.f32 %v698, %v979
      %v1012 = vadd.f32 %v699, %v982
      %v1013 = vadd.f32 %v700, %v984
      %v1014 = vadd.f32 %v701, %v987
      %v1015 = vadd.f32 %v702, %v989
      %v1016 = vadd.f32 %v703, %v992
      %v1017 = vadd.f32 %v704, %v994
      %v1018 = vadd.f32 %v705, %v997
      %v1019 = vadd.f32 %v706, %v999
      %v1020 = vadd.f32 %v707, %v1002
      %v1021 = vadd.f32 %v708, %v1004
      %v1023 = vshrl.u32 %v415, 16
      %v1025 = vrot.slane %v1023, 4
      %v1026 = vshll.u32 %v415, 16
      %v1028 = vrot.slane %v1026, 5
      %v1029 = vor.u32 %v1025, %v1028
      %v1030 = vrot.slane %v1029, 4
      %v1032 = vshll.u32 %v416, 16
      %v1034 = vrot.slane %v1032, 5
      %v1035 = vsel %vm711, %v1030, %v1034
      %v1036 = vshrl.u32 %v416, 16
      %v1038 = vrot.slane %v1036, 4
      %v1039 = vor.u32 %v1038, %v1034
      %v1040 = vrot.slane %v1039, 4
      %v1042 = vshll.u32 %v417, 16
      %v1044 = vrot.slane %v1042, 5
      %v1045 = vsel %vm711, %v1040, %v1044
      %s1046 = scalar_lea.vmem %s3, 16
      %v1047 = vld [vmem:[%s1046] sm:$0xf]
      %v1048 = vunpack.c.l.b16 %v1035
      %v1049 = vunpack.c.l.b16 %v1045
      %v1050 = vpack.c.b16 %v1049, %v1048
      %v1052 = vsel %vm493, %v1050, 0
      %v1055 = vsel %vm518, %v1047, 0
      %1057 = vmatpush.bf16.msra.mxu0 0
      %1058 = vmatpush.bf16.msra.mxu0 0
      %1059 = vmatpush.bf16.msra.mxu0 0
      %1060 = vmatpush.bf16.msra.mxu0 0
      %1061 = vmatpush.bf16.msra.mxu0 0
      %1062 = vmatpush.bf16.msra.mxu0 0
      %1063 = vmatpush.bf16.msra.mxu0 0
      %1064 = vmatpush.bf16.msra.mxu0 %v1055
      %1065 = vmatmul.bf16.gmra.mxu0 %v934
      %v1066 = vpop.f32.mrf.mxu0
      %v1067 = vadd.f32 0.0, %v1066
      %v1068 = vpop.f32.mrf.mxu0
      %v1069 = vadd.f32 0.0, %v1068
      %1070 = vmatmul.bf16.gmra.mxu0 %v937
      %v1071 = vpop.f32.mrf.mxu0
      %v1072 = vadd.f32 0.0, %v1071
      %v1073 = vpop.f32.mrf.mxu0
      %v1074 = vadd.f32 0.0, %v1073
      %1075 = vmatmul.bf16.gmra.mxu0 %v940
      %v1076 = vpop.f32.mrf.mxu0
      %v1077 = vadd.f32 0.0, %v1076
      %v1078 = vpop.f32.mrf.mxu0
      %v1079 = vadd.f32 0.0, %v1078
      %1080 = vmatmul.bf16.gmra.mxu0 %v943
      %v1081 = vpop.f32.mrf.mxu0
      %v1082 = vadd.f32 0.0, %v1081
      %v1083 = vpop.f32.mrf.mxu0
      %v1084 = vadd.f32 0.0, %v1083
      %1085 = vmatmul.bf16.gmra.mxu0 %v946
      %v1086 = vpop.f32.mrf.mxu0
      %v1087 = vadd.f32 0.0, %v1086
      %v1088 = vpop.f32.mrf.mxu0
      %v1089 = vadd.f32 0.0, %v1088
      %1090 = vmatmul.bf16.gmra.mxu0 %v949
      %v1091 = vpop.f32.mrf.mxu0
      %v1092 = vadd.f32 0.0, %v1091
      %v1093 = vpop.f32.mrf.mxu0
      %v1094 = vadd.f32 0.0, %v1093
      %1095 = vmatmul.bf16.gmra.mxu0 %v952
      %v1096 = vpop.f32.mrf.mxu0
      %v1097 = vadd.f32 0.0, %v1096
      %v1098 = vpop.f32.mrf.mxu0
      %v1099 = vadd.f32 0.0, %v1098
      %1100 = vmatmul.bf16.gmra.mxu0 %v1052
      %v1101 = vpop.f32.mrf.mxu0
      %v1102 = vadd.f32 0.0, %v1101
      %v1103 = vpop.f32.mrf.mxu0
      %v1104 = vadd.f32 0.0, %v1103
      %1105 = vdwg.mxu0
      %v1106 = vadd.f32 %v1006, %v1067
      %v1107 = vadd.f32 %v1007, %v1069
      %v1108 = vadd.f32 %v1008, %v1072
      %v1109 = vadd.f32 %v1009, %v1074
      %v1110 = vadd.f32 %v1010, %v1077
      %v1111 = vadd.f32 %v1011, %v1079
      %v1112 = vadd.f32 %v1012, %v1082
      %v1113 = vadd.f32 %v1013, %v1084
      %v1114 = vadd.f32 %v1014, %v1087
      %v1115 = vadd.f32 %v1015, %v1089
      %v1116 = vadd.f32 %v1016, %v1092
      %v1117 = vadd.f32 %v1017, %v1094
      %v1118 = vadd.f32 %v1018, %v1097
      %v1119 = vadd.f32 %v1019, %v1099
      %v1120 = vadd.f32 %v1020, %v1102
      %v1121 = vadd.f32 %v1021, %v1104
      %v1123 = vshrl.u32 %v447, 16
      %v1125 = vrot.slane %v1123, 4
      %v1126 = vshll.u32 %v447, 16
      %v1128 = vrot.slane %v1126, 5
      %v1129 = vor.u32 %v1125, %v1128
      %v1130 = vrot.slane %v1129, 4
      %v1132 = vshll.u32 %v448, 16
      %v1134 = vrot.slane %v1132, 5
      %v1135 = vsel %vm711, %v1130, %v1134
      %v1136 = vshrl.u32 %v448, 16
      %v1138 = vrot.slane %v1136, 4
      %v1139 = vor.u32 %v1138, %v1134
      %v1140 = vrot.slane %v1139, 4
      %v1142 = vshll.u32 %v449, 16
      %v1144 = vrot.slane %v1142, 5
      %v1145 = vsel %vm711, %v1140, %v1144
      %s1146 = scalar_lea.vmem %s3, 28
      %v1147 = vld [vmem:[%s1146] sm:$0xf]
      %v1148 = vunpack.c.l.b16 %v1135
      %v1149 = vunpack.c.l.b16 %v1145
      %v1150 = vpack.c.b16 %v1149, %v1148
      %v1152 = vsel %vm493, %v1150, 0
      %v1155 = vsel %vm518, %v1147, 0
      %1157 = vmatpush.bf16.msra.mxu0 0
      %1158 = vmatpush.bf16.msra.mxu0 0
      %1159 = vmatpush.bf16.msra.mxu0 0
      %1160 = vmatpush.bf16.msra.mxu0 0
      %1161 = vmatpush.bf16.msra.mxu0 0
      %1162 = vmatpush.bf16.msra.mxu0 0
      %1163 = vmatpush.bf16.msra.mxu0 0
      %1164 = vmatpush.bf16.msra.mxu0 %v1155
      %1165 = vmatmul.bf16.gmra.mxu0 %v937
      %v1166 = vpop.f32.mrf.mxu0
      %v1167 = vadd.f32 0.0, %v1166
      %v1168 = vpop.f32.mrf.mxu0
      %v1169 = vadd.f32 0.0, %v1168
      %1170 = vmatmul.bf16.gmra.mxu0 %v940
      %v1171 = vpop.f32.mrf.mxu0
      %v1172 = vadd.f32 0.0, %v1171
      %v1173 = vpop.f32.mrf.mxu0
      %v1174 = vadd.f32 0.0, %v1173
      %1175 = vmatmul.bf16.gmra.mxu0 %v943
      %v1176 = vpop.f32.mrf.mxu0
      %v1177 = vadd.f32 0.0, %v1176
      %v1178 = vpop.f32.mrf.mxu0
      %v1179 = vadd.f32 0.0, %v1178
      %1180 = vmatmul.bf16.gmra.mxu0 %v946
      %v1181 = vpop.f32.mrf.mxu0
      %v1182 = vadd.f32 0.0, %v1181
      %v1183 = vpop.f32.mrf.mxu0
      %v1184 = vadd.f32 0.0, %v1183
      %1185 = vmatmul.bf16.gmra.mxu0 %v949
      %v1186 = vpop.f32.mrf.mxu0
      %v1187 = vadd.f32 0.0, %v1186
      %v1188 = vpop.f32.mrf.mxu0
      %v1189 = vadd.f32 0.0, %v1188
      %1190 = vmatmul.bf16.gmra.mxu0 %v952
      %v1191 = vpop.f32.mrf.mxu0
      %v1192 = vadd.f32 0.0, %v1191
      %v1193 = vpop.f32.mrf.mxu0
      %v1194 = vadd.f32 0.0, %v1193
      %1195 = vmatmul.bf16.gmra.mxu0 %v1052
      %v1196 = vpop.f32.mrf.mxu0
      %v1197 = vadd.f32 0.0, %v1196
      %v1198 = vpop.f32.mrf.mxu0
      %v1199 = vadd.f32 0.0, %v1198
      %1200 = vmatmul.bf16.gmra.mxu0 %v1152
      %v1201 = vpop.f32.mrf.mxu0
      %v1202 = vadd.f32 0.0, %v1201
      %v1203 = vpop.f32.mrf.mxu0
      %v1204 = vadd.f32 0.0, %v1203
      %1205 = vdwg.mxu0
      %v1206 = vadd.f32 %v1106, %v1167
      %v1207 = vadd.f32 %v1107, %v1169
      %v1208 = vadd.f32 %v1108, %v1172
      %v1209 = vadd.f32 %v1109, %v1174
      %v1210 = vadd.f32 %v1110, %v1177
      %v1211 = vadd.f32 %v1111, %v1179
      %v1212 = vadd.f32 %v1112, %v1182
      %v1213 = vadd.f32 %v1113, %v1184
      %v1214 = vadd.f32 %v1114, %v1187
      %v1215 = vadd.f32 %v1115, %v1189
      %v1216 = vadd.f32 %v1116, %v1192
      %v1217 = vadd.f32 %v1117, %v1194
      %v1218 = vadd.f32 %v1118, %v1197
      %v1219 = vadd.f32 %v1119, %v1199
      %v1220 = vadd.f32 %v1120, %v1202
      %v1221 = vadd.f32 %v1121, %v1204
      %vm1230 = vcmask 1042432
      %vm1231 = vcmask 1046532
      %vm1232 = vmor %vm1230, %vm1231
      %v1233 = vrot.slane %v434, 5
      %v1234 = vrot.slane %v1233, 4
      %v1235 = vrot.slane %v435, 5
      %v1236 = vsel %vm1232, %v1234, %v1235
      %v1237 = vrot.slane %v1235, 4
      %v1238 = vrot.slane %v436, 5
      %v1239 = vsel %vm1232, %v1237, %v1238
      %v1240 = vrot.slane %v394, 5
      %v1241 = vrot.slane %v1240, 4
      %v1242 = vrot.slane %v395, 5
      %v1243 = vsel %vm1232, %v1241, %v1242
      %v1244 = vrot.slane %v1242, 4
      %v1245 = vrot.slane %v396, 5
      %v1246 = vsel %vm1232, %v1244, %v1245
      %v1247 = vrot.slane %v397, 5
      %v1248 = vrot.slane %v1247, 4
      %v1249 = vrot.slane %v398, 5
      %v1250 = vsel %vm1232, %v1248, %v1249
      %v1251 = vrot.slane %v1249, 4
      %v1252 = vrot.slane %v399, 5
      %v1253 = vsel %vm1232, %v1251, %v1252
      %v1254 = vrot.slane %v400, 5
      %v1255 = vrot.slane %v1254, 4
      %v1256 = vrot.slane %v401, 5
      %v1257 = vsel %vm1232, %v1255, %v1256
      %v1258 = vrot.slane %v1256, 4
      %v1259 = vrot.slane %v402, 5
      %v1260 = vsel %vm1232, %v1258, %v1259
      %v1261 = vrot.slane %v403, 5
      %v1262 = vrot.slane %v1261, 4
      %v1263 = vrot.slane %v404, 5
      %v1264 = vsel %vm1232, %v1262, %v1263
      %v1265 = vrot.slane %v1263, 4
      %v1266 = vrot.slane %v405, 5
      %v1267 = vsel %vm1232, %v1265, %v1266
      %v1268 = vrot.slane %v406, 5
      %v1269 = vrot.slane %v1268, 4
      %v1270 = vrot.slane %v407, 5
      %v1271 = vsel %vm1232, %v1269, %v1270
      %v1272 = vrot.slane %v1270, 4
      %v1273 = vrot.slane %v408, 5
      %v1274 = vsel %vm1232, %v1272, %v1273
      %v1275 = vrot.slane %v409, 5
      %v1276 = vrot.slane %v1275, 4
      %v1277 = vrot.slane %v410, 5
      %v1278 = vsel %vm1232, %v1276, %v1277
      %v1279 = vrot.slane %v1277, 4
      %v1280 = vrot.slane %v411, 5
      %v1281 = vsel %vm1232, %v1279, %v1280
      %v1282 = vrot.slane %v412, 5
      %v1283 = vrot.slane %v1282, 4
      %v1284 = vrot.slane %v413, 5
      %v1285 = vsel %vm1232, %v1283, %v1284
      %v1286 = vrot.slane %v1284, 4
      %v1287 = vrot.slane %v414, 5
      %v1288 = vsel %vm1232, %v1286, %v1287
      %s1289 = scalar_lea.vmem %s3, 8
      %v1290 = vld [vmem:[%s1289] sm:$0xf]
      %v1291 = vunpack.c.l.b16 %v1236
      %v1292 = vunpack.c.l.b16 %v1239
      %v1293 = vunpack.c.l.b16 %v1243
      %v1294 = vunpack.c.l.b16 %v1246
      %v1295 = vunpack.c.l.b16 %v1250
      %v1296 = vunpack.c.l.b16 %v1253
      %v1297 = vunpack.c.l.b16 %v1257
      %v1298 = vunpack.c.l.b16 %v1260
      %v1299 = vunpack.c.l.b16 %v1264
      %v1300 = vunpack.c.l.b16 %v1267
      %v1301 = vunpack.c.l.b16 %v1271
      %v1302 = vunpack.c.l.b16 %v1274
      %v1303 = vunpack.c.l.b16 %v1278
      %v1304 = vunpack.c.l.b16 %v1281
      %v1305 = vunpack.c.l.b16 %v1285
      %v1306 = vunpack.c.l.b16 %v1288
      %v1307 = vpack.c.b16 %v1292, %v1291
      %v1308 = vpack.c.b16 %v1294, %v1293
      %v1309 = vpack.c.b16 %v1296, %v1295
      %v1310 = vpack.c.b16 %v1298, %v1297
      %v1311 = vpack.c.b16 %v1300, %v1299
      %v1312 = vpack.c.b16 %v1302, %v1301
      %v1313 = vpack.c.b16 %v1304, %v1303
      %v1314 = vpack.c.b16 %v1306, %v1305
      %v1316 = vsel %vm493, %v1307, 0
      %v1319 = vsel %vm493, %v1308, 0
      %v1322 = vsel %vm493, %v1309, 0
      %v1325 = vsel %vm493, %v1310, 0
      %v1328 = vsel %vm493, %v1311, 0
      %v1331 = vsel %vm493, %v1312, 0
      %v1334 = vsel %vm493, %v1313, 0
      %v1337 = vsel %vm493, %v1314, 0
      %v1340 = vsel %vm518, %v1290, 0
      %1342 = vmatpush.bf16.msra.mxu0 0
      %1343 = vmatpush.bf16.msra.mxu0 0
      %1344 = vmatpush.bf16.msra.mxu0 0
      %1345 = vmatpush.bf16.msra.mxu0 0
      %1346 = vmatpush.bf16.msra.mxu0 0
      %1347 = vmatpush.bf16.msra.mxu0 0
      %1348 = vmatpush.bf16.msra.mxu0 0
      %1349 = vmatpush.bf16.msra.mxu0 %v1340
      %1350 = vmatmul.bf16.gmra.mxu0 %v1316
      %v1351 = vpop.f32.mrf.mxu0
      %v1352 = vadd.f32 0.0, %v1351
      %v1353 = vpop.f32.mrf.mxu0
      %v1354 = vadd.f32 0.0, %v1353
      %1355 = vmatmul.bf16.gmra.mxu0 %v1319
      %v1356 = vpop.f32.mrf.mxu0
      %v1357 = vadd.f32 0.0, %v1356
      %v1358 = vpop.f32.mrf.mxu0
      %v1359 = vadd.f32 0.0, %v1358
      %1360 = vmatmul.bf16.gmra.mxu0 %v1322
      %v1361 = vpop.f32.mrf.mxu0
      %v1362 = vadd.f32 0.0, %v1361
      %v1363 = vpop.f32.mrf.mxu0
      %v1364 = vadd.f32 0.0, %v1363
      %1365 = vmatmul.bf16.gmra.mxu0 %v1325
      %v1366 = vpop.f32.mrf.mxu0
      %v1367 = vadd.f32 0.0, %v1366
      %v1368 = vpop.f32.mrf.mxu0
      %v1369 = vadd.f32 0.0, %v1368
      %1370 = vmatmul.bf16.gmra.mxu0 %v1328
      %v1371 = vpop.f32.mrf.mxu0
      %v1372 = vadd.f32 0.0, %v1371
      %v1373 = vpop.f32.mrf.mxu0
      %v1374 = vadd.f32 0.0, %v1373
      %1375 = vmatmul.bf16.gmra.mxu0 %v1331
      %v1376 = vpop.f32.mrf.mxu0
      %v1377 = vadd.f32 0.0, %v1376
      %v1378 = vpop.f32.mrf.mxu0
      %v1379 = vadd.f32 0.0, %v1378
      %1380 = vmatmul.bf16.gmra.mxu0 %v1334
      %v1381 = vpop.f32.mrf.mxu0
      %v1382 = vadd.f32 0.0, %v1381
      %v1383 = vpop.f32.mrf.mxu0
      %v1384 = vadd.f32 0.0, %v1383
      %1385 = vmatmul.bf16.gmra.mxu0 %v1337
      %v1386 = vpop.f32.mrf.mxu0
      %v1387 = vadd.f32 0.0, %v1386
      %v1388 = vpop.f32.mrf.mxu0
      %v1389 = vadd.f32 0.0, %v1388
      %1390 = vdwg.mxu0
      %v1391 = vadd.f32 %v1206, %v1352
      %v1392 = vadd.f32 %v1207, %v1354
      %v1393 = vadd.f32 %v1208, %v1357
      %v1394 = vadd.f32 %v1209, %v1359
      %v1395 = vadd.f32 %v1210, %v1362
      %v1396 = vadd.f32 %v1211, %v1364
      %v1397 = vadd.f32 %v1212, %v1367
      %v1398 = vadd.f32 %v1213, %v1369
      %v1399 = vadd.f32 %v1214, %v1372
      %v1400 = vadd.f32 %v1215, %v1374
      %v1401 = vadd.f32 %v1216, %v1377
      %v1402 = vadd.f32 %v1217, %v1379
      %v1403 = vadd.f32 %v1218, %v1382
      %v1404 = vadd.f32 %v1219, %v1384
      %v1405 = vadd.f32 %v1220, %v1387
      %v1406 = vadd.f32 %v1221, %v1389
      %v1408 = vrot.slane %v415, 5
      %v1409 = vrot.slane %v1408, 4
      %v1410 = vrot.slane %v416, 5
      %v1411 = vsel %vm1232, %v1409, %v1410
      %v1412 = vrot.slane %v1410, 4
      %v1413 = vrot.slane %v417, 5
      %v1414 = vsel %vm1232, %v1412, %v1413
      %s1415 = scalar_lea.vmem %s3, 20
      %v1416 = vld [vmem:[%s1415] sm:$0xf]
      %v1417 = vunpack.c.l.b16 %v1411
      %v1418 = vunpack.c.l.b16 %v1414
      %v1419 = vpack.c.b16 %v1418, %v1417
      %v1421 = vsel %vm493, %v1419, 0
      %v1424 = vsel %vm518, %v1416, 0
      %1426 = vmatpush.bf16.msra.mxu0 0
      %1427 = vmatpush.bf16.msra.mxu0 0
      %1428 = vmatpush.bf16.msra.mxu0 0
      %1429 = vmatpush.bf16.msra.mxu0 0
      %1430 = vmatpush.bf16.msra.mxu0 0
      %1431 = vmatpush.bf16.msra.mxu0 0
      %1432 = vmatpush.bf16.msra.mxu0 0
      %1433 = vmatpush.bf16.msra.mxu0 %v1424
      %1434 = vmatmul.bf16.gmra.mxu0 %v1319
      %v1435 = vpop.f32.mrf.mxu0
      %v1436 = vadd.f32 0.0, %v1435
      %v1437 = vpop.f32.mrf.mxu0
      %v1438 = vadd.f32 0.0, %v1437
      %1439 = vmatmul.bf16.gmra.mxu0 %v1322
      %v1440 = vpop.f32.mrf.mxu0
      %v1441 = vadd.f32 0.0, %v1440
      %v1442 = vpop.f32.mrf.mxu0
      %v1443 = vadd.f32 0.0, %v1442
      %1444 = vmatmul.bf16.gmra.mxu0 %v1325
      %v1445 = vpop.f32.mrf.mxu0
      %v1446 = vadd.f32 0.0, %v1445
      %v1447 = vpop.f32.mrf.mxu0
      %v1448 = vadd.f32 0.0, %v1447
      %1449 = vmatmul.bf16.gmra.mxu0 %v1328
      %v1450 = vpop.f32.mrf.mxu0
      %v1451 = vadd.f32 0.0, %v1450
      %v1452 = vpop.f32.mrf.mxu0
      %v1453 = vadd.f32 0.0, %v1452
      %1454 = vmatmul.bf16.gmra.mxu0 %v1331
      %v1455 = vpop.f32.mrf.mxu0
      %v1456 = vadd.f32 0.0, %v1455
      %v1457 = vpop.f32.mrf.mxu0
      %v1458 = vadd.f32 0.0, %v1457
      %1459 = vmatmul.bf16.gmra.mxu0 %v1334
      %v1460 = vpop.f32.mrf.mxu0
      %v1461 = vadd.f32 0.0, %v1460
      %v1462 = vpop.f32.mrf.mxu0
      %v1463 = vadd.f32 0.0, %v1462
      %1464 = vmatmul.bf16.gmra.mxu0 %v1337
      %v1465 = vpop.f32.mrf.mxu0
      %v1466 = vadd.f32 0.0, %v1465
      %v1467 = vpop.f32.mrf.mxu0
      %v1468 = vadd.f32 0.0, %v1467
      %1469 = vmatmul.bf16.gmra.mxu0 %v1421
      %v1470 = vpop.f32.mrf.mxu0
      %v1471 = vadd.f32 0.0, %v1470
      %v1472 = vpop.f32.mrf.mxu0
      %v1473 = vadd.f32 0.0, %v1472
      %1474 = vdwg.mxu0
      %v1475 = vadd.f32 %v1391, %v1436
      %v1476 = vadd.f32 %v1392, %v1438
      %v1477 = vadd.f32 %v1393, %v1441
      %v1478 = vadd.f32 %v1394, %v1443
      %v1479 = vadd.f32 %v1395, %v1446
      %v1480 = vadd.f32 %v1396, %v1448
      %v1481 = vadd.f32 %v1397, %v1451
      %v1482 = vadd.f32 %v1398, %v1453
      %v1483 = vadd.f32 %v1399, %v1456
      %v1484 = vadd.f32 %v1400, %v1458
      %v1485 = vadd.f32 %v1401, %v1461
      %v1486 = vadd.f32 %v1402, %v1463
      %v1487 = vadd.f32 %v1403, %v1466
      %v1488 = vadd.f32 %v1404, %v1468
      %v1489 = vadd.f32 %v1405, %v1471
      %v1490 = vadd.f32 %v1406, %v1473
      %v1492 = vrot.slane %v447, 5
      %v1493 = vrot.slane %v1492, 4
      %v1494 = vrot.slane %v448, 5
      %v1495 = vsel %vm1232, %v1493, %v1494
      %v1496 = vrot.slane %v1494, 4
      %v1497 = vrot.slane %v449, 5
      %v1498 = vsel %vm1232, %v1496, %v1497
      %s1499 = scalar_lea.vmem %s3, 32
      %v1500 = vld [vmem:[%s1499] sm:$0xf]
      %v1501 = vunpack.c.l.b16 %v1495
      %v1502 = vunpack.c.l.b16 %v1498
      %v1503 = vpack.c.b16 %v1502, %v1501
      %v1505 = vsel %vm493, %v1503, 0
      %v1508 = vsel %vm518, %v1500, 0
      %1510 = vmatpush.bf16.msra.mxu0 0
      %1511 = vmatpush.bf16.msra.mxu0 0
      %1512 = vmatpush.bf16.msra.mxu0 0
      %1513 = vmatpush.bf16.msra.mxu0 0
      %1514 = vmatpush.bf16.msra.mxu0 0
      %1515 = vmatpush.bf16.msra.mxu0 0
      %1516 = vmatpush.bf16.msra.mxu0 0
      %1517 = vmatpush.bf16.msra.mxu0 %v1508
      %1518 = vmatmul.bf16.gmra.mxu0 %v1322
      %v1519 = vpop.f32.mrf.mxu0
      %v1520 = vadd.f32 0.0, %v1519
      %v1521 = vpop.f32.mrf.mxu0
      %v1522 = vadd.f32 0.0, %v1521
      %1523 = vmatmul.bf16.gmra.mxu0 %v1325
      %v1524 = vpop.f32.mrf.mxu0
      %v1525 = vadd.f32 0.0, %v1524
      %v1526 = vpop.f32.mrf.mxu0
      %v1527 = vadd.f32 0.0, %v1526
      %1528 = vmatmul.bf16.gmra.mxu0 %v1328
      %v1529 = vpop.f32.mrf.mxu0
      %v1530 = vadd.f32 0.0, %v1529
      %v1531 = vpop.f32.mrf.mxu0
      %v1532 = vadd.f32 0.0, %v1531
      %1533 = vmatmul.bf16.gmra.mxu0 %v1331
      %v1534 = vpop.f32.mrf.mxu0
      %v1535 = vadd.f32 0.0, %v1534
      %v1536 = vpop.f32.mrf.mxu0
      %v1537 = vadd.f32 0.0, %v1536
      %1538 = vmatmul.bf16.gmra.mxu0 %v1334
      %v1539 = vpop.f32.mrf.mxu0
      %v1540 = vadd.f32 0.0, %v1539
      %v1541 = vpop.f32.mrf.mxu0
      %v1542 = vadd.f32 0.0, %v1541
      %1543 = vmatmul.bf16.gmra.mxu0 %v1337
      %v1544 = vpop.f32.mrf.mxu0
      %v1545 = vadd.f32 0.0, %v1544
      %v1546 = vpop.f32.mrf.mxu0
      %v1547 = vadd.f32 0.0, %v1546
      %1548 = vmatmul.bf16.gmra.mxu0 %v1421
      %v1549 = vpop.f32.mrf.mxu0
      %v1550 = vadd.f32 0.0, %v1549
      %v1551 = vpop.f32.mrf.mxu0
      %v1552 = vadd.f32 0.0, %v1551
      %1553 = vmatmul.bf16.gmra.mxu0 %v1505
      %v1554 = vpop.f32.mrf.mxu0
      %v1555 = vadd.f32 0.0, %v1554
      %v1556 = vpop.f32.mrf.mxu0
      %v1557 = vadd.f32 0.0, %v1556
      %1558 = vdwg.mxu0
      %v1559 = vadd.f32 %v1475, %v1520
      %v1560 = vadd.f32 %v1476, %v1522
      %v1561 = vadd.f32 %v1477, %v1525
      %v1562 = vadd.f32 %v1478, %v1527
      %v1563 = vadd.f32 %v1479, %v1530
      %v1564 = vadd.f32 %v1480, %v1532
      %v1565 = vadd.f32 %v1481, %v1535
      %v1566 = vadd.f32 %v1482, %v1537
      %v1567 = vadd.f32 %v1483, %v1540
      %v1568 = vadd.f32 %v1484, %v1542
      %v1569 = vadd.f32 %v1485, %v1545
      %v1570 = vadd.f32 %v1486, %v1547
      %v1571 = vadd.f32 %v1487, %v1550
      %v1572 = vadd.f32 %v1488, %v1552
      %v1573 = vadd.f32 %v1489, %v1555
      %v1574 = vadd.f32 %v1490, %v1557
      %v1575 = vld [vmem:[%s4] sm:$0x1]
      %v1577 = vperm.slane %v1575, 0
      %v1579 = vadd.f32 %v1559, %v1577
      %v1580 = vadd.f32 %v1560, %v1577
      %v1581 = vadd.f32 %v1561, %v1577
      %v1582 = vadd.f32 %v1562, %v1577
      %v1583 = vadd.f32 %v1563, %v1577
      %v1584 = vadd.f32 %v1564, %v1577
      %v1585 = vadd.f32 %v1565, %v1577
      %v1586 = vadd.f32 %v1566, %v1577
      %v1587 = vadd.f32 %v1567, %v1577
      %v1588 = vadd.f32 %v1568, %v1577
      %v1589 = vadd.f32 %v1569, %v1577
      %v1590 = vadd.f32 %v1570, %v1577
      %v1591 = vadd.f32 %v1571, %v1577
      %v1592 = vadd.f32 %v1572, %v1577
      %v1593 = vadd.f32 %v1573, %v1577
      %v1594 = vadd.f32 %v1574, %v1577
      %v1595 = vmax.f32 %v1579, 0.0
      %v1596 = vmax.f32 %v1580, 0.0
      %v1597 = vmax.f32 %v1581, 0.0
      %v1598 = vmax.f32 %v1582, 0.0
      %v1599 = vmax.f32 %v1583, 0.0
      %v1600 = vmax.f32 %v1584, 0.0
      %v1601 = vmax.f32 %v1585, 0.0
      %v1602 = vmax.f32 %v1586, 0.0
      %v1603 = vmax.f32 %v1587, 0.0
      %v1604 = vmax.f32 %v1588, 0.0
      %v1605 = vmax.f32 %v1589, 0.0
      %v1606 = vmax.f32 %v1590, 0.0
      %v1607 = vmax.f32 %v1591, 0.0
      %v1608 = vmax.f32 %v1592, 0.0
      %v1609 = vmax.f32 %v1593, 0.0
      %v1610 = vmax.f32 %v1594, 0.0
      %vm1627 = vcmask 1040384
      %v1628 = vrot.slane %v1595, 7
      %v1629 = vrot.slane %v1596, 7
      %v1630 = vsel %vm1627, %v1628, %v1629
      %v1631 = vrot.slane %v1597, 7
      %v1632 = vrot.slane %v1598, 7
      %v1633 = vsel %vm1627, %v1631, %v1632
      %v1634 = vrot.slane %v1599, 7
      %v1635 = vrot.slane %v1600, 7
      %v1636 = vsel %vm1627, %v1634, %v1635
      %v1637 = vrot.slane %v1601, 7
      %v1638 = vrot.slane %v1602, 7
      %v1639 = vsel %vm1627, %v1637, %v1638
      %v1640 = vrot.slane %v1603, 7
      %v1641 = vrot.slane %v1604, 7
      %v1642 = vsel %vm1627, %v1640, %v1641
      %v1643 = vrot.slane %v1605, 7
      %v1644 = vrot.slane %v1606, 7
      %v1645 = vsel %vm1627, %v1643, %v1644
      %v1646 = vrot.slane %v1607, 7
      %v1647 = vrot.slane %v1608, 7
      %v1648 = vsel %vm1627, %v1646, %v1647
      %v1649 = vrot.slane %v1609, 7
      %v1650 = vrot.slane %v1610, 7
      %v1651 = vsel %vm1627, %v1649, %v1650
      %v1676 = vsel %vm1627, 0.0, %v1628
      %v1677 = vsel %vm1627, 0.0, %v1631
      %v1678 = vsel %vm1627, 0.0, %v1634
      %v1679 = vsel %vm1627, 0.0, %v1637
      %v1680 = vsel %vm1627, 0.0, %v1640
      %v1681 = vsel %vm1627, 0.0, %v1643
      %v1682 = vsel %vm1627, 0.0, %v1646
      %v1683 = vsel %vm1627, 0.0, %v1649
      %v1684 = vsel %vm1627, %v1629, 0.0
      %v1685 = vsel %vm1627, %v1632, 0.0
      %v1686 = vsel %vm1627, %v1635, 0.0
      %v1687 = vsel %vm1627, %v1638, 0.0
      %v1688 = vsel %vm1627, %v1641, 0.0
      %v1689 = vsel %vm1627, %v1644, 0.0
      %v1690 = vsel %vm1627, %v1647, 0.0
      %v1691 = vsel %vm1627, %v1650, 0.0
      %v1692 = vpack.c.bf16 %v1676, %v1676
      %v1693 = vpack.c.bf16 %v1630, %v1630
      %v1694 = vpack.c.bf16 %v1684, %v1684
      %v1695 = vpack.c.bf16 %v1677, %v1677
      %v1696 = vpack.c.bf16 %v1633, %v1633
      %v1697 = vpack.c.bf16 %v1685, %v1685
      %v1698 = vpack.c.bf16 %v1678, %v1678
      %v1699 = vpack.c.bf16 %v1636, %v1636
      %v1700 = vpack.c.bf16 %v1686, %v1686
      %v1701 = vpack.c.bf16 %v1679, %v1679
      %v1702 = vpack.c.bf16 %v1639, %v1639
      %v1703 = vpack.c.bf16 %v1687, %v1687
      %v1704 = vpack.c.bf16 %v1680, %v1680
      %v1705 = vpack.c.bf16 %v1642, %v1642
      %v1706 = vpack.c.bf16 %v1688, %v1688
      %v1707 = vpack.c.bf16 %v1681, %v1681
      %v1708 = vpack.c.bf16 %v1645, %v1645
      %v1709 = vpack.c.bf16 %v1689, %v1689
      %v1710 = vpack.c.bf16 %v1682, %v1682
      %v1711 = vpack.c.bf16 %v1648, %v1648
      %v1712 = vpack.c.bf16 %v1690, %v1690
      %v1713 = vpack.c.bf16 %v1683, %v1683
      %v1714 = vpack.c.bf16 %v1651, %v1651
      %v1715 = vpack.c.bf16 %v1691, %v1691
      %vm1716 = vcmask 60416
      %1717 = vst.msk [vmem:[%s391] sm:$0xf] %vm1716, %v1692
      %1718 = vst.msk [vmem:[%s391 + $0x4] sm:$0xf] %vm1716, %v1693
      %vm1719 = vcmask 57344
      %1720 = vst.msk [vmem:[%s391 + $0x8] sm:$0x1] %vm1719, %v1694
      %1721 = vst.msk [vmem:[%s391 + $0xc] sm:$0xf] %vm1716, %v1695
      %1722 = vst.msk [vmem:[%s391 + $0x10] sm:$0xf] %vm1716, %v1696
      %1723 = vst.msk [vmem:[%s391 + $0x14] sm:$0x1] %vm1719, %v1697
      %1724 = vst.msk [vmem:[%s391 + $0x18] sm:$0xf] %vm1716, %v1698
      %1725 = vst.msk [vmem:[%s391 + $0x1c] sm:$0xf] %vm1716, %v1699
      %1726 = vst.msk [vmem:[%s391 + $0x20] sm:$0x1] %vm1719, %v1700
      %1727 = vst.msk [vmem:[%s391 + $0x24] sm:$0xf] %vm1716, %v1701
      %1728 = vst.msk [vmem:[%s391 + $0x28] sm:$0xf] %vm1716, %v1702
      %1729 = vst.msk [vmem:[%s391 + $0x2c] sm:$0x1] %vm1719, %v1703
      %1730 = vst.msk [vmem:[%s391 + $0x30] sm:$0xf] %vm1716, %v1704
      %1731 = vst.msk [vmem:[%s391 + $0x34] sm:$0xf] %vm1716, %v1705
      %1732 = vst.msk [vmem:[%s391 + $0x38] sm:$0x1] %vm1719, %v1706
      %1733 = vst.msk [vmem:[%s391 + $0x3c] sm:$0xf] %vm1716, %v1707
      %1734 = vst.msk [vmem:[%s391 + $0x40] sm:$0xf] %vm1716, %v1708
      %1735 = vst.msk [vmem:[%s391 + $0x44] sm:$0x1] %vm1719, %v1709
      %1736 = vst.msk [vmem:[%s391 + $0x48] sm:$0xf] %vm1716, %v1710
      %1737 = vst.msk [vmem:[%s391 + $0x4c] sm:$0xf] %vm1716, %v1711
      %1738 = vst.msk [vmem:[%s391 + $0x50] sm:$0x1] %vm1719, %v1712
      %1739 = vst.msk [vmem:[%s391 + $0x54] sm:$0xf] %vm1716, %v1713
      %1740 = vst.msk [vmem:[%s391 + $0x58] sm:$0xf] %vm1716, %v1714
      %1741 = vst.msk [vmem:[%s391 + $0x5c] sm:$0x1] %vm1719, %v1715
      %s1742 = smul.u32 8, %s21
      %p1743 = scmp.lt.s32.totalorder %s20, 1
      %s1744 = scalar_select %p1743, %s20, 1
      %p1745 = scmp.lt.s32.totalorder %s1742, 15
      %s1746 = scalar_select %p1745, %s1742, 15
      %s1747 = smul.addr %s1746, 3
      %s1748 = smul.addr %s1744, 48
      %s1749 = sadd.s32 %s1747, %s1748
      %s1750 = smul.addr %s1749, 4
      %s1751 = scalar_lea.vmem %s5, %s1750
      // Predicated region
      $region41: #{rednet_forward.11} parent=39 // pred_check
        %p1752 = pneg %p190
      $region42: #{rednet_forward.11} parent=39 // pred_check_branch
        %1754 = sbr.rel (%p1752) target = $region44
      $region43: #{rednet_forward.11} parent=39 // pred_region
        %s1755 = smul.u32 8, %s21
      $region44: #{rednet_forward.11} parent=39 // pred_fallthru
        _
    $region40: #{rednet_forward.11} parent=5 // pred_fallthru
      _
    %p1756 = scmp.le.s32.totalorder 2, %s11
    // Predicated region
    $region45: #{rednet_forward.11} parent=5 // pred_check
      %p1757 = pneg %p1756
    $region46: #{rednet_forward.11} parent=5 // pred_check_branch
      %1759 = sbr.rel (%p1757) target = $region48
    $region47: #{rednet_forward.11} parent=5 // pred_region
      %s1760 = ssub.s32 %s11, 2
      // Predicated region
      $region49: #{rednet_forward.11} parent=47 // pred_check
        %p1761 = pneg %p196
      $region50: #{rednet_forward.11} parent=47 // pred_check_branch
        %1763 = sbr.rel (%p1761) target = $region52
      $region51: #{rednet_forward.11} parent=47 // pred_region
        %s1764 = smul.u32 8, %s23
        %p1765 = scmp.lt.s32.totalorder %s22, 1
        %s1766 = scalar_select %p1765, %s22, 1
        %p1767 = scmp.lt.s32.totalorder %s1764, 15
        %s1768 = scalar_select %p1767, %s1764, 15
        %s1769 = smul.addr %s1768, 3
        %s1770 = smul.addr %s1766, 48
        %s1771 = sadd.s32 %s1769, %s1770
        %s1772 = smul.addr %s1771, 4
        %s1773 = scalar_lea.vmem %s5, %s1772
      $region52: #{rednet_forward.11} parent=47 // pred_fallthru
        _
    $region48: #{rednet_forward.11} parent=5 // pred_fallthru
      _
  $region6: #{rednet_forward.11} parent=0 // loop_footer
    %s15 = sadd.s32 1, %s11
  $region7: #{rednet_forward.11} parent=0 // loop_footer_branch
    %10 = sbr.rel target = $region3
  $region8: #{rednet_forward.11} parent=0 // loop_exit
    _

// kernel: rednet_forward.16
$region0: #{rednet_forward.16}
  #allocation0 [shape = 'u32[]', space=smem, size = 0x4, offset = 0x4, fixed_abs, tag = 'smem constant byte address 0x4 - core index']
  #allocation1 [shape = 'u32[72,128]{1,0:T(1,128)}', space=vmem, size = 0x9000, scoped, tag = 'internal scratch']
  %s0 = inlined_call_operand.vmem [shape: bf16[2,16,18,8], index: 0, kind: input, shape index: {}, may-alias: {0,1,2}]
  %s1 = inlined_call_operand.vmem [shape: bf16[2,16,18,8], index: 1, kind: input, shape index: {}, may-alias: {0,1,2}]
  %s2 = inlined_call_operand.vmem [shape: bf16[2,16,18,8], index: 2, kind: input, shape index: {}, may-alias: {0,1,2}]
  %s3 = inlined_call_operand.vmem [shape: bf16[9,8,8], index: 3, kind: input, shape index: {}]
  %s4 = inlined_call_operand.vmem [shape: f32[1,8], index: 4, kind: input, shape index: {}]
  %s5 = inlined_call_operand.vmem [shape: bf16[2,16,18,8], index: 5, kind: input, shape index: {}]
  %s6 = inlined_call_operand.vmem [shape: bf16[2,16,18,8], index: 6, kind: output, shape index: {}]
  %s7 = sld [smem:[#allocation0]]
  $region57: #{rednet_forward.16} parent=0
    _
  %s9 = ssub.s32 1, %s7
  %s10 = scalar_select 0, %s9, %s7
  loop: start=0, step=1, limit=6
  $region2: #{rednet_forward.16} parent=0 // loop_pre_header
    _
  $region3: #{rednet_forward.16} parent=0 // loop_header
    %s12 = sphi 0, %s16
    %p13 = scmp.ge.s32.totalorder %s12, 6
    %s19 = sphi 0, %s31
    %s20 = sphi 0, %s27
    %s21 = sphi 0, %s19
    %s22 = sphi 0, %s20
    %s23 = sphi 0, %s21
    %s24 = sphi 0, %s22
    %s36 = sphi 0, %s38
    %s39 = sphi 0, %s36
    %s40 = sphi 0, %s39
    %s56 = sphi 0, %s40
    %s72 = sphi 0, %s74
    %s75 = sphi 0, %s72
    %s76 = sphi 0, %s75
    %s92 = sphi 0, %s76
    %s108 = sphi 0, %s110
    %s111 = sphi 0, %s108
    %s112 = sphi 0, %s111
    %s128 = sphi 0, %s112
    %s132 = sphi 0, %s132
    %s134 = sphi 0, %s132
    %s135 = sphi 0, %s134
    %s149 = sphi 0, %s135
    %s153 = sphi 0, %s153
    %s155 = sphi 0, %s153
    %s156 = sphi 0, %s155
    %s170 = sphi 0, %s156
    %s178 = sphi 0, %s180
    %s181 = sphi 0, %s178
    %s182 = sphi 0, %s181
    %s198 = sphi 0, %s182
    %s206 = sphi 0, %s208
    %s209 = sphi 0, %s206
    %s210 = sphi 0, %s209
    %s226 = sphi 0, %s210
  $region4: #{rednet_forward.16} parent=0 // loop_header_branch
    %15 = sbr.rel (%p13) target = $region8
  $region5: #{rednet_forward.16} parent=0 // loop_body
    %s17 = ssub.s32 %s12, 1
    %s18 = ssub.s32 %s12, 2
    %s25 = sadd.s32 1, %s20
    %p26 = scmp.ge.s32.totalorder %s25, 2
    %s27 = scalar_select %p26, 0, %s25
    %s28 = sadd.s32 1, %s19
    %s29 = scalar_select %p26, %s28, %s19
    %p30 = scmp.ge.s32.totalorder %s29, 2
    %s31 = scalar_select %p30, 0, %s29
    %s32 = ssub.s32 %s19, %s31
    %s33 = ssub.s32 %s20, %s27
    %s34 = sor.u32 %s32, %s33
    %p35 = scmp.eq.s32.totalorder %s34, 0
    %s37 = sadd.s32 %s36, 1
    %s38 = scalar_select %p35, %s36, %s37
    %p41 = pneg %p35
    %p42 = scmp.eq.s32.totalorder %s12, 3
    %p43 = por %p41, %p42
    %p44 = scmp.ne.s32.totalorder %s36, %s39
    %p45 = scmp.eq.s32.totalorder %s12, 0
    %p46 = por %p44, %p45
    %p47 = scmp.ne.s32.totalorder %s36, %s39
    %p48 = scmp.eq.s32.totalorder %s17, 3
    %p49 = por %p47, %p48
    %p50 = scmp.ne.s32.totalorder %s39, %s40
    %p51 = scmp.eq.s32.totalorder %s17, 0
    %p52 = por %p50, %p51
    %p53 = scmp.ne.s32.totalorder %s39, %s40
    %p54 = scmp.eq.s32.totalorder %s18, 3
    %p55 = por %p53, %p54
    %p57 = scmp.ne.s32.totalorder %s40, %s56
    %p58 = scmp.eq.s32.totalorder %s18, 0
    %p59 = por %p57, %p58
    %s60 = smul.u32 %s20, 8
    %s61 = ssub.s32 %s60, 1
    %p62 = scmp.gt.s32.totalorder %s61, 0
    %s63 = scalar_select %p62, %s61, 0
    %s64 = smul.u32 %s27, 8
    %s65 = ssub.s32 %s64, 1
    %p66 = scmp.gt.s32.totalorder %s65, 0
    %s67 = scalar_select %p66, %s65, 0
    %s68 = ssub.s32 %s19, %s31
    %s69 = ssub.s32 %s63, %s67
    %s70 = sor.u32 %s68, %s69
    %p71 = scmp.eq.s32.totalorder %s70, 0
    %s73 = sadd.s32 %s72, 1
    %s74 = scalar_select %p71, %s72, %s73
    %p77 = pneg %p71
    %p78 = scmp.eq.s32.totalorder %s12, 3
    %p79 = por %p77, %p78
    %p80 = scmp.ne.s32.totalorder %s72, %s75
    %p81 = scmp.eq.s32.totalorder %s12, 0
    %p82 = por %p80, %p81
    %p83 = scmp.ne.s32.totalorder %s72, %s75
    %p84 = scmp.eq.s32.totalorder %s17, 3
    %p85 = por %p83, %p84
    %p86 = scmp.ne.s32.totalorder %s75, %s76
    %p87 = scmp.eq.s32.totalorder %s17, 0
    %p88 = por %p86, %p87
    %p89 = scmp.ne.s32.totalorder %s75, %s76
    %p90 = scmp.eq.s32.totalorder %s18, 3
    %p91 = por %p89, %p90
    %p93 = scmp.ne.s32.totalorder %s76, %s92
    %p94 = scmp.eq.s32.totalorder %s18, 0
    %p95 = por %p93, %p94
    %s96 = sadd.s32 %s20, 1
    %s97 = smul.u32 %s96, 8
    %p98 = scmp.lt.s32.totalorder %s97, 15
    %s99 = scalar_select %p98, %s97, 15
    %s100 = sadd.s32 %s27, 1
    %s101 = smul.u32 %s100, 8
    %p102 = scmp.lt.s32.totalorder %s101, 15
    %s103 = scalar_select %p102, %s101, 15
    %s104 = ssub.s32 %s19, %s31
    %s105 = ssub.s32 %s99, %s103
    %s106 = sor.u32 %s104, %s105
    %p107 = scmp.eq.s32.totalorder %s106, 0
    %s109 = sadd.s32 %s108, 1
    %s110 = scalar_select %p107, %s108, %s109
    %p113 = pneg %p107
    %p114 = scmp.eq.s32.totalorder %s12, 3
    %p115 = por %p113, %p114
    %p116 = scmp.ne.s32.totalorder %s108, %s111
    %p117 = scmp.eq.s32.totalorder %s12, 0
    %p118 = por %p116, %p117
    %p119 = scmp.ne.s32.totalorder %s108, %s111
    %p120 = scmp.eq.s32.totalorder %s17, 3
    %p121 = por %p119, %p120
    %p122 = scmp.ne.s32.totalorder %s111, %s112
    %p123 = scmp.eq.s32.totalorder %s17, 0
    %p124 = por %p122, %p123
    %p125 = scmp.ne.s32.totalorder %s111, %s112
    %p126 = scmp.eq.s32.totalorder %s18, 3
    %p127 = por %p125, %p126
    %p129 = scmp.ne.s32.totalorder %s112, %s128
    %p130 = scmp.eq.s32.totalorder %s18, 0
    %p131 = por %p129, %p130
    %s133 = sadd.s32 %s132, 1
    %p136 = scmp.eq.s32.totalorder %s12, 3
    %p137 = scmp.ne.s32.totalorder %s132, %s134
    %p138 = scmp.eq.s32.totalorder %s12, 0
    %p139 = por %p137, %p138
    %p140 = scmp.ne.s32.totalorder %s132, %s134
    %p141 = scmp.eq.s32.totalorder %s17, 3
    %p142 = por %p140, %p141
    %p143 = scmp.ne.s32.totalorder %s134, %s135
    %p144 = scmp.eq.s32.totalorder %s17, 0
    %p145 = por %p143, %p144
    %p146 = scmp.ne.s32.totalorder %s134, %s135
    %p147 = scmp.eq.s32.totalorder %s18, 3
    %p148 = por %p146, %p147
    %p150 = scmp.ne.s32.totalorder %s135, %s149
    %p151 = scmp.eq.s32.totalorder %s18, 0
    %p152 = por %p150, %p151
    %s154 = sadd.s32 %s153, 1
    %p157 = scmp.eq.s32.totalorder %s12, 3
    %p158 = scmp.ne.s32.totalorder %s153, %s155
    %p159 = scmp.eq.s32.totalorder %s12, 0
    %p160 = por %p158, %p159
    %p161 = scmp.ne.s32.totalorder %s153, %s155
    %p162 = scmp.eq.s32.totalorder %s17, 3
    %p163 = por %p161, %p162
    %p164 = scmp.ne.s32.totalorder %s155, %s156
    %p165 = scmp.eq.s32.totalorder %s17, 0
    %p166 = por %p164, %p165
    %p167 = scmp.ne.s32.totalorder %s155, %s156
    %p168 = scmp.eq.s32.totalorder %s18, 3
    %p169 = por %p167, %p168
    %p171 = scmp.ne.s32.totalorder %s156, %s170
    %p172 = scmp.eq.s32.totalorder %s18, 0
    %p173 = por %p171, %p172
    %s174 = ssub.s32 %s19, %s31
    %s175 = ssub.s32 %s20, %s27
    %s176 = sor.u32 %s174, %s175
    %p177 = scmp.eq.s32.totalorder %s176, 0
    %s179 = sadd.s32 %s178, 1
    %s180 = scalar_select %p177, %s178, %s179
    %p183 = pneg %p177
    %p184 = scmp.eq.s32.totalorder %s12, 3
    %p185 = por %p183, %p184
    %p186 = scmp.ne.s32.totalorder %s178, %s181
    %p187 = scmp.eq.s32.totalorder %s12, 0
    %p188 = por %p186, %p187
    %p189 = scmp.ne.s32.totalorder %s178, %s181
    %p190 = scmp.eq.s32.totalorder %s17, 3
    %p191 = por %p189, %p190
    %p192 = scmp.ne.s32.totalorder %s181, %s182
    %p193 = scmp.eq.s32.totalorder %s17, 0
    %p194 = por %p192, %p193
    %p195 = scmp.ne.s32.totalorder %s181, %s182
    %p196 = scmp.eq.s32.totalorder %s18, 3
    %p197 = por %p195, %p196
    %p199 = scmp.ne.s32.totalorder %s182, %s198
    %p200 = scmp.eq.s32.totalorder %s18, 0
    %p201 = por %p199, %p200
    %s202 = ssub.s32 %s19, %s31
    %s203 = ssub.s32 %s20, %s27
    %s204 = sor.u32 %s202, %s203
    %p205 = scmp.eq.s32.totalorder %s204, 0
    %s207 = sadd.s32 %s206, 1
    %s208 = scalar_select %p205, %s206, %s207
    %p211 = pneg %p205
    %p212 = scmp.eq.s32.totalorder %s12, 3
    %p213 = por %p211, %p212
    %p214 = scmp.ne.s32.totalorder %s206, %s209
    %p215 = scmp.eq.s32.totalorder %s12, 0
    %p216 = por %p214, %p215
    %p217 = scmp.ne.s32.totalorder %s206, %s209
    %p218 = scmp.eq.s32.totalorder %s17, 3
    %p219 = por %p217, %p218
    %p220 = scmp.ne.s32.totalorder %s209, %s210
    %p221 = scmp.eq.s32.totalorder %s17, 0
    %p222 = por %p220, %p221
    %p223 = scmp.ne.s32.totalorder %s209, %s210
    %p224 = scmp.eq.s32.totalorder %s18, 3
    %p225 = por %p223, %p224
    %p227 = scmp.ne.s32.totalorder %s210, %s226
    %p228 = scmp.eq.s32.totalorder %s18, 0
    %p229 = por %p227, %p228
    %p230 = scmp.le.s32.totalorder 1, %s12
    %p231 = scmp.lt.s32.totalorder %s12, 5
    %p232 = pnand %p230, %p231
    %p233 = pneg %p232
    // Predicated region
    $region9: #{rednet_forward.16} parent=5 // pred_check
      _
    $region10: #{rednet_forward.16} parent=5 // pred_check_branch
      %235 = sbr.rel (%p232) target = $region12
    $region11: #{rednet_forward.16} parent=5 // pred_region
      %s236 = ssub.s32 %s12, 1
      // Predicated region
      $region13: #{rednet_forward.16} parent=11 // pred_check
        %p237 = pneg %p145
      $region14: #{rednet_forward.16} parent=11 // pred_check_branch
        %239 = sbr.rel (%p237) target = $region16
      $region15: #{rednet_forward.16} parent=11 // pred_region
        _
      $region16: #{rednet_forward.16} parent=11 // pred_fallthru
        _
      // Predicated region
      $region17: #{rednet_forward.16} parent=11 // pred_check
        %p240 = pneg %p166
      $region18: #{rednet_forward.16} parent=11 // pred_check_branch
        %242 = sbr.rel (%p240) target = $region20
      $region19: #{rednet_forward.16} parent=11 // pred_region
        _
      $region20: #{rednet_forward.16} parent=11 // pred_fallthru
        _
    $region12: #{rednet_forward.16} parent=5 // pred_fallthru
      _
    %p243 = scmp.lt.s32.totalorder %s12, 4
    // Predicated region
    $region21: #{rednet_forward.16} parent=5 // pred_check
      %p244 = pneg %p243
    $region22: #{rednet_forward.16} parent=5 // pred_check_branch
      %246 = sbr.rel (%p244) target = $region24
    $region23: #{rednet_forward.16} parent=5 // pred_region
      // Predicated region
      $region25: #{rednet_forward.16} parent=23 // pred_check
        %p247 = pneg %p46
      $region26: #{rednet_forward.16} parent=23 // pred_check_branch
        %249 = sbr.rel (%p247) target = $region28
      $region27: #{rednet_forward.16} parent=23 // pred_region
        %s250 = smul.u32 8, %s20
        %p251 = scmp.lt.s32.totalorder %s19, 1
        %s252 = scalar_select %p251, %s19, 1
        %p253 = scmp.lt.s32.totalorder %s250, 15
        %s254 = scalar_select %p253, %s250, 15
        %s255 = smul.addr %s254, 3
        %s256 = smul.addr %s252, 48
        %s257 = sadd.s32 %s255, %s256
        %s258 = smul.addr %s257, 4
        %s259 = scalar_lea.vmem %s0, %s258
        %s260 = smul.u32 8, %s20
      $region28: #{rednet_forward.16} parent=23 // pred_fallthru
        _
      // Predicated region
      $region29: #{rednet_forward.16} parent=23 // pred_check
        %p261 = pneg %p82
      $region30: #{rednet_forward.16} parent=23 // pred_check_branch
        %263 = sbr.rel (%p261) target = $region32
      $region31: #{rednet_forward.16} parent=23 // pred_region
        %s264 = smul.u32 %s20, 8
        %s265 = ssub.s32 %s264, 1
        %p266 = scmp.gt.s32.totalorder %s265, 0
        %s267 = scalar_select %p266, %s265, 0
        %p268 = scmp.lt.s32.totalorder %s19, 1
        %s269 = scalar_select %p268, %s19, 1
        %p270 = scmp.lt.s32.totalorder %s267, 15
        %s271 = scalar_select %p270, %s267, 15
        %s272 = smul.addr %s271, 3
        %s273 = smul.addr %s269, 48
        %s274 = sadd.s32 %s272, %s273
        %s275 = smul.addr %s274, 4
        %s276 = scalar_lea.vmem %s1, %s275
        %s277 = smul.u32 %s20, 8
        %s278 = ssub.s32 %s277, 1
        %p279 = scmp.gt.s32.totalorder %s278, 0
        %s280 = scalar_select %p279, %s278, 0
      $region32: #{rednet_forward.16} parent=23 // pred_fallthru
        _
      // Predicated region
      $region33: #{rednet_forward.16} parent=23 // pred_check
        %p281 = pneg %p118
      $region34: #{rednet_forward.16} parent=23 // pred_check_branch
        %283 = sbr.rel (%p281) target = $region36
      $region35: #{rednet_forward.16} parent=23 // pred_region
        %s284 = sadd.s32 %s20, 1
        %s285 = smul.u32 %s284, 8
        %p286 = scmp.lt.s32.totalorder %s285, 15
        %s287 = scalar_select %p286, %s285, 15
        %p288 = scmp.lt.s32.totalorder %s19, 1
        %s289 = scalar_select %p288, %s19, 1
        %p290 = scmp.lt.s32.totalorder %s287, 15
        %s291 = scalar_select %p290, %s287, 15
        %s292 = smul.addr %s291, 3
        %s293 = smul.addr %s289, 48
        %s294 = sadd.s32 %s292, %s293
        %s295 = smul.addr %s294, 4
        %s296 = scalar_lea.vmem %s2, %s295
        %s297 = sadd.s32 %s20, 1
        %s298 = smul.u32 %s297, 8
        %p299 = scmp.lt.s32.totalorder %s298, 15
        %s300 = scalar_select %p299, %s298, 15
      $region36: #{rednet_forward.16} parent=23 // pred_fallthru
        _
      // Predicated region
      $region37: #{rednet_forward.16} parent=23 // pred_check
        %p301 = pneg %p188
      $region38: #{rednet_forward.16} parent=23 // pred_check_branch
        %303 = sbr.rel (%p301) target = $region40
      $region39: #{rednet_forward.16} parent=23 // pred_region
        %s304 = smul.u32 8, %s20
        %p305 = scmp.lt.s32.totalorder %s19, 1
        %s306 = scalar_select %p305, %s19, 1
        %p307 = scmp.lt.s32.totalorder %s304, 15
        %s308 = scalar_select %p307, %s304, 15
        %s309 = smul.addr %s308, 3
        %s310 = smul.addr %s306, 48
        %s311 = sadd.s32 %s309, %s310
        %s312 = smul.addr %s311, 4
        %s313 = scalar_lea.vmem %s5, %s312
        %s314 = smul.u32 8, %s20
      $region40: #{rednet_forward.16} parent=23 // pred_fallthru
        _
    $region24: #{rednet_forward.16} parent=5 // pred_fallthru
      _
    %p315 = scmp.le.s32.totalorder 1, %s12
    %p316 = scmp.lt.s32.totalorder %s12, 5
    %p317 = pnand %p315, %p316
    %p318 = pneg %p317
    // Predicated region
    $region41: #{rednet_forward.16} parent=5 // pred_check
      _
    $region42: #{rednet_forward.16} parent=5 // pred_check_branch
      %320 = sbr.rel (%p317) target = $region44
    $region43: #{rednet_forward.16} parent=5 // pred_region
      %s321 = ssub.s32 %s12, 1
      %s322 = smul.u32 8, %s22
      %p323 = scmp.lt.s32.totalorder %s21, 1
      %s324 = scalar_select %p323, %s21, 1
      %p325 = scmp.lt.s32.totalorder %s322, 15
      %s326 = scalar_select %p325, %s322, 15
      %s327 = smul.addr %s326, 3
      %s328 = smul.addr %s324, 48
      %s329 = sadd.s32 %s327, %s328
      %s330 = smul.addr %s329, 4
      %s331 = scalar_lea.vmem %s0, %s330
      %p332 = pneg %p52
      %p333 = pneg %p49
      %s334 = smul.u32 %s22, 8
      %s335 = ssub.s32 %s334, 1
      %p336 = scmp.gt.s32.totalorder %s335, 0
      %s337 = scalar_select %p336, %s335, 0
      %p338 = scmp.lt.s32.totalorder %s21, 1
      %s339 = scalar_select %p338, %s21, 1
      %p340 = scmp.lt.s32.totalorder %s337, 15
      %s341 = scalar_select %p340, %s337, 15
      %s342 = smul.addr %s341, 3
      %s343 = smul.addr %s339, 48
      %s344 = sadd.s32 %s342, %s343
      %s345 = smul.addr %s344, 4
      %s346 = scalar_lea.vmem %s1, %s345
      %p347 = pneg %p88
      %p348 = pneg %p85
      %s349 = sadd.s32 %s22, 1
      %s350 = smul.u32 %s349, 8
      %p351 = scmp.lt.s32.totalorder %s350, 15
      %s352 = scalar_select %p351, %s350, 15
      %p353 = scmp.lt.s32.totalorder %s21, 1
      %s354 = scalar_select %p353, %s21, 1
      %p355 = scmp.lt.s32.totalorder %s352, 15
      %s356 = scalar_select %p355, %s352, 15
      %s357 = smul.addr %s356, 3
      %s358 = smul.addr %s354, 48
      %s359 = sadd.s32 %s357, %s358
      %s360 = smul.addr %s359, 4
      %s361 = scalar_lea.vmem %s2, %s360
      %p362 = pneg %p124
      %p363 = pneg %p121
      %p364 = pneg %p145
      %p365 = pneg %p142
      %p366 = pneg %p166
      %p367 = pneg %p163
      %s368 = smul.u32 8, %s22
      %p369 = scmp.lt.s32.totalorder %s21, 1
      %s370 = scalar_select %p369, %s21, 1
      %p371 = scmp.lt.s32.totalorder %s368, 15
      %s372 = scalar_select %p371, %s368, 15
      %s373 = smul.addr %s372, 3
      %s374 = smul.addr %s370, 48
      %s375 = sadd.s32 %s373, %s374
      %s376 = smul.addr %s375, 4
      %s377 = scalar_lea.vmem %s5, %s376
      %p378 = pneg %p194
      %p379 = pneg %p191
      %p380 = pneg %p222
      %p381 = pneg %p219
      %s382 = smul.u32 8, %s22
      %p383 = scmp.lt.s32.totalorder %s21, 1
      %s384 = scalar_select %p383, %s21, 1
      %p385 = scmp.lt.s32.totalorder %s382, 15
      %s386 = scalar_select %p385, %s382, 15
      %s387 = smul.addr %s386, 3
      %s388 = smul.addr %s384, 48
      %s389 = sadd.s32 %s387, %s388
      %s390 = smul.addr %s389, 4
      %s391 = scalar_lea.vmem %s6, %s390
      %s392 = smul.u32 8, %s22
      %p393 = scmp.lt.s32.totalorder %s21, 1
      %s394 = scalar_select %p393, %s21, 1
      %p395 = scmp.lt.s32.totalorder %s392, 15
      %s396 = scalar_select %p395, %s392, 15
      %s397 = smul.addr %s396, 3
      %s398 = smul.addr %s394, 48
      %s399 = sadd.s32 %s397, %s398
      %s400 = smul.addr %s399, 4
      %s401 = scalar_lea.vmem %s0, %s400
      %s402 = smul.u32 8, %s22
      %s403 = smul.u32 %s22, 8
      %s404 = ssub.s32 %s403, 1
      %p405 = scmp.gt.s32.totalorder %s404, 0
      %s406 = scalar_select %p405, %s404, 0
      %p407 = scmp.lt.s32.totalorder %s21, 1
      %s408 = scalar_select %p407, %s21, 1
      %p409 = scmp.lt.s32.totalorder %s406, 15
      %s410 = scalar_select %p409, %s406, 15
      %s411 = smul.addr %s410, 3
      %s412 = smul.addr %s408, 48
      %s413 = sadd.s32 %s411, %s412
      %s414 = smul.addr %s413, 4
      %s415 = scalar_lea.vmem %s1, %s414
      %s416 = smul.u32 %s22, 8
      %s417 = ssub.s32 %s416, 1
      %p418 = scmp.gt.s32.totalorder %s417, 0
      %s419 = scalar_select %p418, %s417, 0
      %s420 = sadd.s32 %s22, 1
      %s421 = smul.u32 %s420, 8
      %p422 = scmp.lt.s32.totalorder %s421, 15
      %s423 = scalar_select %p422, %s421, 15
      %p424 = scmp.lt.s32.totalorder %s21, 1
      %s425 = scalar_select %p424, %s21, 1
      %p426 = scmp.lt.s32.totalorder %s423, 15
      %s427 = scalar_select %p426, %s423, 15
      %s428 = smul.addr %s427, 3
      %s429 = smul.addr %s425, 48
      %s430 = sadd.s32 %s428, %s429
      %s431 = smul.addr %s430, 4
      %s432 = scalar_lea.vmem %s2, %s431
      %s433 = sadd.s32 %s22, 1
      %s434 = smul.u32 %s433, 8
      %p435 = scmp.lt.s32.totalorder %s434, 15
      %s436 = scalar_select %p435, %s434, 15
      %s437 = smul.u32 8, %s22
      %p438 = scmp.lt.s32.totalorder %s21, 1
      %s439 = scalar_select %p438, %s21, 1
      %p440 = scmp.lt.s32.totalorder %s437, 15
      %s441 = scalar_select %p440, %s437, 15
      %s442 = smul.addr %s441, 3
      %s443 = smul.addr %s439, 48
      %s444 = sadd.s32 %s442, %s443
      %s445 = smul.addr %s444, 4
      %s446 = scalar_lea.vmem %s5, %s445
      %s447 = smul.u32 8, %s22
      %s448 = smul.u32 8, %s22
      %p449 = scmp.lt.s32.totalorder %s21, 1
      %s450 = scalar_select %p449, %s21, 1
      %p451 = scmp.lt.s32.totalorder %s448, 15
      %s452 = scalar_select %p451, %s448, 15
      %s453 = smul.addr %s452, 3
      %s454 = smul.addr %s450, 48
      %s455 = sadd.s32 %s453, %s454
      %s456 = smul.addr %s455, 4
      %s457 = scalar_lea.vmem %s6, %s456
      %s458 = smul.u32 8, %s22
      %v460 = vld [vmem:[%s401] sm:$0xf]
      %v461 = vld [vmem:[%s401 + $0x4] sm:$0xf]
      %v462 = vld [vmem:[%s401 + $0x8] sm:$0x1]
      %v463 = vld [vmem:[%s401 + $0xc] sm:$0xf]
      %v464 = vld [vmem:[%s401 + $0x10] sm:$0xf]
      %v465 = vld [vmem:[%s401 + $0x14] sm:$0x1]
      %v466 = vld [vmem:[%s401 + $0x18] sm:$0xf]
      %v467 = vld [vmem:[%s401 + $0x1c] sm:$0xf]
      %v468 = vld [vmem:[%s401 + $0x20] sm:$0x1]
      %v469 = vld [vmem:[%s401 + $0x24] sm:$0xf]
      %v470 = vld [vmem:[%s401 + $0x28] sm:$0xf]
      %v471 = vld [vmem:[%s401 + $0x2c] sm:$0x1]
      %v472 = vld [vmem:[%s401 + $0x30] sm:$0xf]
      %v473 = vld [vmem:[%s401 + $0x34] sm:$0xf]
      %v474 = vld [vmem:[%s401 + $0x38] sm:$0x1]
      %v475 = vld [vmem:[%s401 + $0x3c] sm:$0xf]
      %v476 = vld [vmem:[%s401 + $0x40] sm:$0xf]
      %v477 = vld [vmem:[%s401 + $0x44] sm:$0x1]
      %v478 = vld [vmem:[%s401 + $0x48] sm:$0xf]
      %v479 = vld [vmem:[%s401 + $0x4c] sm:$0xf]
      %v480 = vld [vmem:[%s401 + $0x50] sm:$0x1]
      %v481 = vld [vmem:[%s401 + $0x54] sm:$0xf]
      %v482 = vld [vmem:[%s401 + $0x58] sm:$0xf]
      %v483 = vld [vmem:[%s401 + $0x5c] sm:$0x1]
      %p484 = scmp.gt.s32.totalorder %s22, 0
      %s485 = scalar_select %p484, 1, 0
      %s486 = scvt.s32.f32 %s485
      %p487 = scmp.lt.s32.totalorder %s22, 1
      %s488 = scalar_select %p487, 1, 0
      %s489 = scvt.s32.f32 %s488
      %v490 = vld [vmem:[%s415] sm:$0xf]
      %v491 = vld [vmem:[%s415 + $0x4] sm:$0xf]
      %v492 = vld [vmem:[%s415 + $0x8] sm:$0x1]
      %v493 = vunpack.c.l.bf16 %v490
      %v494 = vunpack.c.l.bf16 %v491
      %v495 = vunpack.c.l.bf16 %v492
      %v496 = vstv %s486
      %v497 = vmul.f32 %v493, %v496
      %v498 = vmul.f32 %v494, %v496
      %v499 = vmul.f32 %v495, %v496
      %v500 = vpack.c.bf16 %v497, %v497
      %v501 = vpack.c.bf16 %v498, %v498
      %v502 = vpack.c.bf16 %v499, %v499
      %v503 = vld [vmem:[%s432] sm:$0xf]
      %v504 = vld [vmem:[%s432 + $0x4] sm:$0xf]
      %v505 = vld [vmem:[%s432 + $0x8] sm:$0x1]
      %v506 = vunpack.c.l.bf16 %v503
      %v507 = vunpack.c.l.bf16 %v504
      %v508 = vunpack.c.l.bf16 %v505
      %v509 = vstv %s489
      %v510 = vmul.f32 %v506, %v509
      %v511 = vmul.f32 %v507, %v509
      %v512 = vmul.f32 %v508, %v509
      %v513 = vpack.c.bf16 %v510, %v510
      %v514 = vpack.c.bf16 %v511, %v511
      %v515 = vpack.c.bf16 %v512, %v512
      %v516 = vld [vmem:[%s3] sm:$0xf]
      %s517 = scalar_lea.vmem %s3, 12
      %v518 = vld [vmem:[%s517] sm:$0xf]
      %v535 = vunpack.c.l.b16 %v460
      %v536 = vunpack.c.l.b16 %v461
      %v537 = vunpack.c.l.b16 %v463
      %v538 = vunpack.c.l.b16 %v464
      %v539 = vunpack.c.l.b16 %v466
      %v540 = vunpack.c.l.b16 %v467
      %v541 = vunpack.c.l.b16 %v469
      %v542 = vunpack.c.l.b16 %v470
      %v543 = vunpack.c.l.b16 %v472
      %v544 = vunpack.c.l.b16 %v473
      %v545 = vunpack.c.l.b16 %v475
      %v546 = vunpack.c.l.b16 %v476
      %v547 = vunpack.c.l.b16 %v478
      %v548 = vunpack.c.l.b16 %v479
      %v549 = vunpack.c.l.b16 %v481
      %v550 = vunpack.c.l.b16 %v482
      %v551 = vpack.c.b16 %v536, %v535
      %v552 = vpack.c.b16 %v538, %v537
      %v553 = vpack.c.b16 %v540, %v539
      %v554 = vpack.c.b16 %v542, %v541
      %v555 = vpack.c.b16 %v544, %v543
      %v556 = vpack.c.b16 %v546, %v545
      %v557 = vpack.c.b16 %v548, %v547
      %v558 = vpack.c.b16 %v550, %v549
      %vm559 = vcmask 64512
      %v561 = vsel %vm559, %v551, 0
      %v564 = vsel %vm559, %v552, 0
      %v567 = vsel %vm559, %v553, 0
      %v570 = vsel %vm559, %v554, 0
      %v573 = vsel %vm559, %v555, 0
      %v576 = vsel %vm559, %v556, 0
      %v579 = vsel %vm559, %v557, 0
      %v582 = vsel %vm559, %v558, 0
      %vm584 = vcmask 1043456
      %v586 = vsel %vm584, %v518, 0
      %588 = vmatpush.bf16.msra.mxu0 0
      %589 = vmatpush.bf16.msra.mxu0 0
      %590 = vmatpush.bf16.msra.mxu0 0
      %591 = vmatpush.bf16.msra.mxu0 0
      %592 = vmatpush.bf16.msra.mxu0 0
      %593 = vmatpush.bf16.msra.mxu0 0
      %594 = vmatpush.bf16.msra.mxu0 0
      %595 = vmatpush.bf16.msra.mxu0 %v586
      %596 = vmatmul.bf16.gmra.mxu0 %v561
      %v597 = vpop.f32.mrf.mxu0
      %v598 = vadd.f32 0.0, %v597
      %v599 = vpop.f32.mrf.mxu0
      %v600 = vadd.f32 0.0, %v599
      %601 = vmatmul.bf16.gmra.mxu0 %v564
      %v602 = vpop.f32.mrf.mxu0
      %v603 = vadd.f32 0.0, %v602
      %v604 = vpop.f32.mrf.mxu0
      %v605 = vadd.f32 0.0, %v604
      %606 = vmatmul.bf16.gmra.mxu0 %v567
      %v607 = vpop.f32.mrf.mxu0
      %v608 = vadd.f32 0.0, %v607
      %v609 = vpop.f32.mrf.mxu0
      %v610 = vadd.f32 0.0, %v609
      %611 = vmatmul.bf16.gmra.mxu0 %v570
      %v612 = vpop.f32.mrf.mxu0
      %v613 = vadd.f32 0.0, %v612
      %v614 = vpop.f32.mrf.mxu0
      %v615 = vadd.f32 0.0, %v614
      %616 = vmatmul.bf16.gmra.mxu0 %v573
      %v617 = vpop.f32.mrf.mxu0
      %v618 = vadd.f32 0.0, %v617
      %v619 = vpop.f32.mrf.mxu0
      %v620 = vadd.f32 0.0, %v619
      %621 = vmatmul.bf16.gmra.mxu0 %v576
      %v622 = vpop.f32.mrf.mxu0
      %v623 = vadd.f32 0.0, %v622
      %v624 = vpop.f32.mrf.mxu0
      %v625 = vadd.f32 0.0, %v624
      %626 = vmatmul.bf16.gmra.mxu0 %v579
      %v627 = vpop.f32.mrf.mxu0
      %v628 = vadd.f32 0.0, %v627
      %v629 = vpop.f32.mrf.mxu0
      %v630 = vadd.f32 0.0, %v629
      %631 = vmatmul.bf16.gmra.mxu0 %v582
      %v632 = vpop.f32.mrf.mxu0
      %v633 = vadd.f32 0.0, %v632
      %v634 = vpop.f32.mrf.mxu0
      %v635 = vadd.f32 0.0, %v634
      %636 = vdwg.mxu0
      %v639 = vunpack.c.l.b16 %v500
      %v640 = vunpack.c.l.b16 %v501
      %v641 = vpack.c.b16 %v640, %v639
      %v643 = vsel %vm559, %v641, 0
      %v646 = vsel %vm584, %v516, 0
      %648 = vmatpush.bf16.msra.mxu0 0
      %649 = vmatpush.bf16.msra.mxu0 0
      %650 = vmatpush.bf16.msra.mxu0 0
      %651 = vmatpush.bf16.msra.mxu0 0
      %652 = vmatpush.bf16.msra.mxu0 0
      %653 = vmatpush.bf16.msra.mxu0 0
      %654 = vmatpush.bf16.msra.mxu0 0
      %655 = vmatpush.bf16.msra.mxu0 %v646
      %656 = vmatmul.bf16.gmra.mxu0 %v643
      %v657 = vpop.f32.mrf.mxu0
      %v658 = vadd.f32 %v598, %v657
      %v659 = vpop.f32.mrf.mxu0
      %v660 = vadd.f32 %v600, %v659
      %661 = vmatmul.bf16.gmra.mxu0 %v561
      %v662 = vpop.f32.mrf.mxu0
      %v663 = vadd.f32 %v603, %v662
      %v664 = vpop.f32.mrf.mxu0
      %v665 = vadd.f32 %v605, %v664
      %666 = vmatmul.bf16.gmra.mxu0 %v564
      %v667 = vpop.f32.mrf.mxu0
      %v668 = vadd.f32 %v608, %v667
      %v669 = vpop.f32.mrf.mxu0
      %v670 = vadd.f32 %v610, %v669
      %671 = vmatmul.bf16.gmra.mxu0 %v567
      %v672 = vpop.f32.mrf.mxu0
      %v673 = vadd.f32 %v613, %v672
      %v674 = vpop.f32.mrf.mxu0
      %v675 = vadd.f32 %v615, %v674
      %676 = vmatmul.bf16.gmra.mxu0 %v570
      %v677 = vpop.f32.mrf.mxu0
      %v678 = vadd.f32 %v618, %v677
      %v679 = vpop.f32.mrf.mxu0
      %v680 = vadd.f32 %v620, %v679
      %681 = vmatmul.bf16.gmra.mxu0 %v573
      %v682 = vpop.f32.mrf.mxu0
      %v683 = vadd.f32 %v623, %v682
      %v684 = vpop.f32.mrf.mxu0
      %v685 = vadd.f32 %v625, %v684
      %686 = vmatmul.bf16.gmra.mxu0 %v576
      %v687 = vpop.f32.mrf.mxu0
      %v688 = vadd.f32 %v628, %v687
      %v689 = vpop.f32.mrf.mxu0
      %v690 = vadd.f32 %v630, %v689
      %691 = vmatmul.bf16.gmra.mxu0 %v579
      %v692 = vpop.f32.mrf.mxu0
      %v693 = vadd.f32 %v633, %v692
      %v694 = vpop.f32.mrf.mxu0
      %v695 = vadd.f32 %v635, %v694
      %696 = vdwg.mxu0
      %s697 = scalar_lea.vmem %s3, 24
      %v698 = vld [vmem:[%s697] sm:$0xf]
      %v701 = vunpack.c.l.b16 %v513
      %v702 = vunpack.c.l.b16 %v514
      %v703 = vpack.c.b16 %v702, %v701
      %v705 = vsel %vm559, %v703, 0
      %v708 = vsel %vm584, %v698, 0
      %710 = vmatpush.bf16.msra.mxu0 0
      %711 = vmatpush.bf16.msra.mxu0 0
      %712 = vmatpush.bf16.msra.mxu0 0
      %713 = vmatpush.bf16.msra.mxu0 0
      %714 = vmatpush.bf16.msra.mxu0 0
      %715 = vmatpush.bf16.msra.mxu0 0
      %716 = vmatpush.bf16.msra.mxu0 0
      %717 = vmatpush.bf16.msra.mxu0 %v708
      %718 = vmatmul.bf16.gmra.mxu0 %v564
      %v719 = vpop.f32.mrf.mxu0
      %v720 = vadd.f32 0.0, %v719
      %v721 = vpop.f32.mrf.mxu0
      %v722 = vadd.f32 0.0, %v721
      %723 = vmatmul.bf16.gmra.mxu0 %v567
      %v724 = vpop.f32.mrf.mxu0
      %v725 = vadd.f32 0.0, %v724
      %v726 = vpop.f32.mrf.mxu0
      %v727 = vadd.f32 0.0, %v726
      %728 = vmatmul.bf16.gmra.mxu0 %v570
      %v729 = vpop.f32.mrf.mxu0
      %v730 = vadd.f32 0.0, %v729
      %v731 = vpop.f32.mrf.mxu0
      %v732 = vadd.f32 0.0, %v731
      %733 = vmatmul.bf16.gmra.mxu0 %v573
      %v734 = vpop.f32.mrf.mxu0
      %v735 = vadd.f32 0.0, %v734
      %v736 = vpop.f32.mrf.mxu0
      %v737 = vadd.f32 0.0, %v736
      %738 = vmatmul.bf16.gmra.mxu0 %v576
      %v739 = vpop.f32.mrf.mxu0
      %v740 = vadd.f32 0.0, %v739
      %v741 = vpop.f32.mrf.mxu0
      %v742 = vadd.f32 0.0, %v741
      %743 = vmatmul.bf16.gmra.mxu0 %v579
      %v744 = vpop.f32.mrf.mxu0
      %v745 = vadd.f32 0.0, %v744
      %v746 = vpop.f32.mrf.mxu0
      %v747 = vadd.f32 0.0, %v746
      %748 = vmatmul.bf16.gmra.mxu0 %v582
      %v749 = vpop.f32.mrf.mxu0
      %v750 = vadd.f32 0.0, %v749
      %v751 = vpop.f32.mrf.mxu0
      %v752 = vadd.f32 0.0, %v751
      %753 = vmatmul.bf16.gmra.mxu0 %v705
      %v754 = vpop.f32.mrf.mxu0
      %v755 = vadd.f32 0.0, %v754
      %v756 = vpop.f32.mrf.mxu0
      %v757 = vadd.f32 0.0, %v756
      %758 = vdwg.mxu0
      %v759 = vadd.f32 %v658, %v720
      %v760 = vadd.f32 %v660, %v722
      %v761 = vadd.f32 %v663, %v725
      %v762 = vadd.f32 %v665, %v727
      %v763 = vadd.f32 %v668, %v730
      %v764 = vadd.f32 %v670, %v732
      %v765 = vadd.f32 %v673, %v735
      %v766 = vadd.f32 %v675, %v737
      %v767 = vadd.f32 %v678, %v740
      %v768 = vadd.f32 %v680, %v742
      %v769 = vadd.f32 %v683, %v745
      %v770 = vadd.f32 %v685, %v747
      %v771 = vadd.f32 %v688, %v750
      %v772 = vadd.f32 %v690, %v752
      %v773 = vadd.f32 %v693, %v755
      %v774 = vadd.f32 %v695, %v757
      %vm775 = vsmask.f32 3328
      %vm776 = vsmask.f32 7440
      %vm777 = vmor %vm775, %vm776
      %v779 = vshrl.u32 %v500, 16
      %v781 = vrot.slane %v779, 4
      %v782 = vshll.u32 %v500, 16
      %v784 = vrot.slane %v782, 5
      %v785 = vor.u32 %v781, %v784
      %v786 = vrot.slane %v785, 4
      %v788 = vshll.u32 %v501, 16
      %v790 = vrot.slane %v788, 5
      %v791 = vsel %vm777, %v786, %v790
      %v792 = vshrl.u32 %v501, 16
      %v794 = vrot.slane %v792, 4
      %v795 = vor.u32 %v794, %v790
      %v796 = vrot.slane %v795, 4
      %v798 = vshll.u32 %v502, 16
      %v800 = vrot.slane %v798, 5
      %v801 = vsel %vm777, %v796, %v800
      %v803 = vshrl.u32 %v460, 16
      %v805 = vrot.slane %v803, 4
      %v806 = vshll.u32 %v460, 16
      %v808 = vrot.slane %v806, 5
      %v809 = vor.u32 %v805, %v808
      %v810 = vrot.slane %v809, 4
      %v812 = vshll.u32 %v461, 16
      %v814 = vrot.slane %v812, 5
      %v815 = vsel %vm777, %v810, %v814
      %v816 = vshrl.u32 %v461, 16
      %v818 = vrot.slane %v816, 4
      %v819 = vor.u32 %v818, %v814
      %v820 = vrot.slane %v819, 4
      %v822 = vshll.u32 %v462, 16
      %v824 = vrot.slane %v822, 5
      %v825 = vsel %vm777, %v820, %v824
      %v827 = vshrl.u32 %v463, 16
      %v829 = vrot.slane %v827, 4
      %v830 = vshll.u32 %v463, 16
      %v832 = vrot.slane %v830, 5
      %v833 = vor.u32 %v829, %v832
      %v834 = vrot.slane %v833, 4
      %v836 = vshll.u32 %v464, 16
      %v838 = vrot.slane %v836, 5
      %v839 = vsel %vm777, %v834, %v838
      %v840 = vshrl.u32 %v464, 16
      %v842 = vrot.slane %v840, 4
      %v843 = vor.u32 %v842, %v838
      %v844 = vrot.slane %v843, 4
      %v846 = vshll.u32 %v465, 16
      %v848 = vrot.slane %v846, 5
      %v849 = vsel %vm777, %v844, %v848
      %v851 = vshrl.u32 %v466, 16
      %v853 = vrot.slane %v851, 4
      %v854 = vshll.u32 %v466, 16
      %v856 = vrot.slane %v854, 5
      %v857 = vor.u32 %v853, %v856
      %v858 = vrot.slane %v857, 4
      %v860 = vshll.u32 %v467, 16
      %v862 = vrot.slane %v860, 5
      %v863 = vsel %vm777, %v858, %v862
      %v864 = vshrl.u32 %v467, 16
      %v866 = vrot.slane %v864, 4
      %v867 = vor.u32 %v866, %v862
      %v868 = vrot.slane %v867, 4
      %v870 = vshll.u32 %v468, 16
      %v872 = vrot.slane %v870, 5
      %v873 = vsel %vm777, %v868, %v872
      %v875 = vshrl.u32 %v469, 16
      %v877 = vrot.slane %v875, 4
      %v878 = vshll.u32 %v469, 16
      %v880 = vrot.slane %v878, 5
      %v881 = vor.u32 %v877, %v880
      %v882 = vrot.slane %v881, 4
      %v884 = vshll.u32 %v470, 16
      %v886 = vrot.slane %v884, 5
      %v887 = vsel %vm777, %v882, %v886
      %v888 = vshrl.u32 %v470, 16
      %v890 = vrot.slane %v888, 4
      %v891 = vor.u32 %v890, %v886
      %v892 = vrot.slane %v891, 4
      %v894 = vshll.u32 %v471, 16
      %v896 = vrot.slane %v894, 5
      %v897 = vsel %vm777, %v892, %v896
      %v899 = vshrl.u32 %v472, 16
      %v901 = vrot.slane %v899, 4
      %v902 = vshll.u32 %v472, 16
      %v904 = vrot.slane %v902, 5
      %v905 = vor.u32 %v901, %v904
      %v906 = vrot.slane %v905, 4
      %v908 = vshll.u32 %v473, 16
      %v910 = vrot.slane %v908, 5
      %v911 = vsel %vm777, %v906, %v910
      %v912 = vshrl.u32 %v473, 16
      %v914 = vrot.slane %v912, 4
      %v915 = vor.u32 %v914, %v910
      %v916 = vrot.slane %v915, 4
      %v918 = vshll.u32 %v474, 16
      %v920 = vrot.slane %v918, 5
      %v921 = vsel %vm777, %v916, %v920
      %v923 = vshrl.u32 %v475, 16
      %v925 = vrot.slane %v923, 4
      %v926 = vshll.u32 %v475, 16
      %v928 = vrot.slane %v926, 5
      %v929 = vor.u32 %v925, %v928
      %v930 = vrot.slane %v929, 4
      %v932 = vshll.u32 %v476, 16
      %v934 = vrot.slane %v932, 5
      %v935 = vsel %vm777, %v930, %v934
      %v936 = vshrl.u32 %v476, 16
      %v938 = vrot.slane %v936, 4
      %v939 = vor.u32 %v938, %v934
      %v940 = vrot.slane %v939, 4
      %v942 = vshll.u32 %v477, 16
      %v944 = vrot.slane %v942, 5
      %v945 = vsel %vm777, %v940, %v944
      %v947 = vshrl.u32 %v478, 16
      %v949 = vrot.slane %v947, 4
      %v950 = vshll.u32 %v478, 16
      %v952 = vrot.slane %v950, 5
      %v953 = vor.u32 %v949, %v952
      %v954 = vrot.slane %v953, 4
      %v956 = vshll.u32 %v479, 16
      %v958 = vrot.slane %v956, 5
      %v959 = vsel %vm777, %v954, %v958
      %v960 = vshrl.u32 %v479, 16
      %v962 = vrot.slane %v960, 4
      %v963 = vor.u32 %v962, %v958
      %v964 = vrot.slane %v963, 4
      %v966 = vshll.u32 %v480, 16
      %v968 = vrot.slane %v966, 5
      %v969 = vsel %vm777, %v964, %v968
      %s970 = scalar_lea.vmem %s3, 4
      %v971 = vld [vmem:[%s970] sm:$0xf]
      %v972 = vunpack.c.l.b16 %v791
      %v973 = vunpack.c.l.b16 %v801
      %v974 = vunpack.c.l.b16 %v815
      %v975 = vunpack.c.l.b16 %v825
      %v976 = vunpack.c.l.b16 %v839
      %v977 = vunpack.c.l.b16 %v849
      %v978 = vunpack.c.l.b16 %v863
      %v979 = vunpack.c.l.b16 %v873
      %v980 = vunpack.c.l.b16 %v887
      %v981 = vunpack.c.l.b16 %v897
      %v982 = vunpack.c.l.b16 %v911
      %v983 = vunpack.c.l.b16 %v921
      %v984 = vunpack.c.l.b16 %v935
      %v985 = vunpack.c.l.b16 %v945
      %v986 = vunpack.c.l.b16 %v959
      %v987 = vunpack.c.l.b16 %v969
      %v988 = vpack.c.b16 %v973, %v972
      %v989 = vpack.c.b16 %v975, %v974
      %v990 = vpack.c.b16 %v977, %v976
      %v991 = vpack.c.b16 %v979, %v978
      %v992 = vpack.c.b16 %v981, %v980
      %v993 = vpack.c.b16 %v983, %v982
      %v994 = vpack.c.b16 %v985, %v984
      %v995 = vpack.c.b16 %v987, %v986
      %v997 = vsel %vm559, %v988, 0
      %v1000 = vsel %vm559, %v989, 0
      %v1003 = vsel %vm559, %v990, 0
      %v1006 = vsel %vm559, %v991, 0
      %v1009 = vsel %vm559, %v992, 0
      %v1012 = vsel %vm559, %v993, 0
      %v1015 = vsel %vm559, %v994, 0
      %v1018 = vsel %vm559, %v995, 0
      %v1021 = vsel %vm584, %v971, 0
      %1023 = vmatpush.bf16.msra.mxu0 0
      %1024 = vmatpush.bf16.msra.mxu0 0
      %1025 = vmatpush.bf16.msra.mxu0 0
      %1026 = vmatpush.bf16.msra.mxu0 0
      %1027 = vmatpush.bf16.msra.mxu0 0
      %1028 = vmatpush.bf16.msra.mxu0 0
      %1029 = vmatpush.bf16.msra.mxu0 0
      %1030 = vmatpush.bf16.msra.mxu0 %v1021
      %1031 = vmatmul.bf16.gmra.mxu0 %v997
      %v1032 = vpop.f32.mrf.mxu0
      %v1033 = vadd.f32 0.0, %v1032
      %v1034 = vpop.f32.mrf.mxu0
      %v1035 = vadd.f32 0.0, %v1034
      %1036 = vmatmul.bf16.gmra.mxu0 %v1000
      %v1037 = vpop.f32.mrf.mxu0
      %v1038 = vadd.f32 0.0, %v1037
      %v1039 = vpop.f32.mrf.mxu0
      %v1040 = vadd.f32 0.0, %v1039
      %1041 = vmatmul.bf16.gmra.mxu0 %v1003
      %v1042 = vpop.f32.mrf.mxu0
      %v1043 = vadd.f32 0.0, %v1042
      %v1044 = vpop.f32.mrf.mxu0
      %v1045 = vadd.f32 0.0, %v1044
      %1046 = vmatmul.bf16.gmra.mxu0 %v1006
      %v1047 = vpop.f32.mrf.mxu0
      %v1048 = vadd.f32 0.0, %v1047
      %v1049 = vpop.f32.mrf.mxu0
      %v1050 = vadd.f32 0.0, %v1049
      %1051 = vmatmul.bf16.gmra.mxu0 %v1009
      %v1052 = vpop.f32.mrf.mxu0
      %v1053 = vadd.f32 0.0, %v1052
      %v1054 = vpop.f32.mrf.mxu0
      %v1055 = vadd.f32 0.0, %v1054
      %1056 = vmatmul.bf16.gmra.mxu0 %v1012
      %v1057 = vpop.f32.mrf.mxu0
      %v1058 = vadd.f32 0.0, %v1057
      %v1059 = vpop.f32.mrf.mxu0
      %v1060 = vadd.f32 0.0, %v1059
      %1061 = vmatmul.bf16.gmra.mxu0 %v1015
      %v1062 = vpop.f32.mrf.mxu0
      %v1063 = vadd.f32 0.0, %v1062
      %v1064 = vpop.f32.mrf.mxu0
      %v1065 = vadd.f32 0.0, %v1064
      %1066 = vmatmul.bf16.gmra.mxu0 %v1018
      %v1067 = vpop.f32.mrf.mxu0
      %v1068 = vadd.f32 0.0, %v1067
      %v1069 = vpop.f32.mrf.mxu0
      %v1070 = vadd.f32 0.0, %v1069
      %1071 = vdwg.mxu0
      %v1072 = vadd.f32 %v759, %v1033
      %v1073 = vadd.f32 %v760, %v1035
      %v1074 = vadd.f32 %v761, %v1038
      %v1075 = vadd.f32 %v762, %v1040
      %v1076 = vadd.f32 %v763, %v1043
      %v1077 = vadd.f32 %v764, %v1045
      %v1078 = vadd.f32 %v765, %v1048
      %v1079 = vadd.f32 %v766, %v1050
      %v1080 = vadd.f32 %v767, %v1053
      %v1081 = vadd.f32 %v768, %v1055
      %v1082 = vadd.f32 %v769, %v1058
      %v1083 = vadd.f32 %v770, %v1060
      %v1084 = vadd.f32 %v771, %v1063
      %v1085 = vadd.f32 %v772, %v1065
      %v1086 = vadd.f32 %v773, %v1068
      %v1087 = vadd.f32 %v774, %v1070
      %v1089 = vshrl.u32 %v481, 16
      %v1091 = vrot.slane %v1089, 4
      %v1092 = vshll.u32 %v481, 16
      %v1094 = vrot.slane %v1092, 5
      %v1095 = vor.u32 %v1091, %v1094
      %v1096 = vrot.slane %v1095, 4
      %v1098 = vshll.u32 %v482, 16
      %v1100 = vrot.slane %v1098, 5
      %v1101 = vsel %vm777, %v1096, %v1100
      %v1102 = vshrl.u32 %v482, 16
      %v1104 = vrot.slane %v1102, 4
      %v1105 = vor.u32 %v1104, %v1100
      %v1106 = vrot.slane %v1105, 4
      %v1108 = vshll.u32 %v483, 16
      %v1110 = vrot.slane %v1108, 5
      %v1111 = vsel %vm777, %v1106, %v1110
      %s1112 = scalar_lea.vmem %s3, 16
      %v1113 = vld [vmem:[%s1112] sm:$0xf]
      %v1114 = vunpack.c.l.b16 %v1101
      %v1115 = vunpack.c.l.b16 %v1111
      %v1116 = vpack.c.b16 %v1115, %v1114
      %v1118 = vsel %vm559, %v1116, 0
      %v1121 = vsel %vm584, %v1113, 0
      %1123 = vmatpush.bf16.msra.mxu0 0
      %1124 = vmatpush.bf16.msra.mxu0 0
      %1125 = vmatpush.bf16.msra.mxu0 0
      %1126 = vmatpush.bf16.msra.mxu0 0
      %1127 = vmatpush.bf16.msra.mxu0 0
      %1128 = vmatpush.bf16.msra.mxu0 0
      %1129 = vmatpush.bf16.msra.mxu0 0
      %1130 = vmatpush.bf16.msra.mxu0 %v1121
      %1131 = vmatmul.bf16.gmra.mxu0 %v1000
      %v1132 = vpop.f32.mrf.mxu0
      %v1133 = vadd.f32 0.0, %v1132
      %v1134 = vpop.f32.mrf.mxu0
      %v1135 = vadd.f32 0.0, %v1134
      %1136 = vmatmul.bf16.gmra.mxu0 %v1003
      %v1137 = vpop.f32.mrf.mxu0
      %v1138 = vadd.f32 0.0, %v1137
      %v1139 = vpop.f32.mrf.mxu0
      %v1140 = vadd.f32 0.0, %v1139
      %1141 = vmatmul.bf16.gmra.mxu0 %v1006
      %v1142 = vpop.f32.mrf.mxu0
      %v1143 = vadd.f32 0.0, %v1142
      %v1144 = vpop.f32.mrf.mxu0
      %v1145 = vadd.f32 0.0, %v1144
      %1146 = vmatmul.bf16.gmra.mxu0 %v1009
      %v1147 = vpop.f32.mrf.mxu0
      %v1148 = vadd.f32 0.0, %v1147
      %v1149 = vpop.f32.mrf.mxu0
      %v1150 = vadd.f32 0.0, %v1149
      %1151 = vmatmul.bf16.gmra.mxu0 %v1012
      %v1152 = vpop.f32.mrf.mxu0
      %v1153 = vadd.f32 0.0, %v1152
      %v1154 = vpop.f32.mrf.mxu0
      %v1155 = vadd.f32 0.0, %v1154
      %1156 = vmatmul.bf16.gmra.mxu0 %v1015
      %v1157 = vpop.f32.mrf.mxu0
      %v1158 = vadd.f32 0.0, %v1157
      %v1159 = vpop.f32.mrf.mxu0
      %v1160 = vadd.f32 0.0, %v1159
      %1161 = vmatmul.bf16.gmra.mxu0 %v1018
      %v1162 = vpop.f32.mrf.mxu0
      %v1163 = vadd.f32 0.0, %v1162
      %v1164 = vpop.f32.mrf.mxu0
      %v1165 = vadd.f32 0.0, %v1164
      %1166 = vmatmul.bf16.gmra.mxu0 %v1118
      %v1167 = vpop.f32.mrf.mxu0
      %v1168 = vadd.f32 0.0, %v1167
      %v1169 = vpop.f32.mrf.mxu0
      %v1170 = vadd.f32 0.0, %v1169
      %1171 = vdwg.mxu0
      %v1172 = vadd.f32 %v1072, %v1133
      %v1173 = vadd.f32 %v1073, %v1135
      %v1174 = vadd.f32 %v1074, %v1138
      %v1175 = vadd.f32 %v1075, %v1140
      %v1176 = vadd.f32 %v1076, %v1143
      %v1177 = vadd.f32 %v1077, %v1145
      %v1178 = vadd.f32 %v1078, %v1148
      %v1179 = vadd.f32 %v1079, %v1150
      %v1180 = vadd.f32 %v1080, %v1153
      %v1181 = vadd.f32 %v1081, %v1155
      %v1182 = vadd.f32 %v1082, %v1158
      %v1183 = vadd.f32 %v1083, %v1160
      %v1184 = vadd.f32 %v1084, %v1163
      %v1185 = vadd.f32 %v1085, %v1165
      %v1186 = vadd.f32 %v1086, %v1168
      %v1187 = vadd.f32 %v1087, %v1170
      %v1189 = vshrl.u32 %v513, 16
      %v1191 = vrot.slane %v1189, 4
      %v1192 = vshll.u32 %v513, 16
      %v1194 = vrot.slane %v1192, 5
      %v1195 = vor.u32 %v1191, %v1194
      %v1196 = vrot.slane %v1195, 4
      %v1198 = vshll.u32 %v514, 16
      %v1200 = vrot.slane %v1198, 5
      %v1201 = vsel %vm777, %v1196, %v1200
      %v1202 = vshrl.u32 %v514, 16
      %v1204 = vrot.slane %v1202, 4
      %v1205 = vor.u32 %v1204, %v1200
      %v1206 = vrot.slane %v1205, 4
      %v1208 = vshll.u32 %v515, 16
      %v1210 = vrot.slane %v1208, 5
      %v1211 = vsel %vm777, %v1206, %v1210
      %s1212 = scalar_lea.vmem %s3, 28
      %v1213 = vld [vmem:[%s1212] sm:$0xf]
      %v1214 = vunpack.c.l.b16 %v1201
      %v1215 = vunpack.c.l.b16 %v1211
      %v1216 = vpack.c.b16 %v1215, %v1214
      %v1218 = vsel %vm559, %v1216, 0
      %v1221 = vsel %vm584, %v1213, 0
      %1223 = vmatpush.bf16.msra.mxu0 0
      %1224 = vmatpush.bf16.msra.mxu0 0
      %1225 = vmatpush.bf16.msra.mxu0 0
      %1226 = vmatpush.bf16.msra.mxu0 0
      %1227 = vmatpush.bf16.msra.mxu0 0
      %1228 = vmatpush.bf16.msra.mxu0 0
      %1229 = vmatpush.bf16.msra.mxu0 0
      %1230 = vmatpush.bf16.msra.mxu0 %v1221
      %1231 = vmatmul.bf16.gmra.mxu0 %v1003
      %v1232 = vpop.f32.mrf.mxu0
      %v1233 = vadd.f32 0.0, %v1232
      %v1234 = vpop.f32.mrf.mxu0
      %v1235 = vadd.f32 0.0, %v1234
      %1236 = vmatmul.bf16.gmra.mxu0 %v1006
      %v1237 = vpop.f32.mrf.mxu0
      %v1238 = vadd.f32 0.0, %v1237
      %v1239 = vpop.f32.mrf.mxu0
      %v1240 = vadd.f32 0.0, %v1239
      %1241 = vmatmul.bf16.gmra.mxu0 %v1009
      %v1242 = vpop.f32.mrf.mxu0
      %v1243 = vadd.f32 0.0, %v1242
      %v1244 = vpop.f32.mrf.mxu0
      %v1245 = vadd.f32 0.0, %v1244
      %1246 = vmatmul.bf16.gmra.mxu0 %v1012
      %v1247 = vpop.f32.mrf.mxu0
      %v1248 = vadd.f32 0.0, %v1247
      %v1249 = vpop.f32.mrf.mxu0
      %v1250 = vadd.f32 0.0, %v1249
      %1251 = vmatmul.bf16.gmra.mxu0 %v1015
      %v1252 = vpop.f32.mrf.mxu0
      %v1253 = vadd.f32 0.0, %v1252
      %v1254 = vpop.f32.mrf.mxu0
      %v1255 = vadd.f32 0.0, %v1254
      %1256 = vmatmul.bf16.gmra.mxu0 %v1018
      %v1257 = vpop.f32.mrf.mxu0
      %v1258 = vadd.f32 0.0, %v1257
      %v1259 = vpop.f32.mrf.mxu0
      %v1260 = vadd.f32 0.0, %v1259
      %1261 = vmatmul.bf16.gmra.mxu0 %v1118
      %v1262 = vpop.f32.mrf.mxu0
      %v1263 = vadd.f32 0.0, %v1262
      %v1264 = vpop.f32.mrf.mxu0
      %v1265 = vadd.f32 0.0, %v1264
      %1266 = vmatmul.bf16.gmra.mxu0 %v1218
      %v1267 = vpop.f32.mrf.mxu0
      %v1268 = vadd.f32 0.0, %v1267
      %v1269 = vpop.f32.mrf.mxu0
      %v1270 = vadd.f32 0.0, %v1269
      %1271 = vdwg.mxu0
      %v1272 = vadd.f32 %v1172, %v1233
      %v1273 = vadd.f32 %v1173, %v1235
      %v1274 = vadd.f32 %v1174, %v1238
      %v1275 = vadd.f32 %v1175, %v1240
      %v1276 = vadd.f32 %v1176, %v1243
      %v1277 = vadd.f32 %v1177, %v1245
      %v1278 = vadd.f32 %v1178, %v1248
      %v1279 = vadd.f32 %v1179, %v1250
      %v1280 = vadd.f32 %v1180, %v1253
      %v1281 = vadd.f32 %v1181, %v1255
      %v1282 = vadd.f32 %v1182, %v1258
      %v1283 = vadd.f32 %v1183, %v1260
      %v1284 = vadd.f32 %v1184, %v1263
      %v1285 = vadd.f32 %v1185, %v1265
      %v1286 = vadd.f32 %v1186, %v1268
      %v1287 = vadd.f32 %v1187, %v1270
      %vm1296 = vcmask 1042432
      %vm1297 = vcmask 1046532
      %vm1298 = vmor %vm1296, %vm1297
      %v1299 = vrot.slane %v500, 5
      %v1300 = vrot.slane %v1299, 4
      %v1301 = vrot.slane %v501, 5
      %v1302 = vsel %vm1298, %v1300, %v1301
      %v1303 = vrot.slane %v1301, 4
      %v1304 = vrot.slane %v502, 5
      %v1305 = vsel %vm1298, %v1303, %v1304
      %v1306 = vrot.slane %v460, 5
      %v1307 = vrot.slane %v1306, 4
      %v1308 = vrot.slane %v461, 5
      %v1309 = vsel %vm1298, %v1307, %v1308
      %v1310 = vrot.slane %v1308, 4
      %v1311 = vrot.slane %v462, 5
      %v1312 = vsel %vm1298, %v1310, %v1311
      %v1313 = vrot.slane %v463, 5
      %v1314 = vrot.slane %v1313, 4
      %v1315 = vrot.slane %v464, 5
      %v1316 = vsel %vm1298, %v1314, %v1315
      %v1317 = vrot.slane %v1315, 4
      %v1318 = vrot.slane %v465, 5
      %v1319 = vsel %vm1298, %v1317, %v1318
      %v1320 = vrot.slane %v466, 5
      %v1321 = vrot.slane %v1320, 4
      %v1322 = vrot.slane %v467, 5
      %v1323 = vsel %vm1298, %v1321, %v1322
      %v1324 = vrot.slane %v1322, 4
      %v1325 = vrot.slane %v468, 5
      %v1326 = vsel %vm1298, %v1324, %v1325
      %v1327 = vrot.slane %v469, 5
      %v1328 = vrot.slane %v1327, 4
      %v1329 = vrot.slane %v470, 5
      %v1330 = vsel %vm1298, %v1328, %v1329
      %v1331 = vrot.slane %v1329, 4
      %v1332 = vrot.slane %v471, 5
      %v1333 = vsel %vm1298, %v1331, %v1332
      %v1334 = vrot.slane %v472, 5
      %v1335 = vrot.slane %v1334, 4
      %v1336 = vrot.slane %v473, 5
      %v1337 = vsel %vm1298, %v1335, %v1336
      %v1338 = vrot.slane %v1336, 4
      %v1339 = vrot.slane %v474, 5
      %v1340 = vsel %vm1298, %v1338, %v1339
      %v1341 = vrot.slane %v475, 5
      %v1342 = vrot.slane %v1341, 4
      %v1343 = vrot.slane %v476, 5
      %v1344 = vsel %vm1298, %v1342, %v1343
      %v1345 = vrot.slane %v1343, 4
      %v1346 = vrot.slane %v477, 5
      %v1347 = vsel %vm1298, %v1345, %v1346
      %v1348 = vrot.slane %v478, 5
      %v1349 = vrot.slane %v1348, 4
      %v1350 = vrot.slane %v479, 5
      %v1351 = vsel %vm1298, %v1349, %v1350
      %v1352 = vrot.slane %v1350, 4
      %v1353 = vrot.slane %v480, 5
      %v1354 = vsel %vm1298, %v1352, %v1353
      %s1355 = scalar_lea.vmem %s3, 8
      %v1356 = vld [vmem:[%s1355] sm:$0xf]
      %v1357 = vunpack.c.l.b16 %v1302
      %v1358 = vunpack.c.l.b16 %v1305
      %v1359 = vunpack.c.l.b16 %v1309
      %v1360 = vunpack.c.l.b16 %v1312
      %v1361 = vunpack.c.l.b16 %v1316
      %v1362 = vunpack.c.l.b16 %v1319
      %v1363 = vunpack.c.l.b16 %v1323
      %v1364 = vunpack.c.l.b16 %v1326
      %v1365 = vunpack.c.l.b16 %v1330
      %v1366 = vunpack.c.l.b16 %v1333
      %v1367 = vunpack.c.l.b16 %v1337
      %v1368 = vunpack.c.l.b16 %v1340
      %v1369 = vunpack.c.l.b16 %v1344
      %v1370 = vunpack.c.l.b16 %v1347
      %v1371 = vunpack.c.l.b16 %v1351
      %v1372 = vunpack.c.l.b16 %v1354
      %v1373 = vpack.c.b16 %v1358, %v1357
      %v1374 = vpack.c.b16 %v1360, %v1359
      %v1375 = vpack.c.b16 %v1362, %v1361
      %v1376 = vpack.c.b16 %v1364, %v1363
      %v1377 = vpack.c.b16 %v1366, %v1365
      %v1378 = vpack.c.b16 %v1368, %v1367
      %v1379 = vpack.c.b16 %v1370, %v1369
      %v1380 = vpack.c.b16 %v1372, %v1371
      %v1382 = vsel %vm559, %v1373, 0
      %v1385 = vsel %vm559, %v1374, 0
      %v1388 = vsel %vm559, %v1375, 0
      %v1391 = vsel %vm559, %v1376, 0
      %v1394 = vsel %vm559, %v1377, 0
      %v1397 = vsel %vm559, %v1378, 0
      %v1400 = vsel %vm559, %v1379, 0
      %v1403 = vsel %vm559, %v1380, 0
      %v1406 = vsel %vm584, %v1356, 0
      %1408 = vmatpush.bf16.msra.mxu0 0
      %1409 = vmatpush.bf16.msra.mxu0 0
      %1410 = vmatpush.bf16.msra.mxu0 0
      %1411 = vmatpush.bf16.msra.mxu0 0
      %1412 = vmatpush.bf16.msra.mxu0 0
      %1413 = vmatpush.bf16.msra.mxu0 0
      %1414 = vmatpush.bf16.msra.mxu0 0
      %1415 = vmatpush.bf16.msra.mxu0 %v1406
      %1416 = vmatmul.bf16.gmra.mxu0 %v1382
      %v1417 = vpop.f32.mrf.mxu0
      %v1418 = vadd.f32 0.0, %v1417
      %v1419 = vpop.f32.mrf.mxu0
      %v1420 = vadd.f32 0.0, %v1419
      %1421 = vmatmul.bf16.gmra.mxu0 %v1385
      %v1422 = vpop.f32.mrf.mxu0
      %v1423 = vadd.f32 0.0, %v1422
      %v1424 = vpop.f32.mrf.mxu0
      %v1425 = vadd.f32 0.0, %v1424
      %1426 = vmatmul.bf16.gmra.mxu0 %v1388
      %v1427 = vpop.f32.mrf.mxu0
      %v1428 = vadd.f32 0.0, %v1427
      %v1429 = vpop.f32.mrf.mxu0
      %v1430 = vadd.f32 0.0, %v1429
      %1431 = vmatmul.bf16.gmra.mxu0 %v1391
      %v1432 = vpop.f32.mrf.mxu0
      %v1433 = vadd.f32 0.0, %v1432
      %v1434 = vpop.f32.mrf.mxu0
      %v1435 = vadd.f32 0.0, %v1434
      %1436 = vmatmul.bf16.gmra.mxu0 %v1394
      %v1437 = vpop.f32.mrf.mxu0
      %v1438 = vadd.f32 0.0, %v1437
      %v1439 = vpop.f32.mrf.mxu0
      %v1440 = vadd.f32 0.0, %v1439
      %1441 = vmatmul.bf16.gmra.mxu0 %v1397
      %v1442 = vpop.f32.mrf.mxu0
      %v1443 = vadd.f32 0.0, %v1442
      %v1444 = vpop.f32.mrf.mxu0
      %v1445 = vadd.f32 0.0, %v1444
      %1446 = vmatmul.bf16.gmra.mxu0 %v1400
      %v1447 = vpop.f32.mrf.mxu0
      %v1448 = vadd.f32 0.0, %v1447
      %v1449 = vpop.f32.mrf.mxu0
      %v1450 = vadd.f32 0.0, %v1449
      %1451 = vmatmul.bf16.gmra.mxu0 %v1403
      %v1452 = vpop.f32.mrf.mxu0
      %v1453 = vadd.f32 0.0, %v1452
      %v1454 = vpop.f32.mrf.mxu0
      %v1455 = vadd.f32 0.0, %v1454
      %1456 = vdwg.mxu0
      %v1457 = vadd.f32 %v1272, %v1418
      %v1458 = vadd.f32 %v1273, %v1420
      %v1459 = vadd.f32 %v1274, %v1423
      %v1460 = vadd.f32 %v1275, %v1425
      %v1461 = vadd.f32 %v1276, %v1428
      %v1462 = vadd.f32 %v1277, %v1430
      %v1463 = vadd.f32 %v1278, %v1433
      %v1464 = vadd.f32 %v1279, %v1435
      %v1465 = vadd.f32 %v1280, %v1438
      %v1466 = vadd.f32 %v1281, %v1440
      %v1467 = vadd.f32 %v1282, %v1443
      %v1468 = vadd.f32 %v1283, %v1445
      %v1469 = vadd.f32 %v1284, %v1448
      %v1470 = vadd.f32 %v1285, %v1450
      %v1471 = vadd.f32 %v1286, %v1453
      %v1472 = vadd.f32 %v1287, %v1455
      %v1474 = vrot.slane %v481, 5
      %v1475 = vrot.slane %v1474, 4
      %v1476 = vrot.slane %v482, 5
      %v1477 = vsel %vm1298, %v1475, %v1476
      %v1478 = vrot.slane %v1476, 4
      %v1479 = vrot.slane %v483, 5
      %v1480 = vsel %vm1298, %v1478, %v1479
      %s1481 = scalar_lea.vmem %s3, 20
      %v1482 = vld [vmem:[%s1481] sm:$0xf]
      %v1483 = vunpack.c.l.b16 %v1477
      %v1484 = vunpack.c.l.b16 %v1480
      %v1485 = vpack.c.b16 %v1484, %v1483
      %v1487 = vsel %vm559, %v1485, 0
      %v1490 = vsel %vm584, %v1482, 0
      %1492 = vmatpush.bf16.msra.mxu0 0
      %1493 = vmatpush.bf16.msra.mxu0 0
      %1494 = vmatpush.bf16.msra.mxu0 0
      %1495 = vmatpush.bf16.msra.mxu0 0
      %1496 = vmatpush.bf16.msra.mxu0 0
      %1497 = vmatpush.bf16.msra.mxu0 0
      %1498 = vmatpush.bf16.msra.mxu0 0
      %1499 = vmatpush.bf16.msra.mxu0 %v1490
      %1500 = vmatmul.bf16.gmra.mxu0 %v1385
      %v1501 = vpop.f32.mrf.mxu0
      %v1502 = vadd.f32 0.0, %v1501
      %v1503 = vpop.f32.mrf.mxu0
      %v1504 = vadd.f32 0.0, %v1503
      %1505 = vmatmul.bf16.gmra.mxu0 %v1388
      %v1506 = vpop.f32.mrf.mxu0
      %v1507 = vadd.f32 0.0, %v1506
      %v1508 = vpop.f32.mrf.mxu0
      %v1509 = vadd.f32 0.0, %v1508
      %1510 = vmatmul.bf16.gmra.mxu0 %v1391
      %v1511 = vpop.f32.mrf.mxu0
      %v1512 = vadd.f32 0.0, %v1511
      %v1513 = vpop.f32.mrf.mxu0
      %v1514 = vadd.f32 0.0, %v1513
      %1515 = vmatmul.bf16.gmra.mxu0 %v1394
      %v1516 = vpop.f32.mrf.mxu0
      %v1517 = vadd.f32 0.0, %v1516
      %v1518 = vpop.f32.mrf.mxu0
      %v1519 = vadd.f32 0.0, %v1518
      %1520 = vmatmul.bf16.gmra.mxu0 %v1397
      %v1521 = vpop.f32.mrf.mxu0
      %v1522 = vadd.f32 0.0, %v1521
      %v1523 = vpop.f32.mrf.mxu0
      %v1524 = vadd.f32 0.0, %v1523
      %1525 = vmatmul.bf16.gmra.mxu0 %v1400
      %v1526 = vpop.f32.mrf.mxu0
      %v1527 = vadd.f32 0.0, %v1526
      %v1528 = vpop.f32.mrf.mxu0
      %v1529 = vadd.f32 0.0, %v1528
      %1530 = vmatmul.bf16.gmra.mxu0 %v1403
      %v1531 = vpop.f32.mrf.mxu0
      %v1532 = vadd.f32 0.0, %v1531
      %v1533 = vpop.f32.mrf.mxu0
      %v1534 = vadd.f32 0.0, %v1533
      %1535 = vmatmul.bf16.gmra.mxu0 %v1487
      %v1536 = vpop.f32.mrf.mxu0
      %v1537 = vadd.f32 0.0, %v1536
      %v1538 = vpop.f32.mrf.mxu0
      %v1539 = vadd.f32 0.0, %v1538
      %1540 = vdwg.mxu0
      %v1541 = vadd.f32 %v1457, %v1502
      %v1542 = vadd.f32 %v1458, %v1504
      %v1543 = vadd.f32 %v1459, %v1507
      %v1544 = vadd.f32 %v1460, %v1509
      %v1545 = vadd.f32 %v1461, %v1512
      %v1546 = vadd.f32 %v1462, %v1514
      %v1547 = vadd.f32 %v1463, %v1517
      %v1548 = vadd.f32 %v1464, %v1519
      %v1549 = vadd.f32 %v1465, %v1522
      %v1550 = vadd.f32 %v1466, %v1524
      %v1551 = vadd.f32 %v1467, %v1527
      %v1552 = vadd.f32 %v1468, %v1529
      %v1553 = vadd.f32 %v1469, %v1532
      %v1554 = vadd.f32 %v1470, %v1534
      %v1555 = vadd.f32 %v1471, %v1537
      %v1556 = vadd.f32 %v1472, %v1539
      %v1558 = vrot.slane %v513, 5
      %v1559 = vrot.slane %v1558, 4
      %v1560 = vrot.slane %v514, 5
      %v1561 = vsel %vm1298, %v1559, %v1560
      %v1562 = vrot.slane %v1560, 4
      %v1563 = vrot.slane %v515, 5
      %v1564 = vsel %vm1298, %v1562, %v1563
      %s1565 = scalar_lea.vmem %s3, 32
      %v1566 = vld [vmem:[%s1565] sm:$0xf]
      %v1567 = vunpack.c.l.b16 %v1561
      %v1568 = vunpack.c.l.b16 %v1564
      %v1569 = vpack.c.b16 %v1568, %v1567
      %v1571 = vsel %vm559, %v1569, 0
      %v1574 = vsel %vm584, %v1566, 0
      %1576 = vmatpush.bf16.msra.mxu0 0
      %1577 = vmatpush.bf16.msra.mxu0 0
      %1578 = vmatpush.bf16.msra.mxu0 0
      %1579 = vmatpush.bf16.msra.mxu0 0
      %1580 = vmatpush.bf16.msra.mxu0 0
      %1581 = vmatpush.bf16.msra.mxu0 0
      %1582 = vmatpush.bf16.msra.mxu0 0
      %1583 = vmatpush.bf16.msra.mxu0 %v1574
      %1584 = vmatmul.bf16.gmra.mxu0 %v1388
      %v1585 = vpop.f32.mrf.mxu0
      %v1586 = vadd.f32 0.0, %v1585
      %v1587 = vpop.f32.mrf.mxu0
      %v1588 = vadd.f32 0.0, %v1587
      %1589 = vmatmul.bf16.gmra.mxu0 %v1391
      %v1590 = vpop.f32.mrf.mxu0
      %v1591 = vadd.f32 0.0, %v1590
      %v1592 = vpop.f32.mrf.mxu0
      %v1593 = vadd.f32 0.0, %v1592
      %1594 = vmatmul.bf16.gmra.mxu0 %v1394
      %v1595 = vpop.f32.mrf.mxu0
      %v1596 = vadd.f32 0.0, %v1595
      %v1597 = vpop.f32.mrf.mxu0
      %v1598 = vadd.f32 0.0, %v1597
      %1599 = vmatmul.bf16.gmra.mxu0 %v1397
      %v1600 = vpop.f32.mrf.mxu0
      %v1601 = vadd.f32 0.0, %v1600
      %v1602 = vpop.f32.mrf.mxu0
      %v1603 = vadd.f32 0.0, %v1602
      %1604 = vmatmul.bf16.gmra.mxu0 %v1400
      %v1605 = vpop.f32.mrf.mxu0
      %v1606 = vadd.f32 0.0, %v1605
      %v1607 = vpop.f32.mrf.mxu0
      %v1608 = vadd.f32 0.0, %v1607
      %1609 = vmatmul.bf16.gmra.mxu0 %v1403
      %v1610 = vpop.f32.mrf.mxu0
      %v1611 = vadd.f32 0.0, %v1610
      %v1612 = vpop.f32.mrf.mxu0
      %v1613 = vadd.f32 0.0, %v1612
      %1614 = vmatmul.bf16.gmra.mxu0 %v1487
      %v1615 = vpop.f32.mrf.mxu0
      %v1616 = vadd.f32 0.0, %v1615
      %v1617 = vpop.f32.mrf.mxu0
      %v1618 = vadd.f32 0.0, %v1617
      %1619 = vmatmul.bf16.gmra.mxu0 %v1571
      %v1620 = vpop.f32.mrf.mxu0
      %v1621 = vadd.f32 0.0, %v1620
      %v1622 = vpop.f32.mrf.mxu0
      %v1623 = vadd.f32 0.0, %v1622
      %1624 = vdwg.mxu0
      %v1625 = vadd.f32 %v1541, %v1586
      %v1626 = vadd.f32 %v1542, %v1588
      %v1627 = vadd.f32 %v1543, %v1591
      %v1628 = vadd.f32 %v1544, %v1593
      %v1629 = vadd.f32 %v1545, %v1596
      %v1630 = vadd.f32 %v1546, %v1598
      %v1631 = vadd.f32 %v1547, %v1601
      %v1632 = vadd.f32 %v1548, %v1603
      %v1633 = vadd.f32 %v1549, %v1606
      %v1634 = vadd.f32 %v1550, %v1608
      %v1635 = vadd.f32 %v1551, %v1611
      %v1636 = vadd.f32 %v1552, %v1613
      %v1637 = vadd.f32 %v1553, %v1616
      %v1638 = vadd.f32 %v1554, %v1618
      %v1639 = vadd.f32 %v1555, %v1621
      %v1640 = vadd.f32 %v1556, %v1623
      %v1641 = vld [vmem:[%s4] sm:$0x1]
      %v1643 = vperm.slane %v1641, 0
      %v1645 = vadd.f32 %v1625, %v1643
      %v1646 = vadd.f32 %v1626, %v1643
      %v1647 = vadd.f32 %v1627, %v1643
      %v1648 = vadd.f32 %v1628, %v1643
      %v1649 = vadd.f32 %v1629, %v1643
      %v1650 = vadd.f32 %v1630, %v1643
      %v1651 = vadd.f32 %v1631, %v1643
      %v1652 = vadd.f32 %v1632, %v1643
      %v1653 = vadd.f32 %v1633, %v1643
      %v1654 = vadd.f32 %v1634, %v1643
      %v1655 = vadd.f32 %v1635, %v1643
      %v1656 = vadd.f32 %v1636, %v1643
      %v1657 = vadd.f32 %v1637, %v1643
      %v1658 = vadd.f32 %v1638, %v1643
      %v1659 = vadd.f32 %v1639, %v1643
      %v1660 = vadd.f32 %v1640, %v1643
      %v1661 = vmax.f32 %v1645, 0.0
      %v1662 = vmax.f32 %v1646, 0.0
      %v1663 = vmax.f32 %v1647, 0.0
      %v1664 = vmax.f32 %v1648, 0.0
      %v1665 = vmax.f32 %v1649, 0.0
      %v1666 = vmax.f32 %v1650, 0.0
      %v1667 = vmax.f32 %v1651, 0.0
      %v1668 = vmax.f32 %v1652, 0.0
      %v1669 = vmax.f32 %v1653, 0.0
      %v1670 = vmax.f32 %v1654, 0.0
      %v1671 = vmax.f32 %v1655, 0.0
      %v1672 = vmax.f32 %v1656, 0.0
      %v1673 = vmax.f32 %v1657, 0.0
      %v1674 = vmax.f32 %v1658, 0.0
      %v1675 = vmax.f32 %v1659, 0.0
      %v1676 = vmax.f32 %v1660, 0.0
      %vm1693 = vcmask 1040384
      %v1694 = vrot.slane %v1661, 7
      %v1695 = vrot.slane %v1662, 7
      %v1696 = vsel %vm1693, %v1694, %v1695
      %v1697 = vrot.slane %v1663, 7
      %v1698 = vrot.slane %v1664, 7
      %v1699 = vsel %vm1693, %v1697, %v1698
      %v1700 = vrot.slane %v1665, 7
      %v1701 = vrot.slane %v1666, 7
      %v1702 = vsel %vm1693, %v1700, %v1701
      %v1703 = vrot.slane %v1667, 7
      %v1704 = vrot.slane %v1668, 7
      %v1705 = vsel %vm1693, %v1703, %v1704
      %v1706 = vrot.slane %v1669, 7
      %v1707 = vrot.slane %v1670, 7
      %v1708 = vsel %vm1693, %v1706, %v1707
      %v1709 = vrot.slane %v1671, 7
      %v1710 = vrot.slane %v1672, 7
      %v1711 = vsel %vm1693, %v1709, %v1710
      %v1712 = vrot.slane %v1673, 7
      %v1713 = vrot.slane %v1674, 7
      %v1714 = vsel %vm1693, %v1712, %v1713
      %v1715 = vrot.slane %v1675, 7
      %v1716 = vrot.slane %v1676, 7
      %v1717 = vsel %vm1693, %v1715, %v1716
      %v1742 = vsel %vm1693, 0.0, %v1694
      %v1743 = vsel %vm1693, 0.0, %v1697
      %v1744 = vsel %vm1693, 0.0, %v1700
      %v1745 = vsel %vm1693, 0.0, %v1703
      %v1746 = vsel %vm1693, 0.0, %v1706
      %v1747 = vsel %vm1693, 0.0, %v1709
      %v1748 = vsel %vm1693, 0.0, %v1712
      %v1749 = vsel %vm1693, 0.0, %v1715
      %v1750 = vsel %vm1693, %v1695, 0.0
      %v1751 = vsel %vm1693, %v1698, 0.0
      %v1752 = vsel %vm1693, %v1701, 0.0
      %v1753 = vsel %vm1693, %v1704, 0.0
      %v1754 = vsel %vm1693, %v1707, 0.0
      %v1755 = vsel %vm1693, %v1710, 0.0
      %v1756 = vsel %vm1693, %v1713, 0.0
      %v1757 = vsel %vm1693, %v1716, 0.0
      %v1758 = vld [vmem:[%s446] sm:$0xf]
      %v1759 = vld [vmem:[%s446 + $0x4] sm:$0xf]
      %v1760 = vld [vmem:[%s446 + $0x8] sm:$0x1]
      %v1761 = vld [vmem:[%s446 + $0xc] sm:$0xf]
      %v1762 = vld [vmem:[%s446 + $0x10] sm:$0xf]
      %v1763 = vld [vmem:[%s446 + $0x14] sm:$0x1]
      %v1764 = vld [vmem:[%s446 + $0x18] sm:$0xf]
      %v1765 = vld [vmem:[%s446 + $0x1c] sm:$0xf]
      %v1766 = vld [vmem:[%s446 + $0x20] sm:$0x1]
      %v1767 = vld [vmem:[%s446 + $0x24] sm:$0xf]
      %v1768 = vld [vmem:[%s446 + $0x28] sm:$0xf]
      %v1769 = vld [vmem:[%s446 + $0x2c] sm:$0x1]
      %v1770 = vld [vmem:[%s446 + $0x30] sm:$0xf]
      %v1771 = vld [vmem:[%s446 + $0x34] sm:$0xf]
      %v1772 = vld [vmem:[%s446 + $0x38] sm:$0x1]
      %v1773 = vld [vmem:[%s446 + $0x3c] sm:$0xf]
      %v1774 = vld [vmem:[%s446 + $0x40] sm:$0xf]
      %v1775 = vld [vmem:[%s446 + $0x44] sm:$0x1]
      %v1776 = vld [vmem:[%s446 + $0x48] sm:$0xf]
      %v1777 = vld [vmem:[%s446 + $0x4c] sm:$0xf]
      %v1778 = vld [vmem:[%s446 + $0x50] sm:$0x1]
      %v1779 = vld [vmem:[%s446 + $0x54] sm:$0xf]
      %v1780 = vld [vmem:[%s446 + $0x58] sm:$0xf]
      %v1781 = vld [vmem:[%s446 + $0x5c] sm:$0x1]
      %v1782 = vunpack.c.l.bf16 %v1758
      %v1783 = vunpack.c.l.bf16 %v1759
      %v1784 = vunpack.c.l.bf16 %v1760
      %v1785 = vunpack.c.l.bf16 %v1761
      %v1786 = vunpack.c.l.bf16 %v1762
      %v1787 = vunpack.c.l.bf16 %v1763
      %v1788 = vunpack.c.l.bf16 %v1764
      %v1789 = vunpack.c.l.bf16 %v1765
      %v1790 = vunpack.c.l.bf16 %v1766
      %v1791 = vunpack.c.l.bf16 %v1767
      %v1792 = vunpack.c.l.bf16 %v1768
      %v1793 = vunpack.c.l.bf16 %v1769
      %v1794 = vunpack.c.l.bf16 %v1770
      %v1795 = vunpack.c.l.bf16 %v1771
      %v1796 = vunpack.c.l.bf16 %v1772
      %v1797 = vunpack.c.l.bf16 %v1773
      %v1798 = vunpack.c.l.bf16 %v1774
      %v1799 = vunpack.c.l.bf16 %v1775
      %v1800 = vunpack.c.l.bf16 %v1776
      %v1801 = vunpack.c.l.bf16 %v1777
      %v1802 = vunpack.c.l.bf16 %v1778
      %v1803 = vunpack.c.l.bf16 %v1779
      %v1804 = vunpack.c.l.bf16 %v1780
      %v1805 = vunpack.c.l.bf16 %v1781
      %v1806 = vadd.f32 %v1742, %v1782
      %v1807 = vadd.f32 %v1696, %v1783
      %v1808 = vadd.f32 %v1750, %v1784
      %v1809 = vadd.f32 %v1743, %v1785
      %v1810 = vadd.f32 %v1699, %v1786
      %v1811 = vadd.f32 %v1751, %v1787
      %v1812 = vadd.f32 %v1744, %v1788
      %v1813 = vadd.f32 %v1702, %v1789
      %v1814 = vadd.f32 %v1752, %v1790
      %v1815 = vadd.f32 %v1745, %v1791
      %v1816 = vadd.f32 %v1705, %v1792
      %v1817 = vadd.f32 %v1753, %v1793
      %v1818 = vadd.f32 %v1746, %v1794
      %v1819 = vadd.f32 %v1708, %v1795
      %v1820 = vadd.f32 %v1754, %v1796
      %v1821 = vadd.f32 %v1747, %v1797
      %v1822 = vadd.f32 %v1711, %v1798
      %v1823 = vadd.f32 %v1755, %v1799
      %v1824 = vadd.f32 %v1748, %v1800
      %v1825 = vadd.f32 %v1714, %v1801
      %v1826 = vadd.f32 %v1756, %v1802
      %v1827 = vadd.f32 %v1749, %v1803
      %v1828 = vadd.f32 %v1717, %v1804
      %v1829 = vadd.f32 %v1757, %v1805
      %v1830 = vmax.f32 %v1806, 0.0
      %v1831 = vmax.f32 %v1807, 0.0
      %v1832 = vmax.f32 %v1808, 0.0
      %v1833 = vmax.f32 %v1809, 0.0
      %v1834 = vmax.f32 %v1810, 0.0
      %v1835 = vmax.f32 %v1811, 0.0
      %v1836 = vmax.f32 %v1812, 0.0
      %v1837 = vmax.f32 %v1813, 0.0
      %v1838 = vmax.f32 %v1814, 0.0
      %v1839 = vmax.f32 %v1815, 0.0
      %v1840 = vmax.f32 %v1816, 0.0
      %v1841 = vmax.f32 %v1817, 0.0
      %v1842 = vmax.f32 %v1818, 0.0
      %v1843 = vmax.f32 %v1819, 0.0
      %v1844 = vmax.f32 %v1820, 0.0
      %v1845 = vmax.f32 %v1821, 0.0
      %v1846 = vmax.f32 %v1822, 0.0
      %v1847 = vmax.f32 %v1823, 0.0
      %v1848 = vmax.f32 %v1824, 0.0
      %v1849 = vmax.f32 %v1825, 0.0
      %v1850 = vmax.f32 %v1826, 0.0
      %v1851 = vmax.f32 %v1827, 0.0
      %v1852 = vmax.f32 %v1828, 0.0
      %v1853 = vmax.f32 %v1829, 0.0
      %v1854 = vpack.c.bf16 %v1830, %v1830
      %v1855 = vpack.c.bf16 %v1831, %v1831
      %v1856 = vpack.c.bf16 %v1832, %v1832
      %v1857 = vpack.c.bf16 %v1833, %v1833
      %v1858 = vpack.c.bf16 %v1834, %v1834
      %v1859 = vpack.c.bf16 %v1835, %v1835
      %v1860 = vpack.c.bf16 %v1836, %v1836
      %v1861 = vpack.c.bf16 %v1837, %v1837
      %v1862 = vpack.c.bf16 %v1838, %v1838
      %v1863 = vpack.c.bf16 %v1839, %v1839
      %v1864 = vpack.c.bf16 %v1840, %v1840
      %v1865 = vpack.c.bf16 %v1841, %v1841
      %v1866 = vpack.c.bf16 %v1842, %v1842
      %v1867 = vpack.c.bf16 %v1843, %v1843
      %v1868 = vpack.c.bf16 %v1844, %v1844
      %v1869 = vpack.c.bf16 %v1845, %v1845
      %v1870 = vpack.c.bf16 %v1846, %v1846
      %v1871 = vpack.c.bf16 %v1847, %v1847
      %v1872 = vpack.c.bf16 %v1848, %v1848
      %v1873 = vpack.c.bf16 %v1849, %v1849
      %v1874 = vpack.c.bf16 %v1850, %v1850
      %v1875 = vpack.c.bf16 %v1851, %v1851
      %v1876 = vpack.c.bf16 %v1852, %v1852
      %v1877 = vpack.c.bf16 %v1853, %v1853
      %vm1878 = vcmask 60416
      %1879 = vst.msk [vmem:[%s457] sm:$0xf] %vm1878, %v1854
      %1880 = vst.msk [vmem:[%s457 + $0x4] sm:$0xf] %vm1878, %v1855
      %vm1881 = vcmask 57344
      %1882 = vst.msk [vmem:[%s457 + $0x8] sm:$0x1] %vm1881, %v1856
      %1883 = vst.msk [vmem:[%s457 + $0xc] sm:$0xf] %vm1878, %v1857
      %1884 = vst.msk [vmem:[%s457 + $0x10] sm:$0xf] %vm1878, %v1858
      %1885 = vst.msk [vmem:[%s457 + $0x14] sm:$0x1] %vm1881, %v1859
      %1886 = vst.msk [vmem:[%s457 + $0x18] sm:$0xf] %vm1878, %v1860
      %1887 = vst.msk [vmem:[%s457 + $0x1c] sm:$0xf] %vm1878, %v1861
      %1888 = vst.msk [vmem:[%s457 + $0x20] sm:$0x1] %vm1881, %v1862
      %1889 = vst.msk [vmem:[%s457 + $0x24] sm:$0xf] %vm1878, %v1863
      %1890 = vst.msk [vmem:[%s457 + $0x28] sm:$0xf] %vm1878, %v1864
      %1891 = vst.msk [vmem:[%s457 + $0x2c] sm:$0x1] %vm1881, %v1865
      %1892 = vst.msk [vmem:[%s457 + $0x30] sm:$0xf] %vm1878, %v1866
      %1893 = vst.msk [vmem:[%s457 + $0x34] sm:$0xf] %vm1878, %v1867
      %1894 = vst.msk [vmem:[%s457 + $0x38] sm:$0x1] %vm1881, %v1868
      %1895 = vst.msk [vmem:[%s457 + $0x3c] sm:$0xf] %vm1878, %v1869
      %1896 = vst.msk [vmem:[%s457 + $0x40] sm:$0xf] %vm1878, %v1870
      %1897 = vst.msk [vmem:[%s457 + $0x44] sm:$0x1] %vm1881, %v1871
      %1898 = vst.msk [vmem:[%s457 + $0x48] sm:$0xf] %vm1878, %v1872
      %1899 = vst.msk [vmem:[%s457 + $0x4c] sm:$0xf] %vm1878, %v1873
      %1900 = vst.msk [vmem:[%s457 + $0x50] sm:$0x1] %vm1881, %v1874
      %1901 = vst.msk [vmem:[%s457 + $0x54] sm:$0xf] %vm1878, %v1875
      %1902 = vst.msk [vmem:[%s457 + $0x58] sm:$0xf] %vm1878, %v1876
      %1903 = vst.msk [vmem:[%s457 + $0x5c] sm:$0x1] %vm1881, %v1877
      %s1904 = smul.u32 8, %s22
      %p1905 = scmp.lt.s32.totalorder %s21, 1
      %s1906 = scalar_select %p1905, %s21, 1
      %p1907 = scmp.lt.s32.totalorder %s1904, 15
      %s1908 = scalar_select %p1907, %s1904, 15
      %s1909 = smul.addr %s1908, 3
      %s1910 = smul.addr %s1906, 48
      %s1911 = sadd.s32 %s1909, %s1910
      %s1912 = smul.addr %s1911, 4
      %s1913 = scalar_lea.vmem %s6, %s1912
      // Predicated region
      $region45: #{rednet_forward.16} parent=43 // pred_check
        %p1914 = pneg %p219
      $region46: #{rednet_forward.16} parent=43 // pred_check_branch
        %1916 = sbr.rel (%p1914) target = $region48
      $region47: #{rednet_forward.16} parent=43 // pred_region
        %s1917 = smul.u32 8, %s22
      $region48: #{rednet_forward.16} parent=43 // pred_fallthru
        _
    $region44: #{rednet_forward.16} parent=5 // pred_fallthru
      _
    %p1918 = scmp.le.s32.totalorder 2, %s12
    // Predicated region
    $region49: #{rednet_forward.16} parent=5 // pred_check
      %p1919 = pneg %p1918
    $region50: #{rednet_forward.16} parent=5 // pred_check_branch
      %1921 = sbr.rel (%p1919) target = $region52
    $region51: #{rednet_forward.16} parent=5 // pred_region
      %s1922 = ssub.s32 %s12, 2
      // Predicated region
      $region53: #{rednet_forward.16} parent=51 // pred_check
        %p1923 = pneg %p225
      $region54: #{rednet_forward.16} parent=51 // pred_check_branch
        %1925 = sbr.rel (%p1923) target = $region56
      $region55: #{rednet_forward.16} parent=51 // pred_region
        %s1926 = smul.u32 8, %s24
        %p1927 = scmp.lt.s32.totalorder %s23, 1
        %s1928 = scalar_select %p1927, %s23, 1
        %p1929 = scmp.lt.s32.totalorder %s1926, 15
        %s1930 = scalar_select %p1929, %s1926, 15
        %s1931 = smul.addr %s1930, 3
        %s1932 = smul.addr %s1928, 48
        %s1933 = sadd.s32 %s1931, %s1932
        %s1934 = smul.addr %s1933, 4
        %s1935 = scalar_lea.vmem %s6, %s1934
      $region56: #{rednet_forward.16} parent=51 // pred_fallthru
        _
    $region52: #{rednet_forward.16} parent=5 // pred_fallthru
      _
  $region6: #{rednet_forward.16} parent=0 // loop_footer
    %s16 = sadd.s32 1, %s12
  $region7: #{rednet_forward.16} parent=0 // loop_footer_branch
    %11 = sbr.rel target = $region3
  $region8: #{rednet_forward.16} parent=0 // loop_exit
    _

// kernel: rednet_forward.19
$region0: #{rednet_forward.19}
  #allocation0 [shape = 'u32[]', space=smem, size = 0x4, offset = 0x4, fixed_abs, tag = 'smem constant byte address 0x4 - core index']
  #allocation1 [shape = 'u32[72,128]{1,0:T(1,128)}', space=vmem, size = 0x9000, scoped, tag = 'internal scratch']
  %s0 = inlined_call_operand.vmem [shape: bf16[2,16,18,8], index: 0, kind: input, shape index: {}, may-alias: {0,1,2}]
  %s1 = inlined_call_operand.vmem [shape: bf16[2,16,18,8], index: 1, kind: input, shape index: {}, may-alias: {0,1,2}]
  %s2 = inlined_call_operand.vmem [shape: bf16[2,16,18,8], index: 2, kind: input, shape index: {}, may-alias: {0,1,2}]
  %s3 = inlined_call_operand.vmem [shape: bf16[9,8,3], index: 3, kind: input, shape index: {}]
  %s4 = inlined_call_operand.vmem [shape: f32[1,3], index: 4, kind: input, shape index: {}]
  %s5 = inlined_call_operand.vmem [shape: f32[2,16,18,3], index: 5, kind: input, shape index: {}]
  %s6 = inlined_call_operand.vmem [shape: f32[2,16,18,3], index: 6, kind: output, shape index: {}]
  %s7 = sld [smem:[#allocation0]]
  $region57: #{rednet_forward.19} parent=0
    _
  %s9 = ssub.s32 1, %s7
  %s10 = scalar_select 0, %s9, %s7
  loop: start=0, step=1, limit=6
  $region2: #{rednet_forward.19} parent=0 // loop_pre_header
    _
  $region3: #{rednet_forward.19} parent=0 // loop_header
    %s12 = sphi 0, %s16
    %p13 = scmp.ge.s32.totalorder %s12, 6
    %s19 = sphi 0, %s31
    %s20 = sphi 0, %s27
    %s21 = sphi 0, %s19
    %s22 = sphi 0, %s20
    %s23 = sphi 0, %s21
    %s24 = sphi 0, %s22
    %s36 = sphi 0, %s38
    %s39 = sphi 0, %s36
    %s40 = sphi 0, %s39
    %s56 = sphi 0, %s40
    %s72 = sphi 0, %s74
    %s75 = sphi 0, %s72
    %s76 = sphi 0, %s75
    %s92 = sphi 0, %s76
    %s108 = sphi 0, %s110
    %s111 = sphi 0, %s108
    %s112 = sphi 0, %s111
    %s128 = sphi 0, %s112
    %s132 = sphi 0, %s132
    %s134 = sphi 0, %s132
    %s135 = sphi 0, %s134
    %s149 = sphi 0, %s135
    %s153 = sphi 0, %s153
    %s155 = sphi 0, %s153
    %s156 = sphi 0, %s155
    %s170 = sphi 0, %s156
    %s178 = sphi 0, %s180
    %s181 = sphi 0, %s178
    %s182 = sphi 0, %s181
    %s198 = sphi 0, %s182
    %s206 = sphi 0, %s208
    %s209 = sphi 0, %s206
    %s210 = sphi 0, %s209
    %s226 = sphi 0, %s210
  $region4: #{rednet_forward.19} parent=0 // loop_header_branch
    %15 = sbr.rel (%p13) target = $region8
  $region5: #{rednet_forward.19} parent=0 // loop_body
    %s17 = ssub.s32 %s12, 1
    %s18 = ssub.s32 %s12, 2
    %s25 = sadd.s32 1, %s20
    %p26 = scmp.ge.s32.totalorder %s25, 2
    %s27 = scalar_select %p26, 0, %s25
    %s28 = sadd.s32 1, %s19
    %s29 = scalar_select %p26, %s28, %s19
    %p30 = scmp.ge.s32.totalorder %s29, 2
    %s31 = scalar_select %p30, 0, %s29
    %s32 = ssub.s32 %s19, %s31
    %s33 = ssub.s32 %s20, %s27
    %s34 = sor.u32 %s32, %s33
    %p35 = scmp.eq.s32.totalorder %s34, 0
    %s37 = sadd.s32 %s36, 1
    %s38 = scalar_select %p35, %s36, %s37
    %p41 = pneg %p35
    %p42 = scmp.eq.s32.totalorder %s12, 3
    %p43 = por %p41, %p42
    %p44 = scmp.ne.s32.totalorder %s36, %s39
    %p45 = scmp.eq.s32.totalorder %s12, 0
    %p46 = por %p44, %p45
    %p47 = scmp.ne.s32.totalorder %s36, %s39
    %p48 = scmp.eq.s32.totalorder %s17, 3
    %p49 = por %p47, %p48
    %p50 = scmp.ne.s32.totalorder %s39, %s40
    %p51 = scmp.eq.s32.totalorder %s17, 0
    %p52 = por %p50, %p51
    %p53 = scmp.ne.s32.totalorder %s39, %s40
    %p54 = scmp.eq.s32.totalorder %s18, 3
    %p55 = por %p53, %p54
    %p57 = scmp.ne.s32.totalorder %s40, %s56
    %p58 = scmp.eq.s32.totalorder %s18, 0
    %p59 = por %p57, %p58
    %s60 = smul.u32 %s20, 8
    %s61 = ssub.s32 %s60, 1
    %p62 = scmp.gt.s32.totalorder %s61, 0
    %s63 = scalar_select %p62, %s61, 0
    %s64 = smul.u32 %s27, 8
    %s65 = ssub.s32 %s64, 1
    %p66 = scmp.gt.s32.totalorder %s65, 0
    %s67 = scalar_select %p66, %s65, 0
    %s68 = ssub.s32 %s19, %s31
    %s69 = ssub.s32 %s63, %s67
    %s70 = sor.u32 %s68, %s69
    %p71 = scmp.eq.s32.totalorder %s70, 0
    %s73 = sadd.s32 %s72, 1
    %s74 = scalar_select %p71, %s72, %s73
    %p77 = pneg %p71
    %p78 = scmp.eq.s32.totalorder %s12, 3
    %p79 = por %p77, %p78
    %p80 = scmp.ne.s32.totalorder %s72, %s75
    %p81 = scmp.eq.s32.totalorder %s12, 0
    %p82 = por %p80, %p81
    %p83 = scmp.ne.s32.totalorder %s72, %s75
    %p84 = scmp.eq.s32.totalorder %s17, 3
    %p85 = por %p83, %p84
    %p86 = scmp.ne.s32.totalorder %s75, %s76
    %p87 = scmp.eq.s32.totalorder %s17, 0
    %p88 = por %p86, %p87
    %p89 = scmp.ne.s32.totalorder %s75, %s76
    %p90 = scmp.eq.s32.totalorder %s18, 3
    %p91 = por %p89, %p90
    %p93 = scmp.ne.s32.totalorder %s76, %s92
    %p94 = scmp.eq.s32.totalorder %s18, 0
    %p95 = por %p93, %p94
    %s96 = sadd.s32 %s20, 1
    %s97 = smul.u32 %s96, 8
    %p98 = scmp.lt.s32.totalorder %s97, 15
    %s99 = scalar_select %p98, %s97, 15
    %s100 = sadd.s32 %s27, 1
    %s101 = smul.u32 %s100, 8
    %p102 = scmp.lt.s32.totalorder %s101, 15
    %s103 = scalar_select %p102, %s101, 15
    %s104 = ssub.s32 %s19, %s31
    %s105 = ssub.s32 %s99, %s103
    %s106 = sor.u32 %s104, %s105
    %p107 = scmp.eq.s32.totalorder %s106, 0
    %s109 = sadd.s32 %s108, 1
    %s110 = scalar_select %p107, %s108, %s109
    %p113 = pneg %p107
    %p114 = scmp.eq.s32.totalorder %s12, 3
    %p115 = por %p113, %p114
    %p116 = scmp.ne.s32.totalorder %s108, %s111
    %p117 = scmp.eq.s32.totalorder %s12, 0
    %p118 = por %p116, %p117
    %p119 = scmp.ne.s32.totalorder %s108, %s111
    %p120 = scmp.eq.s32.totalorder %s17, 3
    %p121 = por %p119, %p120
    %p122 = scmp.ne.s32.totalorder %s111, %s112
    %p123 = scmp.eq.s32.totalorder %s17, 0
    %p124 = por %p122, %p123
    %p125 = scmp.ne.s32.totalorder %s111, %s112
    %p126 = scmp.eq.s32.totalorder %s18, 3
    %p127 = por %p125, %p126
    %p129 = scmp.ne.s32.totalorder %s112, %s128
    %p130 = scmp.eq.s32.totalorder %s18, 0
    %p131 = por %p129, %p130
    %s133 = sadd.s32 %s132, 1
    %p136 = scmp.eq.s32.totalorder %s12, 3
    %p137 = scmp.ne.s32.totalorder %s132, %s134
    %p138 = scmp.eq.s32.totalorder %s12, 0
    %p139 = por %p137, %p138
    %p140 = scmp.ne.s32.totalorder %s132, %s134
    %p141 = scmp.eq.s32.totalorder %s17, 3
    %p142 = por %p140, %p141
    %p143 = scmp.ne.s32.totalorder %s134, %s135
    %p144 = scmp.eq.s32.totalorder %s17, 0
    %p145 = por %p143, %p144
    %p146 = scmp.ne.s32.totalorder %s134, %s135
    %p147 = scmp.eq.s32.totalorder %s18, 3
    %p148 = por %p146, %p147
    %p150 = scmp.ne.s32.totalorder %s135, %s149
    %p151 = scmp.eq.s32.totalorder %s18, 0
    %p152 = por %p150, %p151
    %s154 = sadd.s32 %s153, 1
    %p157 = scmp.eq.s32.totalorder %s12, 3
    %p158 = scmp.ne.s32.totalorder %s153, %s155
    %p159 = scmp.eq.s32.totalorder %s12, 0
    %p160 = por %p158, %p159
    %p161 = scmp.ne.s32.totalorder %s153, %s155
    %p162 = scmp.eq.s32.totalorder %s17, 3
    %p163 = por %p161, %p162
    %p164 = scmp.ne.s32.totalorder %s155, %s156
    %p165 = scmp.eq.s32.totalorder %s17, 0
    %p166 = por %p164, %p165
    %p167 = scmp.ne.s32.totalorder %s155, %s156
    %p168 = scmp.eq.s32.totalorder %s18, 3
    %p169 = por %p167, %p168
    %p171 = scmp.ne.s32.totalorder %s156, %s170
    %p172 = scmp.eq.s32.totalorder %s18, 0
    %p173 = por %p171, %p172
    %s174 = ssub.s32 %s19, %s31
    %s175 = ssub.s32 %s20, %s27
    %s176 = sor.u32 %s174, %s175
    %p177 = scmp.eq.s32.totalorder %s176, 0
    %s179 = sadd.s32 %s178, 1
    %s180 = scalar_select %p177, %s178, %s179
    %p183 = pneg %p177
    %p184 = scmp.eq.s32.totalorder %s12, 3
    %p185 = por %p183, %p184
    %p186 = scmp.ne.s32.totalorder %s178, %s181
    %p187 = scmp.eq.s32.totalorder %s12, 0
    %p188 = por %p186, %p187
    %p189 = scmp.ne.s32.totalorder %s178, %s181
    %p190 = scmp.eq.s32.totalorder %s17, 3
    %p191 = por %p189, %p190
    %p192 = scmp.ne.s32.totalorder %s181, %s182
    %p193 = scmp.eq.s32.totalorder %s17, 0
    %p194 = por %p192, %p193
    %p195 = scmp.ne.s32.totalorder %s181, %s182
    %p196 = scmp.eq.s32.totalorder %s18, 3
    %p197 = por %p195, %p196
    %p199 = scmp.ne.s32.totalorder %s182, %s198
    %p200 = scmp.eq.s32.totalorder %s18, 0
    %p201 = por %p199, %p200
    %s202 = ssub.s32 %s19, %s31
    %s203 = ssub.s32 %s20, %s27
    %s204 = sor.u32 %s202, %s203
    %p205 = scmp.eq.s32.totalorder %s204, 0
    %s207 = sadd.s32 %s206, 1
    %s208 = scalar_select %p205, %s206, %s207
    %p211 = pneg %p205
    %p212 = scmp.eq.s32.totalorder %s12, 3
    %p213 = por %p211, %p212
    %p214 = scmp.ne.s32.totalorder %s206, %s209
    %p215 = scmp.eq.s32.totalorder %s12, 0
    %p216 = por %p214, %p215
    %p217 = scmp.ne.s32.totalorder %s206, %s209
    %p218 = scmp.eq.s32.totalorder %s17, 3
    %p219 = por %p217, %p218
    %p220 = scmp.ne.s32.totalorder %s209, %s210
    %p221 = scmp.eq.s32.totalorder %s17, 0
    %p222 = por %p220, %p221
    %p223 = scmp.ne.s32.totalorder %s209, %s210
    %p224 = scmp.eq.s32.totalorder %s18, 3
    %p225 = por %p223, %p224
    %p227 = scmp.ne.s32.totalorder %s210, %s226
    %p228 = scmp.eq.s32.totalorder %s18, 0
    %p229 = por %p227, %p228
    %p230 = scmp.le.s32.totalorder 1, %s12
    %p231 = scmp.lt.s32.totalorder %s12, 5
    %p232 = pnand %p230, %p231
    %p233 = pneg %p232
    // Predicated region
    $region9: #{rednet_forward.19} parent=5 // pred_check
      _
    $region10: #{rednet_forward.19} parent=5 // pred_check_branch
      %235 = sbr.rel (%p232) target = $region12
    $region11: #{rednet_forward.19} parent=5 // pred_region
      %s236 = ssub.s32 %s12, 1
      // Predicated region
      $region13: #{rednet_forward.19} parent=11 // pred_check
        %p237 = pneg %p145
      $region14: #{rednet_forward.19} parent=11 // pred_check_branch
        %239 = sbr.rel (%p237) target = $region16
      $region15: #{rednet_forward.19} parent=11 // pred_region
        _
      $region16: #{rednet_forward.19} parent=11 // pred_fallthru
        _
      // Predicated region
      $region17: #{rednet_forward.19} parent=11 // pred_check
        %p240 = pneg %p166
      $region18: #{rednet_forward.19} parent=11 // pred_check_branch
        %242 = sbr.rel (%p240) target = $region20
      $region19: #{rednet_forward.19} parent=11 // pred_region
        _
      $region20: #{rednet_forward.19} parent=11 // pred_fallthru
        _
    $region12: #{rednet_forward.19} parent=5 // pred_fallthru
      _
    %p243 = scmp.lt.s32.totalorder %s12, 4
    // Predicated region
    $region21: #{rednet_forward.19} parent=5 // pred_check
      %p244 = pneg %p243
    $region22: #{rednet_forward.19} parent=5 // pred_check_branch
      %246 = sbr.rel (%p244) target = $region24
    $region23: #{rednet_forward.19} parent=5 // pred_region
      // Predicated region
      $region25: #{rednet_forward.19} parent=23 // pred_check
        %p247 = pneg %p46
      $region26: #{rednet_forward.19} parent=23 // pred_check_branch
        %249 = sbr.rel (%p247) target = $region28
      $region27: #{rednet_forward.19} parent=23 // pred_region
        %s250 = smul.u32 8, %s20
        %p251 = scmp.lt.s32.totalorder %s19, 1
        %s252 = scalar_select %p251, %s19, 1
        %p253 = scmp.lt.s32.totalorder %s250, 15
        %s254 = scalar_select %p253, %s250, 15
        %s255 = smul.addr %s254, 3
        %s256 = smul.addr %s252, 48
        %s257 = sadd.s32 %s255, %s256
        %s258 = smul.addr %s257, 4
        %s259 = scalar_lea.vmem %s0, %s258
        %s260 = smul.u32 8, %s20
      $region28: #{rednet_forward.19} parent=23 // pred_fallthru
        _
      // Predicated region
      $region29: #{rednet_forward.19} parent=23 // pred_check
        %p261 = pneg %p82
      $region30: #{rednet_forward.19} parent=23 // pred_check_branch
        %263 = sbr.rel (%p261) target = $region32
      $region31: #{rednet_forward.19} parent=23 // pred_region
        %s264 = smul.u32 %s20, 8
        %s265 = ssub.s32 %s264, 1
        %p266 = scmp.gt.s32.totalorder %s265, 0
        %s267 = scalar_select %p266, %s265, 0
        %p268 = scmp.lt.s32.totalorder %s19, 1
        %s269 = scalar_select %p268, %s19, 1
        %p270 = scmp.lt.s32.totalorder %s267, 15
        %s271 = scalar_select %p270, %s267, 15
        %s272 = smul.addr %s271, 3
        %s273 = smul.addr %s269, 48
        %s274 = sadd.s32 %s272, %s273
        %s275 = smul.addr %s274, 4
        %s276 = scalar_lea.vmem %s1, %s275
        %s277 = smul.u32 %s20, 8
        %s278 = ssub.s32 %s277, 1
        %p279 = scmp.gt.s32.totalorder %s278, 0
        %s280 = scalar_select %p279, %s278, 0
      $region32: #{rednet_forward.19} parent=23 // pred_fallthru
        _
      // Predicated region
      $region33: #{rednet_forward.19} parent=23 // pred_check
        %p281 = pneg %p118
      $region34: #{rednet_forward.19} parent=23 // pred_check_branch
        %283 = sbr.rel (%p281) target = $region36
      $region35: #{rednet_forward.19} parent=23 // pred_region
        %s284 = sadd.s32 %s20, 1
        %s285 = smul.u32 %s284, 8
        %p286 = scmp.lt.s32.totalorder %s285, 15
        %s287 = scalar_select %p286, %s285, 15
        %p288 = scmp.lt.s32.totalorder %s19, 1
        %s289 = scalar_select %p288, %s19, 1
        %p290 = scmp.lt.s32.totalorder %s287, 15
        %s291 = scalar_select %p290, %s287, 15
        %s292 = smul.addr %s291, 3
        %s293 = smul.addr %s289, 48
        %s294 = sadd.s32 %s292, %s293
        %s295 = smul.addr %s294, 4
        %s296 = scalar_lea.vmem %s2, %s295
        %s297 = sadd.s32 %s20, 1
        %s298 = smul.u32 %s297, 8
        %p299 = scmp.lt.s32.totalorder %s298, 15
        %s300 = scalar_select %p299, %s298, 15
      $region36: #{rednet_forward.19} parent=23 // pred_fallthru
        _
      // Predicated region
      $region37: #{rednet_forward.19} parent=23 // pred_check
        %p301 = pneg %p188
      $region38: #{rednet_forward.19} parent=23 // pred_check_branch
        %303 = sbr.rel (%p301) target = $region40
      $region39: #{rednet_forward.19} parent=23 // pred_region
        %s304 = smul.u32 8, %s20
        %p305 = scmp.lt.s32.totalorder %s19, 1
        %s306 = scalar_select %p305, %s19, 1
        %p307 = scmp.lt.s32.totalorder %s304, 15
        %s308 = scalar_select %p307, %s304, 15
        %s309 = smul.addr %s308, 3
        %s310 = smul.addr %s306, 48
        %s311 = sadd.s32 %s309, %s310
        %s312 = smul.addr %s311, 8
        %s313 = scalar_lea.vmem %s5, %s312
        %s314 = smul.u32 8, %s20
      $region40: #{rednet_forward.19} parent=23 // pred_fallthru
        _
    $region24: #{rednet_forward.19} parent=5 // pred_fallthru
      _
    %p315 = scmp.le.s32.totalorder 1, %s12
    %p316 = scmp.lt.s32.totalorder %s12, 5
    %p317 = pnand %p315, %p316
    %p318 = pneg %p317
    // Predicated region
    $region41: #{rednet_forward.19} parent=5 // pred_check
      _
    $region42: #{rednet_forward.19} parent=5 // pred_check_branch
      %320 = sbr.rel (%p317) target = $region44
    $region43: #{rednet_forward.19} parent=5 // pred_region
      %s321 = ssub.s32 %s12, 1
      %s322 = smul.u32 8, %s22
      %p323 = scmp.lt.s32.totalorder %s21, 1
      %s324 = scalar_select %p323, %s21, 1
      %p325 = scmp.lt.s32.totalorder %s322, 15
      %s326 = scalar_select %p325, %s322, 15
      %s327 = smul.addr %s326, 3
      %s328 = smul.addr %s324, 48
      %s329 = sadd.s32 %s327, %s328
      %s330 = smul.addr %s329, 4
      %s331 = scalar_lea.vmem %s0, %s330
      %p332 = pneg %p52
      %p333 = pneg %p49
      %s334 = smul.u32 %s22, 8
      %s335 = ssub.s32 %s334, 1
      %p336 = scmp.gt.s32.totalorder %s335, 0
      %s337 = scalar_select %p336, %s335, 0
      %p338 = scmp.lt.s32.totalorder %s21, 1
      %s339 = scalar_select %p338, %s21, 1
      %p340 = scmp.lt.s32.totalorder %s337, 15
      %s341 = scalar_select %p340, %s337, 15
      %s342 = smul.addr %s341, 3
      %s343 = smul.addr %s339, 48
      %s344 = sadd.s32 %s342, %s343
      %s345 = smul.addr %s344, 4
      %s346 = scalar_lea.vmem %s1, %s345
      %p347 = pneg %p88
      %p348 = pneg %p85
      %s349 = sadd.s32 %s22, 1
      %s350 = smul.u32 %s349, 8
      %p351 = scmp.lt.s32.totalorder %s350, 15
      %s352 = scalar_select %p351, %s350, 15
      %p353 = scmp.lt.s32.totalorder %s21, 1
      %s354 = scalar_select %p353, %s21, 1
      %p355 = scmp.lt.s32.totalorder %s352, 15
      %s356 = scalar_select %p355, %s352, 15
      %s357 = smul.addr %s356, 3
      %s358 = smul.addr %s354, 48
      %s359 = sadd.s32 %s357, %s358
      %s360 = smul.addr %s359, 4
      %s361 = scalar_lea.vmem %s2, %s360
      %p362 = pneg %p124
      %p363 = pneg %p121
      %p364 = pneg %p145
      %p365 = pneg %p142
      %p366 = pneg %p166
      %p367 = pneg %p163
      %s368 = smul.u32 8, %s22
      %p369 = scmp.lt.s32.totalorder %s21, 1
      %s370 = scalar_select %p369, %s21, 1
      %p371 = scmp.lt.s32.totalorder %s368, 15
      %s372 = scalar_select %p371, %s368, 15
      %s373 = smul.addr %s372, 3
      %s374 = smul.addr %s370, 48
      %s375 = sadd.s32 %s373, %s374
      %s376 = smul.addr %s375, 8
      %s377 = scalar_lea.vmem %s5, %s376
      %p378 = pneg %p194
      %p379 = pneg %p191
      %p380 = pneg %p222
      %p381 = pneg %p219
      %s382 = smul.u32 8, %s22
      %p383 = scmp.lt.s32.totalorder %s21, 1
      %s384 = scalar_select %p383, %s21, 1
      %p385 = scmp.lt.s32.totalorder %s382, 15
      %s386 = scalar_select %p385, %s382, 15
      %s387 = smul.addr %s386, 3
      %s388 = smul.addr %s384, 48
      %s389 = sadd.s32 %s387, %s388
      %s390 = smul.addr %s389, 8
      %s391 = scalar_lea.vmem %s6, %s390
      %s392 = smul.u32 8, %s22
      %p393 = scmp.lt.s32.totalorder %s21, 1
      %s394 = scalar_select %p393, %s21, 1
      %p395 = scmp.lt.s32.totalorder %s392, 15
      %s396 = scalar_select %p395, %s392, 15
      %s397 = smul.addr %s396, 3
      %s398 = smul.addr %s394, 48
      %s399 = sadd.s32 %s397, %s398
      %s400 = smul.addr %s399, 4
      %s401 = scalar_lea.vmem %s0, %s400
      %s402 = smul.u32 8, %s22
      %s403 = smul.u32 %s22, 8
      %s404 = ssub.s32 %s403, 1
      %p405 = scmp.gt.s32.totalorder %s404, 0
      %s406 = scalar_select %p405, %s404, 0
      %p407 = scmp.lt.s32.totalorder %s21, 1
      %s408 = scalar_select %p407, %s21, 1
      %p409 = scmp.lt.s32.totalorder %s406, 15
      %s410 = scalar_select %p409, %s406, 15
      %s411 = smul.addr %s410, 3
      %s412 = smul.addr %s408, 48
      %s413 = sadd.s32 %s411, %s412
      %s414 = smul.addr %s413, 4
      %s415 = scalar_lea.vmem %s1, %s414
      %s416 = smul.u32 %s22, 8
      %s417 = ssub.s32 %s416, 1
      %p418 = scmp.gt.s32.totalorder %s417, 0
      %s419 = scalar_select %p418, %s417, 0
      %s420 = sadd.s32 %s22, 1
      %s421 = smul.u32 %s420, 8
      %p422 = scmp.lt.s32.totalorder %s421, 15
      %s423 = scalar_select %p422, %s421, 15
      %p424 = scmp.lt.s32.totalorder %s21, 1
      %s425 = scalar_select %p424, %s21, 1
      %p426 = scmp.lt.s32.totalorder %s423, 15
      %s427 = scalar_select %p426, %s423, 15
      %s428 = smul.addr %s427, 3
      %s429 = smul.addr %s425, 48
      %s430 = sadd.s32 %s428, %s429
      %s431 = smul.addr %s430, 4
      %s432 = scalar_lea.vmem %s2, %s431
      %s433 = sadd.s32 %s22, 1
      %s434 = smul.u32 %s433, 8
      %p435 = scmp.lt.s32.totalorder %s434, 15
      %s436 = scalar_select %p435, %s434, 15
      %s437 = smul.u32 8, %s22
      %p438 = scmp.lt.s32.totalorder %s21, 1
      %s439 = scalar_select %p438, %s21, 1
      %p440 = scmp.lt.s32.totalorder %s437, 15
      %s441 = scalar_select %p440, %s437, 15
      %s442 = smul.addr %s441, 3
      %s443 = smul.addr %s439, 48
      %s444 = sadd.s32 %s442, %s443
      %s445 = smul.addr %s444, 8
      %s446 = scalar_lea.vmem %s5, %s445
      %s447 = smul.u32 8, %s22
      %s448 = smul.u32 8, %s22
      %p449 = scmp.lt.s32.totalorder %s21, 1
      %s450 = scalar_select %p449, %s21, 1
      %p451 = scmp.lt.s32.totalorder %s448, 15
      %s452 = scalar_select %p451, %s448, 15
      %s453 = smul.addr %s452, 3
      %s454 = smul.addr %s450, 48
      %s455 = sadd.s32 %s453, %s454
      %s456 = smul.addr %s455, 8
      %s457 = scalar_lea.vmem %s6, %s456
      %s458 = smul.u32 8, %s22
      %v460 = vld [vmem:[%s401] sm:$0xf]
      %v461 = vld [vmem:[%s401 + $0x4] sm:$0xf]
      %v462 = vld [vmem:[%s401 + $0x8] sm:$0x1]
      %v463 = vld [vmem:[%s401 + $0xc] sm:$0xf]
      %v464 = vld [vmem:[%s401 + $0x10] sm:$0xf]
      %v465 = vld [vmem:[%s401 + $0x14] sm:$0x1]
      %v466 = vld [vmem:[%s401 + $0x18] sm:$0xf]
      %v467 = vld [vmem:[%s401 + $0x1c] sm:$0xf]
      %v468 = vld [vmem:[%s401 + $0x20] sm:$0x1]
      %v469 = vld [vmem:[%s401 + $0x24] sm:$0xf]
      %v470 = vld [vmem:[%s401 + $0x28] sm:$0xf]
      %v471 = vld [vmem:[%s401 + $0x2c] sm:$0x1]
      %v472 = vld [vmem:[%s401 + $0x30] sm:$0xf]
      %v473 = vld [vmem:[%s401 + $0x34] sm:$0xf]
      %v474 = vld [vmem:[%s401 + $0x38] sm:$0x1]
      %v475 = vld [vmem:[%s401 + $0x3c] sm:$0xf]
      %v476 = vld [vmem:[%s401 + $0x40] sm:$0xf]
      %v477 = vld [vmem:[%s401 + $0x44] sm:$0x1]
      %v478 = vld [vmem:[%s401 + $0x48] sm:$0xf]
      %v479 = vld [vmem:[%s401 + $0x4c] sm:$0xf]
      %v480 = vld [vmem:[%s401 + $0x50] sm:$0x1]
      %v481 = vld [vmem:[%s401 + $0x54] sm:$0xf]
      %v482 = vld [vmem:[%s401 + $0x58] sm:$0xf]
      %v483 = vld [vmem:[%s401 + $0x5c] sm:$0x1]
      %p484 = scmp.gt.s32.totalorder %s22, 0
      %s485 = scalar_select %p484, 1, 0
      %s486 = scvt.s32.f32 %s485
      %p487 = scmp.lt.s32.totalorder %s22, 1
      %s488 = scalar_select %p487, 1, 0
      %s489 = scvt.s32.f32 %s488
      %v490 = vld [vmem:[%s415] sm:$0xf]
      %v491 = vld [vmem:[%s415 + $0x4] sm:$0xf]
      %v492 = vld [vmem:[%s415 + $0x8] sm:$0x1]
      %v493 = vunpack.c.l.bf16 %v490
      %v494 = vunpack.c.l.bf16 %v491
      %v495 = vunpack.c.l.bf16 %v492
      %v496 = vstv %s486
      %v497 = vmul.f32 %v493, %v496
      %v498 = vmul.f32 %v494, %v496
      %v499 = vmul.f32 %v495, %v496
      %v500 = vpack.c.bf16 %v497, %v497
      %v501 = vpack.c.bf16 %v498, %v498
      %v502 = vpack.c.bf16 %v499, %v499
      %v503 = vld [vmem:[%s432] sm:$0xf]
      %v504 = vld [vmem:[%s432 + $0x4] sm:$0xf]
      %v505 = vld [vmem:[%s432 + $0x8] sm:$0x1]
      %v506 = vunpack.c.l.bf16 %v503
      %v507 = vunpack.c.l.bf16 %v504
      %v508 = vunpack.c.l.bf16 %v505
      %v509 = vstv %s489
      %v510 = vmul.f32 %v506, %v509
      %v511 = vmul.f32 %v507, %v509
      %v512 = vmul.f32 %v508, %v509
      %v513 = vpack.c.bf16 %v510, %v510
      %v514 = vpack.c.bf16 %v511, %v511
      %v515 = vpack.c.bf16 %v512, %v512
      %v516 = vld [vmem:[%s3] sm:$0xf]
      %s517 = scalar_lea.vmem %s3, 12
      %v518 = vld [vmem:[%s517] sm:$0xf]
      %v535 = vunpack.c.l.b16 %v460
      %v536 = vunpack.c.l.b16 %v461
      %v537 = vunpack.c.l.b16 %v463
      %v538 = vunpack.c.l.b16 %v464
      %v539 = vunpack.c.l.b16 %v466
      %v540 = vunpack.c.l.b16 %v467
      %v541 = vunpack.c.l.b16 %v469
      %v542 = vunpack.c.l.b16 %v470
      %v543 = vunpack.c.l.b16 %v472
      %v544 = vunpack.c.l.b16 %v473
      %v545 = vunpack.c.l.b16 %v475
      %v546 = vunpack.c.l.b16 %v476
      %v547 = vunpack.c.l.b16 %v478
      %v548 = vunpack.c.l.b16 %v479
      %v549 = vunpack.c.l.b16 %v481
      %v550 = vunpack.c.l.b16 %v482
      %v551 = vpack.c.b16 %v536, %v535
      %v552 = vpack.c.b16 %v538, %v537
      %v553 = vpack.c.b16 %v540, %v539
      %v554 = vpack.c.b16 %v542, %v541
      %v555 = vpack.c.b16 %v544, %v543
      %v556 = vpack.c.b16 %v546, %v545
      %v557 = vpack.c.b16 %v548, %v547
      %v558 = vpack.c.b16 %v550, %v549
      %vm559 = vcmask 64512
      %v561 = vsel %vm559, %v551, 0
      %v564 = vsel %vm559, %v552, 0
      %v567 = vsel %vm559, %v553, 0
      %v570 = vsel %vm559, %v554, 0
      %v573 = vsel %vm559, %v555, 0
      %v576 = vsel %vm559, %v556, 0
      %v579 = vsel %vm559, %v557, 0
      %v582 = vsel %vm559, %v558, 0
      %vm584 = vcmask 1043456
      %v586 = vsel %vm584, %v518, 0
      %588 = vmatpush.bf16.msra.mxu0 0
      %589 = vmatpush.bf16.msra.mxu0 0
      %590 = vmatpush.bf16.msra.mxu0 0
      %591 = vmatpush.bf16.msra.mxu0 0
      %592 = vmatpush.bf16.msra.mxu0 0
      %593 = vmatpush.bf16.msra.mxu0 0
      %594 = vmatpush.bf16.msra.mxu0 0
      %595 = vmatpush.bf16.msra.mxu0 %v586
      %596 = vmatmul.bf16.gmra.mxu0 %v561
      %v597 = vpop.f32.mrf.mxu0
      %v598 = vadd.f32 0.0, %v597
      %v599 = vpop.f32.mrf.mxu0
      %v600 = vadd.f32 0.0, %v599
      %601 = vmatmul.bf16.gmra.mxu0 %v564
      %v602 = vpop.f32.mrf.mxu0
      %v603 = vadd.f32 0.0, %v602
      %v604 = vpop.f32.mrf.mxu0
      %v605 = vadd.f32 0.0, %v604
      %606 = vmatmul.bf16.gmra.mxu0 %v567
      %v607 = vpop.f32.mrf.mxu0
      %v608 = vadd.f32 0.0, %v607
      %v609 = vpop.f32.mrf.mxu0
      %v610 = vadd.f32 0.0, %v609
      %611 = vmatmul.bf16.gmra.mxu0 %v570
      %v612 = vpop.f32.mrf.mxu0
      %v613 = vadd.f32 0.0, %v612
      %v614 = vpop.f32.mrf.mxu0
      %v615 = vadd.f32 0.0, %v614
      %616 = vmatmul.bf16.gmra.mxu0 %v573
      %v617 = vpop.f32.mrf.mxu0
      %v618 = vadd.f32 0.0, %v617
      %v619 = vpop.f32.mrf.mxu0
      %v620 = vadd.f32 0.0, %v619
      %621 = vmatmul.bf16.gmra.mxu0 %v576
      %v622 = vpop.f32.mrf.mxu0
      %v623 = vadd.f32 0.0, %v622
      %v624 = vpop.f32.mrf.mxu0
      %v625 = vadd.f32 0.0, %v624
      %626 = vmatmul.bf16.gmra.mxu0 %v579
      %v627 = vpop.f32.mrf.mxu0
      %v628 = vadd.f32 0.0, %v627
      %v629 = vpop.f32.mrf.mxu0
      %v630 = vadd.f32 0.0, %v629
      %631 = vmatmul.bf16.gmra.mxu0 %v582
      %v632 = vpop.f32.mrf.mxu0
      %v633 = vadd.f32 0.0, %v632
      %v634 = vpop.f32.mrf.mxu0
      %v635 = vadd.f32 0.0, %v634
      %636 = vdwg.mxu0
      %v639 = vunpack.c.l.b16 %v500
      %v640 = vunpack.c.l.b16 %v501
      %v641 = vpack.c.b16 %v640, %v639
      %v643 = vsel %vm559, %v641, 0
      %v646 = vsel %vm584, %v516, 0
      %648 = vmatpush.bf16.msra.mxu0 0
      %649 = vmatpush.bf16.msra.mxu0 0
      %650 = vmatpush.bf16.msra.mxu0 0
      %651 = vmatpush.bf16.msra.mxu0 0
      %652 = vmatpush.bf16.msra.mxu0 0
      %653 = vmatpush.bf16.msra.mxu0 0
      %654 = vmatpush.bf16.msra.mxu0 0
      %655 = vmatpush.bf16.msra.mxu0 %v646
      %656 = vmatmul.bf16.gmra.mxu0 %v643
      %v657 = vpop.f32.mrf.mxu0
      %v658 = vadd.f32 %v598, %v657
      %v659 = vpop.f32.mrf.mxu0
      %v660 = vadd.f32 %v600, %v659
      %661 = vmatmul.bf16.gmra.mxu0 %v561
      %v662 = vpop.f32.mrf.mxu0
      %v663 = vadd.f32 %v603, %v662
      %v664 = vpop.f32.mrf.mxu0
      %v665 = vadd.f32 %v605, %v664
      %666 = vmatmul.bf16.gmra.mxu0 %v564
      %v667 = vpop.f32.mrf.mxu0
      %v668 = vadd.f32 %v608, %v667
      %v669 = vpop.f32.mrf.mxu0
      %v670 = vadd.f32 %v610, %v669
      %671 = vmatmul.bf16.gmra.mxu0 %v567
      %v672 = vpop.f32.mrf.mxu0
      %v673 = vadd.f32 %v613, %v672
      %v674 = vpop.f32.mrf.mxu0
      %v675 = vadd.f32 %v615, %v674
      %676 = vmatmul.bf16.gmra.mxu0 %v570
      %v677 = vpop.f32.mrf.mxu0
      %v678 = vadd.f32 %v618, %v677
      %v679 = vpop.f32.mrf.mxu0
      %v680 = vadd.f32 %v620, %v679
      %681 = vmatmul.bf16.gmra.mxu0 %v573
      %v682 = vpop.f32.mrf.mxu0
      %v683 = vadd.f32 %v623, %v682
      %v684 = vpop.f32.mrf.mxu0
      %v685 = vadd.f32 %v625, %v684
      %686 = vmatmul.bf16.gmra.mxu0 %v576
      %v687 = vpop.f32.mrf.mxu0
      %v688 = vadd.f32 %v628, %v687
      %v689 = vpop.f32.mrf.mxu0
      %v690 = vadd.f32 %v630, %v689
      %691 = vmatmul.bf16.gmra.mxu0 %v579
      %v692 = vpop.f32.mrf.mxu0
      %v693 = vadd.f32 %v633, %v692
      %v694 = vpop.f32.mrf.mxu0
      %v695 = vadd.f32 %v635, %v694
      %696 = vdwg.mxu0
      %s697 = scalar_lea.vmem %s3, 24
      %v698 = vld [vmem:[%s697] sm:$0xf]
      %v701 = vunpack.c.l.b16 %v513
      %v702 = vunpack.c.l.b16 %v514
      %v703 = vpack.c.b16 %v702, %v701
      %v705 = vsel %vm559, %v703, 0
      %v708 = vsel %vm584, %v698, 0
      %710 = vmatpush.bf16.msra.mxu0 0
      %711 = vmatpush.bf16.msra.mxu0 0
      %712 = vmatpush.bf16.msra.mxu0 0
      %713 = vmatpush.bf16.msra.mxu0 0
      %714 = vmatpush.bf16.msra.mxu0 0
      %715 = vmatpush.bf16.msra.mxu0 0
      %716 = vmatpush.bf16.msra.mxu0 0
      %717 = vmatpush.bf16.msra.mxu0 %v708
      %718 = vmatmul.bf16.gmra.mxu0 %v564
      %v719 = vpop.f32.mrf.mxu0
      %v720 = vadd.f32 0.0, %v719
      %v721 = vpop.f32.mrf.mxu0
      %v722 = vadd.f32 0.0, %v721
      %723 = vmatmul.bf16.gmra.mxu0 %v567
      %v724 = vpop.f32.mrf.mxu0
      %v725 = vadd.f32 0.0, %v724
      %v726 = vpop.f32.mrf.mxu0
      %v727 = vadd.f32 0.0, %v726
      %728 = vmatmul.bf16.gmra.mxu0 %v570
      %v729 = vpop.f32.mrf.mxu0
      %v730 = vadd.f32 0.0, %v729
      %v731 = vpop.f32.mrf.mxu0
      %v732 = vadd.f32 0.0, %v731
      %733 = vmatmul.bf16.gmra.mxu0 %v573
      %v734 = vpop.f32.mrf.mxu0
      %v735 = vadd.f32 0.0, %v734
      %v736 = vpop.f32.mrf.mxu0
      %v737 = vadd.f32 0.0, %v736
      %738 = vmatmul.bf16.gmra.mxu0 %v576
      %v739 = vpop.f32.mrf.mxu0
      %v740 = vadd.f32 0.0, %v739
      %v741 = vpop.f32.mrf.mxu0
      %v742 = vadd.f32 0.0, %v741
      %743 = vmatmul.bf16.gmra.mxu0 %v579
      %v744 = vpop.f32.mrf.mxu0
      %v745 = vadd.f32 0.0, %v744
      %v746 = vpop.f32.mrf.mxu0
      %v747 = vadd.f32 0.0, %v746
      %748 = vmatmul.bf16.gmra.mxu0 %v582
      %v749 = vpop.f32.mrf.mxu0
      %v750 = vadd.f32 0.0, %v749
      %v751 = vpop.f32.mrf.mxu0
      %v752 = vadd.f32 0.0, %v751
      %753 = vmatmul.bf16.gmra.mxu0 %v705
      %v754 = vpop.f32.mrf.mxu0
      %v755 = vadd.f32 0.0, %v754
      %v756 = vpop.f32.mrf.mxu0
      %v757 = vadd.f32 0.0, %v756
      %758 = vdwg.mxu0
      %v759 = vadd.f32 %v658, %v720
      %v760 = vadd.f32 %v660, %v722
      %v761 = vadd.f32 %v663, %v725
      %v762 = vadd.f32 %v665, %v727
      %v763 = vadd.f32 %v668, %v730
      %v764 = vadd.f32 %v670, %v732
      %v765 = vadd.f32 %v673, %v735
      %v766 = vadd.f32 %v675, %v737
      %v767 = vadd.f32 %v678, %v740
      %v768 = vadd.f32 %v680, %v742
      %v769 = vadd.f32 %v683, %v745
      %v770 = vadd.f32 %v685, %v747
      %v771 = vadd.f32 %v688, %v750
      %v772 = vadd.f32 %v690, %v752
      %v773 = vadd.f32 %v693, %v755
      %v774 = vadd.f32 %v695, %v757
      %vm775 = vsmask.f32 3328
      %vm776 = vsmask.f32 7440
      %vm777 = vmor %vm775, %vm776
      %v779 = vshrl.u32 %v500, 16
      %v781 = vrot.slane %v779, 4
      %v782 = vshll.u32 %v500, 16
      %v784 = vrot.slane %v782, 5
      %v785 = vor.u32 %v781, %v784
      %v786 = vrot.slane %v785, 4
      %v788 = vshll.u32 %v501, 16
      %v790 = vrot.slane %v788, 5
      %v791 = vsel %vm777, %v786, %v790
      %v792 = vshrl.u32 %v501, 16
      %v794 = vrot.slane %v792, 4
      %v795 = vor.u32 %v794, %v790
      %v796 = vrot.slane %v795, 4
      %v798 = vshll.u32 %v502, 16
      %v800 = vrot.slane %v798, 5
      %v801 = vsel %vm777, %v796, %v800
      %v803 = vshrl.u32 %v460, 16
      %v805 = vrot.slane %v803, 4
      %v806 = vshll.u32 %v460, 16
      %v808 = vrot.slane %v806, 5
      %v809 = vor.u32 %v805, %v808
      %v810 = vrot.slane %v809, 4
      %v812 = vshll.u32 %v461, 16
      %v814 = vrot.slane %v812, 5
      %v815 = vsel %vm777, %v810, %v814
      %v816 = vshrl.u32 %v461, 16
      %v818 = vrot.slane %v816, 4
      %v819 = vor.u32 %v818, %v814
      %v820 = vrot.slane %v819, 4
      %v822 = vshll.u32 %v462, 16
      %v824 = vrot.slane %v822, 5
      %v825 = vsel %vm777, %v820, %v824
      %v827 = vshrl.u32 %v463, 16
      %v829 = vrot.slane %v827, 4
      %v830 = vshll.u32 %v463, 16
      %v832 = vrot.slane %v830, 5
      %v833 = vor.u32 %v829, %v832
      %v834 = vrot.slane %v833, 4
      %v836 = vshll.u32 %v464, 16
      %v838 = vrot.slane %v836, 5
      %v839 = vsel %vm777, %v834, %v838
      %v840 = vshrl.u32 %v464, 16
      %v842 = vrot.slane %v840, 4
      %v843 = vor.u32 %v842, %v838
      %v844 = vrot.slane %v843, 4
      %v846 = vshll.u32 %v465, 16
      %v848 = vrot.slane %v846, 5
      %v849 = vsel %vm777, %v844, %v848
      %v851 = vshrl.u32 %v466, 16
      %v853 = vrot.slane %v851, 4
      %v854 = vshll.u32 %v466, 16
      %v856 = vrot.slane %v854, 5
      %v857 = vor.u32 %v853, %v856
      %v858 = vrot.slane %v857, 4
      %v860 = vshll.u32 %v467, 16
      %v862 = vrot.slane %v860, 5
      %v863 = vsel %vm777, %v858, %v862
      %v864 = vshrl.u32 %v467, 16
      %v866 = vrot.slane %v864, 4
      %v867 = vor.u32 %v866, %v862
      %v868 = vrot.slane %v867, 4
      %v870 = vshll.u32 %v468, 16
      %v872 = vrot.slane %v870, 5
      %v873 = vsel %vm777, %v868, %v872
      %v875 = vshrl.u32 %v469, 16
      %v877 = vrot.slane %v875, 4
      %v878 = vshll.u32 %v469, 16
      %v880 = vrot.slane %v878, 5
      %v881 = vor.u32 %v877, %v880
      %v882 = vrot.slane %v881, 4
      %v884 = vshll.u32 %v470, 16
      %v886 = vrot.slane %v884, 5
      %v887 = vsel %vm777, %v882, %v886
      %v888 = vshrl.u32 %v470, 16
      %v890 = vrot.slane %v888, 4
      %v891 = vor.u32 %v890, %v886
      %v892 = vrot.slane %v891, 4
      %v894 = vshll.u32 %v471, 16
      %v896 = vrot.slane %v894, 5
      %v897 = vsel %vm777, %v892, %v896
      %v899 = vshrl.u32 %v472, 16
      %v901 = vrot.slane %v899, 4
      %v902 = vshll.u32 %v472, 16
      %v904 = vrot.slane %v902, 5
      %v905 = vor.u32 %v901, %v904
      %v906 = vrot.slane %v905, 4
      %v908 = vshll.u32 %v473, 16
      %v910 = vrot.slane %v908, 5
      %v911 = vsel %vm777, %v906, %v910
      %v912 = vshrl.u32 %v473, 16
      %v914 = vrot.slane %v912, 4
      %v915 = vor.u32 %v914, %v910
      %v916 = vrot.slane %v915, 4
      %v918 = vshll.u32 %v474, 16
      %v920 = vrot.slane %v918, 5
      %v921 = vsel %vm777, %v916, %v920
      %v923 = vshrl.u32 %v475, 16
      %v925 = vrot.slane %v923, 4
      %v926 = vshll.u32 %v475, 16
      %v928 = vrot.slane %v926, 5
      %v929 = vor.u32 %v925, %v928
      %v930 = vrot.slane %v929, 4
      %v932 = vshll.u32 %v476, 16
      %v934 = vrot.slane %v932, 5
      %v935 = vsel %vm777, %v930, %v934
      %v936 = vshrl.u32 %v476, 16
      %v938 = vrot.slane %v936, 4
      %v939 = vor.u32 %v938, %v934
      %v940 = vrot.slane %v939, 4
      %v942 = vshll.u32 %v477, 16
      %v944 = vrot.slane %v942, 5
      %v945 = vsel %vm777, %v940, %v944
      %v947 = vshrl.u32 %v478, 16
      %v949 = vrot.slane %v947, 4
      %v950 = vshll.u32 %v478, 16
      %v952 = vrot.slane %v950, 5
      %v953 = vor.u32 %v949, %v952
      %v954 = vrot.slane %v953, 4
      %v956 = vshll.u32 %v479, 16
      %v958 = vrot.slane %v956, 5
      %v959 = vsel %vm777, %v954, %v958
      %v960 = vshrl.u32 %v479, 16
      %v962 = vrot.slane %v960, 4
      %v963 = vor.u32 %v962, %v958
      %v964 = vrot.slane %v963, 4
      %v966 = vshll.u32 %v480, 16
      %v968 = vrot.slane %v966, 5
      %v969 = vsel %vm777, %v964, %v968
      %s970 = scalar_lea.vmem %s3, 4
      %v971 = vld [vmem:[%s970] sm:$0xf]
      %v972 = vunpack.c.l.b16 %v791
      %v973 = vunpack.c.l.b16 %v801
      %v974 = vunpack.c.l.b16 %v815
      %v975 = vunpack.c.l.b16 %v825
      %v976 = vunpack.c.l.b16 %v839
      %v977 = vunpack.c.l.b16 %v849
      %v978 = vunpack.c.l.b16 %v863
      %v979 = vunpack.c.l.b16 %v873
      %v980 = vunpack.c.l.b16 %v887
      %v981 = vunpack.c.l.b16 %v897
      %v982 = vunpack.c.l.b16 %v911
      %v983 = vunpack.c.l.b16 %v921
      %v984 = vunpack.c.l.b16 %v935
      %v985 = vunpack.c.l.b16 %v945
      %v986 = vunpack.c.l.b16 %v959
      %v987 = vunpack.c.l.b16 %v969
      %v988 = vpack.c.b16 %v973, %v972
      %v989 = vpack.c.b16 %v975, %v974
      %v990 = vpack.c.b16 %v977, %v976
      %v991 = vpack.c.b16 %v979, %v978
      %v992 = vpack.c.b16 %v981, %v980
      %v993 = vpack.c.b16 %v983, %v982
      %v994 = vpack.c.b16 %v985, %v984
      %v995 = vpack.c.b16 %v987, %v986
      %v997 = vsel %vm559, %v988, 0
      %v1000 = vsel %vm559, %v989, 0
      %v1003 = vsel %vm559, %v990, 0
      %v1006 = vsel %vm559, %v991, 0
      %v1009 = vsel %vm559, %v992, 0
      %v1012 = vsel %vm559, %v993, 0
      %v1015 = vsel %vm559, %v994, 0
      %v1018 = vsel %vm559, %v995, 0
      %v1021 = vsel %vm584, %v971, 0
      %1023 = vmatpush.bf16.msra.mxu0 0
      %1024 = vmatpush.bf16.msra.mxu0 0
      %1025 = vmatpush.bf16.msra.mxu0 0
      %1026 = vmatpush.bf16.msra.mxu0 0
      %1027 = vmatpush.bf16.msra.mxu0 0
      %1028 = vmatpush.bf16.msra.mxu0 0
      %1029 = vmatpush.bf16.msra.mxu0 0
      %1030 = vmatpush.bf16.msra.mxu0 %v1021
      %1031 = vmatmul.bf16.gmra.mxu0 %v997
      %v1032 = vpop.f32.mrf.mxu0
      %v1033 = vadd.f32 0.0, %v1032
      %v1034 = vpop.f32.mrf.mxu0
      %v1035 = vadd.f32 0.0, %v1034
      %1036 = vmatmul.bf16.gmra.mxu0 %v1000
      %v1037 = vpop.f32.mrf.mxu0
      %v1038 = vadd.f32 0.0, %v1037
      %v1039 = vpop.f32.mrf.mxu0
      %v1040 = vadd.f32 0.0, %v1039
      %1041 = vmatmul.bf16.gmra.mxu0 %v1003
      %v1042 = vpop.f32.mrf.mxu0
      %v1043 = vadd.f32 0.0, %v1042
      %v1044 = vpop.f32.mrf.mxu0
      %v1045 = vadd.f32 0.0, %v1044
      %1046 = vmatmul.bf16.gmra.mxu0 %v1006
      %v1047 = vpop.f32.mrf.mxu0
      %v1048 = vadd.f32 0.0, %v1047
      %v1049 = vpop.f32.mrf.mxu0
      %v1050 = vadd.f32 0.0, %v1049
      %1051 = vmatmul.bf16.gmra.mxu0 %v1009
      %v1052 = vpop.f32.mrf.mxu0
      %v1053 = vadd.f32 0.0, %v1052
      %v1054 = vpop.f32.mrf.mxu0
      %v1055 = vadd.f32 0.0, %v1054
      %1056 = vmatmul.bf16.gmra.mxu0 %v1012
      %v1057 = vpop.f32.mrf.mxu0
      %v1058 = vadd.f32 0.0, %v1057
      %v1059 = vpop.f32.mrf.mxu0
      %v1060 = vadd.f32 0.0, %v1059
      %1061 = vmatmul.bf16.gmra.mxu0 %v1015
      %v1062 = vpop.f32.mrf.mxu0
      %v1063 = vadd.f32 0.0, %v1062
      %v1064 = vpop.f32.mrf.mxu0
      %v1065 = vadd.f32 0.0, %v1064
      %1066 = vmatmul.bf16.gmra.mxu0 %v1018
      %v1067 = vpop.f32.mrf.mxu0
      %v1068 = vadd.f32 0.0, %v1067
      %v1069 = vpop.f32.mrf.mxu0
      %v1070 = vadd.f32 0.0, %v1069
      %1071 = vdwg.mxu0
      %v1072 = vadd.f32 %v759, %v1033
      %v1073 = vadd.f32 %v760, %v1035
      %v1074 = vadd.f32 %v761, %v1038
      %v1075 = vadd.f32 %v762, %v1040
      %v1076 = vadd.f32 %v763, %v1043
      %v1077 = vadd.f32 %v764, %v1045
      %v1078 = vadd.f32 %v765, %v1048
      %v1079 = vadd.f32 %v766, %v1050
      %v1080 = vadd.f32 %v767, %v1053
      %v1081 = vadd.f32 %v768, %v1055
      %v1082 = vadd.f32 %v769, %v1058
      %v1083 = vadd.f32 %v770, %v1060
      %v1084 = vadd.f32 %v771, %v1063
      %v1085 = vadd.f32 %v772, %v1065
      %v1086 = vadd.f32 %v773, %v1068
      %v1087 = vadd.f32 %v774, %v1070
      %v1089 = vshrl.u32 %v481, 16
      %v1091 = vrot.slane %v1089, 4
      %v1092 = vshll.u32 %v481, 16
      %v1094 = vrot.slane %v1092, 5
      %v1095 = vor.u32 %v1091, %v1094
      %v1096 = vrot.slane %v1095, 4
      %v1098 = vshll.u32 %v482, 16
      %v1100 = vrot.slane %v1098, 5
      %v1101 = vsel %vm777, %v1096, %v1100
      %v1102 = vshrl.u32 %v482, 16
      %v1104 = vrot.slane %v1102, 4
      %v1105 = vor.u32 %v1104, %v1100
      %v1106 = vrot.slane %v1105, 4
      %v1108 = vshll.u32 %v483, 16
      %v1110 = vrot.slane %v1108, 5
      %v1111 = vsel %vm777, %v1106, %v1110
      %s1112 = scalar_lea.vmem %s3, 16
      %v1113 = vld [vmem:[%s1112] sm:$0xf]
      %v1114 = vunpack.c.l.b16 %v1101
      %v1115 = vunpack.c.l.b16 %v1111
      %v1116 = vpack.c.b16 %v1115, %v1114
      %v1118 = vsel %vm559, %v1116, 0
      %v1121 = vsel %vm584, %v1113, 0
      %1123 = vmatpush.bf16.msra.mxu0 0
      %1124 = vmatpush.bf16.msra.mxu0 0
      %1125 = vmatpush.bf16.msra.mxu0 0
      %1126 = vmatpush.bf16.msra.mxu0 0
      %1127 = vmatpush.bf16.msra.mxu0 0
      %1128 = vmatpush.bf16.msra.mxu0 0
      %1129 = vmatpush.bf16.msra.mxu0 0
      %1130 = vmatpush.bf16.msra.mxu0 %v1121
      %1131 = vmatmul.bf16.gmra.mxu0 %v1000
      %v1132 = vpop.f32.mrf.mxu0
      %v1133 = vadd.f32 0.0, %v1132
      %v1134 = vpop.f32.mrf.mxu0
      %v1135 = vadd.f32 0.0, %v1134
      %1136 = vmatmul.bf16.gmra.mxu0 %v1003
      %v1137 = vpop.f32.mrf.mxu0
      %v1138 = vadd.f32 0.0, %v1137
      %v1139 = vpop.f32.mrf.mxu0
      %v1140 = vadd.f32 0.0, %v1139
      %1141 = vmatmul.bf16.gmra.mxu0 %v1006
      %v1142 = vpop.f32.mrf.mxu0
      %v1143 = vadd.f32 0.0, %v1142
      %v1144 = vpop.f32.mrf.mxu0
      %v1145 = vadd.f32 0.0, %v1144
      %1146 = vmatmul.bf16.gmra.mxu0 %v1009
      %v1147 = vpop.f32.mrf.mxu0
      %v1148 = vadd.f32 0.0, %v1147
      %v1149 = vpop.f32.mrf.mxu0
      %v1150 = vadd.f32 0.0, %v1149
      %1151 = vmatmul.bf16.gmra.mxu0 %v1012
      %v1152 = vpop.f32.mrf.mxu0
      %v1153 = vadd.f32 0.0, %v1152
      %v1154 = vpop.f32.mrf.mxu0
      %v1155 = vadd.f32 0.0, %v1154
      %1156 = vmatmul.bf16.gmra.mxu0 %v1015
      %v1157 = vpop.f32.mrf.mxu0
      %v1158 = vadd.f32 0.0, %v1157
      %v1159 = vpop.f32.mrf.mxu0
      %v1160 = vadd.f32 0.0, %v1159
      %1161 = vmatmul.bf16.gmra.mxu0 %v1018
      %v1162 = vpop.f32.mrf.mxu0
      %v1163 = vadd.f32 0.0, %v1162
      %v1164 = vpop.f32.mrf.mxu0
      %v1165 = vadd.f32 0.0, %v1164
      %1166 = vmatmul.bf16.gmra.mxu0 %v1118
      %v1167 = vpop.f32.mrf.mxu0
      %v1168 = vadd.f32 0.0, %v1167
      %v1169 = vpop.f32.mrf.mxu0
      %v1170 = vadd.f32 0.0, %v1169
      %1171 = vdwg.mxu0
      %v1172 = vadd.f32 %v1072, %v1133
      %v1173 = vadd.f32 %v1073, %v1135
      %v1174 = vadd.f32 %v1074, %v1138
      %v1175 = vadd.f32 %v1075, %v1140
      %v1176 = vadd.f32 %v1076, %v1143
      %v1177 = vadd.f32 %v1077, %v1145
      %v1178 = vadd.f32 %v1078, %v1148
      %v1179 = vadd.f32 %v1079, %v1150
      %v1180 = vadd.f32 %v1080, %v1153
      %v1181 = vadd.f32 %v1081, %v1155
      %v1182 = vadd.f32 %v1082, %v1158
      %v1183 = vadd.f32 %v1083, %v1160
      %v1184 = vadd.f32 %v1084, %v1163
      %v1185 = vadd.f32 %v1085, %v1165
      %v1186 = vadd.f32 %v1086, %v1168
      %v1187 = vadd.f32 %v1087, %v1170
      %v1189 = vshrl.u32 %v513, 16
      %v1191 = vrot.slane %v1189, 4
      %v1192 = vshll.u32 %v513, 16
      %v1194 = vrot.slane %v1192, 5
      %v1195 = vor.u32 %v1191, %v1194
      %v1196 = vrot.slane %v1195, 4
      %v1198 = vshll.u32 %v514, 16
      %v1200 = vrot.slane %v1198, 5
      %v1201 = vsel %vm777, %v1196, %v1200
      %v1202 = vshrl.u32 %v514, 16
      %v1204 = vrot.slane %v1202, 4
      %v1205 = vor.u32 %v1204, %v1200
      %v1206 = vrot.slane %v1205, 4
      %v1208 = vshll.u32 %v515, 16
      %v1210 = vrot.slane %v1208, 5
      %v1211 = vsel %vm777, %v1206, %v1210
      %s1212 = scalar_lea.vmem %s3, 28
      %v1213 = vld [vmem:[%s1212] sm:$0xf]
      %v1214 = vunpack.c.l.b16 %v1201
      %v1215 = vunpack.c.l.b16 %v1211
      %v1216 = vpack.c.b16 %v1215, %v1214
      %v1218 = vsel %vm559, %v1216, 0
      %v1221 = vsel %vm584, %v1213, 0
      %1223 = vmatpush.bf16.msra.mxu0 0
      %1224 = vmatpush.bf16.msra.mxu0 0
      %1225 = vmatpush.bf16.msra.mxu0 0
      %1226 = vmatpush.bf16.msra.mxu0 0
      %1227 = vmatpush.bf16.msra.mxu0 0
      %1228 = vmatpush.bf16.msra.mxu0 0
      %1229 = vmatpush.bf16.msra.mxu0 0
      %1230 = vmatpush.bf16.msra.mxu0 %v1221
      %1231 = vmatmul.bf16.gmra.mxu0 %v1003
      %v1232 = vpop.f32.mrf.mxu0
      %v1233 = vadd.f32 0.0, %v1232
      %v1234 = vpop.f32.mrf.mxu0
      %v1235 = vadd.f32 0.0, %v1234
      %1236 = vmatmul.bf16.gmra.mxu0 %v1006
      %v1237 = vpop.f32.mrf.mxu0
      %v1238 = vadd.f32 0.0, %v1237
      %v1239 = vpop.f32.mrf.mxu0
      %v1240 = vadd.f32 0.0, %v1239
      %1241 = vmatmul.bf16.gmra.mxu0 %v1009
      %v1242 = vpop.f32.mrf.mxu0
      %v1243 = vadd.f32 0.0, %v1242
      %v1244 = vpop.f32.mrf.mxu0
      %v1245 = vadd.f32 0.0, %v1244
      %1246 = vmatmul.bf16.gmra.mxu0 %v1012
      %v1247 = vpop.f32.mrf.mxu0
      %v1248 = vadd.f32 0.0, %v1247
      %v1249 = vpop.f32.mrf.mxu0
      %v1250 = vadd.f32 0.0, %v1249
      %1251 = vmatmul.bf16.gmra.mxu0 %v1015
      %v1252 = vpop.f32.mrf.mxu0
      %v1253 = vadd.f32 0.0, %v1252
      %v1254 = vpop.f32.mrf.mxu0
      %v1255 = vadd.f32 0.0, %v1254
      %1256 = vmatmul.bf16.gmra.mxu0 %v1018
      %v1257 = vpop.f32.mrf.mxu0
      %v1258 = vadd.f32 0.0, %v1257
      %v1259 = vpop.f32.mrf.mxu0
      %v1260 = vadd.f32 0.0, %v1259
      %1261 = vmatmul.bf16.gmra.mxu0 %v1118
      %v1262 = vpop.f32.mrf.mxu0
      %v1263 = vadd.f32 0.0, %v1262
      %v1264 = vpop.f32.mrf.mxu0
      %v1265 = vadd.f32 0.0, %v1264
      %1266 = vmatmul.bf16.gmra.mxu0 %v1218
      %v1267 = vpop.f32.mrf.mxu0
      %v1268 = vadd.f32 0.0, %v1267
      %v1269 = vpop.f32.mrf.mxu0
      %v1270 = vadd.f32 0.0, %v1269
      %1271 = vdwg.mxu0
      %v1272 = vadd.f32 %v1172, %v1233
      %v1273 = vadd.f32 %v1173, %v1235
      %v1274 = vadd.f32 %v1174, %v1238
      %v1275 = vadd.f32 %v1175, %v1240
      %v1276 = vadd.f32 %v1176, %v1243
      %v1277 = vadd.f32 %v1177, %v1245
      %v1278 = vadd.f32 %v1178, %v1248
      %v1279 = vadd.f32 %v1179, %v1250
      %v1280 = vadd.f32 %v1180, %v1253
      %v1281 = vadd.f32 %v1181, %v1255
      %v1282 = vadd.f32 %v1182, %v1258
      %v1283 = vadd.f32 %v1183, %v1260
      %v1284 = vadd.f32 %v1184, %v1263
      %v1285 = vadd.f32 %v1185, %v1265
      %v1286 = vadd.f32 %v1186, %v1268
      %v1287 = vadd.f32 %v1187, %v1270
      %vm1296 = vcmask 1042432
      %vm1297 = vcmask 1046532
      %vm1298 = vmor %vm1296, %vm1297
      %v1299 = vrot.slane %v500, 5
      %v1300 = vrot.slane %v1299, 4
      %v1301 = vrot.slane %v501, 5
      %v1302 = vsel %vm1298, %v1300, %v1301
      %v1303 = vrot.slane %v1301, 4
      %v1304 = vrot.slane %v502, 5
      %v1305 = vsel %vm1298, %v1303, %v1304
      %v1306 = vrot.slane %v460, 5
      %v1307 = vrot.slane %v1306, 4
      %v1308 = vrot.slane %v461, 5
      %v1309 = vsel %vm1298, %v1307, %v1308
      %v1310 = vrot.slane %v1308, 4
      %v1311 = vrot.slane %v462, 5
      %v1312 = vsel %vm1298, %v1310, %v1311
      %v1313 = vrot.slane %v463, 5
      %v1314 = vrot.slane %v1313, 4
      %v1315 = vrot.slane %v464, 5
      %v1316 = vsel %vm1298, %v1314, %v1315
      %v1317 = vrot.slane %v1315, 4
      %v1318 = vrot.slane %v465, 5
      %v1319 = vsel %vm1298, %v1317, %v1318
      %v1320 = vrot.slane %v466, 5
      %v1321 = vrot.slane %v1320, 4
      %v1322 = vrot.slane %v467, 5
      %v1323 = vsel %vm1298, %v1321, %v1322
      %v1324 = vrot.slane %v1322, 4
      %v1325 = vrot.slane %v468, 5
      %v1326 = vsel %vm1298, %v1324, %v1325
      %v1327 = vrot.slane %v469, 5
      %v1328 = vrot.slane %v1327, 4
      %v1329 = vrot.slane %v470, 5
      %v1330 = vsel %vm1298, %v1328, %v1329
      %v1331 = vrot.slane %v1329, 4
      %v1332 = vrot.slane %v471, 5
      %v1333 = vsel %vm1298, %v1331, %v1332
      %v1334 = vrot.slane %v472, 5
      %v1335 = vrot.slane %v1334, 4
      %v1336 = vrot.slane %v473, 5
      %v1337 = vsel %vm1298, %v1335, %v1336
      %v1338 = vrot.slane %v1336, 4
      %v1339 = vrot.slane %v474, 5
      %v1340 = vsel %vm1298, %v1338, %v1339
      %v1341 = vrot.slane %v475, 5
      %v1342 = vrot.slane %v1341, 4
      %v1343 = vrot.slane %v476, 5
      %v1344 = vsel %vm1298, %v1342, %v1343
      %v1345 = vrot.slane %v1343, 4
      %v1346 = vrot.slane %v477, 5
      %v1347 = vsel %vm1298, %v1345, %v1346
      %v1348 = vrot.slane %v478, 5
      %v1349 = vrot.slane %v1348, 4
      %v1350 = vrot.slane %v479, 5
      %v1351 = vsel %vm1298, %v1349, %v1350
      %v1352 = vrot.slane %v1350, 4
      %v1353 = vrot.slane %v480, 5
      %v1354 = vsel %vm1298, %v1352, %v1353
      %s1355 = scalar_lea.vmem %s3, 8
      %v1356 = vld [vmem:[%s1355] sm:$0xf]
      %v1357 = vunpack.c.l.b16 %v1302
      %v1358 = vunpack.c.l.b16 %v1305
      %v1359 = vunpack.c.l.b16 %v1309
      %v1360 = vunpack.c.l.b16 %v1312
      %v1361 = vunpack.c.l.b16 %v1316
      %v1362 = vunpack.c.l.b16 %v1319
      %v1363 = vunpack.c.l.b16 %v1323
      %v1364 = vunpack.c.l.b16 %v1326
      %v1365 = vunpack.c.l.b16 %v1330
      %v1366 = vunpack.c.l.b16 %v1333
      %v1367 = vunpack.c.l.b16 %v1337
      %v1368 = vunpack.c.l.b16 %v1340
      %v1369 = vunpack.c.l.b16 %v1344
      %v1370 = vunpack.c.l.b16 %v1347
      %v1371 = vunpack.c.l.b16 %v1351
      %v1372 = vunpack.c.l.b16 %v1354
      %v1373 = vpack.c.b16 %v1358, %v1357
      %v1374 = vpack.c.b16 %v1360, %v1359
      %v1375 = vpack.c.b16 %v1362, %v1361
      %v1376 = vpack.c.b16 %v1364, %v1363
      %v1377 = vpack.c.b16 %v1366, %v1365
      %v1378 = vpack.c.b16 %v1368, %v1367
      %v1379 = vpack.c.b16 %v1370, %v1369
      %v1380 = vpack.c.b16 %v1372, %v1371
      %v1382 = vsel %vm559, %v1373, 0
      %v1385 = vsel %vm559, %v1374, 0
      %v1388 = vsel %vm559, %v1375, 0
      %v1391 = vsel %vm559, %v1376, 0
      %v1394 = vsel %vm559, %v1377, 0
      %v1397 = vsel %vm559, %v1378, 0
      %v1400 = vsel %vm559, %v1379, 0
      %v1403 = vsel %vm559, %v1380, 0
      %v1406 = vsel %vm584, %v1356, 0
      %1408 = vmatpush.bf16.msra.mxu0 0
      %1409 = vmatpush.bf16.msra.mxu0 0
      %1410 = vmatpush.bf16.msra.mxu0 0
      %1411 = vmatpush.bf16.msra.mxu0 0
      %1412 = vmatpush.bf16.msra.mxu0 0
      %1413 = vmatpush.bf16.msra.mxu0 0
      %1414 = vmatpush.bf16.msra.mxu0 0
      %1415 = vmatpush.bf16.msra.mxu0 %v1406
      %1416 = vmatmul.bf16.gmra.mxu0 %v1382
      %v1417 = vpop.f32.mrf.mxu0
      %v1418 = vadd.f32 0.0, %v1417
      %v1419 = vpop.f32.mrf.mxu0
      %v1420 = vadd.f32 0.0, %v1419
      %1421 = vmatmul.bf16.gmra.mxu0 %v1385
      %v1422 = vpop.f32.mrf.mxu0
      %v1423 = vadd.f32 0.0, %v1422
      %v1424 = vpop.f32.mrf.mxu0
      %v1425 = vadd.f32 0.0, %v1424
      %1426 = vmatmul.bf16.gmra.mxu0 %v1388
      %v1427 = vpop.f32.mrf.mxu0
      %v1428 = vadd.f32 0.0, %v1427
      %v1429 = vpop.f32.mrf.mxu0
      %v1430 = vadd.f32 0.0, %v1429
      %1431 = vmatmul.bf16.gmra.mxu0 %v1391
      %v1432 = vpop.f32.mrf.mxu0
      %v1433 = vadd.f32 0.0, %v1432
      %v1434 = vpop.f32.mrf.mxu0
      %v1435 = vadd.f32 0.0, %v1434
      %1436 = vmatmul.bf16.gmra.mxu0 %v1394
      %v1437 = vpop.f32.mrf.mxu0
      %v1438 = vadd.f32 0.0, %v1437
      %v1439 = vpop.f32.mrf.mxu0
      %v1440 = vadd.f32 0.0, %v1439
      %1441 = vmatmul.bf16.gmra.mxu0 %v1397
      %v1442 = vpop.f32.mrf.mxu0
      %v1443 = vadd.f32 0.0, %v1442
      %v1444 = vpop.f32.mrf.mxu0
      %v1445 = vadd.f32 0.0, %v1444
      %1446 = vmatmul.bf16.gmra.mxu0 %v1400
      %v1447 = vpop.f32.mrf.mxu0
      %v1448 = vadd.f32 0.0, %v1447
      %v1449 = vpop.f32.mrf.mxu0
      %v1450 = vadd.f32 0.0, %v1449
      %1451 = vmatmul.bf16.gmra.mxu0 %v1403
      %v1452 = vpop.f32.mrf.mxu0
      %v1453 = vadd.f32 0.0, %v1452
      %v1454 = vpop.f32.mrf.mxu0
      %v1455 = vadd.f32 0.0, %v1454
      %1456 = vdwg.mxu0
      %v1457 = vadd.f32 %v1272, %v1418
      %v1458 = vadd.f32 %v1273, %v1420
      %v1459 = vadd.f32 %v1274, %v1423
      %v1460 = vadd.f32 %v1275, %v1425
      %v1461 = vadd.f32 %v1276, %v1428
      %v1462 = vadd.f32 %v1277, %v1430
      %v1463 = vadd.f32 %v1278, %v1433
      %v1464 = vadd.f32 %v1279, %v1435
      %v1465 = vadd.f32 %v1280, %v1438
      %v1466 = vadd.f32 %v1281, %v1440
      %v1467 = vadd.f32 %v1282, %v1443
      %v1468 = vadd.f32 %v1283, %v1445
      %v1469 = vadd.f32 %v1284, %v1448
      %v1470 = vadd.f32 %v1285, %v1450
      %v1471 = vadd.f32 %v1286, %v1453
      %v1472 = vadd.f32 %v1287, %v1455
      %v1474 = vrot.slane %v481, 5
      %v1475 = vrot.slane %v1474, 4
      %v1476 = vrot.slane %v482, 5
      %v1477 = vsel %vm1298, %v1475, %v1476
      %v1478 = vrot.slane %v1476, 4
      %v1479 = vrot.slane %v483, 5
      %v1480 = vsel %vm1298, %v1478, %v1479
      %s1481 = scalar_lea.vmem %s3, 20
      %v1482 = vld [vmem:[%s1481] sm:$0xf]
      %v1483 = vunpack.c.l.b16 %v1477
      %v1484 = vunpack.c.l.b16 %v1480
      %v1485 = vpack.c.b16 %v1484, %v1483
      %v1487 = vsel %vm559, %v1485, 0
      %v1490 = vsel %vm584, %v1482, 0
      %1492 = vmatpush.bf16.msra.mxu0 0
      %1493 = vmatpush.bf16.msra.mxu0 0
      %1494 = vmatpush.bf16.msra.mxu0 0
      %1495 = vmatpush.bf16.msra.mxu0 0
      %1496 = vmatpush.bf16.msra.mxu0 0
      %1497 = vmatpush.bf16.msra.mxu0 0
      %1498 = vmatpush.bf16.msra.mxu0 0
      %1499 = vmatpush.bf16.msra.mxu0 %v1490
      %1500 = vmatmul.bf16.gmra.mxu0 %v1385
      %v1501 = vpop.f32.mrf.mxu0
      %v1502 = vadd.f32 0.0, %v1501
      %v1503 = vpop.f32.mrf.mxu0
      %v1504 = vadd.f32 0.0, %v1503
      %1505 = vmatmul.bf16.gmra.mxu0 %v1388
      %v1506 = vpop.f32.mrf.mxu0
      %v1507 = vadd.f32 0.0, %v1506
      %v1508 = vpop.f32.mrf.mxu0
      %v1509 = vadd.f32 0.0, %v1508
      %1510 = vmatmul.bf16.gmra.mxu0 %v1391
      %v1511 = vpop.f32.mrf.mxu0
      %v1512 = vadd.f32 0.0, %v1511
      %v1513 = vpop.f32.mrf.mxu0
      %v1514 = vadd.f32 0.0, %v1513
      %1515 = vmatmul.bf16.gmra.mxu0 %v1394
      %v1516 = vpop.f32.mrf.mxu0
      %v1517 = vadd.f32 0.0, %v1516
      %v1518 = vpop.f32.mrf.mxu0
      %v1519 = vadd.f32 0.0, %v1518
      %1520 = vmatmul.bf16.gmra.mxu0 %v1397
      %v1521 = vpop.f32.mrf.mxu0
      %v1522 = vadd.f32 0.0, %v1521
      %v1523 = vpop.f32.mrf.mxu0
      %v1524 = vadd.f32 0.0, %v1523
      %1525 = vmatmul.bf16.gmra.mxu0 %v1400
      %v1526 = vpop.f32.mrf.mxu0
      %v1527 = vadd.f32 0.0, %v1526
      %v1528 = vpop.f32.mrf.mxu0
      %v1529 = vadd.f32 0.0, %v1528
      %1530 = vmatmul.bf16.gmra.mxu0 %v1403
      %v1531 = vpop.f32.mrf.mxu0
      %v1532 = vadd.f32 0.0, %v1531
      %v1533 = vpop.f32.mrf.mxu0
      %v1534 = vadd.f32 0.0, %v1533
      %1535 = vmatmul.bf16.gmra.mxu0 %v1487
      %v1536 = vpop.f32.mrf.mxu0
      %v1537 = vadd.f32 0.0, %v1536
      %v1538 = vpop.f32.mrf.mxu0
      %v1539 = vadd.f32 0.0, %v1538
      %1540 = vdwg.mxu0
      %v1541 = vadd.f32 %v1457, %v1502
      %v1542 = vadd.f32 %v1458, %v1504
      %v1543 = vadd.f32 %v1459, %v1507
      %v1544 = vadd.f32 %v1460, %v1509
      %v1545 = vadd.f32 %v1461, %v1512
      %v1546 = vadd.f32 %v1462, %v1514
      %v1547 = vadd.f32 %v1463, %v1517
      %v1548 = vadd.f32 %v1464, %v1519
      %v1549 = vadd.f32 %v1465, %v1522
      %v1550 = vadd.f32 %v1466, %v1524
      %v1551 = vadd.f32 %v1467, %v1527
      %v1552 = vadd.f32 %v1468, %v1529
      %v1553 = vadd.f32 %v1469, %v1532
      %v1554 = vadd.f32 %v1470, %v1534
      %v1555 = vadd.f32 %v1471, %v1537
      %v1556 = vadd.f32 %v1472, %v1539
      %v1558 = vrot.slane %v513, 5
      %v1559 = vrot.slane %v1558, 4
      %v1560 = vrot.slane %v514, 5
      %v1561 = vsel %vm1298, %v1559, %v1560
      %v1562 = vrot.slane %v1560, 4
      %v1563 = vrot.slane %v515, 5
      %v1564 = vsel %vm1298, %v1562, %v1563
      %s1565 = scalar_lea.vmem %s3, 32
      %v1566 = vld [vmem:[%s1565] sm:$0xf]
      %v1567 = vunpack.c.l.b16 %v1561
      %v1568 = vunpack.c.l.b16 %v1564
      %v1569 = vpack.c.b16 %v1568, %v1567
      %v1571 = vsel %vm559, %v1569, 0
      %v1574 = vsel %vm584, %v1566, 0
      %1576 = vmatpush.bf16.msra.mxu0 0
      %1577 = vmatpush.bf16.msra.mxu0 0
      %1578 = vmatpush.bf16.msra.mxu0 0
      %1579 = vmatpush.bf16.msra.mxu0 0
      %1580 = vmatpush.bf16.msra.mxu0 0
      %1581 = vmatpush.bf16.msra.mxu0 0
      %1582 = vmatpush.bf16.msra.mxu0 0
      %1583 = vmatpush.bf16.msra.mxu0 %v1574
      %1584 = vmatmul.bf16.gmra.mxu0 %v1388
      %v1585 = vpop.f32.mrf.mxu0
      %v1586 = vadd.f32 0.0, %v1585
      %v1587 = vpop.f32.mrf.mxu0
      %v1588 = vadd.f32 0.0, %v1587
      %1589 = vmatmul.bf16.gmra.mxu0 %v1391
      %v1590 = vpop.f32.mrf.mxu0
      %v1591 = vadd.f32 0.0, %v1590
      %v1592 = vpop.f32.mrf.mxu0
      %v1593 = vadd.f32 0.0, %v1592
      %1594 = vmatmul.bf16.gmra.mxu0 %v1394
      %v1595 = vpop.f32.mrf.mxu0
      %v1596 = vadd.f32 0.0, %v1595
      %v1597 = vpop.f32.mrf.mxu0
      %v1598 = vadd.f32 0.0, %v1597
      %1599 = vmatmul.bf16.gmra.mxu0 %v1397
      %v1600 = vpop.f32.mrf.mxu0
      %v1601 = vadd.f32 0.0, %v1600
      %v1602 = vpop.f32.mrf.mxu0
      %v1603 = vadd.f32 0.0, %v1602
      %1604 = vmatmul.bf16.gmra.mxu0 %v1400
      %v1605 = vpop.f32.mrf.mxu0
      %v1606 = vadd.f32 0.0, %v1605
      %v1607 = vpop.f32.mrf.mxu0
      %v1608 = vadd.f32 0.0, %v1607
      %1609 = vmatmul.bf16.gmra.mxu0 %v1403
      %v1610 = vpop.f32.mrf.mxu0
      %v1611 = vadd.f32 0.0, %v1610
      %v1612 = vpop.f32.mrf.mxu0
      %v1613 = vadd.f32 0.0, %v1612
      %1614 = vmatmul.bf16.gmra.mxu0 %v1487
      %v1615 = vpop.f32.mrf.mxu0
      %v1616 = vadd.f32 0.0, %v1615
      %v1617 = vpop.f32.mrf.mxu0
      %v1618 = vadd.f32 0.0, %v1617
      %1619 = vmatmul.bf16.gmra.mxu0 %v1571
      %v1620 = vpop.f32.mrf.mxu0
      %v1621 = vadd.f32 0.0, %v1620
      %v1622 = vpop.f32.mrf.mxu0
      %v1623 = vadd.f32 0.0, %v1622
      %1624 = vdwg.mxu0
      %v1625 = vadd.f32 %v1541, %v1586
      %v1626 = vadd.f32 %v1542, %v1588
      %v1627 = vadd.f32 %v1543, %v1591
      %v1628 = vadd.f32 %v1544, %v1593
      %v1629 = vadd.f32 %v1545, %v1596
      %v1630 = vadd.f32 %v1546, %v1598
      %v1631 = vadd.f32 %v1547, %v1601
      %v1632 = vadd.f32 %v1548, %v1603
      %v1633 = vadd.f32 %v1549, %v1606
      %v1634 = vadd.f32 %v1550, %v1608
      %v1635 = vadd.f32 %v1551, %v1611
      %v1636 = vadd.f32 %v1552, %v1613
      %v1637 = vadd.f32 %v1553, %v1616
      %v1638 = vadd.f32 %v1554, %v1618
      %v1639 = vadd.f32 %v1555, %v1621
      %v1640 = vadd.f32 %v1556, %v1623
      %v1641 = vld [vmem:[%s4] sm:$0x1]
      %v1643 = vperm.slane %v1641, 0
      %v1645 = vadd.f32 %v1625, %v1643
      %v1646 = vadd.f32 %v1626, %v1643
      %v1647 = vadd.f32 %v1627, %v1643
      %v1648 = vadd.f32 %v1628, %v1643
      %v1649 = vadd.f32 %v1629, %v1643
      %v1650 = vadd.f32 %v1630, %v1643
      %v1651 = vadd.f32 %v1631, %v1643
      %v1652 = vadd.f32 %v1632, %v1643
      %v1653 = vadd.f32 %v1633, %v1643
      %v1654 = vadd.f32 %v1634, %v1643
      %v1655 = vadd.f32 %v1635, %v1643
      %v1656 = vadd.f32 %v1636, %v1643
      %v1657 = vadd.f32 %v1637, %v1643
      %v1658 = vadd.f32 %v1638, %v1643
      %v1659 = vadd.f32 %v1639, %v1643
      %v1660 = vadd.f32 %v1640, %v1643
      %vm1677 = vcmask 1040384
      %v1678 = vrot.slane %v1645, 7
      %v1679 = vrot.slane %v1646, 7
      %v1680 = vsel %vm1677, %v1678, %v1679
      %v1681 = vrot.slane %v1647, 7
      %v1682 = vrot.slane %v1648, 7
      %v1683 = vsel %vm1677, %v1681, %v1682
      %v1684 = vrot.slane %v1649, 7
      %v1685 = vrot.slane %v1650, 7
      %v1686 = vsel %vm1677, %v1684, %v1685
      %v1687 = vrot.slane %v1651, 7
      %v1688 = vrot.slane %v1652, 7
      %v1689 = vsel %vm1677, %v1687, %v1688
      %v1690 = vrot.slane %v1653, 7
      %v1691 = vrot.slane %v1654, 7
      %v1692 = vsel %vm1677, %v1690, %v1691
      %v1693 = vrot.slane %v1655, 7
      %v1694 = vrot.slane %v1656, 7
      %v1695 = vsel %vm1677, %v1693, %v1694
      %v1696 = vrot.slane %v1657, 7
      %v1697 = vrot.slane %v1658, 7
      %v1698 = vsel %vm1677, %v1696, %v1697
      %v1699 = vrot.slane %v1659, 7
      %v1700 = vrot.slane %v1660, 7
      %v1701 = vsel %vm1677, %v1699, %v1700
      %v1726 = vsel %vm1677, 0.0, %v1678
      %v1727 = vsel %vm1677, 0.0, %v1681
      %v1728 = vsel %vm1677, 0.0, %v1684
      %v1729 = vsel %vm1677, 0.0, %v1687
      %v1730 = vsel %vm1677, 0.0, %v1690
      %v1731 = vsel %vm1677, 0.0, %v1693
      %v1732 = vsel %vm1677, 0.0, %v1696
      %v1733 = vsel %vm1677, 0.0, %v1699
      %v1734 = vsel %vm1677, %v1679, 0.0
      %v1735 = vsel %vm1677, %v1682, 0.0
      %v1736 = vsel %vm1677, %v1685, 0.0
      %v1737 = vsel %vm1677, %v1688, 0.0
      %v1738 = vsel %vm1677, %v1691, 0.0
      %v1739 = vsel %vm1677, %v1694, 0.0
      %v1740 = vsel %vm1677, %v1697, 0.0
      %v1741 = vsel %vm1677, %v1700, 0.0
      %v1742 = vld [vmem:[%s446] sm:$0xff]
      %v1743 = vld [vmem:[%s446 + $0x8] sm:$0xff]
      %v1744 = vld [vmem:[%s446 + $0x10] sm:$0x3]
      %v1745 = vld [vmem:[%s446 + $0x18] sm:$0xff]
      %v1746 = vld [vmem:[%s446 + $0x20] sm:$0xff]
      %v1747 = vld [vmem:[%s446 + $0x28] sm:$0x3]
      %v1748 = vld [vmem:[%s446 + $0x30] sm:$0xff]
      %v1749 = vld [vmem:[%s446 + $0x38] sm:$0xff]
      %v1750 = vld [vmem:[%s446 + $0x40] sm:$0x3]
      %v1751 = vld [vmem:[%s446 + $0x48] sm:$0xff]
      %v1752 = vld [vmem:[%s446 + $0x50] sm:$0xff]
      %v1753 = vld [vmem:[%s446 + $0x58] sm:$0x3]
      %v1754 = vld [vmem:[%s446 + $0x60] sm:$0xff]
      %v1755 = vld [vmem:[%s446 + $0x68] sm:$0xff]
      %v1756 = vld [vmem:[%s446 + $0x70] sm:$0x3]
      %v1757 = vld [vmem:[%s446 + $0x78] sm:$0xff]
      %v1758 = vld [vmem:[%s446 + $0x80] sm:$0xff]
      %v1759 = vld [vmem:[%s446 + $0x88] sm:$0x3]
      %v1760 = vld [vmem:[%s446 + $0x90] sm:$0xff]
      %v1761 = vld [vmem:[%s446 + $0x98] sm:$0xff]
      %v1762 = vld [vmem:[%s446 + $0xa0] sm:$0x3]
      %v1763 = vld [vmem:[%s446 + $0xa8] sm:$0xff]
      %v1764 = vld [vmem:[%s446 + $0xb0] sm:$0xff]
      %v1765 = vld [vmem:[%s446 + $0xb8] sm:$0x3]
      %v1766 = vadd.f32 %v1726, %v1742
      %v1767 = vadd.f32 %v1680, %v1743
      %v1768 = vadd.f32 %v1734, %v1744
      %v1769 = vadd.f32 %v1727, %v1745
      %v1770 = vadd.f32 %v1683, %v1746
      %v1771 = vadd.f32 %v1735, %v1747
      %v1772 = vadd.f32 %v1728, %v1748
      %v1773 = vadd.f32 %v1686, %v1749
      %v1774 = vadd.f32 %v1736, %v1750
      %v1775 = vadd.f32 %v1729, %v1751
      %v1776 = vadd.f32 %v1689, %v1752
      %v1777 = vadd.f32 %v1737, %v1753
      %v1778 = vadd.f32 %v1730, %v1754
      %v1779 = vadd.f32 %v1692, %v1755
      %v1780 = vadd.f32 %v1738, %v1756
      %v1781 = vadd.f32 %v1731, %v1757
      %v1782 = vadd.f32 %v1695, %v1758
      %v1783 = vadd.f32 %v1739, %v1759
      %v1784 = vadd.f32 %v1732, %v1760
      %v1785 = vadd.f32 %v1698, %v1761
      %v1786 = vadd.f32 %v1740, %v1762
      %v1787 = vadd.f32 %v1733, %v1763
      %v1788 = vadd.f32 %v1701, %v1764
      %v1789 = vadd.f32 %v1741, %v1765
      %vm1790 = vcmask 23552
      %1791 = vst.msk [vmem:[%s457] sm:$0xff] %vm1790, %v1766
      %1792 = vst.msk [vmem:[%s457 + $0x8] sm:$0xff] %vm1790, %v1767
      %vm1793 = vcmask 17408
      %1794 = vst.msk [vmem:[%s457 + $0x10] sm:$0x3] %vm1793, %v1768
      %1795 = vst.msk [vmem:[%s457 + $0x18] sm:$0xff] %vm1790, %v1769
      %1796 = vst.msk [vmem:[%s457 + $0x20] sm:$0xff] %vm1790, %v1770
      %1797 = vst.msk [vmem:[%s457 + $0x28] sm:$0x3] %vm1793, %v1771
      %1798 = vst.msk [vmem:[%s457 + $0x30] sm:$0xff] %vm1790, %v1772
      %1799 = vst.msk [vmem:[%s457 + $0x38] sm:$0xff] %vm1790, %v1773
      %1800 = vst.msk [vmem:[%s457 + $0x40] sm:$0x3] %vm1793, %v1774
      %1801 = vst.msk [vmem:[%s457 + $0x48] sm:$0xff] %vm1790, %v1775
      %1802 = vst.msk [vmem:[%s457 + $0x50] sm:$0xff] %vm1790, %v1776
      %1803 = vst.msk [vmem:[%s457 + $0x58] sm:$0x3] %vm1793, %v1777
      %1804 = vst.msk [vmem:[%s457 + $0x60] sm:$0xff] %vm1790, %v1778
      %1805 = vst.msk [vmem:[%s457 + $0x68] sm:$0xff] %vm1790, %v1779
      %1806 = vst.msk [vmem:[%s457 + $0x70] sm:$0x3] %vm1793, %v1780
      %1807 = vst.msk [vmem:[%s457 + $0x78] sm:$0xff] %vm1790, %v1781
      %1808 = vst.msk [vmem:[%s457 + $0x80] sm:$0xff] %vm1790, %v1782
      %1809 = vst.msk [vmem:[%s457 + $0x88] sm:$0x3] %vm1793, %v1783
      %1810 = vst.msk [vmem:[%s457 + $0x90] sm:$0xff] %vm1790, %v1784
      %1811 = vst.msk [vmem:[%s457 + $0x98] sm:$0xff] %vm1790, %v1785
      %1812 = vst.msk [vmem:[%s457 + $0xa0] sm:$0x3] %vm1793, %v1786
      %1813 = vst.msk [vmem:[%s457 + $0xa8] sm:$0xff] %vm1790, %v1787
      %1814 = vst.msk [vmem:[%s457 + $0xb0] sm:$0xff] %vm1790, %v1788
      %1815 = vst.msk [vmem:[%s457 + $0xb8] sm:$0x3] %vm1793, %v1789
      %s1816 = smul.u32 8, %s22
      %p1817 = scmp.lt.s32.totalorder %s21, 1
      %s1818 = scalar_select %p1817, %s21, 1
      %p1819 = scmp.lt.s32.totalorder %s1816, 15
      %s1820 = scalar_select %p1819, %s1816, 15
      %s1821 = smul.addr %s1820, 3
      %s1822 = smul.addr %s1818, 48
      %s1823 = sadd.s32 %s1821, %s1822
      %s1824 = smul.addr %s1823, 8
      %s1825 = scalar_lea.vmem %s6, %s1824
      // Predicated region
      $region45: #{rednet_forward.19} parent=43 // pred_check
        %p1826 = pneg %p219
      $region46: #{rednet_forward.19} parent=43 // pred_check_branch
        %1828 = sbr.rel (%p1826) target = $region48
      $region47: #{rednet_forward.19} parent=43 // pred_region
        %s1829 = smul.u32 8, %s22
      $region48: #{rednet_forward.19} parent=43 // pred_fallthru
        _
    $region44: #{rednet_forward.19} parent=5 // pred_fallthru
      _
    %p1830 = scmp.le.s32.totalorder 2, %s12
    // Predicated region
    $region49: #{rednet_forward.19} parent=5 // pred_check
      %p1831 = pneg %p1830
    $region50: #{rednet_forward.19} parent=5 // pred_check_branch
      %1833 = sbr.rel (%p1831) target = $region52
    $region51: #{rednet_forward.19} parent=5 // pred_region
      %s1834 = ssub.s32 %s12, 2
      // Predicated region
      $region53: #{rednet_forward.19} parent=51 // pred_check
        %p1835 = pneg %p225
      $region54: #{rednet_forward.19} parent=51 // pred_check_branch
        %1837 = sbr.rel (%p1835) target = $region56
      $region55: #{rednet_forward.19} parent=51 // pred_region
        %s1838 = smul.u32 8, %s24
        %p1839 = scmp.lt.s32.totalorder %s23, 1
        %s1840 = scalar_select %p1839, %s23, 1
        %p1841 = scmp.lt.s32.totalorder %s1838, 15
        %s1842 = scalar_select %p1841, %s1838, 15
        %s1843 = smul.addr %s1842, 3
        %s1844 = smul.addr %s1840, 48
        %s1845 = sadd.s32 %s1843, %s1844
        %s1846 = smul.addr %s1845, 8
        %s1847 = scalar_lea.vmem %s6, %s1846
      $region56: #{rednet_forward.19} parent=51 // pred_fallthru
        _
    $region52: #{rednet_forward.19} parent=5 // pred_fallthru
      _
  $region6: #{rednet_forward.19} parent=0 // loop_footer
    %s16 = sadd.s32 1, %s12
  $region7: #{rednet_forward.19} parent=0 // loop_footer_branch
    %11 = sbr.rel target = $region3
  $region8: #{rednet_forward.19} parent=0 // loop_exit
    _

</llo_original>
